<compile_context>
chip_gen: v5e
topology: v5e:2x2
jax: 0.10.0
libtpu: 0.0.40
codegen_flags: <defaults>
</compile_context>

<pallas_src>
import functools
import math

import numpy as np
import jax
import jax.numpy as jnp
from jax.experimental import pallas as pl
from jax.experimental.pallas import tpu as pltpu

D_MODEL = 32
HEADS = 4
NUM_EXPERTS = 4
TOP_K = 2
EPS = float(np.finfo(float).eps)  # combined[combined == 0] = np.finfo(float).eps


# -----------------------------------------------------------------------------
# Pallas kernel: single grid step, all experts/heads statically unrolled with
# VMEM-resident weights; one fused QKV matmul for all experts, one K=D output
# projection per expert, gate-weighted dense combine, eps-fill.
# -----------------------------------------------------------------------------
def _moe_mha_kernel(x_ref, bias_ref, gates_ref, wqkv_ref, bqkv_ref, wo_ref, bo_ref,
                    o_ref, *, heads, num_experts, bh, seq):
    D = x_ref.shape[-1]
    dk = D // heads
    n = bh * seq

    xb = x_ref[...].astype(jnp.bfloat16)                       # (n, D) tokens, bf16 for MXU

    # One fused QKV projection for ALL experts: N = E*3*D lanes on the MXU.
    # Column layout (set up in prepare_expert_weights): e-major, then [Q | K | V], then
    # (head, dk) inside each D-wide block. Wq / bq are pre-scaled by 1/sqrt(dk).
    qkv = jnp.dot(xb, wqkv_ref[...],
                  preferred_element_type=jnp.float32) + bqkv_ref[...]   # (n, E*3*D) f32

    gates = gates_ref[...]                                      # (n, E) per-token gate weights

    # Hoisted additive-mask broadcast (0 keep / -1e9 masked); reused by every score add.
    bias3 = jnp.broadcast_to(bias_ref[...][None, :, :], (bh, seq, seq))

    # gate-weighted combine accumulator, kept flat in the output layout (registers; ~8 KiB).
    acc = jnp.zeros((n, D), jnp.float32)

    # TODO(synk): attention-probability dropout is omitted (inference semantics).
    for e in range(num_experts):                                # static unroll over experts
        base = e * 3 * D
        ctx_heads = []
        for h in range(heads):                                  # static unroll over heads
            qh = qkv[:, base + h * dk:base + (h + 1) * dk].reshape(bh, seq, dk)
            kh = qkv[:, base + D + h * dk:base + D + (h + 1) * dk].reshape(bh, seq, dk)
            vh = qkv[:, base + 2 * D + h * dk:base + 2 * D + (h + 1) * dk].reshape(bh, seq, dk)

            scores = jnp.einsum('bqd,bkd->bqk', qh, kh,
                                preferred_element_type=jnp.float32) + bias3
            m = jnp.max(scores, axis=-1, keepdims=True)
            p = jnp.exp(scores - m)
            attn = p * pl.reciprocal(jnp.sum(p, axis=-1, keepdims=True), approx=True)
            ctx = jnp.einsum('bqk,bkd->bqd', attn, vh,
                             preferred_element_type=jnp.float32)        # (bh, seq, dk)
            ctx_heads.append(ctx.reshape(n, dk))

        # Merge heads once -> ONE output projection per expert with contraction K = D.
        ctx_all = jnp.concatenate(ctx_heads, axis=-1).astype(jnp.bfloat16)   # (n, D)
        out = jnp.dot(ctx_all, wo_ref[e],
                      preferred_element_type=jnp.float32) + bo_ref[e]        # (n, D) f32

        # dense equivalent of SparseDispatcher.combine: gate==0 contributes exactly 0
        acc = acc + gates[:, e:e + 1] * out

    o_ref[...] = jnp.where(acc == 0.0, EPS, acc)                # combined[combined == 0] = eps


# -----------------------------------------------------------------------------
# One-time parameter preprocessing (hoisted out of the per-call path).
# -----------------------------------------------------------------------------
def prepare_expert_weights(wq, bq, wk, bk, wv, bv, wo, bo, *, heads):
    E, D, _ = wq.shape
    dk = D // heads
    scale = 1.0 / math.sqrt(dk)

    # Fold the 1/sqrt(dk) score scale into the Q projection and fuse Q/K/V over all experts:
    # columns ordered expert-major, then [Q(D) | K(D) | V(D)], matching the kernel's slices.
    wqkv = jnp.concatenate([wq * scale, wk, wv], axis=-1)                     # (E, D, 3D)
    wqkv = jnp.transpose(wqkv, (1, 0, 2)).reshape(D, E * 3 * D).astype(jnp.bfloat16)
    bqkv = jnp.concatenate([bq * scale, bk, bv], axis=-1)                     # (E, 1, 3D)
    bqkv = jnp.transpose(bqkv, (1, 0, 2)).reshape(1, E * 3 * D).astype(jnp.float32)

    return {
        "wqkv": wqkv,                         # (D, E*3D) bf16
        "bqkv": bqkv,                         # (1, E*3D) f32
        "wo": wo.astype(jnp.bfloat16),        # (E, D, D) bf16
        "bo": bo.astype(jnp.float32),         # (E, 1, D) f32
    }


def moe_mha_forward(q, mask, gates, prep, *, heads, n_par=1):
    B, S, D = q.shape
    E = prep["wo"].shape[0]
    if B % n_par != 0:
        n_par = 1
    bh = B // n_par

    # additive attention-mask bias (0 keep / -1e9 masked), shared across batch
    mask_bias = ((mask[0] - 1.0) * 1e9).astype(jnp.float32)                   # (S, S)

    x_flat = q.reshape(B * S, D)
    gates_tok = jnp.repeat(gates.astype(jnp.float32), S, axis=0)              # (B*S, E)

    kernel = functools.partial(_moe_mha_kernel, heads=heads, num_experts=E, bh=bh, seq=S)

    # NOTE: resident-weight inputs have constant index_maps, so they are DMA'd once and stay
    # VMEM-resident (~100 KiB total; single-buffering via pl.Buffered(1) only matters if the
    # model is scaled up toward v7x's 64 MiB VMEM).
    out_flat = pl.pallas_call(
        kernel,
        out_shape=jax.ShapeDtypeStruct((B * S, D), jnp.float32),
        grid=(n_par,),
        in_specs=[
            pl.BlockSpec((bh * S, D), lambda g: (g, 0)),             # tokens (flat)
            pl.BlockSpec((S, S), lambda g: (0, 0)),                  # additive mask bias
            pl.BlockSpec((bh * S, E), lambda g: (g, 0)),             # per-token gates
            pl.BlockSpec((D, E * 3 * D), lambda g: (0, 0)),          # fused Wqkv (resident)
            pl.BlockSpec((1, E * 3 * D), lambda g: (0, 0)),          # fused bqkv (resident)
            pl.BlockSpec((E, D, D), lambda g: (0, 0, 0)),            # Wo per expert (resident)
            pl.BlockSpec((E, 1, D), lambda g: (0, 0, 0)),            # bo (resident)
        ],
        out_specs=pl.BlockSpec((bh * S, D), lambda g: (g, 0)),
        compiler_params=pltpu.CompilerParams(
            dimension_semantics=("parallel",)),
    )(x_flat, mask_bias, gates_tok, prep["wqkv"], prep["bqkv"], prep["wo"], prep["bo"])

    return out_flat.reshape(B, S, D)


# -----------------------------------------------------------------------------
# Gating network (generate_gates_and_loss) -- small, data-dependent topk/scatter
# routing logic; kept as plain JAX glue.
# -----------------------------------------------------------------------------
def generate_gates_and_loss(q, w_gate, num_experts, top_k, key):
    x = jnp.sum(q, axis=1)                       # (B, D) -- sum over seq dim
    B = x.shape[0]
    expert_capacity = B // num_experts
    rows = jnp.arange(B)

    gates_soft = jax.nn.softmax(x @ w_gate, axis=1)            # (B, E)
    mean_gates = jnp.mean(gates_soft, axis=0)                  # (E,)
    top_gates, top_indices = jax.lax.top_k(gates_soft, min(top_k, num_experts))
    top_gates = top_gates / jnp.sum(top_gates, axis=1, keepdims=True)

    counts = jnp.sum(top_indices[:, 0:1] == jnp.arange(num_experts)[None, :],
                     axis=0).astype(jnp.float32)
    loss_aux = jnp.mean(counts / B * mean_gates)

    # expert 1 weights
    gcw1 = jnp.zeros((B, num_experts), jnp.float32).at[
        rows, top_indices[:, 0]].set(top_gates[:, 0])

    # expert 2 weights (stochastically kept)
    k1, k2, k3 = jax.random.split(key, 3)
    random_uniform = jax.random.uniform(k1, (B, num_experts), jnp.float32) / 2.0
    gcw2 = jnp.zeros((B, num_experts), jnp.float32).at[
        rows, top_indices[:, 1]].set(top_gates[:, 1])
    gcw2 = jnp.where(gcw2 > random_uniform, gcw2, 0.0)

    gcw = gcw1 + gcw2

    # capacity-limited topk per expert (torch: topk along dim=0, then scatter dim=0)
    top_vals, top_idx = jax.lax.top_k(gcw.T, expert_capacity)        # (E, cap)
    e_idx = jnp.broadcast_to(jnp.arange(num_experts)[:, None], top_idx.shape)
    gcwc = jnp.zeros((B, num_experts), jnp.float32).at[top_idx, e_idx].set(top_vals)

    # random routing for tokens that got no expert
    unutilised = jnp.sum(gcwc > 0, axis=1) == 0                      # (B,)
    rand_vals = jax.random.uniform(k2, (B, top_k), jnp.float32)
    rand_vals = rand_vals / jnp.sum(rand_vals, axis=1, keepdims=True)
    rand_idx = jax.random.randint(k3, (B, top_k), 0, num_experts)
    b_idx = jnp.broadcast_to(rows[:, None], (B, top_k))
    placeholder = jnp.zeros((B, num_experts), jnp.float32).at[
        b_idx, rand_idx].set(rand_vals)
    gcwc = jnp.where(unutilised[:, None], placeholder, gcwc)

    return gcwc, loss_aux


# -----------------------------------------------------------------------------
# End-to-end forward (mirrors MoeMultiHeadAttention.forward)
# -----------------------------------------------------------------------------
def moe_multi_head_attention_forward(q, mask, w_gate, prep, key, loss_coef=0.1):
    gates, loss_aux = generate_gates_and_loss(q, w_gate, NUM_EXPERTS, TOP_K, key)
    loss = loss_aux * loss_coef
    y = moe_mha_forward(q, mask, gates, prep, heads=HEADS)
    return y, loss


if __name__ == "__main__":
    B, S = 8, 8
    key = jax.random.PRNGKey(0)
    keys = jax.random.split(key, 12)

    # inputs
    q = jax.random.normal(keys[0], (B, S, D_MODEL), jnp.float32)
    mask = jnp.tril(jnp.ones((S, S), jnp.float32))[None, :, :]   # (1, S, S) causal

    # deterministic parameter init (shapes from module __init__; nn.Linear-style bounds)
    bound = 1.0 / math.sqrt(D_MODEL)

    def uni(k, shape):
        return jax.random.uniform(k, shape, jnp.float32, -bound, bound)

    params = {
        "w_gate": 0.1 * jax.random.normal(keys[1], (D_MODEL, NUM_EXPERTS), jnp.float32),
        "wq": uni(keys[2], (NUM_EXPERTS, D_MODEL, D_MODEL)),
        "bq": uni(keys[3], (NUM_EXPERTS, 1, D_MODEL)),
        "wk": uni(keys[4], (NUM_EXPERTS, D_MODEL, D_MODEL)),
        "bk": uni(keys[5], (NUM_EXPERTS, 1, D_MODEL)),
        "wv": uni(keys[6], (NUM_EXPERTS, D_MODEL, D_MODEL)),
        "bv": uni(keys[7], (NUM_EXPERTS, 1, D_MODEL)),
        "wo": uni(keys[8], (NUM_EXPERTS, D_MODEL, D_MODEL)),
        "bo": uni(keys[9], (NUM_EXPERTS, 1, D_MODEL)),
    }

    # one-time weight preprocessing (hoisted out of the per-call path)
    prep = prepare_expert_weights(
        params["wq"], params["bq"], params["wk"], params["bk"],
        params["wv"], params["bv"], params["wo"], params["bo"], heads=HEADS)
    prep = jax.tree_util.tree_map(jax.block_until_ready, prep)

    y, loss = moe_multi_head_attention_forward(q, mask, params["w_gate"], prep, keys[10])
    y = jax.block_until_ready(y)
    loss = jax.block_until_ready(loss)

    assert y.shape == (B, S, D_MODEL)
    assert jnp.isfinite(y).all() and jnp.isfinite(loss)
    print("KERNEL_OK")
</pallas_src>

<mosaic_0001>
module attributes {stable_mosaic.version = 11 : i64} {
  func.func @_moe_mha_kernel(%arg0: i32, %arg1: memref<64x32xf32, #tpu.memory_space<vmem>>, %arg2: memref<8x8xf32, #tpu.memory_space<vmem>>, %arg3: memref<64x4xf32, #tpu.memory_space<vmem>>, %arg4: memref<32x384xbf16, #tpu.memory_space<vmem>>, %arg5: memref<1x384xf32, #tpu.memory_space<vmem>>, %arg6: memref<4x32x32xbf16, #tpu.memory_space<vmem>>, %arg7: memref<4x1x32xf32, #tpu.memory_space<vmem>>, %arg8: memref<64x32xf32, #tpu.memory_space<vmem>>) attributes {dimension_semantics = [#tpu.dimension_semantics<parallel>], iteration_bounds = array<i64: 1>, scalar_prefetch = 0 : i64, scratch_operands = 0 : i64, tpu.core_type = #tpu.core_type<tc>, window_params = [{transform_indices = @transform_0, window_bounds = array<i64: 64, 32>}, {pipeline_mode = #tpu.pipeline_mode<synchronous>, transform_indices = @transform_1, window_bounds = array<i64: 8, 8>}, {transform_indices = @transform_2, window_bounds = array<i64: 64, 4>}, {pipeline_mode = #tpu.pipeline_mode<synchronous>, transform_indices = @transform_3, window_bounds = array<i64: 32, 384>}, {pipeline_mode = #tpu.pipeline_mode<synchronous>, transform_indices = @transform_4, window_bounds = array<i64: 1, 384>}, {pipeline_mode = #tpu.pipeline_mode<synchronous>, transform_indices = @transform_5, window_bounds = array<i64: 4, 32, 32>}, {pipeline_mode = #tpu.pipeline_mode<synchronous>, transform_indices = @transform_6, window_bounds = array<i64: 4, 1, 32>}, {transform_indices = @transform_7, window_bounds = array<i64: 64, 32>}]} {
    %c0 = arith.constant 0 : index
    %c0_0 = arith.constant 0 : index
    %0 = vector.load %arg1[%c0, %c0_0] : memref<64x32xf32, #tpu.memory_space<vmem>>, vector<64x32xf32>
    %1 = arith.truncf %0 : vector<64x32xf32> to vector<64x32xbf16>
    %c0_1 = arith.constant 0 : index
    %c0_2 = arith.constant 0 : index
    %2 = vector.load %arg4[%c0_1, %c0_2] : memref<32x384xbf16, #tpu.memory_space<vmem>>, vector<32x384xbf16>
    %cst = arith.constant dense<0.000000e+00> : vector<64x384xf32>
    %3 = tpu.matmul %1, %2, %cst {dimension_numbers = #tpu.dot_dimension_numbers<[1], [0], [0], [1], [0, 0, 1, 1], [], []>} : vector<64x32xbf16>, vector<32x384xbf16>, vector<64x384xf32> -> vector<64x384xf32>
    %c0_3 = arith.constant 0 : index
    %c0_4 = arith.constant 0 : index
    %4 = vector.load %arg5[%c0_3, %c0_4] : memref<1x384xf32, #tpu.memory_space<vmem>>, vector<1x384xf32>
    %5 = vector.broadcast %4 : vector<1x384xf32> to vector<64x384xf32>
    %6 = arith.addf %3, %5 : vector<64x384xf32>
    %c0_5 = arith.constant 0 : index
    %c0_6 = arith.constant 0 : index
    %7 = vector.load %arg3[%c0_5, %c0_6] : memref<64x4xf32, #tpu.memory_space<vmem>>, vector<64x4xf32>
    %c0_7 = arith.constant 0 : index
    %c0_8 = arith.constant 0 : index
    %8 = vector.load %arg2[%c0_7, %c0_8] : memref<8x8xf32, #tpu.memory_space<vmem>>, vector<8x8xf32>
    %9 = vector.shape_cast %8 : vector<8x8xf32> to vector<1x8x8xf32>
    %10 = vector.shape_cast %9 : vector<1x8x8xf32> to vector<1x8x8xf32>
    %11 = vector.broadcast %10 : vector<1x8x8xf32> to vector<8x8x8xf32>
    %cst_9 = arith.constant 0.000000e+00 : f32
    %12 = vector.broadcast %cst_9 : f32 to vector<64x32xf32>
    %13 = vector.extract_strided_slice %6 {offsets = [0, 0], sizes = [64, 8], strides = [1, 1]} : vector<64x384xf32> to vector<64x8xf32>
    %14 = vector.shape_cast %13 : vector<64x8xf32> to vector<8x8x8xf32>
    %15 = vector.extract_strided_slice %6 {offsets = [0, 32], sizes = [64, 8], strides = [1, 1]} : vector<64x384xf32> to vector<64x8xf32>
    %16 = vector.shape_cast %15 : vector<64x8xf32> to vector<8x8x8xf32>
    %17 = vector.extract_strided_slice %6 {offsets = [0, 64], sizes = [64, 8], strides = [1, 1]} : vector<64x384xf32> to vector<64x8xf32>
    %18 = vector.shape_cast %17 : vector<64x8xf32> to vector<8x8x8xf32>
    "tpu.trace_start"() <{level = 10 : i32, message = "bqd,bkd->bqk"}> : () -> ()
    %cst_10 = arith.constant dense<0.000000e+00> : vector<8x8x8xf32>
    %19 = tpu.matmul %14, %16, %cst_10 {dimension_numbers = #tpu.dot_dimension_numbers<[2], [2], [1], [1], [0, 0, 0, 1, 1, 1], [0], [0]>} : vector<8x8x8xf32>, vector<8x8x8xf32>, vector<8x8x8xf32> -> vector<8x8x8xf32>
    "tpu.trace_stop"() : () -> ()
    %20 = arith.addf %19, %11 : vector<8x8x8xf32>
    %cst_11 = arith.constant dense<0xFF800000> : vector<8x8xf32>
    %21 = vector.multi_reduction <maximumf>, %20, %cst_11 [2] : vector<8x8x8xf32> to vector<8x8xf32>
    %22 = vector.shape_cast %21 : vector<8x8xf32> to vector<8x8x1xf32>
    %23 = vector.broadcast %22 : vector<8x8x1xf32> to vector<8x8x8xf32>
    %24 = arith.subf %20, %23 : vector<8x8x8xf32>
    %25 = math.exp %24 : vector<8x8x8xf32>
    %cst_12 = arith.constant dense<0.000000e+00> : vector<8x8xf32>
    %26 = vector.multi_reduction <add>, %25, %cst_12 [2] : vector<8x8x8xf32> to vector<8x8xf32>
    %27 = vector.shape_cast %26 : vector<8x8xf32> to vector<8x8x1xf32>
    %28 = tpu.reciprocal %27 {approx = true} : vector<8x8x1xf32> -> vector<8x8x1xf32>
    %29 = vector.broadcast %28 : vector<8x8x1xf32> to vector<8x8x8xf32>
    %30 = arith.mulf %25, %29 : vector<8x8x8xf32>
    "tpu.trace_start"() <{level = 10 : i32, message = "bqk,bkd->bqd"}> : () -> ()
    %cst_13 = arith.constant dense<0.000000e+00> : vector<8x8x8xf32>
    %31 = tpu.matmul %30, %18, %cst_13 {dimension_numbers = #tpu.dot_dimension_numbers<[2], [1], [1], [2], [0, 0, 0, 1, 1, 2], [0], [0]>} : vector<8x8x8xf32>, vector<8x8x8xf32>, vector<8x8x8xf32> -> vector<8x8x8xf32>
    "tpu.trace_stop"() : () -> ()
    %32 = vector.shape_cast %31 : vector<8x8x8xf32> to vector<64x8xf32>
    %33 = vector.extract_strided_slice %6 {offsets = [0, 8], sizes = [64, 8], strides = [1, 1]} : vector<64x384xf32> to vector<64x8xf32>
    %34 = vector.shape_cast %33 : vector<64x8xf32> to vector<8x8x8xf32>
    %35 = vector.extract_strided_slice %6 {offsets = [0, 40], sizes = [64, 8], strides = [1, 1]} : vector<64x384xf32> to vector<64x8xf32>
    %36 = vector.shape_cast %35 : vector<64x8xf32> to vector<8x8x8xf32>
    %37 = vector.extract_strided_slice %6 {offsets = [0, 72], sizes = [64, 8], strides = [1, 1]} : vector<64x384xf32> to vector<64x8xf32>
    %38 = vector.shape_cast %37 : vector<64x8xf32> to vector<8x8x8xf32>
    "tpu.trace_start"() <{level = 10 : i32, message = "bqd,bkd->bqk"}> : () -> ()
    %cst_14 = arith.constant dense<0.000000e+00> : vector<8x8x8xf32>
    %39 = tpu.matmul %34, %36, %cst_14 {dimension_numbers = #tpu.dot_dimension_numbers<[2], [2], [1], [1], [0, 0, 0, 1, 1, 1], [0], [0]>} : vector<8x8x8xf32>, vector<8x8x8xf32>, vector<8x8x8xf32> -> vector<8x8x8xf32>
    "tpu.trace_stop"() : () -> ()
    %40 = arith.addf %39, %11 : vector<8x8x8xf32>
    %cst_15 = arith.constant dense<0xFF800000> : vector<8x8xf32>
    %41 = vector.multi_reduction <maximumf>, %40, %cst_15 [2] : vector<8x8x8xf32> to vector<8x8xf32>
    %42 = vector.shape_cast %41 : vector<8x8xf32> to vector<8x8x1xf32>
    %43 = vector.broadcast %42 : vector<8x8x1xf32> to vector<8x8x8xf32>
    %44 = arith.subf %40, %43 : vector<8x8x8xf32>
    %45 = math.exp %44 : vector<8x8x8xf32>
    %cst_16 = arith.constant dense<0.000000e+00> : vector<8x8xf32>
    %46 = vector.multi_reduction <add>, %45, %cst_16 [2] : vector<8x8x8xf32> to vector<8x8xf32>
    %47 = vector.shape_cast %46 : vector<8x8xf32> to vector<8x8x1xf32>
    %48 = tpu.reciprocal %47 {approx = true} : vector<8x8x1xf32> -> vector<8x8x1xf32>
    %49 = vector.broadcast %48 : vector<8x8x1xf32> to vector<8x8x8xf32>
    %50 = arith.mulf %45, %49 : vector<8x8x8xf32>
    "tpu.trace_start"() <{level = 10 : i32, message = "bqk,bkd->bqd"}> : () -> ()
    %cst_17 = arith.constant dense<0.000000e+00> : vector<8x8x8xf32>
    %51 = tpu.matmul %50, %38, %cst_17 {dimension_numbers = #tpu.dot_dimension_numbers<[2], [1], [1], [2], [0, 0, 0, 1, 1, 2], [0], [0]>} : vector<8x8x8xf32>, vector<8x8x8xf32>, vector<8x8x8xf32> -> vector<8x8x8xf32>
    "tpu.trace_stop"() : () -> ()
    %52 = vector.shape_cast %51 : vector<8x8x8xf32> to vector<64x8xf32>
    %53 = vector.extract_strided_slice %6 {offsets = [0, 16], sizes = [64, 8], strides = [1, 1]} : vector<64x384xf32> to vector<64x8xf32>
    %54 = vector.shape_cast %53 : vector<64x8xf32> to vector<8x8x8xf32>
    %55 = vector.extract_strided_slice %6 {offsets = [0, 48], sizes = [64, 8], strides = [1, 1]} : vector<64x384xf32> to vector<64x8xf32>
    %56 = vector.shape_cast %55 : vector<64x8xf32> to vector<8x8x8xf32>
    %57 = vector.extract_strided_slice %6 {offsets = [0, 80], sizes = [64, 8], strides = [1, 1]} : vector<64x384xf32> to vector<64x8xf32>
    %58 = vector.shape_cast %57 : vector<64x8xf32> to vector<8x8x8xf32>
    "tpu.trace_start"() <{level = 10 : i32, message = "bqd,bkd->bqk"}> : () -> ()
    %cst_18 = arith.constant dense<0.000000e+00> : vector<8x8x8xf32>
    %59 = tpu.matmul %54, %56, %cst_18 {dimension_numbers = #tpu.dot_dimension_numbers<[2], [2], [1], [1], [0, 0, 0, 1, 1, 1], [0], [0]>} : vector<8x8x8xf32>, vector<8x8x8xf32>, vector<8x8x8xf32> -> vector<8x8x8xf32>
    "tpu.trace_stop"() : () -> ()
    %60 = arith.addf %59, %11 : vector<8x8x8xf32>
    %cst_19 = arith.constant dense<0xFF800000> : vector<8x8xf32>
    %61 = vector.multi_reduction <maximumf>, %60, %cst_19 [2] : vector<8x8x8xf32> to vector<8x8xf32>
    %62 = vector.shape_cast %61 : vector<8x8xf32> to vector<8x8x1xf32>
    %63 = vector.broadcast %62 : vector<8x8x1xf32> to vector<8x8x8xf32>
    %64 = arith.subf %60, %63 : vector<8x8x8xf32>
    %65 = math.exp %64 : vector<8x8x8xf32>
    %cst_20 = arith.constant dense<0.000000e+00> : vector<8x8xf32>
    %66 = vector.multi_reduction <add>, %65, %cst_20 [2] : vector<8x8x8xf32> to vector<8x8xf32>
    %67 = vector.shape_cast %66 : vector<8x8xf32> to vector<8x8x1xf32>
    %68 = tpu.reciprocal %67 {approx = true} : vector<8x8x1xf32> -> vector<8x8x1xf32>
    %69 = vector.broadcast %68 : vector<8x8x1xf32> to vector<8x8x8xf32>
    %70 = arith.mulf %65, %69 : vector<8x8x8xf32>
    "tpu.trace_start"() <{level = 10 : i32, message = "bqk,bkd->bqd"}> : () -> ()
    %cst_21 = arith.constant dense<0.000000e+00> : vector<8x8x8xf32>
    %71 = tpu.matmul %70, %58, %cst_21 {dimension_numbers = #tpu.dot_dimension_numbers<[2], [1], [1], [2], [0, 0, 0, 1, 1, 2], [0], [0]>} : vector<8x8x8xf32>, vector<8x8x8xf32>, vector<8x8x8xf32> -> vector<8x8x8xf32>
    "tpu.trace_stop"() : () -> ()
    %72 = vector.shape_cast %71 : vector<8x8x8xf32> to vector<64x8xf32>
    %73 = vector.extract_strided_slice %6 {offsets = [0, 24], sizes = [64, 8], strides = [1, 1]} : vector<64x384xf32> to vector<64x8xf32>
    %74 = vector.shape_cast %73 : vector<64x8xf32> to vector<8x8x8xf32>
    %75 = vector.extract_strided_slice %6 {offsets = [0, 56], sizes = [64, 8], strides = [1, 1]} : vector<64x384xf32> to vector<64x8xf32>
    %76 = vector.shape_cast %75 : vector<64x8xf32> to vector<8x8x8xf32>
    %77 = vector.extract_strided_slice %6 {offsets = [0, 88], sizes = [64, 8], strides = [1, 1]} : vector<64x384xf32> to vector<64x8xf32>
    %78 = vector.shape_cast %77 : vector<64x8xf32> to vector<8x8x8xf32>
    "tpu.trace_start"() <{level = 10 : i32, message = "bqd,bkd->bqk"}> : () -> ()
    %cst_22 = arith.constant dense<0.000000e+00> : vector<8x8x8xf32>
    %79 = tpu.matmul %74, %76, %cst_22 {dimension_numbers = #tpu.dot_dimension_numbers<[2], [2], [1], [1], [0, 0, 0, 1, 1, 1], [0], [0]>} : vector<8x8x8xf32>, vector<8x8x8xf32>, vector<8x8x8xf32> -> vector<8x8x8xf32>
    "tpu.trace_stop"() : () -> ()
    %80 = arith.addf %79, %11 : vector<8x8x8xf32>
    %cst_23 = arith.constant dense<0xFF800000> : vector<8x8xf32>
    %81 = vector.multi_reduction <maximumf>, %80, %cst_23 [2] : vector<8x8x8xf32> to vector<8x8xf32>
    %82 = vector.shape_cast %81 : vector<8x8xf32> to vector<8x8x1xf32>
    %83 = vector.broadcast %82 : vector<8x8x1xf32> to vector<8x8x8xf32>
    %84 = arith.subf %80, %83 : vector<8x8x8xf32>
    %85 = math.exp %84 : vector<8x8x8xf32>
    %cst_24 = arith.constant dense<0.000000e+00> : vector<8x8xf32>
    %86 = vector.multi_reduction <add>, %85, %cst_24 [2] : vector<8x8x8xf32> to vector<8x8xf32>
    %87 = vector.shape_cast %86 : vector<8x8xf32> to vector<8x8x1xf32>
    %88 = tpu.reciprocal %87 {approx = true} : vector<8x8x1xf32> -> vector<8x8x1xf32>
    %89 = vector.broadcast %88 : vector<8x8x1xf32> to vector<8x8x8xf32>
    %90 = arith.mulf %85, %89 : vector<8x8x8xf32>
    "tpu.trace_start"() <{level = 10 : i32, message = "bqk,bkd->bqd"}> : () -> ()
    %cst_25 = arith.constant dense<0.000000e+00> : vector<8x8x8xf32>
    %91 = tpu.matmul %90, %78, %cst_25 {dimension_numbers = #tpu.dot_dimension_numbers<[2], [1], [1], [2], [0, 0, 0, 1, 1, 2], [0], [0]>} : vector<8x8x8xf32>, vector<8x8x8xf32>, vector<8x8x8xf32> -> vector<8x8x8xf32>
    "tpu.trace_stop"() : () -> ()
    %92 = vector.shape_cast %91 : vector<8x8x8xf32> to vector<64x8xf32>
    %93 = tpu.concatenate %32, %52, %72, %92 in 1 : vector<64x8xf32>, vector<64x8xf32>, vector<64x8xf32>, vector<64x8xf32> -> vector<64x32xf32>
    %94 = arith.truncf %93 : vector<64x32xf32> to vector<64x32xbf16>
    %c0_26 = arith.constant 0 : index
    %c0_27 = arith.constant 0 : index
    %c0_28 = arith.constant 0 : index
    %95 = vector.load %arg6[%c0_26, %c0_27, %c0_28] : memref<4x32x32xbf16, #tpu.memory_space<vmem>>, vector<1x32x32xbf16>
    %96 = vector.shape_cast %95 : vector<1x32x32xbf16> to vector<32x32xbf16>
    %cst_29 = arith.constant dense<0.000000e+00> : vector<64x32xf32>
    %97 = tpu.matmul %94, %96, %cst_29 {dimension_numbers = #tpu.dot_dimension_numbers<[1], [0], [0], [1], [0, 0, 1, 1], [], []>} : vector<64x32xbf16>, vector<32x32xbf16>, vector<64x32xf32> -> vector<64x32xf32>
    %c0_30 = arith.constant 0 : index
    %c0_31 = arith.constant 0 : index
    %c0_32 = arith.constant 0 : index
    %98 = vector.load %arg7[%c0_30, %c0_31, %c0_32] : memref<4x1x32xf32, #tpu.memory_space<vmem>>, vector<1x1x32xf32>
    %99 = vector.shape_cast %98 : vector<1x1x32xf32> to vector<1x32xf32>
    %100 = vector.broadcast %99 : vector<1x32xf32> to vector<64x32xf32>
    %101 = arith.addf %97, %100 : vector<64x32xf32>
    %102 = vector.extract_strided_slice %7 {offsets = [0, 0], sizes = [64, 1], strides = [1, 1]} : vector<64x4xf32> to vector<64x1xf32>
    %103 = vector.broadcast %102 : vector<64x1xf32> to vector<64x32xf32>
    %104 = arith.mulf %103, %101 : vector<64x32xf32>
    %105 = arith.addf %12, %104 : vector<64x32xf32>
    %106 = vector.extract_strided_slice %6 {offsets = [0, 96], sizes = [64, 8], strides = [1, 1]} : vector<64x384xf32> to vector<64x8xf32>
    %107 = vector.shape_cast %106 : vector<64x8xf32> to vector<8x8x8xf32>
    %108 = vector.extract_strided_slice %6 {offsets = [0, 128], sizes = [64, 8], strides = [1, 1]} : vector<64x384xf32> to vector<64x8xf32>
    %109 = vector.shape_cast %108 : vector<64x8xf32> to vector<8x8x8xf32>
    %110 = vector.extract_strided_slice %6 {offsets = [0, 160], sizes = [64, 8], strides = [1, 1]} : vector<64x384xf32> to vector<64x8xf32>
    %111 = vector.shape_cast %110 : vector<64x8xf32> to vector<8x8x8xf32>
    "tpu.trace_start"() <{level = 10 : i32, message = "bqd,bkd->bqk"}> : () -> ()
    %cst_33 = arith.constant dense<0.000000e+00> : vector<8x8x8xf32>
    %112 = tpu.matmul %107, %109, %cst_33 {dimension_numbers = #tpu.dot_dimension_numbers<[2], [2], [1], [1], [0, 0, 0, 1, 1, 1], [0], [0]>} : vector<8x8x8xf32>, vector<8x8x8xf32>, vector<8x8x8xf32> -> vector<8x8x8xf32>
    "tpu.trace_stop"() : () -> ()
    %113 = arith.addf %112, %11 : vector<8x8x8xf32>
    %cst_34 = arith.constant dense<0xFF800000> : vector<8x8xf32>
    %114 = vector.multi_reduction <maximumf>, %113, %cst_34 [2] : vector<8x8x8xf32> to vector<8x8xf32>
    %115 = vector.shape_cast %114 : vector<8x8xf32> to vector<8x8x1xf32>
    %116 = vector.broadcast %115 : vector<8x8x1xf32> to vector<8x8x8xf32>
    %117 = arith.subf %113, %116 : vector<8x8x8xf32>
    %118 = math.exp %117 : vector<8x8x8xf32>
    %cst_35 = arith.constant dense<0.000000e+00> : vector<8x8xf32>
    %119 = vector.multi_reduction <add>, %118, %cst_35 [2] : vector<8x8x8xf32> to vector<8x8xf32>
    %120 = vector.shape_cast %119 : vector<8x8xf32> to vector<8x8x1xf32>
    %121 = tpu.reciprocal %120 {approx = true} : vector<8x8x1xf32> -> vector<8x8x1xf32>
    %122 = vector.broadcast %121 : vector<8x8x1xf32> to vector<8x8x8xf32>
    %123 = arith.mulf %118, %122 : vector<8x8x8xf32>
    "tpu.trace_start"() <{level = 10 : i32, message = "bqk,bkd->bqd"}> : () -> ()
    %cst_36 = arith.constant dense<0.000000e+00> : vector<8x8x8xf32>
    %124 = tpu.matmul %123, %111, %cst_36 {dimension_numbers = #tpu.dot_dimension_numbers<[2], [1], [1], [2], [0, 0, 0, 1, 1, 2], [0], [0]>} : vector<8x8x8xf32>, vector<8x8x8xf32>, vector<8x8x8xf32> -> vector<8x8x8xf32>
    "tpu.trace_stop"() : () -> ()
    %125 = vector.shape_cast %124 : vector<8x8x8xf32> to vector<64x8xf32>
    %126 = vector.extract_strided_slice %6 {offsets = [0, 104], sizes = [64, 8], strides = [1, 1]} : vector<64x384xf32> to vector<64x8xf32>
    %127 = vector.shape_cast %126 : vector<64x8xf32> to vector<8x8x8xf32>
    %128 = vector.extract_strided_slice %6 {offsets = [0, 136], sizes = [64, 8], strides = [1, 1]} : vector<64x384xf32> to vector<64x8xf32>
    %129 = vector.shape_cast %128 : vector<64x8xf32> to vector<8x8x8xf32>
    %130 = vector.extract_strided_slice %6 {offsets = [0, 168], sizes = [64, 8], strides = [1, 1]} : vector<64x384xf32> to vector<64x8xf32>
    %131 = vector.shape_cast %130 : vector<64x8xf32> to vector<8x8x8xf32>
    "tpu.trace_start"() <{level = 10 : i32, message = "bqd,bkd->bqk"}> : () -> ()
    %cst_37 = arith.constant dense<0.000000e+00> : vector<8x8x8xf32>
    %132 = tpu.matmul %127, %129, %cst_37 {dimension_numbers = #tpu.dot_dimension_numbers<[2], [2], [1], [1], [0, 0, 0, 1, 1, 1], [0], [0]>} : vector<8x8x8xf32>, vector<8x8x8xf32>, vector<8x8x8xf32> -> vector<8x8x8xf32>
    "tpu.trace_stop"() : () -> ()
    %133 = arith.addf %132, %11 : vector<8x8x8xf32>
    %cst_38 = arith.constant dense<0xFF800000> : vector<8x8xf32>
    %134 = vector.multi_reduction <maximumf>, %133, %cst_38 [2] : vector<8x8x8xf32> to vector<8x8xf32>
    %135 = vector.shape_cast %134 : vector<8x8xf32> to vector<8x8x1xf32>
    %136 = vector.broadcast %135 : vector<8x8x1xf32> to vector<8x8x8xf32>
    %137 = arith.subf %133, %136 : vector<8x8x8xf32>
    %138 = math.exp %137 : vector<8x8x8xf32>
    %cst_39 = arith.constant dense<0.000000e+00> : vector<8x8xf32>
    %139 = vector.multi_reduction <add>, %138, %cst_39 [2] : vector<8x8x8xf32> to vector<8x8xf32>
    %140 = vector.shape_cast %139 : vector<8x8xf32> to vector<8x8x1xf32>
    %141 = tpu.reciprocal %140 {approx = true} : vector<8x8x1xf32> -> vector<8x8x1xf32>
    %142 = vector.broadcast %141 : vector<8x8x1xf32> to vector<8x8x8xf32>
    %143 = arith.mulf %138, %142 : vector<8x8x8xf32>
    "tpu.trace_start"() <{level = 10 : i32, message = "bqk,bkd->bqd"}> : () -> ()
    %cst_40 = arith.constant dense<0.000000e+00> : vector<8x8x8xf32>
    %144 = tpu.matmul %143, %131, %cst_40 {dimension_numbers = #tpu.dot_dimension_numbers<[2], [1], [1], [2], [0, 0, 0, 1, 1, 2], [0], [0]>} : vector<8x8x8xf32>, vector<8x8x8xf32>, vector<8x8x8xf32> -> vector<8x8x8xf32>
    "tpu.trace_stop"() : () -> ()
    %145 = vector.shape_cast %144 : vector<8x8x8xf32> to vector<64x8xf32>
    %146 = vector.extract_strided_slice %6 {offsets = [0, 112], sizes = [64, 8], strides = [1, 1]} : vector<64x384xf32> to vector<64x8xf32>
    %147 = vector.shape_cast %146 : vector<64x8xf32> to vector<8x8x8xf32>
    %148 = vector.extract_strided_slice %6 {offsets = [0, 144], sizes = [64, 8], strides = [1, 1]} : vector<64x384xf32> to vector<64x8xf32>
    %149 = vector.shape_cast %148 : vector<64x8xf32> to vector<8x8x8xf32>
    %150 = vector.extract_strided_slice %6 {offsets = [0, 176], sizes = [64, 8], strides = [1, 1]} : vector<64x384xf32> to vector<64x8xf32>
    %151 = vector.shape_cast %150 : vector<64x8xf32> to vector<8x8x8xf32>
    "tpu.trace_start"() <{level = 10 : i32, message = "bqd,bkd->bqk"}> : () -> ()
    %cst_41 = arith.constant dense<0.000000e+00> : vector<8x8x8xf32>
    %152 = tpu.matmul %147, %149, %cst_41 {dimension_numbers = #tpu.dot_dimension_numbers<[2], [2], [1], [1], [0, 0, 0, 1, 1, 1], [0], [0]>} : vector<8x8x8xf32>, vector<8x8x8xf32>, vector<8x8x8xf32> -> vector<8x8x8xf32>
    "tpu.trace_stop"() : () -> ()
    %153 = arith.addf %152, %11 : vector<8x8x8xf32>
    %cst_42 = arith.constant dense<0xFF800000> : vector<8x8xf32>
    %154 = vector.multi_reduction <maximumf>, %153, %cst_42 [2] : vector<8x8x8xf32> to vector<8x8xf32>
    %155 = vector.shape_cast %154 : vector<8x8xf32> to vector<8x8x1xf32>
    %156 = vector.broadcast %155 : vector<8x8x1xf32> to vector<8x8x8xf32>
    %157 = arith.subf %153, %156 : vector<8x8x8xf32>
    %158 = math.exp %157 : vector<8x8x8xf32>
    %cst_43 = arith.constant dense<0.000000e+00> : vector<8x8xf32>
    %159 = vector.multi_reduction <add>, %158, %cst_43 [2] : vector<8x8x8xf32> to vector<8x8xf32>
    %160 = vector.shape_cast %159 : vector<8x8xf32> to vector<8x8x1xf32>
    %161 = tpu.reciprocal %160 {approx = true} : vector<8x8x1xf32> -> vector<8x8x1xf32>
    %162 = vector.broadcast %161 : vector<8x8x1xf32> to vector<8x8x8xf32>
    %163 = arith.mulf %158, %162 : vector<8x8x8xf32>
    "tpu.trace_start"() <{level = 10 : i32, message = "bqk,bkd->bqd"}> : () -> ()
    %cst_44 = arith.constant dense<0.000000e+00> : vector<8x8x8xf32>
    %164 = tpu.matmul %163, %151, %cst_44 {dimension_numbers = #tpu.dot_dimension_numbers<[2], [1], [1], [2], [0, 0, 0, 1, 1, 2], [0], [0]>} : vector<8x8x8xf32>, vector<8x8x8xf32>, vector<8x8x8xf32> -> vector<8x8x8xf32>
    "tpu.trace_stop"() : () -> ()
    %165 = vector.shape_cast %164 : vector<8x8x8xf32> to vector<64x8xf32>
    %166 = vector.extract_strided_slice %6 {offsets = [0, 120], sizes = [64, 8], strides = [1, 1]} : vector<64x384xf32> to vector<64x8xf32>
    %167 = vector.shape_cast %166 : vector<64x8xf32> to vector<8x8x8xf32>
    %168 = vector.extract_strided_slice %6 {offsets = [0, 152], sizes = [64, 8], strides = [1, 1]} : vector<64x384xf32> to vector<64x8xf32>
    %169 = vector.shape_cast %168 : vector<64x8xf32> to vector<8x8x8xf32>
    %170 = vector.extract_strided_slice %6 {offsets = [0, 184], sizes = [64, 8], strides = [1, 1]} : vector<64x384xf32> to vector<64x8xf32>
    %171 = vector.shape_cast %170 : vector<64x8xf32> to vector<8x8x8xf32>
    "tpu.trace_start"() <{level = 10 : i32, message = "bqd,bkd->bqk"}> : () -> ()
    %cst_45 = arith.constant dense<0.000000e+00> : vector<8x8x8xf32>
    %172 = tpu.matmul %167, %169, %cst_45 {dimension_numbers = #tpu.dot_dimension_numbers<[2], [2], [1], [1], [0, 0, 0, 1, 1, 1], [0], [0]>} : vector<8x8x8xf32>, vector<8x8x8xf32>, vector<8x8x8xf32> -> vector<8x8x8xf32>
    "tpu.trace_stop"() : () -> ()
    %173 = arith.addf %172, %11 : vector<8x8x8xf32>
    %cst_46 = arith.constant dense<0xFF800000> : vector<8x8xf32>
    %174 = vector.multi_reduction <maximumf>, %173, %cst_46 [2] : vector<8x8x8xf32> to vector<8x8xf32>
    %175 = vector.shape_cast %174 : vector<8x8xf32> to vector<8x8x1xf32>
    %176 = vector.broadcast %175 : vector<8x8x1xf32> to vector<8x8x8xf32>
    %177 = arith.subf %173, %176 : vector<8x8x8xf32>
    %178 = math.exp %177 : vector<8x8x8xf32>
    %cst_47 = arith.constant dense<0.000000e+00> : vector<8x8xf32>
    %179 = vector.multi_reduction <add>, %178, %cst_47 [2] : vector<8x8x8xf32> to vector<8x8xf32>
    %180 = vector.shape_cast %179 : vector<8x8xf32> to vector<8x8x1xf32>
    %181 = tpu.reciprocal %180 {approx = true} : vector<8x8x1xf32> -> vector<8x8x1xf32>
    %182 = vector.broadcast %181 : vector<8x8x1xf32> to vector<8x8x8xf32>
    %183 = arith.mulf %178, %182 : vector<8x8x8xf32>
    "tpu.trace_start"() <{level = 10 : i32, message = "bqk,bkd->bqd"}> : () -> ()
    %cst_48 = arith.constant dense<0.000000e+00> : vector<8x8x8xf32>
    %184 = tpu.matmul %183, %171, %cst_48 {dimension_numbers = #tpu.dot_dimension_numbers<[2], [1], [1], [2], [0, 0, 0, 1, 1, 2], [0], [0]>} : vector<8x8x8xf32>, vector<8x8x8xf32>, vector<8x8x8xf32> -> vector<8x8x8xf32>
    "tpu.trace_stop"() : () -> ()
    %185 = vector.shape_cast %184 : vector<8x8x8xf32> to vector<64x8xf32>
    %186 = tpu.concatenate %125, %145, %165, %185 in 1 : vector<64x8xf32>, vector<64x8xf32>, vector<64x8xf32>, vector<64x8xf32> -> vector<64x32xf32>
    %187 = arith.truncf %186 : vector<64x32xf32> to vector<64x32xbf16>
    %c1 = arith.constant 1 : index
    %c0_49 = arith.constant 0 : index
    %c0_50 = arith.constant 0 : index
    %188 = vector.load %arg6[%c1, %c0_49, %c0_50] : memref<4x32x32xbf16, #tpu.memory_space<vmem>>, vector<1x32x32xbf16>
    %189 = vector.shape_cast %188 : vector<1x32x32xbf16> to vector<32x32xbf16>
    %cst_51 = arith.constant dense<0.000000e+00> : vector<64x32xf32>
    %190 = tpu.matmul %187, %189, %cst_51 {dimension_numbers = #tpu.dot_dimension_numbers<[1], [0], [0], [1], [0, 0, 1, 1], [], []>} : vector<64x32xbf16>, vector<32x32xbf16>, vector<64x32xf32> -> vector<64x32xf32>
    %c1_52 = arith.constant 1 : index
    %c0_53 = arith.constant 0 : index
    %c0_54 = arith.constant 0 : index
    %191 = vector.load %arg7[%c1_52, %c0_53, %c0_54] : memref<4x1x32xf32, #tpu.memory_space<vmem>>, vector<1x1x32xf32>
    %192 = vector.shape_cast %191 : vector<1x1x32xf32> to vector<1x32xf32>
    %193 = vector.broadcast %192 : vector<1x32xf32> to vector<64x32xf32>
    %194 = arith.addf %190, %193 : vector<64x32xf32>
    %195 = vector.extract_strided_slice %7 {offsets = [0, 1], sizes = [64, 1], strides = [1, 1]} : vector<64x4xf32> to vector<64x1xf32>
    %196 = vector.broadcast %195 : vector<64x1xf32> to vector<64x32xf32>
    %197 = arith.mulf %196, %194 : vector<64x32xf32>
    %198 = arith.addf %105, %197 : vector<64x32xf32>
    %199 = vector.extract_strided_slice %6 {offsets = [0, 192], sizes = [64, 8], strides = [1, 1]} : vector<64x384xf32> to vector<64x8xf32>
    %200 = vector.shape_cast %199 : vector<64x8xf32> to vector<8x8x8xf32>
    %201 = vector.extract_strided_slice %6 {offsets = [0, 224], sizes = [64, 8], strides = [1, 1]} : vector<64x384xf32> to vector<64x8xf32>
    %202 = vector.shape_cast %201 : vector<64x8xf32> to vector<8x8x8xf32>
    %203 = vector.extract_strided_slice %6 {offsets = [0, 256], sizes = [64, 8], strides = [1, 1]} : vector<64x384xf32> to vector<64x8xf32>
    %204 = vector.shape_cast %203 : vector<64x8xf32> to vector<8x8x8xf32>
    "tpu.trace_start"() <{level = 10 : i32, message = "bqd,bkd->bqk"}> : () -> ()
    %cst_55 = arith.constant dense<0.000000e+00> : vector<8x8x8xf32>
    %205 = tpu.matmul %200, %202, %cst_55 {dimension_numbers = #tpu.dot_dimension_numbers<[2], [2], [1], [1], [0, 0, 0, 1, 1, 1], [0], [0]>} : vector<8x8x8xf32>, vector<8x8x8xf32>, vector<8x8x8xf32> -> vector<8x8x8xf32>
    "tpu.trace_stop"() : () -> ()
    %206 = arith.addf %205, %11 : vector<8x8x8xf32>
    %cst_56 = arith.constant dense<0xFF800000> : vector<8x8xf32>
    %207 = vector.multi_reduction <maximumf>, %206, %cst_56 [2] : vector<8x8x8xf32> to vector<8x8xf32>
    %208 = vector.shape_cast %207 : vector<8x8xf32> to vector<8x8x1xf32>
    %209 = vector.broadcast %208 : vector<8x8x1xf32> to vector<8x8x8xf32>
    %210 = arith.subf %206, %209 : vector<8x8x8xf32>
    %211 = math.exp %210 : vector<8x8x8xf32>
    %cst_57 = arith.constant dense<0.000000e+00> : vector<8x8xf32>
    %212 = vector.multi_reduction <add>, %211, %cst_57 [2] : vector<8x8x8xf32> to vector<8x8xf32>
    %213 = vector.shape_cast %212 : vector<8x8xf32> to vector<8x8x1xf32>
    %214 = tpu.reciprocal %213 {approx = true} : vector<8x8x1xf32> -> vector<8x8x1xf32>
    %215 = vector.broadcast %214 : vector<8x8x1xf32> to vector<8x8x8xf32>
    %216 = arith.mulf %211, %215 : vector<8x8x8xf32>
    "tpu.trace_start"() <{level = 10 : i32, message = "bqk,bkd->bqd"}> : () -> ()
    %cst_58 = arith.constant dense<0.000000e+00> : vector<8x8x8xf32>
    %217 = tpu.matmul %216, %204, %cst_58 {dimension_numbers = #tpu.dot_dimension_numbers<[2], [1], [1], [2], [0, 0, 0, 1, 1, 2], [0], [0]>} : vector<8x8x8xf32>, vector<8x8x8xf32>, vector<8x8x8xf32> -> vector<8x8x8xf32>
    "tpu.trace_stop"() : () -> ()
    %218 = vector.shape_cast %217 : vector<8x8x8xf32> to vector<64x8xf32>
    %219 = vector.extract_strided_slice %6 {offsets = [0, 200], sizes = [64, 8], strides = [1, 1]} : vector<64x384xf32> to vector<64x8xf32>
    %220 = vector.shape_cast %219 : vector<64x8xf32> to vector<8x8x8xf32>
    %221 = vector.extract_strided_slice %6 {offsets = [0, 232], sizes = [64, 8], strides = [1, 1]} : vector<64x384xf32> to vector<64x8xf32>
    %222 = vector.shape_cast %221 : vector<64x8xf32> to vector<8x8x8xf32>
    %223 = vector.extract_strided_slice %6 {offsets = [0, 264], sizes = [64, 8], strides = [1, 1]} : vector<64x384xf32> to vector<64x8xf32>
    %224 = vector.shape_cast %223 : vector<64x8xf32> to vector<8x8x8xf32>
    "tpu.trace_start"() <{level = 10 : i32, message = "bqd,bkd->bqk"}> : () -> ()
    %cst_59 = arith.constant dense<0.000000e+00> : vector<8x8x8xf32>
    %225 = tpu.matmul %220, %222, %cst_59 {dimension_numbers = #tpu.dot_dimension_numbers<[2], [2], [1], [1], [0, 0, 0, 1, 1, 1], [0], [0]>} : vector<8x8x8xf32>, vector<8x8x8xf32>, vector<8x8x8xf32> -> vector<8x8x8xf32>
    "tpu.trace_stop"() : () -> ()
    %226 = arith.addf %225, %11 : vector<8x8x8xf32>
    %cst_60 = arith.constant dense<0xFF800000> : vector<8x8xf32>
    %227 = vector.multi_reduction <maximumf>, %226, %cst_60 [2] : vector<8x8x8xf32> to vector<8x8xf32>
    %228 = vector.shape_cast %227 : vector<8x8xf32> to vector<8x8x1xf32>
    %229 = vector.broadcast %228 : vector<8x8x1xf32> to vector<8x8x8xf32>
    %230 = arith.subf %226, %229 : vector<8x8x8xf32>
    %231 = math.exp %230 : vector<8x8x8xf32>
    %cst_61 = arith.constant dense<0.000000e+00> : vector<8x8xf32>
    %232 = vector.multi_reduction <add>, %231, %cst_61 [2] : vector<8x8x8xf32> to vector<8x8xf32>
    %233 = vector.shape_cast %232 : vector<8x8xf32> to vector<8x8x1xf32>
    %234 = tpu.reciprocal %233 {approx = true} : vector<8x8x1xf32> -> vector<8x8x1xf32>
    %235 = vector.broadcast %234 : vector<8x8x1xf32> to vector<8x8x8xf32>
    %236 = arith.mulf %231, %235 : vector<8x8x8xf32>
    "tpu.trace_start"() <{level = 10 : i32, message = "bqk,bkd->bqd"}> : () -> ()
    %cst_62 = arith.constant dense<0.000000e+00> : vector<8x8x8xf32>
    %237 = tpu.matmul %236, %224, %cst_62 {dimension_numbers = #tpu.dot_dimension_numbers<[2], [1], [1], [2], [0, 0, 0, 1, 1, 2], [0], [0]>} : vector<8x8x8xf32>, vector<8x8x8xf32>, vector<8x8x8xf32> -> vector<8x8x8xf32>
    "tpu.trace_stop"() : () -> ()
    %238 = vector.shape_cast %237 : vector<8x8x8xf32> to vector<64x8xf32>
    %239 = vector.extract_strided_slice %6 {offsets = [0, 208], sizes = [64, 8], strides = [1, 1]} : vector<64x384xf32> to vector<64x8xf32>
    %240 = vector.shape_cast %239 : vector<64x8xf32> to vector<8x8x8xf32>
    %241 = vector.extract_strided_slice %6 {offsets = [0, 240], sizes = [64, 8], strides = [1, 1]} : vector<64x384xf32> to vector<64x8xf32>
    %242 = vector.shape_cast %241 : vector<64x8xf32> to vector<8x8x8xf32>
    %243 = vector.extract_strided_slice %6 {offsets = [0, 272], sizes = [64, 8], strides = [1, 1]} : vector<64x384xf32> to vector<64x8xf32>
    %244 = vector.shape_cast %243 : vector<64x8xf32> to vector<8x8x8xf32>
    "tpu.trace_start"() <{level = 10 : i32, message = "bqd,bkd->bqk"}> : () -> ()
    %cst_63 = arith.constant dense<0.000000e+00> : vector<8x8x8xf32>
    %245 = tpu.matmul %240, %242, %cst_63 {dimension_numbers = #tpu.dot_dimension_numbers<[2], [2], [1], [1], [0, 0, 0, 1, 1, 1], [0], [0]>} : vector<8x8x8xf32>, vector<8x8x8xf32>, vector<8x8x8xf32> -> vector<8x8x8xf32>
    "tpu.trace_stop"() : () -> ()
    %246 = arith.addf %245, %11 : vector<8x8x8xf32>
    %cst_64 = arith.constant dense<0xFF800000> : vector<8x8xf32>
    %247 = vector.multi_reduction <maximumf>, %246, %cst_64 [2] : vector<8x8x8xf32> to vector<8x8xf32>
    %248 = vector.shape_cast %247 : vector<8x8xf32> to vector<8x8x1xf32>
    %249 = vector.broadcast %248 : vector<8x8x1xf32> to vector<8x8x8xf32>
    %250 = arith.subf %246, %249 : vector<8x8x8xf32>
    %251 = math.exp %250 : vector<8x8x8xf32>
    %cst_65 = arith.constant dense<0.000000e+00> : vector<8x8xf32>
    %252 = vector.multi_reduction <add>, %251, %cst_65 [2] : vector<8x8x8xf32> to vector<8x8xf32>
    %253 = vector.shape_cast %252 : vector<8x8xf32> to vector<8x8x1xf32>
    %254 = tpu.reciprocal %253 {approx = true} : vector<8x8x1xf32> -> vector<8x8x1xf32>
    %255 = vector.broadcast %254 : vector<8x8x1xf32> to vector<8x8x8xf32>
    %256 = arith.mulf %251, %255 : vector<8x8x8xf32>
    "tpu.trace_start"() <{level = 10 : i32, message = "bqk,bkd->bqd"}> : () -> ()
    %cst_66 = arith.constant dense<0.000000e+00> : vector<8x8x8xf32>
    %257 = tpu.matmul %256, %244, %cst_66 {dimension_numbers = #tpu.dot_dimension_numbers<[2], [1], [1], [2], [0, 0, 0, 1, 1, 2], [0], [0]>} : vector<8x8x8xf32>, vector<8x8x8xf32>, vector<8x8x8xf32> -> vector<8x8x8xf32>
    "tpu.trace_stop"() : () -> ()
    %258 = vector.shape_cast %257 : vector<8x8x8xf32> to vector<64x8xf32>
    %259 = vector.extract_strided_slice %6 {offsets = [0, 216], sizes = [64, 8], strides = [1, 1]} : vector<64x384xf32> to vector<64x8xf32>
    %260 = vector.shape_cast %259 : vector<64x8xf32> to vector<8x8x8xf32>
    %261 = vector.extract_strided_slice %6 {offsets = [0, 248], sizes = [64, 8], strides = [1, 1]} : vector<64x384xf32> to vector<64x8xf32>
    %262 = vector.shape_cast %261 : vector<64x8xf32> to vector<8x8x8xf32>
    %263 = vector.extract_strided_slice %6 {offsets = [0, 280], sizes = [64, 8], strides = [1, 1]} : vector<64x384xf32> to vector<64x8xf32>
    %264 = vector.shape_cast %263 : vector<64x8xf32> to vector<8x8x8xf32>
    "tpu.trace_start"() <{level = 10 : i32, message = "bqd,bkd->bqk"}> : () -> ()
    %cst_67 = arith.constant dense<0.000000e+00> : vector<8x8x8xf32>
    %265 = tpu.matmul %260, %262, %cst_67 {dimension_numbers = #tpu.dot_dimension_numbers<[2], [2], [1], [1], [0, 0, 0, 1, 1, 1], [0], [0]>} : vector<8x8x8xf32>, vector<8x8x8xf32>, vector<8x8x8xf32> -> vector<8x8x8xf32>
    "tpu.trace_stop"() : () -> ()
    %266 = arith.addf %265, %11 : vector<8x8x8xf32>
    %cst_68 = arith.constant dense<0xFF800000> : vector<8x8xf32>
    %267 = vector.multi_reduction <maximumf>, %266, %cst_68 [2] : vector<8x8x8xf32> to vector<8x8xf32>
    %268 = vector.shape_cast %267 : vector<8x8xf32> to vector<8x8x1xf32>
    %269 = vector.broadcast %268 : vector<8x8x1xf32> to vector<8x8x8xf32>
    %270 = arith.subf %266, %269 : vector<8x8x8xf32>
    %271 = math.exp %270 : vector<8x8x8xf32>
    %cst_69 = arith.constant dense<0.000000e+00> : vector<8x8xf32>
    %272 = vector.multi_reduction <add>, %271, %cst_69 [2] : vector<8x8x8xf32> to vector<8x8xf32>
    %273 = vector.shape_cast %272 : vector<8x8xf32> to vector<8x8x1xf32>
    %274 = tpu.reciprocal %273 {approx = true} : vector<8x8x1xf32> -> vector<8x8x1xf32>
    %275 = vector.broadcast %274 : vector<8x8x1xf32> to vector<8x8x8xf32>
    %276 = arith.mulf %271, %275 : vector<8x8x8xf32>
    "tpu.trace_start"() <{level = 10 : i32, message = "bqk,bkd->bqd"}> : () -> ()
    %cst_70 = arith.constant dense<0.000000e+00> : vector<8x8x8xf32>
    %277 = tpu.matmul %276, %264, %cst_70 {dimension_numbers = #tpu.dot_dimension_numbers<[2], [1], [1], [2], [0, 0, 0, 1, 1, 2], [0], [0]>} : vector<8x8x8xf32>, vector<8x8x8xf32>, vector<8x8x8xf32> -> vector<8x8x8xf32>
    "tpu.trace_stop"() : () -> ()
    %278 = vector.shape_cast %277 : vector<8x8x8xf32> to vector<64x8xf32>
    %279 = tpu.concatenate %218, %238, %258, %278 in 1 : vector<64x8xf32>, vector<64x8xf32>, vector<64x8xf32>, vector<64x8xf32> -> vector<64x32xf32>
    %280 = arith.truncf %279 : vector<64x32xf32> to vector<64x32xbf16>
    %c2 = arith.constant 2 : index
    %c0_71 = arith.constant 0 : index
    %c0_72 = arith.constant 0 : index
    %281 = vector.load %arg6[%c2, %c0_71, %c0_72] : memref<4x32x32xbf16, #tpu.memory_space<vmem>>, vector<1x32x32xbf16>
    %282 = vector.shape_cast %281 : vector<1x32x32xbf16> to vector<32x32xbf16>
    %cst_73 = arith.constant dense<0.000000e+00> : vector<64x32xf32>
    %283 = tpu.matmul %280, %282, %cst_73 {dimension_numbers = #tpu.dot_dimension_numbers<[1], [0], [0], [1], [0, 0, 1, 1], [], []>} : vector<64x32xbf16>, vector<32x32xbf16>, vector<64x32xf32> -> vector<64x32xf32>
    %c2_74 = arith.constant 2 : index
    %c0_75 = arith.constant 0 : index
    %c0_76 = arith.constant 0 : index
    %284 = vector.load %arg7[%c2_74, %c0_75, %c0_76] : memref<4x1x32xf32, #tpu.memory_space<vmem>>, vector<1x1x32xf32>
    %285 = vector.shape_cast %284 : vector<1x1x32xf32> to vector<1x32xf32>
    %286 = vector.broadcast %285 : vector<1x32xf32> to vector<64x32xf32>
    %287 = arith.addf %283, %286 : vector<64x32xf32>
    %288 = vector.extract_strided_slice %7 {offsets = [0, 2], sizes = [64, 1], strides = [1, 1]} : vector<64x4xf32> to vector<64x1xf32>
    %289 = vector.broadcast %288 : vector<64x1xf32> to vector<64x32xf32>
    %290 = arith.mulf %289, %287 : vector<64x32xf32>
    %291 = arith.addf %198, %290 : vector<64x32xf32>
    %292 = vector.extract_strided_slice %6 {offsets = [0, 288], sizes = [64, 8], strides = [1, 1]} : vector<64x384xf32> to vector<64x8xf32>
    %293 = vector.shape_cast %292 : vector<64x8xf32> to vector<8x8x8xf32>
    %294 = vector.extract_strided_slice %6 {offsets = [0, 320], sizes = [64, 8], strides = [1, 1]} : vector<64x384xf32> to vector<64x8xf32>
    %295 = vector.shape_cast %294 : vector<64x8xf32> to vector<8x8x8xf32>
    %296 = vector.extract_strided_slice %6 {offsets = [0, 352], sizes = [64, 8], strides = [1, 1]} : vector<64x384xf32> to vector<64x8xf32>
    %297 = vector.shape_cast %296 : vector<64x8xf32> to vector<8x8x8xf32>
    "tpu.trace_start"() <{level = 10 : i32, message = "bqd,bkd->bqk"}> : () -> ()
    %cst_77 = arith.constant dense<0.000000e+00> : vector<8x8x8xf32>
    %298 = tpu.matmul %293, %295, %cst_77 {dimension_numbers = #tpu.dot_dimension_numbers<[2], [2], [1], [1], [0, 0, 0, 1, 1, 1], [0], [0]>} : vector<8x8x8xf32>, vector<8x8x8xf32>, vector<8x8x8xf32> -> vector<8x8x8xf32>
    "tpu.trace_stop"() : () -> ()
    %299 = arith.addf %298, %11 : vector<8x8x8xf32>
    %cst_78 = arith.constant dense<0xFF800000> : vector<8x8xf32>
    %300 = vector.multi_reduction <maximumf>, %299, %cst_78 [2] : vector<8x8x8xf32> to vector<8x8xf32>
    %301 = vector.shape_cast %300 : vector<8x8xf32> to vector<8x8x1xf32>
    %302 = vector.broadcast %301 : vector<8x8x1xf32> to vector<8x8x8xf32>
    %303 = arith.subf %299, %302 : vector<8x8x8xf32>
    %304 = math.exp %303 : vector<8x8x8xf32>
    %cst_79 = arith.constant dense<0.000000e+00> : vector<8x8xf32>
    %305 = vector.multi_reduction <add>, %304, %cst_79 [2] : vector<8x8x8xf32> to vector<8x8xf32>
    %306 = vector.shape_cast %305 : vector<8x8xf32> to vector<8x8x1xf32>
    %307 = tpu.reciprocal %306 {approx = true} : vector<8x8x1xf32> -> vector<8x8x1xf32>
    %308 = vector.broadcast %307 : vector<8x8x1xf32> to vector<8x8x8xf32>
    %309 = arith.mulf %304, %308 : vector<8x8x8xf32>
    "tpu.trace_start"() <{level = 10 : i32, message = "bqk,bkd->bqd"}> : () -> ()
    %cst_80 = arith.constant dense<0.000000e+00> : vector<8x8x8xf32>
    %310 = tpu.matmul %309, %297, %cst_80 {dimension_numbers = #tpu.dot_dimension_numbers<[2], [1], [1], [2], [0, 0, 0, 1, 1, 2], [0], [0]>} : vector<8x8x8xf32>, vector<8x8x8xf32>, vector<8x8x8xf32> -> vector<8x8x8xf32>
    "tpu.trace_stop"() : () -> ()
    %311 = vector.shape_cast %310 : vector<8x8x8xf32> to vector<64x8xf32>
    %312 = vector.extract_strided_slice %6 {offsets = [0, 296], sizes = [64, 8], strides = [1, 1]} : vector<64x384xf32> to vector<64x8xf32>
    %313 = vector.shape_cast %312 : vector<64x8xf32> to vector<8x8x8xf32>
    %314 = vector.extract_strided_slice %6 {offsets = [0, 328], sizes = [64, 8], strides = [1, 1]} : vector<64x384xf32> to vector<64x8xf32>
    %315 = vector.shape_cast %314 : vector<64x8xf32> to vector<8x8x8xf32>
    %316 = vector.extract_strided_slice %6 {offsets = [0, 360], sizes = [64, 8], strides = [1, 1]} : vector<64x384xf32> to vector<64x8xf32>
    %317 = vector.shape_cast %316 : vector<64x8xf32> to vector<8x8x8xf32>
    "tpu.trace_start"() <{level = 10 : i32, message = "bqd,bkd->bqk"}> : () -> ()
    %cst_81 = arith.constant dense<0.000000e+00> : vector<8x8x8xf32>
    %318 = tpu.matmul %313, %315, %cst_81 {dimension_numbers = #tpu.dot_dimension_numbers<[2], [2], [1], [1], [0, 0, 0, 1, 1, 1], [0], [0]>} : vector<8x8x8xf32>, vector<8x8x8xf32>, vector<8x8x8xf32> -> vector<8x8x8xf32>
    "tpu.trace_stop"() : () -> ()
    %319 = arith.addf %318, %11 : vector<8x8x8xf32>
    %cst_82 = arith.constant dense<0xFF800000> : vector<8x8xf32>
    %320 = vector.multi_reduction <maximumf>, %319, %cst_82 [2] : vector<8x8x8xf32> to vector<8x8xf32>
    %321 = vector.shape_cast %320 : vector<8x8xf32> to vector<8x8x1xf32>
    %322 = vector.broadcast %321 : vector<8x8x1xf32> to vector<8x8x8xf32>
    %323 = arith.subf %319, %322 : vector<8x8x8xf32>
    %324 = math.exp %323 : vector<8x8x8xf32>
    %cst_83 = arith.constant dense<0.000000e+00> : vector<8x8xf32>
    %325 = vector.multi_reduction <add>, %324, %cst_83 [2] : vector<8x8x8xf32> to vector<8x8xf32>
    %326 = vector.shape_cast %325 : vector<8x8xf32> to vector<8x8x1xf32>
    %327 = tpu.reciprocal %326 {approx = true} : vector<8x8x1xf32> -> vector<8x8x1xf32>
    %328 = vector.broadcast %327 : vector<8x8x1xf32> to vector<8x8x8xf32>
    %329 = arith.mulf %324, %328 : vector<8x8x8xf32>
    "tpu.trace_start"() <{level = 10 : i32, message = "bqk,bkd->bqd"}> : () -> ()
    %cst_84 = arith.constant dense<0.000000e+00> : vector<8x8x8xf32>
    %330 = tpu.matmul %329, %317, %cst_84 {dimension_numbers = #tpu.dot_dimension_numbers<[2], [1], [1], [2], [0, 0, 0, 1, 1, 2], [0], [0]>} : vector<8x8x8xf32>, vector<8x8x8xf32>, vector<8x8x8xf32> -> vector<8x8x8xf32>
    "tpu.trace_stop"() : () -> ()
    %331 = vector.shape_cast %330 : vector<8x8x8xf32> to vector<64x8xf32>
    %332 = vector.extract_strided_slice %6 {offsets = [0, 304], sizes = [64, 8], strides = [1, 1]} : vector<64x384xf32> to vector<64x8xf32>
    %333 = vector.shape_cast %332 : vector<64x8xf32> to vector<8x8x8xf32>
    %334 = vector.extract_strided_slice %6 {offsets = [0, 336], sizes = [64, 8], strides = [1, 1]} : vector<64x384xf32> to vector<64x8xf32>
    %335 = vector.shape_cast %334 : vector<64x8xf32> to vector<8x8x8xf32>
    %336 = vector.extract_strided_slice %6 {offsets = [0, 368], sizes = [64, 8], strides = [1, 1]} : vector<64x384xf32> to vector<64x8xf32>
    %337 = vector.shape_cast %336 : vector<64x8xf32> to vector<8x8x8xf32>
    "tpu.trace_start"() <{level = 10 : i32, message = "bqd,bkd->bqk"}> : () -> ()
    %cst_85 = arith.constant dense<0.000000e+00> : vector<8x8x8xf32>
    %338 = tpu.matmul %333, %335, %cst_85 {dimension_numbers = #tpu.dot_dimension_numbers<[2], [2], [1], [1], [0, 0, 0, 1, 1, 1], [0], [0]>} : vector<8x8x8xf32>, vector<8x8x8xf32>, vector<8x8x8xf32> -> vector<8x8x8xf32>
    "tpu.trace_stop"() : () -> ()
    %339 = arith.addf %338, %11 : vector<8x8x8xf32>
    %cst_86 = arith.constant dense<0xFF800000> : vector<8x8xf32>
    %340 = vector.multi_reduction <maximumf>, %339, %cst_86 [2] : vector<8x8x8xf32> to vector<8x8xf32>
    %341 = vector.shape_cast %340 : vector<8x8xf32> to vector<8x8x1xf32>
    %342 = vector.broadcast %341 : vector<8x8x1xf32> to vector<8x8x8xf32>
    %343 = arith.subf %339, %342 : vector<8x8x8xf32>
    %344 = math.exp %343 : vector<8x8x8xf32>
    %cst_87 = arith.constant dense<0.000000e+00> : vector<8x8xf32>
    %345 = vector.multi_reduction <add>, %344, %cst_87 [2] : vector<8x8x8xf32> to vector<8x8xf32>
    %346 = vector.shape_cast %345 : vector<8x8xf32> to vector<8x8x1xf32>
    %347 = tpu.reciprocal %346 {approx = true} : vector<8x8x1xf32> -> vector<8x8x1xf32>
    %348 = vector.broadcast %347 : vector<8x8x1xf32> to vector<8x8x8xf32>
    %349 = arith.mulf %344, %348 : vector<8x8x8xf32>
    "tpu.trace_start"() <{level = 10 : i32, message = "bqk,bkd->bqd"}> : () -> ()
    %cst_88 = arith.constant dense<0.000000e+00> : vector<8x8x8xf32>
    %350 = tpu.matmul %349, %337, %cst_88 {dimension_numbers = #tpu.dot_dimension_numbers<[2], [1], [1], [2], [0, 0, 0, 1, 1, 2], [0], [0]>} : vector<8x8x8xf32>, vector<8x8x8xf32>, vector<8x8x8xf32> -> vector<8x8x8xf32>
    "tpu.trace_stop"() : () -> ()
    %351 = vector.shape_cast %350 : vector<8x8x8xf32> to vector<64x8xf32>
    %352 = vector.extract_strided_slice %6 {offsets = [0, 312], sizes = [64, 8], strides = [1, 1]} : vector<64x384xf32> to vector<64x8xf32>
    %353 = vector.shape_cast %352 : vector<64x8xf32> to vector<8x8x8xf32>
    %354 = vector.extract_strided_slice %6 {offsets = [0, 344], sizes = [64, 8], strides = [1, 1]} : vector<64x384xf32> to vector<64x8xf32>
    %355 = vector.shape_cast %354 : vector<64x8xf32> to vector<8x8x8xf32>
    %356 = vector.extract_strided_slice %6 {offsets = [0, 376], sizes = [64, 8], strides = [1, 1]} : vector<64x384xf32> to vector<64x8xf32>
    %357 = vector.shape_cast %356 : vector<64x8xf32> to vector<8x8x8xf32>
    "tpu.trace_start"() <{level = 10 : i32, message = "bqd,bkd->bqk"}> : () -> ()
    %cst_89 = arith.constant dense<0.000000e+00> : vector<8x8x8xf32>
    %358 = tpu.matmul %353, %355, %cst_89 {dimension_numbers = #tpu.dot_dimension_numbers<[2], [2], [1], [1], [0, 0, 0, 1, 1, 1], [0], [0]>} : vector<8x8x8xf32>, vector<8x8x8xf32>, vector<8x8x8xf32> -> vector<8x8x8xf32>
    "tpu.trace_stop"() : () -> ()
    %359 = arith.addf %358, %11 : vector<8x8x8xf32>
    %cst_90 = arith.constant dense<0xFF800000> : vector<8x8xf32>
    %360 = vector.multi_reduction <maximumf>, %359, %cst_90 [2] : vector<8x8x8xf32> to vector<8x8xf32>
    %361 = vector.shape_cast %360 : vector<8x8xf32> to vector<8x8x1xf32>
    %362 = vector.broadcast %361 : vector<8x8x1xf32> to vector<8x8x8xf32>
    %363 = arith.subf %359, %362 : vector<8x8x8xf32>
    %364 = math.exp %363 : vector<8x8x8xf32>
    %cst_91 = arith.constant dense<0.000000e+00> : vector<8x8xf32>
    %365 = vector.multi_reduction <add>, %364, %cst_91 [2] : vector<8x8x8xf32> to vector<8x8xf32>
    %366 = vector.shape_cast %365 : vector<8x8xf32> to vector<8x8x1xf32>
    %367 = tpu.reciprocal %366 {approx = true} : vector<8x8x1xf32> -> vector<8x8x1xf32>
    %368 = vector.broadcast %367 : vector<8x8x1xf32> to vector<8x8x8xf32>
    %369 = arith.mulf %364, %368 : vector<8x8x8xf32>
    "tpu.trace_start"() <{level = 10 : i32, message = "bqk,bkd->bqd"}> : () -> ()
    %cst_92 = arith.constant dense<0.000000e+00> : vector<8x8x8xf32>
    %370 = tpu.matmul %369, %357, %cst_92 {dimension_numbers = #tpu.dot_dimension_numbers<[2], [1], [1], [2], [0, 0, 0, 1, 1, 2], [0], [0]>} : vector<8x8x8xf32>, vector<8x8x8xf32>, vector<8x8x8xf32> -> vector<8x8x8xf32>
    "tpu.trace_stop"() : () -> ()
    %371 = vector.shape_cast %370 : vector<8x8x8xf32> to vector<64x8xf32>
    %372 = tpu.concatenate %311, %331, %351, %371 in 1 : vector<64x8xf32>, vector<64x8xf32>, vector<64x8xf32>, vector<64x8xf32> -> vector<64x32xf32>
    %373 = arith.truncf %372 : vector<64x32xf32> to vector<64x32xbf16>
    %c3 = arith.constant 3 : index
    %c0_93 = arith.constant 0 : index
    %c0_94 = arith.constant 0 : index
    %374 = vector.load %arg6[%c3, %c0_93, %c0_94] : memref<4x32x32xbf16, #tpu.memory_space<vmem>>, vector<1x32x32xbf16>
    %375 = vector.shape_cast %374 : vector<1x32x32xbf16> to vector<32x32xbf16>
    %cst_95 = arith.constant dense<0.000000e+00> : vector<64x32xf32>
    %376 = tpu.matmul %373, %375, %cst_95 {dimension_numbers = #tpu.dot_dimension_numbers<[1], [0], [0], [1], [0, 0, 1, 1], [], []>} : vector<64x32xbf16>, vector<32x32xbf16>, vector<64x32xf32> -> vector<64x32xf32>
    %c3_96 = arith.constant 3 : index
    %c0_97 = arith.constant 0 : index
    %c0_98 = arith.constant 0 : index
    %377 = vector.load %arg7[%c3_96, %c0_97, %c0_98] : memref<4x1x32xf32, #tpu.memory_space<vmem>>, vector<1x1x32xf32>
    %378 = vector.shape_cast %377 : vector<1x1x32xf32> to vector<1x32xf32>
    %379 = vector.broadcast %378 : vector<1x32xf32> to vector<64x32xf32>
    %380 = arith.addf %376, %379 : vector<64x32xf32>
    %381 = vector.extract_strided_slice %7 {offsets = [0, 3], sizes = [64, 1], strides = [1, 1]} : vector<64x4xf32> to vector<64x1xf32>
    %382 = vector.broadcast %381 : vector<64x1xf32> to vector<64x32xf32>
    %383 = arith.mulf %382, %380 : vector<64x32xf32>
    %384 = arith.addf %291, %383 : vector<64x32xf32>
    %cst_99 = arith.constant 0.000000e+00 : f32
    %385 = vector.broadcast %cst_99 : f32 to vector<64x32xf32>
    %386 = arith.cmpf oeq, %384, %385 : vector<64x32xf32>
    %cst_100 = arith.constant 2.22044605E-16 : f32
    %387 = vector.broadcast %cst_100 : f32 to vector<64x32xf32>
    %388 = arith.select %386, %387, %384 : vector<64x32xi1>, vector<64x32xf32>
    %c0_101 = arith.constant 0 : index
    %c0_102 = arith.constant 0 : index
    %389 = vector.load %arg8[%c0_101, %c0_102] : memref<64x32xf32, #tpu.memory_space<vmem>>, vector<64x32xf32>
    tpu.vector_store %arg8[%c0_101, %c0_102], %388 {strides = array<i32>} : memref<64x32xf32, #tpu.memory_space<vmem>>, vector<64x32xf32>,
    return
  }
  func.func @transform_0(%arg0: i32) -> (i32, i32) {
    %c0_i32 = arith.constant 0 : i32
    %c0_i32_0 = arith.constant 0 : i32
    return %arg0, %c0_i32 : i32, i32
  }
  func.func @transform_1(%arg0: i32) -> (i32, i32) {
    %c0_i32 = arith.constant 0 : i32
    %c0_i32_0 = arith.constant 0 : i32
    %c0_i32_1 = arith.constant 0 : i32
    return %c0_i32, %c0_i32_0 : i32, i32
  }
  func.func @transform_2(%arg0: i32) -> (i32, i32) {
    %c0_i32 = arith.constant 0 : i32
    %c0_i32_0 = arith.constant 0 : i32
    return %arg0, %c0_i32 : i32, i32
  }
  func.func @transform_3(%arg0: i32) -> (i32, i32) {
    %c0_i32 = arith.constant 0 : i32
    %c0_i32_0 = arith.constant 0 : i32
    %c0_i32_1 = arith.constant 0 : i32
    return %c0_i32, %c0_i32_0 : i32, i32
  }
  func.func @transform_4(%arg0: i32) -> (i32, i32) {
    %c0_i32 = arith.constant 0 : i32
    %c0_i32_0 = arith.constant 0 : i32
    %c0_i32_1 = arith.constant 0 : i32
    return %c0_i32, %c0_i32_0 : i32, i32
  }
  func.func @transform_5(%arg0: i32) -> (i32, i32, i32) {
    %c0_i32 = arith.constant 0 : i32
    %c0_i32_0 = arith.constant 0 : i32
    %c0_i32_1 = arith.constant 0 : i32
    %c0_i32_2 = arith.constant 0 : i32
    return %c0_i32, %c0_i32_0, %c0_i32_1 : i32, i32, i32
  }
  func.func @transform_6(%arg0: i32) -> (i32, i32, i32) {
    %c0_i32 = arith.constant 0 : i32
    %c0_i32_0 = arith.constant 0 : i32
    %c0_i32_1 = arith.constant 0 : i32
    %c0_i32_2 = arith.constant 0 : i32
    return %c0_i32, %c0_i32_0, %c0_i32_1 : i32, i32, i32
  }
  func.func @transform_7(%arg0: i32) -> (i32, i32) {
    %c0_i32 = arith.constant 0 : i32
    %c0_i32_0 = arith.constant 0 : i32
    return %arg0, %c0_i32 : i32, i32
  }
}

</mosaic_0001>

<llo_original>
// kernel: tpu_custom_call.1
$region0: #{tpu_custom_call.1}
  #allocation0 [shape = 'u32[]', space=smem, size = 0x4, offset = 0x4, fixed_abs, tag = 'smem constant byte address 0x4 - core index']
  #allocation1 [shape = 'u32[72,128]{1,0:T(1,128)}', space=vmem, size = 0x9000, scoped, tag = 'internal scratch']
  %s0 = inlined_call_operand.vmem [shape: f32[64,32], index: 0, kind: input, shape index: {}]
  %s1 = inlined_call_operand.vmem [shape: f32[8,8], index: 1, kind: input, shape index: {}]
  %s2 = inlined_call_operand.vmem [shape: f32[64,4], index: 2, kind: input, shape index: {}]
  %s3 = inlined_call_operand.vmem [shape: bf16[32,384], index: 3, kind: input, shape index: {}]
  %s4 = inlined_call_operand.vmem [shape: f32[1,384], index: 4, kind: input, shape index: {}]
  %s5 = inlined_call_operand.vmem [shape: bf16[4,32,32], index: 5, kind: input, shape index: {}]
  %s6 = inlined_call_operand.vmem [shape: f32[4,1,32], index: 6, kind: input, shape index: {}]
  %s7 = inlined_call_operand.vmem [shape: f32[64,32], index: 7, kind: output, shape index: {}]
  %s8 = sld [smem:[#allocation0]]
  $region38: #{tpu_custom_call.1} parent=0
    _
  %s10 = ssub.s32 1, %s8
  %s11 = scalar_select 0, %s10, %s8
  // Predicated region
  $region2: #{tpu_custom_call.1} parent=0 // pred_check
    _
  $region3: #{tpu_custom_call.1} parent=0 // pred_check_branch
    %13 = sbr.rel (0) target = $region5
  $region4: #{tpu_custom_call.1} parent=0 // pred_region
    _
  $region5: #{tpu_custom_call.1} parent=0 // pred_fallthru
    _
  // Predicated region
  $region6: #{tpu_custom_call.1} parent=0 // pred_check
    _
  $region7: #{tpu_custom_call.1} parent=0 // pred_check_branch
    %15 = sbr.rel (0) target = $region9
  $region8: #{tpu_custom_call.1} parent=0 // pred_region
    _
  $region9: #{tpu_custom_call.1} parent=0 // pred_fallthru
    _
  // Predicated region
  $region10: #{tpu_custom_call.1} parent=0 // pred_check
    _
  $region11: #{tpu_custom_call.1} parent=0 // pred_check_branch
    %17 = sbr.rel (0) target = $region13
  $region12: #{tpu_custom_call.1} parent=0 // pred_region
    _
  $region13: #{tpu_custom_call.1} parent=0 // pred_fallthru
    _
  // Predicated region
  $region14: #{tpu_custom_call.1} parent=0 // pred_check
    _
  $region15: #{tpu_custom_call.1} parent=0 // pred_check_branch
    %19 = sbr.rel (0) target = $region17
  $region16: #{tpu_custom_call.1} parent=0 // pred_region
    _
  $region17: #{tpu_custom_call.1} parent=0 // pred_fallthru
    _
  // Predicated region
  $region18: #{tpu_custom_call.1} parent=0 // pred_check
    _
  $region19: #{tpu_custom_call.1} parent=0 // pred_check_branch
    %21 = sbr.rel (0) target = $region21
  $region20: #{tpu_custom_call.1} parent=0 // pred_region
    _
  $region21: #{tpu_custom_call.1} parent=0 // pred_fallthru
    _
  // Predicated region
  $region22: #{tpu_custom_call.1} parent=0 // pred_check
    _
  $region23: #{tpu_custom_call.1} parent=0 // pred_check_branch
    %23 = sbr.rel (0) target = $region25
  $region24: #{tpu_custom_call.1} parent=0 // pred_region
    _
  $region25: #{tpu_custom_call.1} parent=0 // pred_fallthru
    _
  // Predicated region
  $region26: #{tpu_custom_call.1} parent=0 // pred_check
    _
  $region27: #{tpu_custom_call.1} parent=0 // pred_check_branch
    %25 = sbr.rel (0) target = $region29
  $region28: #{tpu_custom_call.1} parent=0 // pred_region
    _
  $region29: #{tpu_custom_call.1} parent=0 // pred_fallthru
    _
  %v27 = vld [vmem:[%s0] sm:$0xff]
  %v28 = vld [vmem:[%s0 + $0x8] sm:$0xff]
  %v29 = vld [vmem:[%s0 + $0x10] sm:$0xff]
  %v30 = vld [vmem:[%s0 + $0x18] sm:$0xff]
  %v31 = vld [vmem:[%s0 + $0x20] sm:$0xff]
  %v32 = vld [vmem:[%s0 + $0x28] sm:$0xff]
  %v33 = vld [vmem:[%s0 + $0x30] sm:$0xff]
  %v34 = vld [vmem:[%s0 + $0x38] sm:$0xff]
  %v35 = vpack.c.bf16 %v28, %v27
  %v36 = vpack.c.bf16 %v30, %v29
  %v37 = vpack.c.bf16 %v32, %v31
  %v38 = vpack.c.bf16 %v34, %v33
  %v39 = vld [vmem:[%s3] sm:$0xff]
  %v40 = vld [vmem:[%s3 + $0x8] sm:$0xf]
  %v41 = vld [vmem:[%s3 + $0xc] sm:$0xff]
  %v42 = vld [vmem:[%s3 + $0x14] sm:$0xf]
  %v43 = vld [vmem:[%s3 + $0x18] sm:$0xff]
  %v44 = vld [vmem:[%s3 + $0x20] sm:$0xf]
  %v45 = vld [vmem:[%s3 + $0x24] sm:$0xff]
  %v46 = vld [vmem:[%s3 + $0x2c] sm:$0xf]
  %v47 = vld [vmem:[%s4] sm:$0x7]
  %v49 = vperm.slane %v47, 0
  %v50 = vperm.slane %v47, 1
  %v51 = vperm.slane %v47, 2
  %v63 = vunpack.c.l.b16 %v39
  %v64 = vunpack.c.h.b16 %v39
  %v65 = vunpack.c.l.b16 %v40
  %v66 = vunpack.c.l.b16 %v41
  %v67 = vunpack.c.h.b16 %v41
  %v68 = vunpack.c.l.b16 %v42
  %v69 = vunpack.c.l.b16 %v43
  %v70 = vunpack.c.h.b16 %v43
  %v71 = vunpack.c.l.b16 %v44
  %v72 = vunpack.c.l.b16 %v45
  %v73 = vunpack.c.h.b16 %v45
  %v74 = vunpack.c.l.b16 %v46
  %v75 = vpack.c.b16 %v66, %v63
  %v76 = vpack.c.b16 %v67, %v64
  %v77 = vpack.c.b16 %v68, %v65
  %v78 = vpack.c.b16 %v72, %v69
  %v79 = vpack.c.b16 %v73, %v70
  %v80 = vpack.c.b16 %v74, %v71
  %vm87 = vcmask 261120
  %v89 = vsel %vm87, %v35, 0
  %v92 = vsel %vm87, %v36, 0
  %v95 = vsel %vm87, %v37, 0
  %v98 = vsel %vm87, %v38, 0
  %100 = vmatpush.bf16.msra.mxu0 0
  %101 = vmatpush.bf16.msra.mxu0 0
  %102 = vmatpush.bf16.msra.mxu0 0
  %103 = vmatpush.bf16.msra.mxu0 0
  %104 = vmatpush.bf16.msra.mxu0 0
  %105 = vmatpush.bf16.msra.mxu0 0
  %106 = vmatpush.bf16.msra.mxu0 %v78
  %107 = vmatpush.bf16.msra.mxu0 %v75
  %108 = vmatmul.bf16.gmra.mxu0 %v89
  %v109 = vpop.f32.mrf.mxu0
  %v110 = vadd.f32 %v49, %v109
  %v111 = vpop.f32.mrf.mxu0
  %v112 = vadd.f32 %v49, %v111
  %113 = vmatmul.bf16.gmra.mxu0 %v92
  %v114 = vpop.f32.mrf.mxu0
  %v115 = vadd.f32 %v49, %v114
  %v116 = vpop.f32.mrf.mxu0
  %v117 = vadd.f32 %v49, %v116
  %118 = vmatmul.bf16.gmra.mxu0 %v95
  %v119 = vpop.f32.mrf.mxu0
  %v120 = vadd.f32 %v49, %v119
  %v121 = vpop.f32.mrf.mxu0
  %v122 = vadd.f32 %v49, %v121
  %123 = vmatmul.bf16.gmra.mxu0 %v98
  %v124 = vpop.f32.mrf.mxu0
  %v125 = vadd.f32 %v49, %v124
  %v126 = vpop.f32.mrf.mxu0
  %v127 = vadd.f32 %v49, %v126
  %128 = vdwg.mxu0
  %129 = vmatpush.bf16.msra.mxu0 0
  %130 = vmatpush.bf16.msra.mxu0 0
  %131 = vmatpush.bf16.msra.mxu0 0
  %132 = vmatpush.bf16.msra.mxu0 0
  %133 = vmatpush.bf16.msra.mxu0 0
  %134 = vmatpush.bf16.msra.mxu0 0
  %135 = vmatpush.bf16.msra.mxu0 %v79
  %136 = vmatpush.bf16.msra.mxu0 %v76
  %137 = vmatmul.bf16.gmra.mxu0 %v89
  %v138 = vpop.f32.mrf.mxu0
  %v139 = vadd.f32 %v50, %v138
  %v140 = vpop.f32.mrf.mxu0
  %v141 = vadd.f32 %v50, %v140
  %142 = vmatmul.bf16.gmra.mxu0 %v92
  %v143 = vpop.f32.mrf.mxu0
  %v144 = vadd.f32 %v50, %v143
  %v145 = vpop.f32.mrf.mxu0
  %v146 = vadd.f32 %v50, %v145
  %147 = vmatmul.bf16.gmra.mxu0 %v95
  %v148 = vpop.f32.mrf.mxu0
  %v149 = vadd.f32 %v50, %v148
  %v150 = vpop.f32.mrf.mxu0
  %v151 = vadd.f32 %v50, %v150
  %152 = vmatmul.bf16.gmra.mxu0 %v98
  %v153 = vpop.f32.mrf.mxu0
  %v154 = vadd.f32 %v50, %v153
  %v155 = vpop.f32.mrf.mxu0
  %v156 = vadd.f32 %v50, %v155
  %157 = vdwg.mxu0
  %158 = vmatpush.bf16.msra.mxu0 0
  %159 = vmatpush.bf16.msra.mxu0 0
  %160 = vmatpush.bf16.msra.mxu0 0
  %161 = vmatpush.bf16.msra.mxu0 0
  %162 = vmatpush.bf16.msra.mxu0 0
  %163 = vmatpush.bf16.msra.mxu0 0
  %164 = vmatpush.bf16.msra.mxu0 %v80
  %165 = vmatpush.bf16.msra.mxu0 %v77
  %166 = vmatmul.bf16.gmra.mxu0 %v89
  %v167 = vpop.f32.mrf.mxu0
  %v168 = vadd.f32 %v51, %v167
  %v169 = vpop.f32.mrf.mxu0
  %v170 = vadd.f32 %v51, %v169
  %171 = vmatmul.bf16.gmra.mxu0 %v92
  %v172 = vpop.f32.mrf.mxu0
  %v173 = vadd.f32 %v51, %v172
  %v174 = vpop.f32.mrf.mxu0
  %v175 = vadd.f32 %v51, %v174
  %176 = vmatmul.bf16.gmra.mxu0 %v95
  %v177 = vpop.f32.mrf.mxu0
  %v178 = vadd.f32 %v51, %v177
  %v179 = vpop.f32.mrf.mxu0
  %v180 = vadd.f32 %v51, %v179
  %181 = vmatmul.bf16.gmra.mxu0 %v98
  %v182 = vpop.f32.mrf.mxu0
  %v183 = vadd.f32 %v51, %v182
  %v184 = vpop.f32.mrf.mxu0
  %v185 = vadd.f32 %v51, %v184
  %186 = vdwg.mxu0
  %v187 = vld [vmem:[%s2] sm:$0xff]
  %v188 = vld [vmem:[%s2 + $0x8] sm:$0xff]
  %v189 = vld [vmem:[%s2 + $0x10] sm:$0xff]
  %v190 = vld [vmem:[%s2 + $0x18] sm:$0xff]
  %v191 = vld [vmem:[%s2 + $0x20] sm:$0xff]
  %v192 = vld [vmem:[%s2 + $0x28] sm:$0xff]
  %v193 = vld [vmem:[%s2 + $0x30] sm:$0xff]
  %v194 = vld [vmem:[%s2 + $0x38] sm:$0xff]
  %v195 = vld [vmem:[%s1] sm:$0xff]
  %197 = vrot.lane.b32.xlu0 %v110, 96
  %v198 = vpop.permute.xlu0 %197
  %vm199 = vcmask 64512
  %v200 = vsel %vm199, %v110, 0
  %v202 = vsel %vm199, %v198, 0
  %204 = vmatpush.xpose.msra.mxu0 0.0
  %205 = vmatpush.xpose.msra.mxu0 0.0
  %206 = vmatpush.xpose.msra.mxu0 0.0
  %207 = vmatpush.xpose.msra.mxu0 0.0
  %208 = vmatpush.xpose.msra.mxu0 0.0
  %209 = vmatpush.xpose.msra.mxu0 0.0
  %210 = vmatpush.xpose.msra.mxu0 0.0
  %211 = vmatpush.xpose.msra.mxu0 0.0
  %212 = vmatpush.xpose.msra.mxu0 0.0
  %213 = vmatpush.xpose.msra.mxu0 0.0
  %214 = vmatpush.xpose.msra.mxu0 0.0
  %215 = vmatpush.xpose.msra.mxu0 0.0
  %216 = vmatpush.xpose.msra.mxu0 0.0
  %217 = vmatpush.xpose.msra.mxu0 0.0
  %218 = vmatpush.xpose.msra.mxu0 0.0
  %219 = vmatpush.xpose.msra.mxu0 %v202
  %220 = vmatmul.f32.gmra.mxu0 %v200
  %v221 = vpop.f32.mrf.mxu0
  %v222 = vadd.f32 %v195, %v221
  %223 = vdwg.mxu0
  %225 = vrot.lane.b32.xlu0 %v112, 96
  %v226 = vpop.permute.xlu0 %225
  %v227 = vsel %vm199, %v112, 0
  %v229 = vsel %vm199, %v226, 0
  %231 = vmatpush.xpose.msra.mxu0 0.0
  %232 = vmatpush.xpose.msra.mxu0 0.0
  %233 = vmatpush.xpose.msra.mxu0 0.0
  %234 = vmatpush.xpose.msra.mxu0 0.0
  %235 = vmatpush.xpose.msra.mxu0 0.0
  %236 = vmatpush.xpose.msra.mxu0 0.0
  %237 = vmatpush.xpose.msra.mxu0 0.0
  %238 = vmatpush.xpose.msra.mxu0 0.0
  %239 = vmatpush.xpose.msra.mxu0 0.0
  %240 = vmatpush.xpose.msra.mxu0 0.0
  %241 = vmatpush.xpose.msra.mxu0 0.0
  %242 = vmatpush.xpose.msra.mxu0 0.0
  %243 = vmatpush.xpose.msra.mxu0 0.0
  %244 = vmatpush.xpose.msra.mxu0 0.0
  %245 = vmatpush.xpose.msra.mxu0 0.0
  %246 = vmatpush.xpose.msra.mxu0 %v229
  %247 = vmatmul.f32.gmra.mxu0 %v227
  %v248 = vpop.f32.mrf.mxu0
  %v249 = vadd.f32 %v195, %v248
  %250 = vdwg.mxu0
  %252 = vrot.lane.b32.xlu0 %v115, 96
  %v253 = vpop.permute.xlu0 %252
  %v254 = vsel %vm199, %v115, 0
  %v256 = vsel %vm199, %v253, 0
  %258 = vmatpush.xpose.msra.mxu0 0.0
  %259 = vmatpush.xpose.msra.mxu0 0.0
  %260 = vmatpush.xpose.msra.mxu0 0.0
  %261 = vmatpush.xpose.msra.mxu0 0.0
  %262 = vmatpush.xpose.msra.mxu0 0.0
  %263 = vmatpush.xpose.msra.mxu0 0.0
  %264 = vmatpush.xpose.msra.mxu0 0.0
  %265 = vmatpush.xpose.msra.mxu0 0.0
  %266 = vmatpush.xpose.msra.mxu0 0.0
  %267 = vmatpush.xpose.msra.mxu0 0.0
  %268 = vmatpush.xpose.msra.mxu0 0.0
  %269 = vmatpush.xpose.msra.mxu0 0.0
  %270 = vmatpush.xpose.msra.mxu0 0.0
  %271 = vmatpush.xpose.msra.mxu0 0.0
  %272 = vmatpush.xpose.msra.mxu0 0.0
  %273 = vmatpush.xpose.msra.mxu0 %v256
  %274 = vmatmul.f32.gmra.mxu0 %v254
  %v275 = vpop.f32.mrf.mxu0
  %v276 = vadd.f32 %v195, %v275
  %277 = vdwg.mxu0
  %279 = vrot.lane.b32.xlu0 %v117, 96
  %v280 = vpop.permute.xlu0 %279
  %v281 = vsel %vm199, %v117, 0
  %v283 = vsel %vm199, %v280, 0
  %285 = vmatpush.xpose.msra.mxu0 0.0
  %286 = vmatpush.xpose.msra.mxu0 0.0
  %287 = vmatpush.xpose.msra.mxu0 0.0
  %288 = vmatpush.xpose.msra.mxu0 0.0
  %289 = vmatpush.xpose.msra.mxu0 0.0
  %290 = vmatpush.xpose.msra.mxu0 0.0
  %291 = vmatpush.xpose.msra.mxu0 0.0
  %292 = vmatpush.xpose.msra.mxu0 0.0
  %293 = vmatpush.xpose.msra.mxu0 0.0
  %294 = vmatpush.xpose.msra.mxu0 0.0
  %295 = vmatpush.xpose.msra.mxu0 0.0
  %296 = vmatpush.xpose.msra.mxu0 0.0
  %297 = vmatpush.xpose.msra.mxu0 0.0
  %298 = vmatpush.xpose.msra.mxu0 0.0
  %299 = vmatpush.xpose.msra.mxu0 0.0
  %300 = vmatpush.xpose.msra.mxu0 %v283
  %301 = vmatmul.f32.gmra.mxu0 %v281
  %v302 = vpop.f32.mrf.mxu0
  %v303 = vadd.f32 %v195, %v302
  %304 = vdwg.mxu0
  %306 = vrot.lane.b32.xlu0 %v120, 96
  %v307 = vpop.permute.xlu0 %306
  %v308 = vsel %vm199, %v120, 0
  %v310 = vsel %vm199, %v307, 0
  %312 = vmatpush.xpose.msra.mxu0 0.0
  %313 = vmatpush.xpose.msra.mxu0 0.0
  %314 = vmatpush.xpose.msra.mxu0 0.0
  %315 = vmatpush.xpose.msra.mxu0 0.0
  %316 = vmatpush.xpose.msra.mxu0 0.0
  %317 = vmatpush.xpose.msra.mxu0 0.0
  %318 = vmatpush.xpose.msra.mxu0 0.0
  %319 = vmatpush.xpose.msra.mxu0 0.0
  %320 = vmatpush.xpose.msra.mxu0 0.0
  %321 = vmatpush.xpose.msra.mxu0 0.0
  %322 = vmatpush.xpose.msra.mxu0 0.0
  %323 = vmatpush.xpose.msra.mxu0 0.0
  %324 = vmatpush.xpose.msra.mxu0 0.0
  %325 = vmatpush.xpose.msra.mxu0 0.0
  %326 = vmatpush.xpose.msra.mxu0 0.0
  %327 = vmatpush.xpose.msra.mxu0 %v310
  %328 = vmatmul.f32.gmra.mxu0 %v308
  %v329 = vpop.f32.mrf.mxu0
  %v330 = vadd.f32 %v195, %v329
  %331 = vdwg.mxu0
  %333 = vrot.lane.b32.xlu0 %v122, 96
  %v334 = vpop.permute.xlu0 %333
  %v335 = vsel %vm199, %v122, 0
  %v337 = vsel %vm199, %v334, 0
  %339 = vmatpush.xpose.msra.mxu0 0.0
  %340 = vmatpush.xpose.msra.mxu0 0.0
  %341 = vmatpush.xpose.msra.mxu0 0.0
  %342 = vmatpush.xpose.msra.mxu0 0.0
  %343 = vmatpush.xpose.msra.mxu0 0.0
  %344 = vmatpush.xpose.msra.mxu0 0.0
  %345 = vmatpush.xpose.msra.mxu0 0.0
  %346 = vmatpush.xpose.msra.mxu0 0.0
  %347 = vmatpush.xpose.msra.mxu0 0.0
  %348 = vmatpush.xpose.msra.mxu0 0.0
  %349 = vmatpush.xpose.msra.mxu0 0.0
  %350 = vmatpush.xpose.msra.mxu0 0.0
  %351 = vmatpush.xpose.msra.mxu0 0.0
  %352 = vmatpush.xpose.msra.mxu0 0.0
  %353 = vmatpush.xpose.msra.mxu0 0.0
  %354 = vmatpush.xpose.msra.mxu0 %v337
  %355 = vmatmul.f32.gmra.mxu0 %v335
  %v356 = vpop.f32.mrf.mxu0
  %v357 = vadd.f32 %v195, %v356
  %358 = vdwg.mxu0
  %360 = vrot.lane.b32.xlu0 %v125, 96
  %v361 = vpop.permute.xlu0 %360
  %v362 = vsel %vm199, %v125, 0
  %v364 = vsel %vm199, %v361, 0
  %366 = vmatpush.xpose.msra.mxu0 0.0
  %367 = vmatpush.xpose.msra.mxu0 0.0
  %368 = vmatpush.xpose.msra.mxu0 0.0
  %369 = vmatpush.xpose.msra.mxu0 0.0
  %370 = vmatpush.xpose.msra.mxu0 0.0
  %371 = vmatpush.xpose.msra.mxu0 0.0
  %372 = vmatpush.xpose.msra.mxu0 0.0
  %373 = vmatpush.xpose.msra.mxu0 0.0
  %374 = vmatpush.xpose.msra.mxu0 0.0
  %375 = vmatpush.xpose.msra.mxu0 0.0
  %376 = vmatpush.xpose.msra.mxu0 0.0
  %377 = vmatpush.xpose.msra.mxu0 0.0
  %378 = vmatpush.xpose.msra.mxu0 0.0
  %379 = vmatpush.xpose.msra.mxu0 0.0
  %380 = vmatpush.xpose.msra.mxu0 0.0
  %381 = vmatpush.xpose.msra.mxu0 %v364
  %382 = vmatmul.f32.gmra.mxu0 %v362
  %v383 = vpop.f32.mrf.mxu0
  %v384 = vadd.f32 %v195, %v383
  %385 = vdwg.mxu0
  %387 = vrot.lane.b32.xlu0 %v127, 96
  %v388 = vpop.permute.xlu0 %387
  %v389 = vsel %vm199, %v127, 0
  %v391 = vsel %vm199, %v388, 0
  %393 = vmatpush.xpose.msra.mxu0 0.0
  %394 = vmatpush.xpose.msra.mxu0 0.0
  %395 = vmatpush.xpose.msra.mxu0 0.0
  %396 = vmatpush.xpose.msra.mxu0 0.0
  %397 = vmatpush.xpose.msra.mxu0 0.0
  %398 = vmatpush.xpose.msra.mxu0 0.0
  %399 = vmatpush.xpose.msra.mxu0 0.0
  %400 = vmatpush.xpose.msra.mxu0 0.0
  %401 = vmatpush.xpose.msra.mxu0 0.0
  %402 = vmatpush.xpose.msra.mxu0 0.0
  %403 = vmatpush.xpose.msra.mxu0 0.0
  %404 = vmatpush.xpose.msra.mxu0 0.0
  %405 = vmatpush.xpose.msra.mxu0 0.0
  %406 = vmatpush.xpose.msra.mxu0 0.0
  %407 = vmatpush.xpose.msra.mxu0 0.0
  %408 = vmatpush.xpose.msra.mxu0 %v391
  %409 = vmatmul.f32.gmra.mxu0 %v389
  %v410 = vpop.f32.mrf.mxu0
  %v411 = vadd.f32 %v195, %v410
  %412 = vdwg.mxu0
  %v413 = vsel %vm199, %v222, -inf
  %414 = vmax.xlane.f32.xlu0 %v413
  %v415 = vpop.xlane.xlu0 %414
  %v416 = vsel %vm199, %v249, -inf
  %417 = vmax.xlane.f32.xlu0 %v416
  %v418 = vpop.xlane.xlu0 %417
  %v419 = vsel %vm199, %v276, -inf
  %420 = vmax.xlane.f32.xlu0 %v419
  %v421 = vpop.xlane.xlu0 %420
  %v422 = vsel %vm199, %v303, -inf
  %423 = vmax.xlane.f32.xlu0 %v422
  %v424 = vpop.xlane.xlu0 %423
  %v425 = vsel %vm199, %v330, -inf
  %426 = vmax.xlane.f32.xlu0 %v425
  %v427 = vpop.xlane.xlu0 %426
  %v428 = vsel %vm199, %v357, -inf
  %429 = vmax.xlane.f32.xlu0 %v428
  %v430 = vpop.xlane.xlu0 %429
  %v431 = vsel %vm199, %v384, -inf
  %432 = vmax.xlane.f32.xlu0 %v431
  %v433 = vpop.xlane.xlu0 %432
  %v434 = vsel %vm199, %v411, -inf
  %435 = vmax.xlane.f32.xlu0 %v434
  %v436 = vpop.xlane.xlu0 %435
  %v437 = vsub.f32 %v222, %v415
  %v438 = vsub.f32 %v249, %v418
  %v439 = vsub.f32 %v276, %v421
  %v440 = vsub.f32 %v303, %v424
  %v441 = vsub.f32 %v330, %v427
  %v442 = vsub.f32 %v357, %v430
  %v443 = vsub.f32 %v384, %v433
  %v444 = vsub.f32 %v411, %v436
  %v445 = vmul.f32 %v437, 1.442695
  %v446 = vpow.pop %v445
  %v447 = vmul.f32 %v438, 1.442695
  %v448 = vpow.pop %v447
  %v449 = vmul.f32 %v439, 1.442695
  %v450 = vpow.pop %v449
  %v451 = vmul.f32 %v440, 1.442695
  %v452 = vpow.pop %v451
  %v453 = vmul.f32 %v441, 1.442695
  %v454 = vpow.pop %v453
  %v455 = vmul.f32 %v442, 1.442695
  %v456 = vpow.pop %v455
  %v457 = vmul.f32 %v443, 1.442695
  %v458 = vpow.pop %v457
  %v459 = vmul.f32 %v444, 1.442695
  %v460 = vpow.pop %v459
  %v461 = vsel %vm199, %v446, 0.0
  %462 = vadd.xlane.f32.xlu0 %v461
  %v463 = vpop.xlane.xlu0 %462
  %v464 = vsel %vm199, %v448, 0.0
  %465 = vadd.xlane.f32.xlu0 %v464
  %v466 = vpop.xlane.xlu0 %465
  %v467 = vsel %vm199, %v450, 0.0
  %468 = vadd.xlane.f32.xlu0 %v467
  %v469 = vpop.xlane.xlu0 %468
  %v470 = vsel %vm199, %v452, 0.0
  %471 = vadd.xlane.f32.xlu0 %v470
  %v472 = vpop.xlane.xlu0 %471
  %v473 = vsel %vm199, %v454, 0.0
  %474 = vadd.xlane.f32.xlu0 %v473
  %v475 = vpop.xlane.xlu0 %474
  %v476 = vsel %vm199, %v456, 0.0
  %477 = vadd.xlane.f32.xlu0 %v476
  %v478 = vpop.xlane.xlu0 %477
  %v479 = vsel %vm199, %v458, 0.0
  %480 = vadd.xlane.f32.xlu0 %v479
  %v481 = vpop.xlane.xlu0 %480
  %v482 = vsel %vm199, %v460, 0.0
  %483 = vadd.xlane.f32.xlu0 %v482
  %v484 = vpop.xlane.xlu0 %483
  %v485 = vrcp.pop %v463
  %v486 = vrcp.pop %v466
  %v487 = vrcp.pop %v469
  %v488 = vrcp.pop %v472
  %v489 = vrcp.pop %v475
  %v490 = vrcp.pop %v478
  %v491 = vrcp.pop %v481
  %v492 = vrcp.pop %v484
  %v493 = vmul.f32 %v446, %v485
  %v494 = vmul.f32 %v448, %v486
  %v495 = vmul.f32 %v450, %v487
  %v496 = vmul.f32 %v452, %v488
  %v497 = vmul.f32 %v454, %v489
  %v498 = vmul.f32 %v456, %v490
  %v499 = vmul.f32 %v458, %v491
  %v500 = vmul.f32 %v460, %v492
  %501 = vrot.lane.b32.xlu0 %v110, 64
  %v502 = vpop.permute.xlu0 %501
  %v505 = vsel %vm199, %v493, 0
  %507 = vmatpush.msra.mxu0 0.0
  %508 = vmatpush.msra.mxu0 0.0
  %509 = vmatpush.msra.mxu0 0.0
  %510 = vmatpush.msra.mxu0 0.0
  %511 = vmatpush.msra.mxu0 0.0
  %512 = vmatpush.msra.mxu0 0.0
  %513 = vmatpush.msra.mxu0 0.0
  %514 = vmatpush.msra.mxu0 0.0
  %515 = vmatpush.msra.mxu0 0.0
  %516 = vmatpush.msra.mxu0 0.0
  %517 = vmatpush.msra.mxu0 0.0
  %518 = vmatpush.msra.mxu0 0.0
  %519 = vmatpush.msra.mxu0 0.0
  %520 = vmatpush.msra.mxu0 0.0
  %521 = vmatpush.msra.mxu0 0.0
  %522 = vmatpush.msra.mxu0 %v502
  %523 = vmatmul.f32.gmra.mxu0 %v505
  %v524 = vpop.f32.mrf.mxu0
  %v525 = vadd.f32 0.0, %v524
  %526 = vdwg.mxu0
  %527 = vrot.lane.b32.xlu0 %v112, 64
  %v528 = vpop.permute.xlu0 %527
  %v531 = vsel %vm199, %v494, 0
  %533 = vmatpush.msra.mxu0 0.0
  %534 = vmatpush.msra.mxu0 0.0
  %535 = vmatpush.msra.mxu0 0.0
  %536 = vmatpush.msra.mxu0 0.0
  %537 = vmatpush.msra.mxu0 0.0
  %538 = vmatpush.msra.mxu0 0.0
  %539 = vmatpush.msra.mxu0 0.0
  %540 = vmatpush.msra.mxu0 0.0
  %541 = vmatpush.msra.mxu0 0.0
  %542 = vmatpush.msra.mxu0 0.0
  %543 = vmatpush.msra.mxu0 0.0
  %544 = vmatpush.msra.mxu0 0.0
  %545 = vmatpush.msra.mxu0 0.0
  %546 = vmatpush.msra.mxu0 0.0
  %547 = vmatpush.msra.mxu0 0.0
  %548 = vmatpush.msra.mxu0 %v528
  %549 = vmatmul.f32.gmra.mxu0 %v531
  %v550 = vpop.f32.mrf.mxu0
  %v551 = vadd.f32 0.0, %v550
  %552 = vdwg.mxu0
  %553 = vrot.lane.b32.xlu0 %v115, 64
  %v554 = vpop.permute.xlu0 %553
  %v557 = vsel %vm199, %v495, 0
  %559 = vmatpush.msra.mxu0 0.0
  %560 = vmatpush.msra.mxu0 0.0
  %561 = vmatpush.msra.mxu0 0.0
  %562 = vmatpush.msra.mxu0 0.0
  %563 = vmatpush.msra.mxu0 0.0
  %564 = vmatpush.msra.mxu0 0.0
  %565 = vmatpush.msra.mxu0 0.0
  %566 = vmatpush.msra.mxu0 0.0
  %567 = vmatpush.msra.mxu0 0.0
  %568 = vmatpush.msra.mxu0 0.0
  %569 = vmatpush.msra.mxu0 0.0
  %570 = vmatpush.msra.mxu0 0.0
  %571 = vmatpush.msra.mxu0 0.0
  %572 = vmatpush.msra.mxu0 0.0
  %573 = vmatpush.msra.mxu0 0.0
  %574 = vmatpush.msra.mxu0 %v554
  %575 = vmatmul.f32.gmra.mxu0 %v557
  %v576 = vpop.f32.mrf.mxu0
  %v577 = vadd.f32 0.0, %v576
  %578 = vdwg.mxu0
  %579 = vrot.lane.b32.xlu0 %v117, 64
  %v580 = vpop.permute.xlu0 %579
  %v583 = vsel %vm199, %v496, 0
  %585 = vmatpush.msra.mxu0 0.0
  %586 = vmatpush.msra.mxu0 0.0
  %587 = vmatpush.msra.mxu0 0.0
  %588 = vmatpush.msra.mxu0 0.0
  %589 = vmatpush.msra.mxu0 0.0
  %590 = vmatpush.msra.mxu0 0.0
  %591 = vmatpush.msra.mxu0 0.0
  %592 = vmatpush.msra.mxu0 0.0
  %593 = vmatpush.msra.mxu0 0.0
  %594 = vmatpush.msra.mxu0 0.0
  %595 = vmatpush.msra.mxu0 0.0
  %596 = vmatpush.msra.mxu0 0.0
  %597 = vmatpush.msra.mxu0 0.0
  %598 = vmatpush.msra.mxu0 0.0
  %599 = vmatpush.msra.mxu0 0.0
  %600 = vmatpush.msra.mxu0 %v580
  %601 = vmatmul.f32.gmra.mxu0 %v583
  %v602 = vpop.f32.mrf.mxu0
  %v603 = vadd.f32 0.0, %v602
  %604 = vdwg.mxu0
  %605 = vrot.lane.b32.xlu0 %v120, 64
  %v606 = vpop.permute.xlu0 %605
  %v609 = vsel %vm199, %v497, 0
  %611 = vmatpush.msra.mxu0 0.0
  %612 = vmatpush.msra.mxu0 0.0
  %613 = vmatpush.msra.mxu0 0.0
  %614 = vmatpush.msra.mxu0 0.0
  %615 = vmatpush.msra.mxu0 0.0
  %616 = vmatpush.msra.mxu0 0.0
  %617 = vmatpush.msra.mxu0 0.0
  %618 = vmatpush.msra.mxu0 0.0
  %619 = vmatpush.msra.mxu0 0.0
  %620 = vmatpush.msra.mxu0 0.0
  %621 = vmatpush.msra.mxu0 0.0
  %622 = vmatpush.msra.mxu0 0.0
  %623 = vmatpush.msra.mxu0 0.0
  %624 = vmatpush.msra.mxu0 0.0
  %625 = vmatpush.msra.mxu0 0.0
  %626 = vmatpush.msra.mxu0 %v606
  %627 = vmatmul.f32.gmra.mxu0 %v609
  %v628 = vpop.f32.mrf.mxu0
  %v629 = vadd.f32 0.0, %v628
  %630 = vdwg.mxu0
  %631 = vrot.lane.b32.xlu0 %v122, 64
  %v632 = vpop.permute.xlu0 %631
  %v635 = vsel %vm199, %v498, 0
  %637 = vmatpush.msra.mxu0 0.0
  %638 = vmatpush.msra.mxu0 0.0
  %639 = vmatpush.msra.mxu0 0.0
  %640 = vmatpush.msra.mxu0 0.0
  %641 = vmatpush.msra.mxu0 0.0
  %642 = vmatpush.msra.mxu0 0.0
  %643 = vmatpush.msra.mxu0 0.0
  %644 = vmatpush.msra.mxu0 0.0
  %645 = vmatpush.msra.mxu0 0.0
  %646 = vmatpush.msra.mxu0 0.0
  %647 = vmatpush.msra.mxu0 0.0
  %648 = vmatpush.msra.mxu0 0.0
  %649 = vmatpush.msra.mxu0 0.0
  %650 = vmatpush.msra.mxu0 0.0
  %651 = vmatpush.msra.mxu0 0.0
  %652 = vmatpush.msra.mxu0 %v632
  %653 = vmatmul.f32.gmra.mxu0 %v635
  %v654 = vpop.f32.mrf.mxu0
  %v655 = vadd.f32 0.0, %v654
  %656 = vdwg.mxu0
  %657 = vrot.lane.b32.xlu0 %v125, 64
  %v658 = vpop.permute.xlu0 %657
  %v661 = vsel %vm199, %v499, 0
  %663 = vmatpush.msra.mxu0 0.0
  %664 = vmatpush.msra.mxu0 0.0
  %665 = vmatpush.msra.mxu0 0.0
  %666 = vmatpush.msra.mxu0 0.0
  %667 = vmatpush.msra.mxu0 0.0
  %668 = vmatpush.msra.mxu0 0.0
  %669 = vmatpush.msra.mxu0 0.0
  %670 = vmatpush.msra.mxu0 0.0
  %671 = vmatpush.msra.mxu0 0.0
  %672 = vmatpush.msra.mxu0 0.0
  %673 = vmatpush.msra.mxu0 0.0
  %674 = vmatpush.msra.mxu0 0.0
  %675 = vmatpush.msra.mxu0 0.0
  %676 = vmatpush.msra.mxu0 0.0
  %677 = vmatpush.msra.mxu0 0.0
  %678 = vmatpush.msra.mxu0 %v658
  %679 = vmatmul.f32.gmra.mxu0 %v661
  %v680 = vpop.f32.mrf.mxu0
  %v681 = vadd.f32 0.0, %v680
  %682 = vdwg.mxu0
  %683 = vrot.lane.b32.xlu0 %v127, 64
  %v684 = vpop.permute.xlu0 %683
  %v687 = vsel %vm199, %v500, 0
  %689 = vmatpush.msra.mxu0 0.0
  %690 = vmatpush.msra.mxu0 0.0
  %691 = vmatpush.msra.mxu0 0.0
  %692 = vmatpush.msra.mxu0 0.0
  %693 = vmatpush.msra.mxu0 0.0
  %694 = vmatpush.msra.mxu0 0.0
  %695 = vmatpush.msra.mxu0 0.0
  %696 = vmatpush.msra.mxu0 0.0
  %697 = vmatpush.msra.mxu0 0.0
  %698 = vmatpush.msra.mxu0 0.0
  %699 = vmatpush.msra.mxu0 0.0
  %700 = vmatpush.msra.mxu0 0.0
  %701 = vmatpush.msra.mxu0 0.0
  %702 = vmatpush.msra.mxu0 0.0
  %703 = vmatpush.msra.mxu0 0.0
  %704 = vmatpush.msra.mxu0 %v684
  %705 = vmatmul.f32.gmra.mxu0 %v687
  %v706 = vpop.f32.mrf.mxu0
  %v707 = vadd.f32 0.0, %v706
  %708 = vdwg.mxu0
  %709 = vrot.lane.b32.xlu0 %v110, 120
  %v710 = vpop.permute.xlu0 %709
  %711 = vrot.lane.b32.xlu0 %v110, 88
  %v712 = vpop.permute.xlu0 %711
  %v713 = vsel %vm199, %v710, 0
  %v715 = vsel %vm199, %v712, 0
  %717 = vmatpush.xpose.msra.mxu0 0.0
  %718 = vmatpush.xpose.msra.mxu0 0.0
  %719 = vmatpush.xpose.msra.mxu0 0.0
  %720 = vmatpush.xpose.msra.mxu0 0.0
  %721 = vmatpush.xpose.msra.mxu0 0.0
  %722 = vmatpush.xpose.msra.mxu0 0.0
  %723 = vmatpush.xpose.msra.mxu0 0.0
  %724 = vmatpush.xpose.msra.mxu0 0.0
  %725 = vmatpush.xpose.msra.mxu0 0.0
  %726 = vmatpush.xpose.msra.mxu0 0.0
  %727 = vmatpush.xpose.msra.mxu0 0.0
  %728 = vmatpush.xpose.msra.mxu0 0.0
  %729 = vmatpush.xpose.msra.mxu0 0.0
  %730 = vmatpush.xpose.msra.mxu0 0.0
  %731 = vmatpush.xpose.msra.mxu0 0.0
  %732 = vmatpush.xpose.msra.mxu0 %v715
  %733 = vmatmul.f32.gmra.mxu0 %v713
  %v734 = vpop.f32.mrf.mxu0
  %v735 = vadd.f32 %v195, %v734
  %736 = vdwg.mxu0
  %737 = vrot.lane.b32.xlu0 %v112, 120
  %v738 = vpop.permute.xlu0 %737
  %739 = vrot.lane.b32.xlu0 %v112, 88
  %v740 = vpop.permute.xlu0 %739
  %v741 = vsel %vm199, %v738, 0
  %v743 = vsel %vm199, %v740, 0
  %745 = vmatpush.xpose.msra.mxu0 0.0
  %746 = vmatpush.xpose.msra.mxu0 0.0
  %747 = vmatpush.xpose.msra.mxu0 0.0
  %748 = vmatpush.xpose.msra.mxu0 0.0
  %749 = vmatpush.xpose.msra.mxu0 0.0
  %750 = vmatpush.xpose.msra.mxu0 0.0
  %751 = vmatpush.xpose.msra.mxu0 0.0
  %752 = vmatpush.xpose.msra.mxu0 0.0
  %753 = vmatpush.xpose.msra.mxu0 0.0
  %754 = vmatpush.xpose.msra.mxu0 0.0
  %755 = vmatpush.xpose.msra.mxu0 0.0
  %756 = vmatpush.xpose.msra.mxu0 0.0
  %757 = vmatpush.xpose.msra.mxu0 0.0
  %758 = vmatpush.xpose.msra.mxu0 0.0
  %759 = vmatpush.xpose.msra.mxu0 0.0
  %760 = vmatpush.xpose.msra.mxu0 %v743
  %761 = vmatmul.f32.gmra.mxu0 %v741
  %v762 = vpop.f32.mrf.mxu0
  %v763 = vadd.f32 %v195, %v762
  %764 = vdwg.mxu0
  %765 = vrot.lane.b32.xlu0 %v115, 120
  %v766 = vpop.permute.xlu0 %765
  %767 = vrot.lane.b32.xlu0 %v115, 88
  %v768 = vpop.permute.xlu0 %767
  %v769 = vsel %vm199, %v766, 0
  %v771 = vsel %vm199, %v768, 0
  %773 = vmatpush.xpose.msra.mxu0 0.0
  %774 = vmatpush.xpose.msra.mxu0 0.0
  %775 = vmatpush.xpose.msra.mxu0 0.0
  %776 = vmatpush.xpose.msra.mxu0 0.0
  %777 = vmatpush.xpose.msra.mxu0 0.0
  %778 = vmatpush.xpose.msra.mxu0 0.0
  %779 = vmatpush.xpose.msra.mxu0 0.0
  %780 = vmatpush.xpose.msra.mxu0 0.0
  %781 = vmatpush.xpose.msra.mxu0 0.0
  %782 = vmatpush.xpose.msra.mxu0 0.0
  %783 = vmatpush.xpose.msra.mxu0 0.0
  %784 = vmatpush.xpose.msra.mxu0 0.0
  %785 = vmatpush.xpose.msra.mxu0 0.0
  %786 = vmatpush.xpose.msra.mxu0 0.0
  %787 = vmatpush.xpose.msra.mxu0 0.0
  %788 = vmatpush.xpose.msra.mxu0 %v771
  %789 = vmatmul.f32.gmra.mxu0 %v769
  %v790 = vpop.f32.mrf.mxu0
  %v791 = vadd.f32 %v195, %v790
  %792 = vdwg.mxu0
  %793 = vrot.lane.b32.xlu0 %v117, 120
  %v794 = vpop.permute.xlu0 %793
  %795 = vrot.lane.b32.xlu0 %v117, 88
  %v796 = vpop.permute.xlu0 %795
  %v797 = vsel %vm199, %v794, 0
  %v799 = vsel %vm199, %v796, 0
  %801 = vmatpush.xpose.msra.mxu0 0.0
  %802 = vmatpush.xpose.msra.mxu0 0.0
  %803 = vmatpush.xpose.msra.mxu0 0.0
  %804 = vmatpush.xpose.msra.mxu0 0.0
  %805 = vmatpush.xpose.msra.mxu0 0.0
  %806 = vmatpush.xpose.msra.mxu0 0.0
  %807 = vmatpush.xpose.msra.mxu0 0.0
  %808 = vmatpush.xpose.msra.mxu0 0.0
  %809 = vmatpush.xpose.msra.mxu0 0.0
  %810 = vmatpush.xpose.msra.mxu0 0.0
  %811 = vmatpush.xpose.msra.mxu0 0.0
  %812 = vmatpush.xpose.msra.mxu0 0.0
  %813 = vmatpush.xpose.msra.mxu0 0.0
  %814 = vmatpush.xpose.msra.mxu0 0.0
  %815 = vmatpush.xpose.msra.mxu0 0.0
  %816 = vmatpush.xpose.msra.mxu0 %v799
  %817 = vmatmul.f32.gmra.mxu0 %v797
  %v818 = vpop.f32.mrf.mxu0
  %v819 = vadd.f32 %v195, %v818
  %820 = vdwg.mxu0
  %821 = vrot.lane.b32.xlu0 %v120, 120
  %v822 = vpop.permute.xlu0 %821
  %823 = vrot.lane.b32.xlu0 %v120, 88
  %v824 = vpop.permute.xlu0 %823
  %v825 = vsel %vm199, %v822, 0
  %v827 = vsel %vm199, %v824, 0
  %829 = vmatpush.xpose.msra.mxu0 0.0
  %830 = vmatpush.xpose.msra.mxu0 0.0
  %831 = vmatpush.xpose.msra.mxu0 0.0
  %832 = vmatpush.xpose.msra.mxu0 0.0
  %833 = vmatpush.xpose.msra.mxu0 0.0
  %834 = vmatpush.xpose.msra.mxu0 0.0
  %835 = vmatpush.xpose.msra.mxu0 0.0
  %836 = vmatpush.xpose.msra.mxu0 0.0
  %837 = vmatpush.xpose.msra.mxu0 0.0
  %838 = vmatpush.xpose.msra.mxu0 0.0
  %839 = vmatpush.xpose.msra.mxu0 0.0
  %840 = vmatpush.xpose.msra.mxu0 0.0
  %841 = vmatpush.xpose.msra.mxu0 0.0
  %842 = vmatpush.xpose.msra.mxu0 0.0
  %843 = vmatpush.xpose.msra.mxu0 0.0
  %844 = vmatpush.xpose.msra.mxu0 %v827
  %845 = vmatmul.f32.gmra.mxu0 %v825
  %v846 = vpop.f32.mrf.mxu0
  %v847 = vadd.f32 %v195, %v846
  %848 = vdwg.mxu0
  %849 = vrot.lane.b32.xlu0 %v122, 120
  %v850 = vpop.permute.xlu0 %849
  %851 = vrot.lane.b32.xlu0 %v122, 88
  %v852 = vpop.permute.xlu0 %851
  %v853 = vsel %vm199, %v850, 0
  %v855 = vsel %vm199, %v852, 0
  %857 = vmatpush.xpose.msra.mxu0 0.0
  %858 = vmatpush.xpose.msra.mxu0 0.0
  %859 = vmatpush.xpose.msra.mxu0 0.0
  %860 = vmatpush.xpose.msra.mxu0 0.0
  %861 = vmatpush.xpose.msra.mxu0 0.0
  %862 = vmatpush.xpose.msra.mxu0 0.0
  %863 = vmatpush.xpose.msra.mxu0 0.0
  %864 = vmatpush.xpose.msra.mxu0 0.0
  %865 = vmatpush.xpose.msra.mxu0 0.0
  %866 = vmatpush.xpose.msra.mxu0 0.0
  %867 = vmatpush.xpose.msra.mxu0 0.0
  %868 = vmatpush.xpose.msra.mxu0 0.0
  %869 = vmatpush.xpose.msra.mxu0 0.0
  %870 = vmatpush.xpose.msra.mxu0 0.0
  %871 = vmatpush.xpose.msra.mxu0 0.0
  %872 = vmatpush.xpose.msra.mxu0 %v855
  %873 = vmatmul.f32.gmra.mxu0 %v853
  %v874 = vpop.f32.mrf.mxu0
  %v875 = vadd.f32 %v195, %v874
  %876 = vdwg.mxu0
  %877 = vrot.lane.b32.xlu0 %v125, 120
  %v878 = vpop.permute.xlu0 %877
  %879 = vrot.lane.b32.xlu0 %v125, 88
  %v880 = vpop.permute.xlu0 %879
  %v881 = vsel %vm199, %v878, 0
  %v883 = vsel %vm199, %v880, 0
  %885 = vmatpush.xpose.msra.mxu0 0.0
  %886 = vmatpush.xpose.msra.mxu0 0.0
  %887 = vmatpush.xpose.msra.mxu0 0.0
  %888 = vmatpush.xpose.msra.mxu0 0.0
  %889 = vmatpush.xpose.msra.mxu0 0.0
  %890 = vmatpush.xpose.msra.mxu0 0.0
  %891 = vmatpush.xpose.msra.mxu0 0.0
  %892 = vmatpush.xpose.msra.mxu0 0.0
  %893 = vmatpush.xpose.msra.mxu0 0.0
  %894 = vmatpush.xpose.msra.mxu0 0.0
  %895 = vmatpush.xpose.msra.mxu0 0.0
  %896 = vmatpush.xpose.msra.mxu0 0.0
  %897 = vmatpush.xpose.msra.mxu0 0.0
  %898 = vmatpush.xpose.msra.mxu0 0.0
  %899 = vmatpush.xpose.msra.mxu0 0.0
  %900 = vmatpush.xpose.msra.mxu0 %v883
  %901 = vmatmul.f32.gmra.mxu0 %v881
  %v902 = vpop.f32.mrf.mxu0
  %v903 = vadd.f32 %v195, %v902
  %904 = vdwg.mxu0
  %905 = vrot.lane.b32.xlu0 %v127, 120
  %v906 = vpop.permute.xlu0 %905
  %907 = vrot.lane.b32.xlu0 %v127, 88
  %v908 = vpop.permute.xlu0 %907
  %v909 = vsel %vm199, %v906, 0
  %v911 = vsel %vm199, %v908, 0
  %913 = vmatpush.xpose.msra.mxu0 0.0
  %914 = vmatpush.xpose.msra.mxu0 0.0
  %915 = vmatpush.xpose.msra.mxu0 0.0
  %916 = vmatpush.xpose.msra.mxu0 0.0
  %917 = vmatpush.xpose.msra.mxu0 0.0
  %918 = vmatpush.xpose.msra.mxu0 0.0
  %919 = vmatpush.xpose.msra.mxu0 0.0
  %920 = vmatpush.xpose.msra.mxu0 0.0
  %921 = vmatpush.xpose.msra.mxu0 0.0
  %922 = vmatpush.xpose.msra.mxu0 0.0
  %923 = vmatpush.xpose.msra.mxu0 0.0
  %924 = vmatpush.xpose.msra.mxu0 0.0
  %925 = vmatpush.xpose.msra.mxu0 0.0
  %926 = vmatpush.xpose.msra.mxu0 0.0
  %927 = vmatpush.xpose.msra.mxu0 0.0
  %928 = vmatpush.xpose.msra.mxu0 %v911
  %929 = vmatmul.f32.gmra.mxu0 %v909
  %v930 = vpop.f32.mrf.mxu0
  %v931 = vadd.f32 %v195, %v930
  %932 = vdwg.mxu0
  %v933 = vsel %vm199, %v735, -inf
  %934 = vmax.xlane.f32.xlu0 %v933
  %v935 = vpop.xlane.xlu0 %934
  %v936 = vsel %vm199, %v763, -inf
  %937 = vmax.xlane.f32.xlu0 %v936
  %v938 = vpop.xlane.xlu0 %937
  %v939 = vsel %vm199, %v791, -inf
  %940 = vmax.xlane.f32.xlu0 %v939
  %v941 = vpop.xlane.xlu0 %940
  %v942 = vsel %vm199, %v819, -inf
  %943 = vmax.xlane.f32.xlu0 %v942
  %v944 = vpop.xlane.xlu0 %943
  %v945 = vsel %vm199, %v847, -inf
  %946 = vmax.xlane.f32.xlu0 %v945
  %v947 = vpop.xlane.xlu0 %946
  %v948 = vsel %vm199, %v875, -inf
  %949 = vmax.xlane.f32.xlu0 %v948
  %v950 = vpop.xlane.xlu0 %949
  %v951 = vsel %vm199, %v903, -inf
  %952 = vmax.xlane.f32.xlu0 %v951
  %v953 = vpop.xlane.xlu0 %952
  %v954 = vsel %vm199, %v931, -inf
  %955 = vmax.xlane.f32.xlu0 %v954
  %v956 = vpop.xlane.xlu0 %955
  %v957 = vsub.f32 %v735, %v935
  %v958 = vsub.f32 %v763, %v938
  %v959 = vsub.f32 %v791, %v941
  %v960 = vsub.f32 %v819, %v944
  %v961 = vsub.f32 %v847, %v947
  %v962 = vsub.f32 %v875, %v950
  %v963 = vsub.f32 %v903, %v953
  %v964 = vsub.f32 %v931, %v956
  %v965 = vmul.f32 %v957, 1.442695
  %v966 = vpow.pop %v965
  %v967 = vmul.f32 %v958, 1.442695
  %v968 = vpow.pop %v967
  %v969 = vmul.f32 %v959, 1.442695
  %v970 = vpow.pop %v969
  %v971 = vmul.f32 %v960, 1.442695
  %v972 = vpow.pop %v971
  %v973 = vmul.f32 %v961, 1.442695
  %v974 = vpow.pop %v973
  %v975 = vmul.f32 %v962, 1.442695
  %v976 = vpow.pop %v975
  %v977 = vmul.f32 %v963, 1.442695
  %v978 = vpow.pop %v977
  %v979 = vmul.f32 %v964, 1.442695
  %v980 = vpow.pop %v979
  %v981 = vsel %vm199, %v966, 0.0
  %982 = vadd.xlane.f32.xlu0 %v981
  %v983 = vpop.xlane.xlu0 %982
  %v984 = vsel %vm199, %v968, 0.0
  %985 = vadd.xlane.f32.xlu0 %v984
  %v986 = vpop.xlane.xlu0 %985
  %v987 = vsel %vm199, %v970, 0.0
  %988 = vadd.xlane.f32.xlu0 %v987
  %v989 = vpop.xlane.xlu0 %988
  %v990 = vsel %vm199, %v972, 0.0
  %991 = vadd.xlane.f32.xlu0 %v990
  %v992 = vpop.xlane.xlu0 %991
  %v993 = vsel %vm199, %v974, 0.0
  %994 = vadd.xlane.f32.xlu0 %v993
  %v995 = vpop.xlane.xlu0 %994
  %v996 = vsel %vm199, %v976, 0.0
  %997 = vadd.xlane.f32.xlu0 %v996
  %v998 = vpop.xlane.xlu0 %997
  %v999 = vsel %vm199, %v978, 0.0
  %1000 = vadd.xlane.f32.xlu0 %v999
  %v1001 = vpop.xlane.xlu0 %1000
  %v1002 = vsel %vm199, %v980, 0.0
  %1003 = vadd.xlane.f32.xlu0 %v1002
  %v1004 = vpop.xlane.xlu0 %1003
  %v1005 = vrcp.pop %v983
  %v1006 = vrcp.pop %v986
  %v1007 = vrcp.pop %v989
  %v1008 = vrcp.pop %v992
  %v1009 = vrcp.pop %v995
  %v1010 = vrcp.pop %v998
  %v1011 = vrcp.pop %v1001
  %v1012 = vrcp.pop %v1004
  %v1013 = vmul.f32 %v966, %v1005
  %v1014 = vmul.f32 %v968, %v1006
  %v1015 = vmul.f32 %v970, %v1007
  %v1016 = vmul.f32 %v972, %v1008
  %v1017 = vmul.f32 %v974, %v1009
  %v1018 = vmul.f32 %v976, %v1010
  %v1019 = vmul.f32 %v978, %v1011
  %v1020 = vmul.f32 %v980, %v1012
  %1021 = vrot.lane.b32.xlu0 %v110, 56
  %v1022 = vpop.permute.xlu0 %1021
  %v1025 = vsel %vm199, %v1013, 0
  %1027 = vmatpush.msra.mxu0 0.0
  %1028 = vmatpush.msra.mxu0 0.0
  %1029 = vmatpush.msra.mxu0 0.0
  %1030 = vmatpush.msra.mxu0 0.0
  %1031 = vmatpush.msra.mxu0 0.0
  %1032 = vmatpush.msra.mxu0 0.0
  %1033 = vmatpush.msra.mxu0 0.0
  %1034 = vmatpush.msra.mxu0 0.0
  %1035 = vmatpush.msra.mxu0 0.0
  %1036 = vmatpush.msra.mxu0 0.0
  %1037 = vmatpush.msra.mxu0 0.0
  %1038 = vmatpush.msra.mxu0 0.0
  %1039 = vmatpush.msra.mxu0 0.0
  %1040 = vmatpush.msra.mxu0 0.0
  %1041 = vmatpush.msra.mxu0 0.0
  %1042 = vmatpush.msra.mxu0 %v1022
  %1043 = vmatmul.f32.gmra.mxu0 %v1025
  %v1044 = vpop.f32.mrf.mxu0
  %v1045 = vadd.f32 0.0, %v1044
  %1046 = vdwg.mxu0
  %1047 = vrot.lane.b32.xlu0 %v112, 56
  %v1048 = vpop.permute.xlu0 %1047
  %v1051 = vsel %vm199, %v1014, 0
  %1053 = vmatpush.msra.mxu0 0.0
  %1054 = vmatpush.msra.mxu0 0.0
  %1055 = vmatpush.msra.mxu0 0.0
  %1056 = vmatpush.msra.mxu0 0.0
  %1057 = vmatpush.msra.mxu0 0.0
  %1058 = vmatpush.msra.mxu0 0.0
  %1059 = vmatpush.msra.mxu0 0.0
  %1060 = vmatpush.msra.mxu0 0.0
  %1061 = vmatpush.msra.mxu0 0.0
  %1062 = vmatpush.msra.mxu0 0.0
  %1063 = vmatpush.msra.mxu0 0.0
  %1064 = vmatpush.msra.mxu0 0.0
  %1065 = vmatpush.msra.mxu0 0.0
  %1066 = vmatpush.msra.mxu0 0.0
  %1067 = vmatpush.msra.mxu0 0.0
  %1068 = vmatpush.msra.mxu0 %v1048
  %1069 = vmatmul.f32.gmra.mxu0 %v1051
  %v1070 = vpop.f32.mrf.mxu0
  %v1071 = vadd.f32 0.0, %v1070
  %1072 = vdwg.mxu0
  %1073 = vrot.lane.b32.xlu0 %v115, 56
  %v1074 = vpop.permute.xlu0 %1073
  %v1077 = vsel %vm199, %v1015, 0
  %1079 = vmatpush.msra.mxu0 0.0
  %1080 = vmatpush.msra.mxu0 0.0
  %1081 = vmatpush.msra.mxu0 0.0
  %1082 = vmatpush.msra.mxu0 0.0
  %1083 = vmatpush.msra.mxu0 0.0
  %1084 = vmatpush.msra.mxu0 0.0
  %1085 = vmatpush.msra.mxu0 0.0
  %1086 = vmatpush.msra.mxu0 0.0
  %1087 = vmatpush.msra.mxu0 0.0
  %1088 = vmatpush.msra.mxu0 0.0
  %1089 = vmatpush.msra.mxu0 0.0
  %1090 = vmatpush.msra.mxu0 0.0
  %1091 = vmatpush.msra.mxu0 0.0
  %1092 = vmatpush.msra.mxu0 0.0
  %1093 = vmatpush.msra.mxu0 0.0
  %1094 = vmatpush.msra.mxu0 %v1074
  %1095 = vmatmul.f32.gmra.mxu0 %v1077
  %v1096 = vpop.f32.mrf.mxu0
  %v1097 = vadd.f32 0.0, %v1096
  %1098 = vdwg.mxu0
  %1099 = vrot.lane.b32.xlu0 %v117, 56
  %v1100 = vpop.permute.xlu0 %1099
  %v1103 = vsel %vm199, %v1016, 0
  %1105 = vmatpush.msra.mxu0 0.0
  %1106 = vmatpush.msra.mxu0 0.0
  %1107 = vmatpush.msra.mxu0 0.0
  %1108 = vmatpush.msra.mxu0 0.0
  %1109 = vmatpush.msra.mxu0 0.0
  %1110 = vmatpush.msra.mxu0 0.0
  %1111 = vmatpush.msra.mxu0 0.0
  %1112 = vmatpush.msra.mxu0 0.0
  %1113 = vmatpush.msra.mxu0 0.0
  %1114 = vmatpush.msra.mxu0 0.0
  %1115 = vmatpush.msra.mxu0 0.0
  %1116 = vmatpush.msra.mxu0 0.0
  %1117 = vmatpush.msra.mxu0 0.0
  %1118 = vmatpush.msra.mxu0 0.0
  %1119 = vmatpush.msra.mxu0 0.0
  %1120 = vmatpush.msra.mxu0 %v1100
  %1121 = vmatmul.f32.gmra.mxu0 %v1103
  %v1122 = vpop.f32.mrf.mxu0
  %v1123 = vadd.f32 0.0, %v1122
  %1124 = vdwg.mxu0
  %1125 = vrot.lane.b32.xlu0 %v120, 56
  %v1126 = vpop.permute.xlu0 %1125
  %v1129 = vsel %vm199, %v1017, 0
  %1131 = vmatpush.msra.mxu0 0.0
  %1132 = vmatpush.msra.mxu0 0.0
  %1133 = vmatpush.msra.mxu0 0.0
  %1134 = vmatpush.msra.mxu0 0.0
  %1135 = vmatpush.msra.mxu0 0.0
  %1136 = vmatpush.msra.mxu0 0.0
  %1137 = vmatpush.msra.mxu0 0.0
  %1138 = vmatpush.msra.mxu0 0.0
  %1139 = vmatpush.msra.mxu0 0.0
  %1140 = vmatpush.msra.mxu0 0.0
  %1141 = vmatpush.msra.mxu0 0.0
  %1142 = vmatpush.msra.mxu0 0.0
  %1143 = vmatpush.msra.mxu0 0.0
  %1144 = vmatpush.msra.mxu0 0.0
  %1145 = vmatpush.msra.mxu0 0.0
  %1146 = vmatpush.msra.mxu0 %v1126
  %1147 = vmatmul.f32.gmra.mxu0 %v1129
  %v1148 = vpop.f32.mrf.mxu0
  %v1149 = vadd.f32 0.0, %v1148
  %1150 = vdwg.mxu0
  %1151 = vrot.lane.b32.xlu0 %v122, 56
  %v1152 = vpop.permute.xlu0 %1151
  %v1155 = vsel %vm199, %v1018, 0
  %1157 = vmatpush.msra.mxu0 0.0
  %1158 = vmatpush.msra.mxu0 0.0
  %1159 = vmatpush.msra.mxu0 0.0
  %1160 = vmatpush.msra.mxu0 0.0
  %1161 = vmatpush.msra.mxu0 0.0
  %1162 = vmatpush.msra.mxu0 0.0
  %1163 = vmatpush.msra.mxu0 0.0
  %1164 = vmatpush.msra.mxu0 0.0
  %1165 = vmatpush.msra.mxu0 0.0
  %1166 = vmatpush.msra.mxu0 0.0
  %1167 = vmatpush.msra.mxu0 0.0
  %1168 = vmatpush.msra.mxu0 0.0
  %1169 = vmatpush.msra.mxu0 0.0
  %1170 = vmatpush.msra.mxu0 0.0
  %1171 = vmatpush.msra.mxu0 0.0
  %1172 = vmatpush.msra.mxu0 %v1152
  %1173 = vmatmul.f32.gmra.mxu0 %v1155
  %v1174 = vpop.f32.mrf.mxu0
  %v1175 = vadd.f32 0.0, %v1174
  %1176 = vdwg.mxu0
  %1177 = vrot.lane.b32.xlu0 %v125, 56
  %v1178 = vpop.permute.xlu0 %1177
  %v1181 = vsel %vm199, %v1019, 0
  %1183 = vmatpush.msra.mxu0 0.0
  %1184 = vmatpush.msra.mxu0 0.0
  %1185 = vmatpush.msra.mxu0 0.0
  %1186 = vmatpush.msra.mxu0 0.0
  %1187 = vmatpush.msra.mxu0 0.0
  %1188 = vmatpush.msra.mxu0 0.0
  %1189 = vmatpush.msra.mxu0 0.0
  %1190 = vmatpush.msra.mxu0 0.0
  %1191 = vmatpush.msra.mxu0 0.0
  %1192 = vmatpush.msra.mxu0 0.0
  %1193 = vmatpush.msra.mxu0 0.0
  %1194 = vmatpush.msra.mxu0 0.0
  %1195 = vmatpush.msra.mxu0 0.0
  %1196 = vmatpush.msra.mxu0 0.0
  %1197 = vmatpush.msra.mxu0 0.0
  %1198 = vmatpush.msra.mxu0 %v1178
  %1199 = vmatmul.f32.gmra.mxu0 %v1181
  %v1200 = vpop.f32.mrf.mxu0
  %v1201 = vadd.f32 0.0, %v1200
  %1202 = vdwg.mxu0
  %1203 = vrot.lane.b32.xlu0 %v127, 56
  %v1204 = vpop.permute.xlu0 %1203
  %v1207 = vsel %vm199, %v1020, 0
  %1209 = vmatpush.msra.mxu0 0.0
  %1210 = vmatpush.msra.mxu0 0.0
  %1211 = vmatpush.msra.mxu0 0.0
  %1212 = vmatpush.msra.mxu0 0.0
  %1213 = vmatpush.msra.mxu0 0.0
  %1214 = vmatpush.msra.mxu0 0.0
  %1215 = vmatpush.msra.mxu0 0.0
  %1216 = vmatpush.msra.mxu0 0.0
  %1217 = vmatpush.msra.mxu0 0.0
  %1218 = vmatpush.msra.mxu0 0.0
  %1219 = vmatpush.msra.mxu0 0.0
  %1220 = vmatpush.msra.mxu0 0.0
  %1221 = vmatpush.msra.mxu0 0.0
  %1222 = vmatpush.msra.mxu0 0.0
  %1223 = vmatpush.msra.mxu0 0.0
  %1224 = vmatpush.msra.mxu0 %v1204
  %1225 = vmatmul.f32.gmra.mxu0 %v1207
  %v1226 = vpop.f32.mrf.mxu0
  %v1227 = vadd.f32 0.0, %v1226
  %1228 = vdwg.mxu0
  %1229 = vrot.lane.b32.xlu0 %v110, 112
  %v1230 = vpop.permute.xlu0 %1229
  %1231 = vrot.lane.b32.xlu0 %v110, 80
  %v1232 = vpop.permute.xlu0 %1231
  %v1233 = vsel %vm199, %v1230, 0
  %v1235 = vsel %vm199, %v1232, 0
  %1237 = vmatpush.xpose.msra.mxu0 0.0
  %1238 = vmatpush.xpose.msra.mxu0 0.0
  %1239 = vmatpush.xpose.msra.mxu0 0.0
  %1240 = vmatpush.xpose.msra.mxu0 0.0
  %1241 = vmatpush.xpose.msra.mxu0 0.0
  %1242 = vmatpush.xpose.msra.mxu0 0.0
  %1243 = vmatpush.xpose.msra.mxu0 0.0
  %1244 = vmatpush.xpose.msra.mxu0 0.0
  %1245 = vmatpush.xpose.msra.mxu0 0.0
  %1246 = vmatpush.xpose.msra.mxu0 0.0
  %1247 = vmatpush.xpose.msra.mxu0 0.0
  %1248 = vmatpush.xpose.msra.mxu0 0.0
  %1249 = vmatpush.xpose.msra.mxu0 0.0
  %1250 = vmatpush.xpose.msra.mxu0 0.0
  %1251 = vmatpush.xpose.msra.mxu0 0.0
  %1252 = vmatpush.xpose.msra.mxu0 %v1235
  %1253 = vmatmul.f32.gmra.mxu0 %v1233
  %v1254 = vpop.f32.mrf.mxu0
  %v1255 = vadd.f32 %v195, %v1254
  %1256 = vdwg.mxu0
  %1257 = vrot.lane.b32.xlu0 %v112, 112
  %v1258 = vpop.permute.xlu0 %1257
  %1259 = vrot.lane.b32.xlu0 %v112, 80
  %v1260 = vpop.permute.xlu0 %1259
  %v1261 = vsel %vm199, %v1258, 0
  %v1263 = vsel %vm199, %v1260, 0
  %1265 = vmatpush.xpose.msra.mxu0 0.0
  %1266 = vmatpush.xpose.msra.mxu0 0.0
  %1267 = vmatpush.xpose.msra.mxu0 0.0
  %1268 = vmatpush.xpose.msra.mxu0 0.0
  %1269 = vmatpush.xpose.msra.mxu0 0.0
  %1270 = vmatpush.xpose.msra.mxu0 0.0
  %1271 = vmatpush.xpose.msra.mxu0 0.0
  %1272 = vmatpush.xpose.msra.mxu0 0.0
  %1273 = vmatpush.xpose.msra.mxu0 0.0
  %1274 = vmatpush.xpose.msra.mxu0 0.0
  %1275 = vmatpush.xpose.msra.mxu0 0.0
  %1276 = vmatpush.xpose.msra.mxu0 0.0
  %1277 = vmatpush.xpose.msra.mxu0 0.0
  %1278 = vmatpush.xpose.msra.mxu0 0.0
  %1279 = vmatpush.xpose.msra.mxu0 0.0
  %1280 = vmatpush.xpose.msra.mxu0 %v1263
  %1281 = vmatmul.f32.gmra.mxu0 %v1261
  %v1282 = vpop.f32.mrf.mxu0
  %v1283 = vadd.f32 %v195, %v1282
  %1284 = vdwg.mxu0
  %1285 = vrot.lane.b32.xlu0 %v115, 112
  %v1286 = vpop.permute.xlu0 %1285
  %1287 = vrot.lane.b32.xlu0 %v115, 80
  %v1288 = vpop.permute.xlu0 %1287
  %v1289 = vsel %vm199, %v1286, 0
  %v1291 = vsel %vm199, %v1288, 0
  %1293 = vmatpush.xpose.msra.mxu0 0.0
  %1294 = vmatpush.xpose.msra.mxu0 0.0
  %1295 = vmatpush.xpose.msra.mxu0 0.0
  %1296 = vmatpush.xpose.msra.mxu0 0.0
  %1297 = vmatpush.xpose.msra.mxu0 0.0
  %1298 = vmatpush.xpose.msra.mxu0 0.0
  %1299 = vmatpush.xpose.msra.mxu0 0.0
  %1300 = vmatpush.xpose.msra.mxu0 0.0
  %1301 = vmatpush.xpose.msra.mxu0 0.0
  %1302 = vmatpush.xpose.msra.mxu0 0.0
  %1303 = vmatpush.xpose.msra.mxu0 0.0
  %1304 = vmatpush.xpose.msra.mxu0 0.0
  %1305 = vmatpush.xpose.msra.mxu0 0.0
  %1306 = vmatpush.xpose.msra.mxu0 0.0
  %1307 = vmatpush.xpose.msra.mxu0 0.0
  %1308 = vmatpush.xpose.msra.mxu0 %v1291
  %1309 = vmatmul.f32.gmra.mxu0 %v1289
  %v1310 = vpop.f32.mrf.mxu0
  %v1311 = vadd.f32 %v195, %v1310
  %1312 = vdwg.mxu0
  %1313 = vrot.lane.b32.xlu0 %v117, 112
  %v1314 = vpop.permute.xlu0 %1313
  %1315 = vrot.lane.b32.xlu0 %v117, 80
  %v1316 = vpop.permute.xlu0 %1315
  %v1317 = vsel %vm199, %v1314, 0
  %v1319 = vsel %vm199, %v1316, 0
  %1321 = vmatpush.xpose.msra.mxu0 0.0
  %1322 = vmatpush.xpose.msra.mxu0 0.0
  %1323 = vmatpush.xpose.msra.mxu0 0.0
  %1324 = vmatpush.xpose.msra.mxu0 0.0
  %1325 = vmatpush.xpose.msra.mxu0 0.0
  %1326 = vmatpush.xpose.msra.mxu0 0.0
  %1327 = vmatpush.xpose.msra.mxu0 0.0
  %1328 = vmatpush.xpose.msra.mxu0 0.0
  %1329 = vmatpush.xpose.msra.mxu0 0.0
  %1330 = vmatpush.xpose.msra.mxu0 0.0
  %1331 = vmatpush.xpose.msra.mxu0 0.0
  %1332 = vmatpush.xpose.msra.mxu0 0.0
  %1333 = vmatpush.xpose.msra.mxu0 0.0
  %1334 = vmatpush.xpose.msra.mxu0 0.0
  %1335 = vmatpush.xpose.msra.mxu0 0.0
  %1336 = vmatpush.xpose.msra.mxu0 %v1319
  %1337 = vmatmul.f32.gmra.mxu0 %v1317
  %v1338 = vpop.f32.mrf.mxu0
  %v1339 = vadd.f32 %v195, %v1338
  %1340 = vdwg.mxu0
  %1341 = vrot.lane.b32.xlu0 %v120, 112
  %v1342 = vpop.permute.xlu0 %1341
  %1343 = vrot.lane.b32.xlu0 %v120, 80
  %v1344 = vpop.permute.xlu0 %1343
  %v1345 = vsel %vm199, %v1342, 0
  %v1347 = vsel %vm199, %v1344, 0
  %1349 = vmatpush.xpose.msra.mxu0 0.0
  %1350 = vmatpush.xpose.msra.mxu0 0.0
  %1351 = vmatpush.xpose.msra.mxu0 0.0
  %1352 = vmatpush.xpose.msra.mxu0 0.0
  %1353 = vmatpush.xpose.msra.mxu0 0.0
  %1354 = vmatpush.xpose.msra.mxu0 0.0
  %1355 = vmatpush.xpose.msra.mxu0 0.0
  %1356 = vmatpush.xpose.msra.mxu0 0.0
  %1357 = vmatpush.xpose.msra.mxu0 0.0
  %1358 = vmatpush.xpose.msra.mxu0 0.0
  %1359 = vmatpush.xpose.msra.mxu0 0.0
  %1360 = vmatpush.xpose.msra.mxu0 0.0
  %1361 = vmatpush.xpose.msra.mxu0 0.0
  %1362 = vmatpush.xpose.msra.mxu0 0.0
  %1363 = vmatpush.xpose.msra.mxu0 0.0
  %1364 = vmatpush.xpose.msra.mxu0 %v1347
  %1365 = vmatmul.f32.gmra.mxu0 %v1345
  %v1366 = vpop.f32.mrf.mxu0
  %v1367 = vadd.f32 %v195, %v1366
  %1368 = vdwg.mxu0
  %1369 = vrot.lane.b32.xlu0 %v122, 112
  %v1370 = vpop.permute.xlu0 %1369
  %1371 = vrot.lane.b32.xlu0 %v122, 80
  %v1372 = vpop.permute.xlu0 %1371
  %v1373 = vsel %vm199, %v1370, 0
  %v1375 = vsel %vm199, %v1372, 0
  %1377 = vmatpush.xpose.msra.mxu0 0.0
  %1378 = vmatpush.xpose.msra.mxu0 0.0
  %1379 = vmatpush.xpose.msra.mxu0 0.0
  %1380 = vmatpush.xpose.msra.mxu0 0.0
  %1381 = vmatpush.xpose.msra.mxu0 0.0
  %1382 = vmatpush.xpose.msra.mxu0 0.0
  %1383 = vmatpush.xpose.msra.mxu0 0.0
  %1384 = vmatpush.xpose.msra.mxu0 0.0
  %1385 = vmatpush.xpose.msra.mxu0 0.0
  %1386 = vmatpush.xpose.msra.mxu0 0.0
  %1387 = vmatpush.xpose.msra.mxu0 0.0
  %1388 = vmatpush.xpose.msra.mxu0 0.0
  %1389 = vmatpush.xpose.msra.mxu0 0.0
  %1390 = vmatpush.xpose.msra.mxu0 0.0
  %1391 = vmatpush.xpose.msra.mxu0 0.0
  %1392 = vmatpush.xpose.msra.mxu0 %v1375
  %1393 = vmatmul.f32.gmra.mxu0 %v1373
  %v1394 = vpop.f32.mrf.mxu0
  %v1395 = vadd.f32 %v195, %v1394
  %1396 = vdwg.mxu0
  %1397 = vrot.lane.b32.xlu0 %v125, 112
  %v1398 = vpop.permute.xlu0 %1397
  %1399 = vrot.lane.b32.xlu0 %v125, 80
  %v1400 = vpop.permute.xlu0 %1399
  %v1401 = vsel %vm199, %v1398, 0
  %v1403 = vsel %vm199, %v1400, 0
  %1405 = vmatpush.xpose.msra.mxu0 0.0
  %1406 = vmatpush.xpose.msra.mxu0 0.0
  %1407 = vmatpush.xpose.msra.mxu0 0.0
  %1408 = vmatpush.xpose.msra.mxu0 0.0
  %1409 = vmatpush.xpose.msra.mxu0 0.0
  %1410 = vmatpush.xpose.msra.mxu0 0.0
  %1411 = vmatpush.xpose.msra.mxu0 0.0
  %1412 = vmatpush.xpose.msra.mxu0 0.0
  %1413 = vmatpush.xpose.msra.mxu0 0.0
  %1414 = vmatpush.xpose.msra.mxu0 0.0
  %1415 = vmatpush.xpose.msra.mxu0 0.0
  %1416 = vmatpush.xpose.msra.mxu0 0.0
  %1417 = vmatpush.xpose.msra.mxu0 0.0
  %1418 = vmatpush.xpose.msra.mxu0 0.0
  %1419 = vmatpush.xpose.msra.mxu0 0.0
  %1420 = vmatpush.xpose.msra.mxu0 %v1403
  %1421 = vmatmul.f32.gmra.mxu0 %v1401
  %v1422 = vpop.f32.mrf.mxu0
  %v1423 = vadd.f32 %v195, %v1422
  %1424 = vdwg.mxu0
  %1425 = vrot.lane.b32.xlu0 %v127, 112
  %v1426 = vpop.permute.xlu0 %1425
  %1427 = vrot.lane.b32.xlu0 %v127, 80
  %v1428 = vpop.permute.xlu0 %1427
  %v1429 = vsel %vm199, %v1426, 0
  %v1431 = vsel %vm199, %v1428, 0
  %1433 = vmatpush.xpose.msra.mxu0 0.0
  %1434 = vmatpush.xpose.msra.mxu0 0.0
  %1435 = vmatpush.xpose.msra.mxu0 0.0
  %1436 = vmatpush.xpose.msra.mxu0 0.0
  %1437 = vmatpush.xpose.msra.mxu0 0.0
  %1438 = vmatpush.xpose.msra.mxu0 0.0
  %1439 = vmatpush.xpose.msra.mxu0 0.0
  %1440 = vmatpush.xpose.msra.mxu0 0.0
  %1441 = vmatpush.xpose.msra.mxu0 0.0
  %1442 = vmatpush.xpose.msra.mxu0 0.0
  %1443 = vmatpush.xpose.msra.mxu0 0.0
  %1444 = vmatpush.xpose.msra.mxu0 0.0
  %1445 = vmatpush.xpose.msra.mxu0 0.0
  %1446 = vmatpush.xpose.msra.mxu0 0.0
  %1447 = vmatpush.xpose.msra.mxu0 0.0
  %1448 = vmatpush.xpose.msra.mxu0 %v1431
  %1449 = vmatmul.f32.gmra.mxu0 %v1429
  %v1450 = vpop.f32.mrf.mxu0
  %v1451 = vadd.f32 %v195, %v1450
  %1452 = vdwg.mxu0
  %v1453 = vsel %vm199, %v1255, -inf
  %1454 = vmax.xlane.f32.xlu0 %v1453
  %v1455 = vpop.xlane.xlu0 %1454
  %v1456 = vsel %vm199, %v1283, -inf
  %1457 = vmax.xlane.f32.xlu0 %v1456
  %v1458 = vpop.xlane.xlu0 %1457
  %v1459 = vsel %vm199, %v1311, -inf
  %1460 = vmax.xlane.f32.xlu0 %v1459
  %v1461 = vpop.xlane.xlu0 %1460
  %v1462 = vsel %vm199, %v1339, -inf
  %1463 = vmax.xlane.f32.xlu0 %v1462
  %v1464 = vpop.xlane.xlu0 %1463
  %v1465 = vsel %vm199, %v1367, -inf
  %1466 = vmax.xlane.f32.xlu0 %v1465
  %v1467 = vpop.xlane.xlu0 %1466
  %v1468 = vsel %vm199, %v1395, -inf
  %1469 = vmax.xlane.f32.xlu0 %v1468
  %v1470 = vpop.xlane.xlu0 %1469
  %v1471 = vsel %vm199, %v1423, -inf
  %1472 = vmax.xlane.f32.xlu0 %v1471
  %v1473 = vpop.xlane.xlu0 %1472
  %v1474 = vsel %vm199, %v1451, -inf
  %1475 = vmax.xlane.f32.xlu0 %v1474
  %v1476 = vpop.xlane.xlu0 %1475
  %v1477 = vsub.f32 %v1255, %v1455
  %v1478 = vsub.f32 %v1283, %v1458
  %v1479 = vsub.f32 %v1311, %v1461
  %v1480 = vsub.f32 %v1339, %v1464
  %v1481 = vsub.f32 %v1367, %v1467
  %v1482 = vsub.f32 %v1395, %v1470
  %v1483 = vsub.f32 %v1423, %v1473
  %v1484 = vsub.f32 %v1451, %v1476
  %v1485 = vmul.f32 %v1477, 1.442695
  %v1486 = vpow.pop %v1485
  %v1487 = vmul.f32 %v1478, 1.442695
  %v1488 = vpow.pop %v1487
  %v1489 = vmul.f32 %v1479, 1.442695
  %v1490 = vpow.pop %v1489
  %v1491 = vmul.f32 %v1480, 1.442695
  %v1492 = vpow.pop %v1491
  %v1493 = vmul.f32 %v1481, 1.442695
  %v1494 = vpow.pop %v1493
  %v1495 = vmul.f32 %v1482, 1.442695
  %v1496 = vpow.pop %v1495
  %v1497 = vmul.f32 %v1483, 1.442695
  %v1498 = vpow.pop %v1497
  %v1499 = vmul.f32 %v1484, 1.442695
  %v1500 = vpow.pop %v1499
  %v1501 = vsel %vm199, %v1486, 0.0
  %1502 = vadd.xlane.f32.xlu0 %v1501
  %v1503 = vpop.xlane.xlu0 %1502
  %v1504 = vsel %vm199, %v1488, 0.0
  %1505 = vadd.xlane.f32.xlu0 %v1504
  %v1506 = vpop.xlane.xlu0 %1505
  %v1507 = vsel %vm199, %v1490, 0.0
  %1508 = vadd.xlane.f32.xlu0 %v1507
  %v1509 = vpop.xlane.xlu0 %1508
  %v1510 = vsel %vm199, %v1492, 0.0
  %1511 = vadd.xlane.f32.xlu0 %v1510
  %v1512 = vpop.xlane.xlu0 %1511
  %v1513 = vsel %vm199, %v1494, 0.0
  %1514 = vadd.xlane.f32.xlu0 %v1513
  %v1515 = vpop.xlane.xlu0 %1514
  %v1516 = vsel %vm199, %v1496, 0.0
  %1517 = vadd.xlane.f32.xlu0 %v1516
  %v1518 = vpop.xlane.xlu0 %1517
  %v1519 = vsel %vm199, %v1498, 0.0
  %1520 = vadd.xlane.f32.xlu0 %v1519
  %v1521 = vpop.xlane.xlu0 %1520
  %v1522 = vsel %vm199, %v1500, 0.0
  %1523 = vadd.xlane.f32.xlu0 %v1522
  %v1524 = vpop.xlane.xlu0 %1523
  %v1525 = vrcp.pop %v1503
  %v1526 = vrcp.pop %v1506
  %v1527 = vrcp.pop %v1509
  %v1528 = vrcp.pop %v1512
  %v1529 = vrcp.pop %v1515
  %v1530 = vrcp.pop %v1518
  %v1531 = vrcp.pop %v1521
  %v1532 = vrcp.pop %v1524
  %v1533 = vmul.f32 %v1486, %v1525
  %v1534 = vmul.f32 %v1488, %v1526
  %v1535 = vmul.f32 %v1490, %v1527
  %v1536 = vmul.f32 %v1492, %v1528
  %v1537 = vmul.f32 %v1494, %v1529
  %v1538 = vmul.f32 %v1496, %v1530
  %v1539 = vmul.f32 %v1498, %v1531
  %v1540 = vmul.f32 %v1500, %v1532
  %1541 = vrot.lane.b32.xlu0 %v110, 48
  %v1542 = vpop.permute.xlu0 %1541
  %v1545 = vsel %vm199, %v1533, 0
  %1547 = vmatpush.msra.mxu0 0.0
  %1548 = vmatpush.msra.mxu0 0.0
  %1549 = vmatpush.msra.mxu0 0.0
  %1550 = vmatpush.msra.mxu0 0.0
  %1551 = vmatpush.msra.mxu0 0.0
  %1552 = vmatpush.msra.mxu0 0.0
  %1553 = vmatpush.msra.mxu0 0.0
  %1554 = vmatpush.msra.mxu0 0.0
  %1555 = vmatpush.msra.mxu0 0.0
  %1556 = vmatpush.msra.mxu0 0.0
  %1557 = vmatpush.msra.mxu0 0.0
  %1558 = vmatpush.msra.mxu0 0.0
  %1559 = vmatpush.msra.mxu0 0.0
  %1560 = vmatpush.msra.mxu0 0.0
  %1561 = vmatpush.msra.mxu0 0.0
  %1562 = vmatpush.msra.mxu0 %v1542
  %1563 = vmatmul.f32.gmra.mxu0 %v1545
  %v1564 = vpop.f32.mrf.mxu0
  %v1565 = vadd.f32 0.0, %v1564
  %1566 = vdwg.mxu0
  %1567 = vrot.lane.b32.xlu0 %v112, 48
  %v1568 = vpop.permute.xlu0 %1567
  %v1571 = vsel %vm199, %v1534, 0
  %1573 = vmatpush.msra.mxu0 0.0
  %1574 = vmatpush.msra.mxu0 0.0
  %1575 = vmatpush.msra.mxu0 0.0
  %1576 = vmatpush.msra.mxu0 0.0
  %1577 = vmatpush.msra.mxu0 0.0
  %1578 = vmatpush.msra.mxu0 0.0
  %1579 = vmatpush.msra.mxu0 0.0
  %1580 = vmatpush.msra.mxu0 0.0
  %1581 = vmatpush.msra.mxu0 0.0
  %1582 = vmatpush.msra.mxu0 0.0
  %1583 = vmatpush.msra.mxu0 0.0
  %1584 = vmatpush.msra.mxu0 0.0
  %1585 = vmatpush.msra.mxu0 0.0
  %1586 = vmatpush.msra.mxu0 0.0
  %1587 = vmatpush.msra.mxu0 0.0
  %1588 = vmatpush.msra.mxu0 %v1568
  %1589 = vmatmul.f32.gmra.mxu0 %v1571
  %v1590 = vpop.f32.mrf.mxu0
  %v1591 = vadd.f32 0.0, %v1590
  %1592 = vdwg.mxu0
  %1593 = vrot.lane.b32.xlu0 %v115, 48
  %v1594 = vpop.permute.xlu0 %1593
  %v1597 = vsel %vm199, %v1535, 0
  %1599 = vmatpush.msra.mxu0 0.0
  %1600 = vmatpush.msra.mxu0 0.0
  %1601 = vmatpush.msra.mxu0 0.0
  %1602 = vmatpush.msra.mxu0 0.0
  %1603 = vmatpush.msra.mxu0 0.0
  %1604 = vmatpush.msra.mxu0 0.0
  %1605 = vmatpush.msra.mxu0 0.0
  %1606 = vmatpush.msra.mxu0 0.0
  %1607 = vmatpush.msra.mxu0 0.0
  %1608 = vmatpush.msra.mxu0 0.0
  %1609 = vmatpush.msra.mxu0 0.0
  %1610 = vmatpush.msra.mxu0 0.0
  %1611 = vmatpush.msra.mxu0 0.0
  %1612 = vmatpush.msra.mxu0 0.0
  %1613 = vmatpush.msra.mxu0 0.0
  %1614 = vmatpush.msra.mxu0 %v1594
  %1615 = vmatmul.f32.gmra.mxu0 %v1597
  %v1616 = vpop.f32.mrf.mxu0
  %v1617 = vadd.f32 0.0, %v1616
  %1618 = vdwg.mxu0
  %1619 = vrot.lane.b32.xlu0 %v117, 48
  %v1620 = vpop.permute.xlu0 %1619
  %v1623 = vsel %vm199, %v1536, 0
  %1625 = vmatpush.msra.mxu0 0.0
  %1626 = vmatpush.msra.mxu0 0.0
  %1627 = vmatpush.msra.mxu0 0.0
  %1628 = vmatpush.msra.mxu0 0.0
  %1629 = vmatpush.msra.mxu0 0.0
  %1630 = vmatpush.msra.mxu0 0.0
  %1631 = vmatpush.msra.mxu0 0.0
  %1632 = vmatpush.msra.mxu0 0.0
  %1633 = vmatpush.msra.mxu0 0.0
  %1634 = vmatpush.msra.mxu0 0.0
  %1635 = vmatpush.msra.mxu0 0.0
  %1636 = vmatpush.msra.mxu0 0.0
  %1637 = vmatpush.msra.mxu0 0.0
  %1638 = vmatpush.msra.mxu0 0.0
  %1639 = vmatpush.msra.mxu0 0.0
  %1640 = vmatpush.msra.mxu0 %v1620
  %1641 = vmatmul.f32.gmra.mxu0 %v1623
  %v1642 = vpop.f32.mrf.mxu0
  %v1643 = vadd.f32 0.0, %v1642
  %1644 = vdwg.mxu0
  %1645 = vrot.lane.b32.xlu0 %v120, 48
  %v1646 = vpop.permute.xlu0 %1645
  %v1649 = vsel %vm199, %v1537, 0
  %1651 = vmatpush.msra.mxu0 0.0
  %1652 = vmatpush.msra.mxu0 0.0
  %1653 = vmatpush.msra.mxu0 0.0
  %1654 = vmatpush.msra.mxu0 0.0
  %1655 = vmatpush.msra.mxu0 0.0
  %1656 = vmatpush.msra.mxu0 0.0
  %1657 = vmatpush.msra.mxu0 0.0
  %1658 = vmatpush.msra.mxu0 0.0
  %1659 = vmatpush.msra.mxu0 0.0
  %1660 = vmatpush.msra.mxu0 0.0
  %1661 = vmatpush.msra.mxu0 0.0
  %1662 = vmatpush.msra.mxu0 0.0
  %1663 = vmatpush.msra.mxu0 0.0
  %1664 = vmatpush.msra.mxu0 0.0
  %1665 = vmatpush.msra.mxu0 0.0
  %1666 = vmatpush.msra.mxu0 %v1646
  %1667 = vmatmul.f32.gmra.mxu0 %v1649
  %v1668 = vpop.f32.mrf.mxu0
  %v1669 = vadd.f32 0.0, %v1668
  %1670 = vdwg.mxu0
  %1671 = vrot.lane.b32.xlu0 %v122, 48
  %v1672 = vpop.permute.xlu0 %1671
  %v1675 = vsel %vm199, %v1538, 0
  %1677 = vmatpush.msra.mxu0 0.0
  %1678 = vmatpush.msra.mxu0 0.0
  %1679 = vmatpush.msra.mxu0 0.0
  %1680 = vmatpush.msra.mxu0 0.0
  %1681 = vmatpush.msra.mxu0 0.0
  %1682 = vmatpush.msra.mxu0 0.0
  %1683 = vmatpush.msra.mxu0 0.0
  %1684 = vmatpush.msra.mxu0 0.0
  %1685 = vmatpush.msra.mxu0 0.0
  %1686 = vmatpush.msra.mxu0 0.0
  %1687 = vmatpush.msra.mxu0 0.0
  %1688 = vmatpush.msra.mxu0 0.0
  %1689 = vmatpush.msra.mxu0 0.0
  %1690 = vmatpush.msra.mxu0 0.0
  %1691 = vmatpush.msra.mxu0 0.0
  %1692 = vmatpush.msra.mxu0 %v1672
  %1693 = vmatmul.f32.gmra.mxu0 %v1675
  %v1694 = vpop.f32.mrf.mxu0
  %v1695 = vadd.f32 0.0, %v1694
  %1696 = vdwg.mxu0
  %1697 = vrot.lane.b32.xlu0 %v125, 48
  %v1698 = vpop.permute.xlu0 %1697
  %v1701 = vsel %vm199, %v1539, 0
  %1703 = vmatpush.msra.mxu0 0.0
  %1704 = vmatpush.msra.mxu0 0.0
  %1705 = vmatpush.msra.mxu0 0.0
  %1706 = vmatpush.msra.mxu0 0.0
  %1707 = vmatpush.msra.mxu0 0.0
  %1708 = vmatpush.msra.mxu0 0.0
  %1709 = vmatpush.msra.mxu0 0.0
  %1710 = vmatpush.msra.mxu0 0.0
  %1711 = vmatpush.msra.mxu0 0.0
  %1712 = vmatpush.msra.mxu0 0.0
  %1713 = vmatpush.msra.mxu0 0.0
  %1714 = vmatpush.msra.mxu0 0.0
  %1715 = vmatpush.msra.mxu0 0.0
  %1716 = vmatpush.msra.mxu0 0.0
  %1717 = vmatpush.msra.mxu0 0.0
  %1718 = vmatpush.msra.mxu0 %v1698
  %1719 = vmatmul.f32.gmra.mxu0 %v1701
  %v1720 = vpop.f32.mrf.mxu0
  %v1721 = vadd.f32 0.0, %v1720
  %1722 = vdwg.mxu0
  %1723 = vrot.lane.b32.xlu0 %v127, 48
  %v1724 = vpop.permute.xlu0 %1723
  %v1727 = vsel %vm199, %v1540, 0
  %1729 = vmatpush.msra.mxu0 0.0
  %1730 = vmatpush.msra.mxu0 0.0
  %1731 = vmatpush.msra.mxu0 0.0
  %1732 = vmatpush.msra.mxu0 0.0
  %1733 = vmatpush.msra.mxu0 0.0
  %1734 = vmatpush.msra.mxu0 0.0
  %1735 = vmatpush.msra.mxu0 0.0
  %1736 = vmatpush.msra.mxu0 0.0
  %1737 = vmatpush.msra.mxu0 0.0
  %1738 = vmatpush.msra.mxu0 0.0
  %1739 = vmatpush.msra.mxu0 0.0
  %1740 = vmatpush.msra.mxu0 0.0
  %1741 = vmatpush.msra.mxu0 0.0
  %1742 = vmatpush.msra.mxu0 0.0
  %1743 = vmatpush.msra.mxu0 0.0
  %1744 = vmatpush.msra.mxu0 %v1724
  %1745 = vmatmul.f32.gmra.mxu0 %v1727
  %v1746 = vpop.f32.mrf.mxu0
  %v1747 = vadd.f32 0.0, %v1746
  %1748 = vdwg.mxu0
  %1749 = vrot.lane.b32.xlu0 %v110, 104
  %v1750 = vpop.permute.xlu0 %1749
  %1751 = vrot.lane.b32.xlu0 %v110, 72
  %v1752 = vpop.permute.xlu0 %1751
  %v1753 = vsel %vm199, %v1750, 0
  %v1755 = vsel %vm199, %v1752, 0
  %1757 = vmatpush.xpose.msra.mxu0 0.0
  %1758 = vmatpush.xpose.msra.mxu0 0.0
  %1759 = vmatpush.xpose.msra.mxu0 0.0
  %1760 = vmatpush.xpose.msra.mxu0 0.0
  %1761 = vmatpush.xpose.msra.mxu0 0.0
  %1762 = vmatpush.xpose.msra.mxu0 0.0
  %1763 = vmatpush.xpose.msra.mxu0 0.0
  %1764 = vmatpush.xpose.msra.mxu0 0.0
  %1765 = vmatpush.xpose.msra.mxu0 0.0
  %1766 = vmatpush.xpose.msra.mxu0 0.0
  %1767 = vmatpush.xpose.msra.mxu0 0.0
  %1768 = vmatpush.xpose.msra.mxu0 0.0
  %1769 = vmatpush.xpose.msra.mxu0 0.0
  %1770 = vmatpush.xpose.msra.mxu0 0.0
  %1771 = vmatpush.xpose.msra.mxu0 0.0
  %1772 = vmatpush.xpose.msra.mxu0 %v1755
  %1773 = vmatmul.f32.gmra.mxu0 %v1753
  %v1774 = vpop.f32.mrf.mxu0
  %v1775 = vadd.f32 %v195, %v1774
  %1776 = vdwg.mxu0
  %1777 = vrot.lane.b32.xlu0 %v112, 104
  %v1778 = vpop.permute.xlu0 %1777
  %1779 = vrot.lane.b32.xlu0 %v112, 72
  %v1780 = vpop.permute.xlu0 %1779
  %v1781 = vsel %vm199, %v1778, 0
  %v1783 = vsel %vm199, %v1780, 0
  %1785 = vmatpush.xpose.msra.mxu0 0.0
  %1786 = vmatpush.xpose.msra.mxu0 0.0
  %1787 = vmatpush.xpose.msra.mxu0 0.0
  %1788 = vmatpush.xpose.msra.mxu0 0.0
  %1789 = vmatpush.xpose.msra.mxu0 0.0
  %1790 = vmatpush.xpose.msra.mxu0 0.0
  %1791 = vmatpush.xpose.msra.mxu0 0.0
  %1792 = vmatpush.xpose.msra.mxu0 0.0
  %1793 = vmatpush.xpose.msra.mxu0 0.0
  %1794 = vmatpush.xpose.msra.mxu0 0.0
  %1795 = vmatpush.xpose.msra.mxu0 0.0
  %1796 = vmatpush.xpose.msra.mxu0 0.0
  %1797 = vmatpush.xpose.msra.mxu0 0.0
  %1798 = vmatpush.xpose.msra.mxu0 0.0
  %1799 = vmatpush.xpose.msra.mxu0 0.0
  %1800 = vmatpush.xpose.msra.mxu0 %v1783
  %1801 = vmatmul.f32.gmra.mxu0 %v1781
  %v1802 = vpop.f32.mrf.mxu0
  %v1803 = vadd.f32 %v195, %v1802
  %1804 = vdwg.mxu0
  %1805 = vrot.lane.b32.xlu0 %v115, 104
  %v1806 = vpop.permute.xlu0 %1805
  %1807 = vrot.lane.b32.xlu0 %v115, 72
  %v1808 = vpop.permute.xlu0 %1807
  %v1809 = vsel %vm199, %v1806, 0
  %v1811 = vsel %vm199, %v1808, 0
  %1813 = vmatpush.xpose.msra.mxu0 0.0
  %1814 = vmatpush.xpose.msra.mxu0 0.0
  %1815 = vmatpush.xpose.msra.mxu0 0.0
  %1816 = vmatpush.xpose.msra.mxu0 0.0
  %1817 = vmatpush.xpose.msra.mxu0 0.0
  %1818 = vmatpush.xpose.msra.mxu0 0.0
  %1819 = vmatpush.xpose.msra.mxu0 0.0
  %1820 = vmatpush.xpose.msra.mxu0 0.0
  %1821 = vmatpush.xpose.msra.mxu0 0.0
  %1822 = vmatpush.xpose.msra.mxu0 0.0
  %1823 = vmatpush.xpose.msra.mxu0 0.0
  %1824 = vmatpush.xpose.msra.mxu0 0.0
  %1825 = vmatpush.xpose.msra.mxu0 0.0
  %1826 = vmatpush.xpose.msra.mxu0 0.0
  %1827 = vmatpush.xpose.msra.mxu0 0.0
  %1828 = vmatpush.xpose.msra.mxu0 %v1811
  %1829 = vmatmul.f32.gmra.mxu0 %v1809
  %v1830 = vpop.f32.mrf.mxu0
  %v1831 = vadd.f32 %v195, %v1830
  %1832 = vdwg.mxu0
  %1833 = vrot.lane.b32.xlu0 %v117, 104
  %v1834 = vpop.permute.xlu0 %1833
  %1835 = vrot.lane.b32.xlu0 %v117, 72
  %v1836 = vpop.permute.xlu0 %1835
  %v1837 = vsel %vm199, %v1834, 0
  %v1839 = vsel %vm199, %v1836, 0
  %1841 = vmatpush.xpose.msra.mxu0 0.0
  %1842 = vmatpush.xpose.msra.mxu0 0.0
  %1843 = vmatpush.xpose.msra.mxu0 0.0
  %1844 = vmatpush.xpose.msra.mxu0 0.0
  %1845 = vmatpush.xpose.msra.mxu0 0.0
  %1846 = vmatpush.xpose.msra.mxu0 0.0
  %1847 = vmatpush.xpose.msra.mxu0 0.0
  %1848 = vmatpush.xpose.msra.mxu0 0.0
  %1849 = vmatpush.xpose.msra.mxu0 0.0
  %1850 = vmatpush.xpose.msra.mxu0 0.0
  %1851 = vmatpush.xpose.msra.mxu0 0.0
  %1852 = vmatpush.xpose.msra.mxu0 0.0
  %1853 = vmatpush.xpose.msra.mxu0 0.0
  %1854 = vmatpush.xpose.msra.mxu0 0.0
  %1855 = vmatpush.xpose.msra.mxu0 0.0
  %1856 = vmatpush.xpose.msra.mxu0 %v1839
  %1857 = vmatmul.f32.gmra.mxu0 %v1837
  %v1858 = vpop.f32.mrf.mxu0
  %v1859 = vadd.f32 %v195, %v1858
  %1860 = vdwg.mxu0
  %1861 = vrot.lane.b32.xlu0 %v120, 104
  %v1862 = vpop.permute.xlu0 %1861
  %1863 = vrot.lane.b32.xlu0 %v120, 72
  %v1864 = vpop.permute.xlu0 %1863
  %v1865 = vsel %vm199, %v1862, 0
  %v1867 = vsel %vm199, %v1864, 0
  %1869 = vmatpush.xpose.msra.mxu0 0.0
  %1870 = vmatpush.xpose.msra.mxu0 0.0
  %1871 = vmatpush.xpose.msra.mxu0 0.0
  %1872 = vmatpush.xpose.msra.mxu0 0.0
  %1873 = vmatpush.xpose.msra.mxu0 0.0
  %1874 = vmatpush.xpose.msra.mxu0 0.0
  %1875 = vmatpush.xpose.msra.mxu0 0.0
  %1876 = vmatpush.xpose.msra.mxu0 0.0
  %1877 = vmatpush.xpose.msra.mxu0 0.0
  %1878 = vmatpush.xpose.msra.mxu0 0.0
  %1879 = vmatpush.xpose.msra.mxu0 0.0
  %1880 = vmatpush.xpose.msra.mxu0 0.0
  %1881 = vmatpush.xpose.msra.mxu0 0.0
  %1882 = vmatpush.xpose.msra.mxu0 0.0
  %1883 = vmatpush.xpose.msra.mxu0 0.0
  %1884 = vmatpush.xpose.msra.mxu0 %v1867
  %1885 = vmatmul.f32.gmra.mxu0 %v1865
  %v1886 = vpop.f32.mrf.mxu0
  %v1887 = vadd.f32 %v195, %v1886
  %1888 = vdwg.mxu0
  %1889 = vrot.lane.b32.xlu0 %v122, 104
  %v1890 = vpop.permute.xlu0 %1889
  %1891 = vrot.lane.b32.xlu0 %v122, 72
  %v1892 = vpop.permute.xlu0 %1891
  %v1893 = vsel %vm199, %v1890, 0
  %v1895 = vsel %vm199, %v1892, 0
  %1897 = vmatpush.xpose.msra.mxu0 0.0
  %1898 = vmatpush.xpose.msra.mxu0 0.0
  %1899 = vmatpush.xpose.msra.mxu0 0.0
  %1900 = vmatpush.xpose.msra.mxu0 0.0
  %1901 = vmatpush.xpose.msra.mxu0 0.0
  %1902 = vmatpush.xpose.msra.mxu0 0.0
  %1903 = vmatpush.xpose.msra.mxu0 0.0
  %1904 = vmatpush.xpose.msra.mxu0 0.0
  %1905 = vmatpush.xpose.msra.mxu0 0.0
  %1906 = vmatpush.xpose.msra.mxu0 0.0
  %1907 = vmatpush.xpose.msra.mxu0 0.0
  %1908 = vmatpush.xpose.msra.mxu0 0.0
  %1909 = vmatpush.xpose.msra.mxu0 0.0
  %1910 = vmatpush.xpose.msra.mxu0 0.0
  %1911 = vmatpush.xpose.msra.mxu0 0.0
  %1912 = vmatpush.xpose.msra.mxu0 %v1895
  %1913 = vmatmul.f32.gmra.mxu0 %v1893
  %v1914 = vpop.f32.mrf.mxu0
  %v1915 = vadd.f32 %v195, %v1914
  %1916 = vdwg.mxu0
  %1917 = vrot.lane.b32.xlu0 %v125, 104
  %v1918 = vpop.permute.xlu0 %1917
  %1919 = vrot.lane.b32.xlu0 %v125, 72
  %v1920 = vpop.permute.xlu0 %1919
  %v1921 = vsel %vm199, %v1918, 0
  %v1923 = vsel %vm199, %v1920, 0
  %1925 = vmatpush.xpose.msra.mxu0 0.0
  %1926 = vmatpush.xpose.msra.mxu0 0.0
  %1927 = vmatpush.xpose.msra.mxu0 0.0
  %1928 = vmatpush.xpose.msra.mxu0 0.0
  %1929 = vmatpush.xpose.msra.mxu0 0.0
  %1930 = vmatpush.xpose.msra.mxu0 0.0
  %1931 = vmatpush.xpose.msra.mxu0 0.0
  %1932 = vmatpush.xpose.msra.mxu0 0.0
  %1933 = vmatpush.xpose.msra.mxu0 0.0
  %1934 = vmatpush.xpose.msra.mxu0 0.0
  %1935 = vmatpush.xpose.msra.mxu0 0.0
  %1936 = vmatpush.xpose.msra.mxu0 0.0
  %1937 = vmatpush.xpose.msra.mxu0 0.0
  %1938 = vmatpush.xpose.msra.mxu0 0.0
  %1939 = vmatpush.xpose.msra.mxu0 0.0
  %1940 = vmatpush.xpose.msra.mxu0 %v1923
  %1941 = vmatmul.f32.gmra.mxu0 %v1921
  %v1942 = vpop.f32.mrf.mxu0
  %v1943 = vadd.f32 %v195, %v1942
  %1944 = vdwg.mxu0
  %1945 = vrot.lane.b32.xlu0 %v127, 104
  %v1946 = vpop.permute.xlu0 %1945
  %1947 = vrot.lane.b32.xlu0 %v127, 72
  %v1948 = vpop.permute.xlu0 %1947
  %v1949 = vsel %vm199, %v1946, 0
  %v1951 = vsel %vm199, %v1948, 0
  %1953 = vmatpush.xpose.msra.mxu0 0.0
  %1954 = vmatpush.xpose.msra.mxu0 0.0
  %1955 = vmatpush.xpose.msra.mxu0 0.0
  %1956 = vmatpush.xpose.msra.mxu0 0.0
  %1957 = vmatpush.xpose.msra.mxu0 0.0
  %1958 = vmatpush.xpose.msra.mxu0 0.0
  %1959 = vmatpush.xpose.msra.mxu0 0.0
  %1960 = vmatpush.xpose.msra.mxu0 0.0
  %1961 = vmatpush.xpose.msra.mxu0 0.0
  %1962 = vmatpush.xpose.msra.mxu0 0.0
  %1963 = vmatpush.xpose.msra.mxu0 0.0
  %1964 = vmatpush.xpose.msra.mxu0 0.0
  %1965 = vmatpush.xpose.msra.mxu0 0.0
  %1966 = vmatpush.xpose.msra.mxu0 0.0
  %1967 = vmatpush.xpose.msra.mxu0 0.0
  %1968 = vmatpush.xpose.msra.mxu0 %v1951
  %1969 = vmatmul.f32.gmra.mxu0 %v1949
  %v1970 = vpop.f32.mrf.mxu0
  %v1971 = vadd.f32 %v195, %v1970
  %1972 = vdwg.mxu0
  %v1973 = vsel %vm199, %v1775, -inf
  %1974 = vmax.xlane.f32.xlu0 %v1973
  %v1975 = vpop.xlane.xlu0 %1974
  %v1976 = vsel %vm199, %v1803, -inf
  %1977 = vmax.xlane.f32.xlu0 %v1976
  %v1978 = vpop.xlane.xlu0 %1977
  %v1979 = vsel %vm199, %v1831, -inf
  %1980 = vmax.xlane.f32.xlu0 %v1979
  %v1981 = vpop.xlane.xlu0 %1980
  %v1982 = vsel %vm199, %v1859, -inf
  %1983 = vmax.xlane.f32.xlu0 %v1982
  %v1984 = vpop.xlane.xlu0 %1983
  %v1985 = vsel %vm199, %v1887, -inf
  %1986 = vmax.xlane.f32.xlu0 %v1985
  %v1987 = vpop.xlane.xlu0 %1986
  %v1988 = vsel %vm199, %v1915, -inf
  %1989 = vmax.xlane.f32.xlu0 %v1988
  %v1990 = vpop.xlane.xlu0 %1989
  %v1991 = vsel %vm199, %v1943, -inf
  %1992 = vmax.xlane.f32.xlu0 %v1991
  %v1993 = vpop.xlane.xlu0 %1992
  %v1994 = vsel %vm199, %v1971, -inf
  %1995 = vmax.xlane.f32.xlu0 %v1994
  %v1996 = vpop.xlane.xlu0 %1995
  %v1997 = vsub.f32 %v1775, %v1975
  %v1998 = vsub.f32 %v1803, %v1978
  %v1999 = vsub.f32 %v1831, %v1981
  %v2000 = vsub.f32 %v1859, %v1984
  %v2001 = vsub.f32 %v1887, %v1987
  %v2002 = vsub.f32 %v1915, %v1990
  %v2003 = vsub.f32 %v1943, %v1993
  %v2004 = vsub.f32 %v1971, %v1996
  %v2005 = vmul.f32 %v1997, 1.442695
  %v2006 = vpow.pop %v2005
  %v2007 = vmul.f32 %v1998, 1.442695
  %v2008 = vpow.pop %v2007
  %v2009 = vmul.f32 %v1999, 1.442695
  %v2010 = vpow.pop %v2009
  %v2011 = vmul.f32 %v2000, 1.442695
  %v2012 = vpow.pop %v2011
  %v2013 = vmul.f32 %v2001, 1.442695
  %v2014 = vpow.pop %v2013
  %v2015 = vmul.f32 %v2002, 1.442695
  %v2016 = vpow.pop %v2015
  %v2017 = vmul.f32 %v2003, 1.442695
  %v2018 = vpow.pop %v2017
  %v2019 = vmul.f32 %v2004, 1.442695
  %v2020 = vpow.pop %v2019
  %v2021 = vsel %vm199, %v2006, 0.0
  %2022 = vadd.xlane.f32.xlu0 %v2021
  %v2023 = vpop.xlane.xlu0 %2022
  %v2024 = vsel %vm199, %v2008, 0.0
  %2025 = vadd.xlane.f32.xlu0 %v2024
  %v2026 = vpop.xlane.xlu0 %2025
  %v2027 = vsel %vm199, %v2010, 0.0
  %2028 = vadd.xlane.f32.xlu0 %v2027
  %v2029 = vpop.xlane.xlu0 %2028
  %v2030 = vsel %vm199, %v2012, 0.0
  %2031 = vadd.xlane.f32.xlu0 %v2030
  %v2032 = vpop.xlane.xlu0 %2031
  %v2033 = vsel %vm199, %v2014, 0.0
  %2034 = vadd.xlane.f32.xlu0 %v2033
  %v2035 = vpop.xlane.xlu0 %2034
  %v2036 = vsel %vm199, %v2016, 0.0
  %2037 = vadd.xlane.f32.xlu0 %v2036
  %v2038 = vpop.xlane.xlu0 %2037
  %v2039 = vsel %vm199, %v2018, 0.0
  %2040 = vadd.xlane.f32.xlu0 %v2039
  %v2041 = vpop.xlane.xlu0 %2040
  %v2042 = vsel %vm199, %v2020, 0.0
  %2043 = vadd.xlane.f32.xlu0 %v2042
  %v2044 = vpop.xlane.xlu0 %2043
  %v2045 = vrcp.pop %v2023
  %v2046 = vrcp.pop %v2026
  %v2047 = vrcp.pop %v2029
  %v2048 = vrcp.pop %v2032
  %v2049 = vrcp.pop %v2035
  %v2050 = vrcp.pop %v2038
  %v2051 = vrcp.pop %v2041
  %v2052 = vrcp.pop %v2044
  %v2053 = vmul.f32 %v2006, %v2045
  %v2054 = vmul.f32 %v2008, %v2046
  %v2055 = vmul.f32 %v2010, %v2047
  %v2056 = vmul.f32 %v2012, %v2048
  %v2057 = vmul.f32 %v2014, %v2049
  %v2058 = vmul.f32 %v2016, %v2050
  %v2059 = vmul.f32 %v2018, %v2051
  %v2060 = vmul.f32 %v2020, %v2052
  %2061 = vrot.lane.b32.xlu0 %v110, 40
  %v2062 = vpop.permute.xlu0 %2061
  %v2065 = vsel %vm199, %v2053, 0
  %2067 = vmatpush.msra.mxu0 0.0
  %2068 = vmatpush.msra.mxu0 0.0
  %2069 = vmatpush.msra.mxu0 0.0
  %2070 = vmatpush.msra.mxu0 0.0
  %2071 = vmatpush.msra.mxu0 0.0
  %2072 = vmatpush.msra.mxu0 0.0
  %2073 = vmatpush.msra.mxu0 0.0
  %2074 = vmatpush.msra.mxu0 0.0
  %2075 = vmatpush.msra.mxu0 0.0
  %2076 = vmatpush.msra.mxu0 0.0
  %2077 = vmatpush.msra.mxu0 0.0
  %2078 = vmatpush.msra.mxu0 0.0
  %2079 = vmatpush.msra.mxu0 0.0
  %2080 = vmatpush.msra.mxu0 0.0
  %2081 = vmatpush.msra.mxu0 0.0
  %2082 = vmatpush.msra.mxu0 %v2062
  %2083 = vmatmul.f32.gmra.mxu0 %v2065
  %v2084 = vpop.f32.mrf.mxu0
  %v2085 = vadd.f32 0.0, %v2084
  %2086 = vdwg.mxu0
  %2087 = vrot.lane.b32.xlu0 %v112, 40
  %v2088 = vpop.permute.xlu0 %2087
  %v2091 = vsel %vm199, %v2054, 0
  %2093 = vmatpush.msra.mxu0 0.0
  %2094 = vmatpush.msra.mxu0 0.0
  %2095 = vmatpush.msra.mxu0 0.0
  %2096 = vmatpush.msra.mxu0 0.0
  %2097 = vmatpush.msra.mxu0 0.0
  %2098 = vmatpush.msra.mxu0 0.0
  %2099 = vmatpush.msra.mxu0 0.0
  %2100 = vmatpush.msra.mxu0 0.0
  %2101 = vmatpush.msra.mxu0 0.0
  %2102 = vmatpush.msra.mxu0 0.0
  %2103 = vmatpush.msra.mxu0 0.0
  %2104 = vmatpush.msra.mxu0 0.0
  %2105 = vmatpush.msra.mxu0 0.0
  %2106 = vmatpush.msra.mxu0 0.0
  %2107 = vmatpush.msra.mxu0 0.0
  %2108 = vmatpush.msra.mxu0 %v2088
  %2109 = vmatmul.f32.gmra.mxu0 %v2091
  %v2110 = vpop.f32.mrf.mxu0
  %v2111 = vadd.f32 0.0, %v2110
  %2112 = vdwg.mxu0
  %2113 = vrot.lane.b32.xlu0 %v115, 40
  %v2114 = vpop.permute.xlu0 %2113
  %v2117 = vsel %vm199, %v2055, 0
  %2119 = vmatpush.msra.mxu0 0.0
  %2120 = vmatpush.msra.mxu0 0.0
  %2121 = vmatpush.msra.mxu0 0.0
  %2122 = vmatpush.msra.mxu0 0.0
  %2123 = vmatpush.msra.mxu0 0.0
  %2124 = vmatpush.msra.mxu0 0.0
  %2125 = vmatpush.msra.mxu0 0.0
  %2126 = vmatpush.msra.mxu0 0.0
  %2127 = vmatpush.msra.mxu0 0.0
  %2128 = vmatpush.msra.mxu0 0.0
  %2129 = vmatpush.msra.mxu0 0.0
  %2130 = vmatpush.msra.mxu0 0.0
  %2131 = vmatpush.msra.mxu0 0.0
  %2132 = vmatpush.msra.mxu0 0.0
  %2133 = vmatpush.msra.mxu0 0.0
  %2134 = vmatpush.msra.mxu0 %v2114
  %2135 = vmatmul.f32.gmra.mxu0 %v2117
  %v2136 = vpop.f32.mrf.mxu0
  %v2137 = vadd.f32 0.0, %v2136
  %2138 = vdwg.mxu0
  %2139 = vrot.lane.b32.xlu0 %v117, 40
  %v2140 = vpop.permute.xlu0 %2139
  %v2143 = vsel %vm199, %v2056, 0
  %2145 = vmatpush.msra.mxu0 0.0
  %2146 = vmatpush.msra.mxu0 0.0
  %2147 = vmatpush.msra.mxu0 0.0
  %2148 = vmatpush.msra.mxu0 0.0
  %2149 = vmatpush.msra.mxu0 0.0
  %2150 = vmatpush.msra.mxu0 0.0
  %2151 = vmatpush.msra.mxu0 0.0
  %2152 = vmatpush.msra.mxu0 0.0
  %2153 = vmatpush.msra.mxu0 0.0
  %2154 = vmatpush.msra.mxu0 0.0
  %2155 = vmatpush.msra.mxu0 0.0
  %2156 = vmatpush.msra.mxu0 0.0
  %2157 = vmatpush.msra.mxu0 0.0
  %2158 = vmatpush.msra.mxu0 0.0
  %2159 = vmatpush.msra.mxu0 0.0
  %2160 = vmatpush.msra.mxu0 %v2140
  %2161 = vmatmul.f32.gmra.mxu0 %v2143
  %v2162 = vpop.f32.mrf.mxu0
  %v2163 = vadd.f32 0.0, %v2162
  %2164 = vdwg.mxu0
  %2165 = vrot.lane.b32.xlu0 %v120, 40
  %v2166 = vpop.permute.xlu0 %2165
  %v2169 = vsel %vm199, %v2057, 0
  %2171 = vmatpush.msra.mxu0 0.0
  %2172 = vmatpush.msra.mxu0 0.0
  %2173 = vmatpush.msra.mxu0 0.0
  %2174 = vmatpush.msra.mxu0 0.0
  %2175 = vmatpush.msra.mxu0 0.0
  %2176 = vmatpush.msra.mxu0 0.0
  %2177 = vmatpush.msra.mxu0 0.0
  %2178 = vmatpush.msra.mxu0 0.0
  %2179 = vmatpush.msra.mxu0 0.0
  %2180 = vmatpush.msra.mxu0 0.0
  %2181 = vmatpush.msra.mxu0 0.0
  %2182 = vmatpush.msra.mxu0 0.0
  %2183 = vmatpush.msra.mxu0 0.0
  %2184 = vmatpush.msra.mxu0 0.0
  %2185 = vmatpush.msra.mxu0 0.0
  %2186 = vmatpush.msra.mxu0 %v2166
  %2187 = vmatmul.f32.gmra.mxu0 %v2169
  %v2188 = vpop.f32.mrf.mxu0
  %v2189 = vadd.f32 0.0, %v2188
  %2190 = vdwg.mxu0
  %2191 = vrot.lane.b32.xlu0 %v122, 40
  %v2192 = vpop.permute.xlu0 %2191
  %v2195 = vsel %vm199, %v2058, 0
  %2197 = vmatpush.msra.mxu0 0.0
  %2198 = vmatpush.msra.mxu0 0.0
  %2199 = vmatpush.msra.mxu0 0.0
  %2200 = vmatpush.msra.mxu0 0.0
  %2201 = vmatpush.msra.mxu0 0.0
  %2202 = vmatpush.msra.mxu0 0.0
  %2203 = vmatpush.msra.mxu0 0.0
  %2204 = vmatpush.msra.mxu0 0.0
  %2205 = vmatpush.msra.mxu0 0.0
  %2206 = vmatpush.msra.mxu0 0.0
  %2207 = vmatpush.msra.mxu0 0.0
  %2208 = vmatpush.msra.mxu0 0.0
  %2209 = vmatpush.msra.mxu0 0.0
  %2210 = vmatpush.msra.mxu0 0.0
  %2211 = vmatpush.msra.mxu0 0.0
  %2212 = vmatpush.msra.mxu0 %v2192
  %2213 = vmatmul.f32.gmra.mxu0 %v2195
  %v2214 = vpop.f32.mrf.mxu0
  %v2215 = vadd.f32 0.0, %v2214
  %2216 = vdwg.mxu0
  %2217 = vrot.lane.b32.xlu0 %v125, 40
  %v2218 = vpop.permute.xlu0 %2217
  %v2221 = vsel %vm199, %v2059, 0
  %2223 = vmatpush.msra.mxu0 0.0
  %2224 = vmatpush.msra.mxu0 0.0
  %2225 = vmatpush.msra.mxu0 0.0
  %2226 = vmatpush.msra.mxu0 0.0
  %2227 = vmatpush.msra.mxu0 0.0
  %2228 = vmatpush.msra.mxu0 0.0
  %2229 = vmatpush.msra.mxu0 0.0
  %2230 = vmatpush.msra.mxu0 0.0
  %2231 = vmatpush.msra.mxu0 0.0
  %2232 = vmatpush.msra.mxu0 0.0
  %2233 = vmatpush.msra.mxu0 0.0
  %2234 = vmatpush.msra.mxu0 0.0
  %2235 = vmatpush.msra.mxu0 0.0
  %2236 = vmatpush.msra.mxu0 0.0
  %2237 = vmatpush.msra.mxu0 0.0
  %2238 = vmatpush.msra.mxu0 %v2218
  %2239 = vmatmul.f32.gmra.mxu0 %v2221
  %v2240 = vpop.f32.mrf.mxu0
  %v2241 = vadd.f32 0.0, %v2240
  %2242 = vdwg.mxu0
  %2243 = vrot.lane.b32.xlu0 %v127, 40
  %v2244 = vpop.permute.xlu0 %2243
  %v2247 = vsel %vm199, %v2060, 0
  %2249 = vmatpush.msra.mxu0 0.0
  %2250 = vmatpush.msra.mxu0 0.0
  %2251 = vmatpush.msra.mxu0 0.0
  %2252 = vmatpush.msra.mxu0 0.0
  %2253 = vmatpush.msra.mxu0 0.0
  %2254 = vmatpush.msra.mxu0 0.0
  %2255 = vmatpush.msra.mxu0 0.0
  %2256 = vmatpush.msra.mxu0 0.0
  %2257 = vmatpush.msra.mxu0 0.0
  %2258 = vmatpush.msra.mxu0 0.0
  %2259 = vmatpush.msra.mxu0 0.0
  %2260 = vmatpush.msra.mxu0 0.0
  %2261 = vmatpush.msra.mxu0 0.0
  %2262 = vmatpush.msra.mxu0 0.0
  %2263 = vmatpush.msra.mxu0 0.0
  %2264 = vmatpush.msra.mxu0 %v2244
  %2265 = vmatmul.f32.gmra.mxu0 %v2247
  %v2266 = vpop.f32.mrf.mxu0
  %v2267 = vadd.f32 0.0, %v2266
  %2268 = vdwg.mxu0
  %2277 = vrot.lane.b32.xlu0 %v1045, 8
  %v2278 = vpop.permute.xlu0 %2277
  %2279 = vrot.lane.b32.xlu0 %v1071, 8
  %v2280 = vpop.permute.xlu0 %2279
  %2281 = vrot.lane.b32.xlu0 %v1097, 8
  %v2282 = vpop.permute.xlu0 %2281
  %2283 = vrot.lane.b32.xlu0 %v1123, 8
  %v2284 = vpop.permute.xlu0 %2283
  %2285 = vrot.lane.b32.xlu0 %v1149, 8
  %v2286 = vpop.permute.xlu0 %2285
  %2287 = vrot.lane.b32.xlu0 %v1175, 8
  %v2288 = vpop.permute.xlu0 %2287
  %2289 = vrot.lane.b32.xlu0 %v1201, 8
  %v2290 = vpop.permute.xlu0 %2289
  %2291 = vrot.lane.b32.xlu0 %v1227, 8
  %v2292 = vpop.permute.xlu0 %2291
  %2309 = vrot.lane.b32.xlu0 %v1565, 16
  %v2310 = vpop.permute.xlu0 %2309
  %2311 = vrot.lane.b32.xlu0 %v1591, 16
  %v2312 = vpop.permute.xlu0 %2311
  %2313 = vrot.lane.b32.xlu0 %v1617, 16
  %v2314 = vpop.permute.xlu0 %2313
  %2315 = vrot.lane.b32.xlu0 %v1643, 16
  %v2316 = vpop.permute.xlu0 %2315
  %2317 = vrot.lane.b32.xlu0 %v1669, 16
  %v2318 = vpop.permute.xlu0 %2317
  %2319 = vrot.lane.b32.xlu0 %v1695, 16
  %v2320 = vpop.permute.xlu0 %2319
  %2321 = vrot.lane.b32.xlu0 %v1721, 16
  %v2322 = vpop.permute.xlu0 %2321
  %2323 = vrot.lane.b32.xlu0 %v1747, 16
  %v2324 = vpop.permute.xlu0 %2323
  %2341 = vrot.lane.b32.xlu0 %v2085, 24
  %v2342 = vpop.permute.xlu0 %2341
  %2343 = vrot.lane.b32.xlu0 %v2111, 24
  %v2344 = vpop.permute.xlu0 %2343
  %2345 = vrot.lane.b32.xlu0 %v2137, 24
  %v2346 = vpop.permute.xlu0 %2345
  %2347 = vrot.lane.b32.xlu0 %v2163, 24
  %v2348 = vpop.permute.xlu0 %2347
  %2349 = vrot.lane.b32.xlu0 %v2189, 24
  %v2350 = vpop.permute.xlu0 %2349
  %2351 = vrot.lane.b32.xlu0 %v2215, 24
  %v2352 = vpop.permute.xlu0 %2351
  %2353 = vrot.lane.b32.xlu0 %v2241, 24
  %v2354 = vpop.permute.xlu0 %2353
  %2355 = vrot.lane.b32.xlu0 %v2267, 24
  %v2356 = vpop.permute.xlu0 %2355
  %v2365 = vsel %vm199, %v525, %v2278
  %v2366 = vsel %vm199, %v551, %v2280
  %v2367 = vsel %vm199, %v577, %v2282
  %v2368 = vsel %vm199, %v603, %v2284
  %v2369 = vsel %vm199, %v629, %v2286
  %v2370 = vsel %vm199, %v655, %v2288
  %v2371 = vsel %vm199, %v681, %v2290
  %v2372 = vsel %vm199, %v707, %v2292
  %vm2373 = vcmask 130048
  %v2374 = vsel %vm2373, %v2365, %v2310
  %v2375 = vsel %vm2373, %v2366, %v2312
  %v2376 = vsel %vm2373, %v2367, %v2314
  %v2377 = vsel %vm2373, %v2368, %v2316
  %v2378 = vsel %vm2373, %v2369, %v2318
  %v2379 = vsel %vm2373, %v2370, %v2320
  %v2380 = vsel %vm2373, %v2371, %v2322
  %v2381 = vsel %vm2373, %v2372, %v2324
  %vm2382 = vcmask 195584
  %v2383 = vsel %vm2382, %v2374, %v2342
  %v2384 = vsel %vm2382, %v2375, %v2344
  %v2385 = vsel %vm2382, %v2376, %v2346
  %v2386 = vsel %vm2382, %v2377, %v2348
  %v2387 = vsel %vm2382, %v2378, %v2350
  %v2388 = vsel %vm2382, %v2379, %v2352
  %v2389 = vsel %vm2382, %v2380, %v2354
  %v2390 = vsel %vm2382, %v2381, %v2356
  %v2391 = vpack.c.bf16 %v2384, %v2383
  %v2392 = vpack.c.bf16 %v2386, %v2385
  %v2393 = vpack.c.bf16 %v2388, %v2387
  %v2394 = vpack.c.bf16 %v2390, %v2389
  %v2395 = vld [vmem:[%s5] sm:$0xf]
  %v2396 = vld [vmem:[%s5 + $0x4] sm:$0xf]
  %v2397 = vld [vmem:[%s5 + $0x8] sm:$0xf]
  %v2398 = vld [vmem:[%s5 + $0xc] sm:$0xf]
  %v2399 = vld [vmem:[%s6] sm:$0x1]
  %v2401 = vperm.slane %v2399, 0
  %v2407 = vunpack.c.l.b16 %v2395
  %v2408 = vunpack.c.l.b16 %v2396
  %v2409 = vunpack.c.l.b16 %v2397
  %v2410 = vunpack.c.l.b16 %v2398
  %v2411 = vpack.c.b16 %v2408, %v2407
  %v2412 = vpack.c.b16 %v2410, %v2409
  %v2416 = vsel %vm87, %v2391, 0
  %v2419 = vsel %vm87, %v2392, 0
  %v2422 = vsel %vm87, %v2393, 0
  %v2425 = vsel %vm87, %v2394, 0
  %2427 = vmatpush.bf16.msra.mxu0 0
  %2428 = vmatpush.bf16.msra.mxu0 0
  %2429 = vmatpush.bf16.msra.mxu0 0
  %2430 = vmatpush.bf16.msra.mxu0 0
  %2431 = vmatpush.bf16.msra.mxu0 0
  %2432 = vmatpush.bf16.msra.mxu0 0
  %2433 = vmatpush.bf16.msra.mxu0 %v2412
  %2434 = vmatpush.bf16.msra.mxu0 %v2411
  %2435 = vmatmul.bf16.gmra.mxu0 %v2416
  %v2436 = vpop.f32.mrf.mxu0
  %v2437 = vadd.f32 %v2401, %v2436
  %v2438 = vpop.f32.mrf.mxu0
  %v2439 = vadd.f32 %v2401, %v2438
  %2440 = vmatmul.bf16.gmra.mxu0 %v2419
  %v2441 = vpop.f32.mrf.mxu0
  %v2442 = vadd.f32 %v2401, %v2441
  %v2443 = vpop.f32.mrf.mxu0
  %v2444 = vadd.f32 %v2401, %v2443
  %2445 = vmatmul.bf16.gmra.mxu0 %v2422
  %v2446 = vpop.f32.mrf.mxu0
  %v2447 = vadd.f32 %v2401, %v2446
  %v2448 = vpop.f32.mrf.mxu0
  %v2449 = vadd.f32 %v2401, %v2448
  %2450 = vmatmul.bf16.gmra.mxu0 %v2425
  %v2451 = vpop.f32.mrf.mxu0
  %v2452 = vadd.f32 %v2401, %v2451
  %v2453 = vpop.f32.mrf.mxu0
  %v2454 = vadd.f32 %v2401, %v2453
  %2455 = vdwg.mxu0
  %2457 = vset.pattern.permute.xlu0 0
  %2458 = vperm.xlu0 %2457, %v187
  %v2459 = vpop.permute.xlu0 %2458
  %2462 = vset.pattern.permute.xlu0 0
  %2463 = vperm.xlu0 %2462, %v188
  %v2464 = vpop.permute.xlu0 %2463
  %2467 = vset.pattern.permute.xlu0 0
  %2468 = vperm.xlu0 %2467, %v189
  %v2469 = vpop.permute.xlu0 %2468
  %2472 = vset.pattern.permute.xlu0 0
  %2473 = vperm.xlu0 %2472, %v190
  %v2474 = vpop.permute.xlu0 %2473
  %2477 = vset.pattern.permute.xlu0 0
  %2478 = vperm.xlu0 %2477, %v191
  %v2479 = vpop.permute.xlu0 %2478
  %2482 = vset.pattern.permute.xlu0 0
  %2483 = vperm.xlu0 %2482, %v192
  %v2484 = vpop.permute.xlu0 %2483
  %2487 = vset.pattern.permute.xlu0 0
  %2488 = vperm.xlu0 %2487, %v193
  %v2489 = vpop.permute.xlu0 %2488
  %2492 = vset.pattern.permute.xlu0 0
  %2493 = vperm.xlu0 %2492, %v194
  %v2494 = vpop.permute.xlu0 %2493
  %v2496 = vmul.f32 %v2459, %v2437
  %v2497 = vmul.f32 %v2464, %v2439
  %v2498 = vmul.f32 %v2469, %v2442
  %v2499 = vmul.f32 %v2474, %v2444
  %v2500 = vmul.f32 %v2479, %v2447
  %v2501 = vmul.f32 %v2484, %v2449
  %v2502 = vmul.f32 %v2489, %v2452
  %v2503 = vmul.f32 %v2494, %v2454
  %v2504 = vadd.f32 %v2496, 0.0
  %v2505 = vadd.f32 %v2497, 0.0
  %v2506 = vadd.f32 %v2498, 0.0
  %v2507 = vadd.f32 %v2499, 0.0
  %v2508 = vadd.f32 %v2500, 0.0
  %v2509 = vadd.f32 %v2501, 0.0
  %v2510 = vadd.f32 %v2502, 0.0
  %v2511 = vadd.f32 %v2503, 0.0
  %2512 = vrot.lane.b32.xlu0 %v110, 32
  %v2513 = vpop.permute.xlu0 %2512
  %v2514 = vsel %vm199, %v2513, 0
  %v2517 = vsel %vm199, %v139, 0
  %2519 = vmatpush.xpose.msra.mxu0 0.0
  %2520 = vmatpush.xpose.msra.mxu0 0.0
  %2521 = vmatpush.xpose.msra.mxu0 0.0
  %2522 = vmatpush.xpose.msra.mxu0 0.0
  %2523 = vmatpush.xpose.msra.mxu0 0.0
  %2524 = vmatpush.xpose.msra.mxu0 0.0
  %2525 = vmatpush.xpose.msra.mxu0 0.0
  %2526 = vmatpush.xpose.msra.mxu0 0.0
  %2527 = vmatpush.xpose.msra.mxu0 0.0
  %2528 = vmatpush.xpose.msra.mxu0 0.0
  %2529 = vmatpush.xpose.msra.mxu0 0.0
  %2530 = vmatpush.xpose.msra.mxu0 0.0
  %2531 = vmatpush.xpose.msra.mxu0 0.0
  %2532 = vmatpush.xpose.msra.mxu0 0.0
  %2533 = vmatpush.xpose.msra.mxu0 0.0
  %2534 = vmatpush.xpose.msra.mxu0 %v2517
  %2535 = vmatmul.f32.gmra.mxu0 %v2514
  %v2536 = vpop.f32.mrf.mxu0
  %v2537 = vadd.f32 %v195, %v2536
  %2538 = vdwg.mxu0
  %2539 = vrot.lane.b32.xlu0 %v112, 32
  %v2540 = vpop.permute.xlu0 %2539
  %v2541 = vsel %vm199, %v2540, 0
  %v2544 = vsel %vm199, %v141, 0
  %2546 = vmatpush.xpose.msra.mxu0 0.0
  %2547 = vmatpush.xpose.msra.mxu0 0.0
  %2548 = vmatpush.xpose.msra.mxu0 0.0
  %2549 = vmatpush.xpose.msra.mxu0 0.0
  %2550 = vmatpush.xpose.msra.mxu0 0.0
  %2551 = vmatpush.xpose.msra.mxu0 0.0
  %2552 = vmatpush.xpose.msra.mxu0 0.0
  %2553 = vmatpush.xpose.msra.mxu0 0.0
  %2554 = vmatpush.xpose.msra.mxu0 0.0
  %2555 = vmatpush.xpose.msra.mxu0 0.0
  %2556 = vmatpush.xpose.msra.mxu0 0.0
  %2557 = vmatpush.xpose.msra.mxu0 0.0
  %2558 = vmatpush.xpose.msra.mxu0 0.0
  %2559 = vmatpush.xpose.msra.mxu0 0.0
  %2560 = vmatpush.xpose.msra.mxu0 0.0
  %2561 = vmatpush.xpose.msra.mxu0 %v2544
  %2562 = vmatmul.f32.gmra.mxu0 %v2541
  %v2563 = vpop.f32.mrf.mxu0
  %v2564 = vadd.f32 %v195, %v2563
  %2565 = vdwg.mxu0
  %2566 = vrot.lane.b32.xlu0 %v115, 32
  %v2567 = vpop.permute.xlu0 %2566
  %v2568 = vsel %vm199, %v2567, 0
  %v2571 = vsel %vm199, %v144, 0
  %2573 = vmatpush.xpose.msra.mxu0 0.0
  %2574 = vmatpush.xpose.msra.mxu0 0.0
  %2575 = vmatpush.xpose.msra.mxu0 0.0
  %2576 = vmatpush.xpose.msra.mxu0 0.0
  %2577 = vmatpush.xpose.msra.mxu0 0.0
  %2578 = vmatpush.xpose.msra.mxu0 0.0
  %2579 = vmatpush.xpose.msra.mxu0 0.0
  %2580 = vmatpush.xpose.msra.mxu0 0.0
  %2581 = vmatpush.xpose.msra.mxu0 0.0
  %2582 = vmatpush.xpose.msra.mxu0 0.0
  %2583 = vmatpush.xpose.msra.mxu0 0.0
  %2584 = vmatpush.xpose.msra.mxu0 0.0
  %2585 = vmatpush.xpose.msra.mxu0 0.0
  %2586 = vmatpush.xpose.msra.mxu0 0.0
  %2587 = vmatpush.xpose.msra.mxu0 0.0
  %2588 = vmatpush.xpose.msra.mxu0 %v2571
  %2589 = vmatmul.f32.gmra.mxu0 %v2568
  %v2590 = vpop.f32.mrf.mxu0
  %v2591 = vadd.f32 %v195, %v2590
  %2592 = vdwg.mxu0
  %2593 = vrot.lane.b32.xlu0 %v117, 32
  %v2594 = vpop.permute.xlu0 %2593
  %v2595 = vsel %vm199, %v2594, 0
  %v2598 = vsel %vm199, %v146, 0
  %2600 = vmatpush.xpose.msra.mxu0 0.0
  %2601 = vmatpush.xpose.msra.mxu0 0.0
  %2602 = vmatpush.xpose.msra.mxu0 0.0
  %2603 = vmatpush.xpose.msra.mxu0 0.0
  %2604 = vmatpush.xpose.msra.mxu0 0.0
  %2605 = vmatpush.xpose.msra.mxu0 0.0
  %2606 = vmatpush.xpose.msra.mxu0 0.0
  %2607 = vmatpush.xpose.msra.mxu0 0.0
  %2608 = vmatpush.xpose.msra.mxu0 0.0
  %2609 = vmatpush.xpose.msra.mxu0 0.0
  %2610 = vmatpush.xpose.msra.mxu0 0.0
  %2611 = vmatpush.xpose.msra.mxu0 0.0
  %2612 = vmatpush.xpose.msra.mxu0 0.0
  %2613 = vmatpush.xpose.msra.mxu0 0.0
  %2614 = vmatpush.xpose.msra.mxu0 0.0
  %2615 = vmatpush.xpose.msra.mxu0 %v2598
  %2616 = vmatmul.f32.gmra.mxu0 %v2595
  %v2617 = vpop.f32.mrf.mxu0
  %v2618 = vadd.f32 %v195, %v2617
  %2619 = vdwg.mxu0
  %2620 = vrot.lane.b32.xlu0 %v120, 32
  %v2621 = vpop.permute.xlu0 %2620
  %v2622 = vsel %vm199, %v2621, 0
  %v2625 = vsel %vm199, %v149, 0
  %2627 = vmatpush.xpose.msra.mxu0 0.0
  %2628 = vmatpush.xpose.msra.mxu0 0.0
  %2629 = vmatpush.xpose.msra.mxu0 0.0
  %2630 = vmatpush.xpose.msra.mxu0 0.0
  %2631 = vmatpush.xpose.msra.mxu0 0.0
  %2632 = vmatpush.xpose.msra.mxu0 0.0
  %2633 = vmatpush.xpose.msra.mxu0 0.0
  %2634 = vmatpush.xpose.msra.mxu0 0.0
  %2635 = vmatpush.xpose.msra.mxu0 0.0
  %2636 = vmatpush.xpose.msra.mxu0 0.0
  %2637 = vmatpush.xpose.msra.mxu0 0.0
  %2638 = vmatpush.xpose.msra.mxu0 0.0
  %2639 = vmatpush.xpose.msra.mxu0 0.0
  %2640 = vmatpush.xpose.msra.mxu0 0.0
  %2641 = vmatpush.xpose.msra.mxu0 0.0
  %2642 = vmatpush.xpose.msra.mxu0 %v2625
  %2643 = vmatmul.f32.gmra.mxu0 %v2622
  %v2644 = vpop.f32.mrf.mxu0
  %v2645 = vadd.f32 %v195, %v2644
  %2646 = vdwg.mxu0
  %2647 = vrot.lane.b32.xlu0 %v122, 32
  %v2648 = vpop.permute.xlu0 %2647
  %v2649 = vsel %vm199, %v2648, 0
  %v2652 = vsel %vm199, %v151, 0
  %2654 = vmatpush.xpose.msra.mxu0 0.0
  %2655 = vmatpush.xpose.msra.mxu0 0.0
  %2656 = vmatpush.xpose.msra.mxu0 0.0
  %2657 = vmatpush.xpose.msra.mxu0 0.0
  %2658 = vmatpush.xpose.msra.mxu0 0.0
  %2659 = vmatpush.xpose.msra.mxu0 0.0
  %2660 = vmatpush.xpose.msra.mxu0 0.0
  %2661 = vmatpush.xpose.msra.mxu0 0.0
  %2662 = vmatpush.xpose.msra.mxu0 0.0
  %2663 = vmatpush.xpose.msra.mxu0 0.0
  %2664 = vmatpush.xpose.msra.mxu0 0.0
  %2665 = vmatpush.xpose.msra.mxu0 0.0
  %2666 = vmatpush.xpose.msra.mxu0 0.0
  %2667 = vmatpush.xpose.msra.mxu0 0.0
  %2668 = vmatpush.xpose.msra.mxu0 0.0
  %2669 = vmatpush.xpose.msra.mxu0 %v2652
  %2670 = vmatmul.f32.gmra.mxu0 %v2649
  %v2671 = vpop.f32.mrf.mxu0
  %v2672 = vadd.f32 %v195, %v2671
  %2673 = vdwg.mxu0
  %2674 = vrot.lane.b32.xlu0 %v125, 32
  %v2675 = vpop.permute.xlu0 %2674
  %v2676 = vsel %vm199, %v2675, 0
  %v2679 = vsel %vm199, %v154, 0
  %2681 = vmatpush.xpose.msra.mxu0 0.0
  %2682 = vmatpush.xpose.msra.mxu0 0.0
  %2683 = vmatpush.xpose.msra.mxu0 0.0
  %2684 = vmatpush.xpose.msra.mxu0 0.0
  %2685 = vmatpush.xpose.msra.mxu0 0.0
  %2686 = vmatpush.xpose.msra.mxu0 0.0
  %2687 = vmatpush.xpose.msra.mxu0 0.0
  %2688 = vmatpush.xpose.msra.mxu0 0.0
  %2689 = vmatpush.xpose.msra.mxu0 0.0
  %2690 = vmatpush.xpose.msra.mxu0 0.0
  %2691 = vmatpush.xpose.msra.mxu0 0.0
  %2692 = vmatpush.xpose.msra.mxu0 0.0
  %2693 = vmatpush.xpose.msra.mxu0 0.0
  %2694 = vmatpush.xpose.msra.mxu0 0.0
  %2695 = vmatpush.xpose.msra.mxu0 0.0
  %2696 = vmatpush.xpose.msra.mxu0 %v2679
  %2697 = vmatmul.f32.gmra.mxu0 %v2676
  %v2698 = vpop.f32.mrf.mxu0
  %v2699 = vadd.f32 %v195, %v2698
  %2700 = vdwg.mxu0
  %2701 = vrot.lane.b32.xlu0 %v127, 32
  %v2702 = vpop.permute.xlu0 %2701
  %v2703 = vsel %vm199, %v2702, 0
  %v2706 = vsel %vm199, %v156, 0
  %2708 = vmatpush.xpose.msra.mxu0 0.0
  %2709 = vmatpush.xpose.msra.mxu0 0.0
  %2710 = vmatpush.xpose.msra.mxu0 0.0
  %2711 = vmatpush.xpose.msra.mxu0 0.0
  %2712 = vmatpush.xpose.msra.mxu0 0.0
  %2713 = vmatpush.xpose.msra.mxu0 0.0
  %2714 = vmatpush.xpose.msra.mxu0 0.0
  %2715 = vmatpush.xpose.msra.mxu0 0.0
  %2716 = vmatpush.xpose.msra.mxu0 0.0
  %2717 = vmatpush.xpose.msra.mxu0 0.0
  %2718 = vmatpush.xpose.msra.mxu0 0.0
  %2719 = vmatpush.xpose.msra.mxu0 0.0
  %2720 = vmatpush.xpose.msra.mxu0 0.0
  %2721 = vmatpush.xpose.msra.mxu0 0.0
  %2722 = vmatpush.xpose.msra.mxu0 0.0
  %2723 = vmatpush.xpose.msra.mxu0 %v2706
  %2724 = vmatmul.f32.gmra.mxu0 %v2703
  %v2725 = vpop.f32.mrf.mxu0
  %v2726 = vadd.f32 %v195, %v2725
  %2727 = vdwg.mxu0
  %v2728 = vsel %vm199, %v2537, -inf
  %2729 = vmax.xlane.f32.xlu0 %v2728
  %v2730 = vpop.xlane.xlu0 %2729
  %v2731 = vsel %vm199, %v2564, -inf
  %2732 = vmax.xlane.f32.xlu0 %v2731
  %v2733 = vpop.xlane.xlu0 %2732
  %v2734 = vsel %vm199, %v2591, -inf
  %2735 = vmax.xlane.f32.xlu0 %v2734
  %v2736 = vpop.xlane.xlu0 %2735
  %v2737 = vsel %vm199, %v2618, -inf
  %2738 = vmax.xlane.f32.xlu0 %v2737
  %v2739 = vpop.xlane.xlu0 %2738
  %v2740 = vsel %vm199, %v2645, -inf
  %2741 = vmax.xlane.f32.xlu0 %v2740
  %v2742 = vpop.xlane.xlu0 %2741
  %v2743 = vsel %vm199, %v2672, -inf
  %2744 = vmax.xlane.f32.xlu0 %v2743
  %v2745 = vpop.xlane.xlu0 %2744
  %v2746 = vsel %vm199, %v2699, -inf
  %2747 = vmax.xlane.f32.xlu0 %v2746
  %v2748 = vpop.xlane.xlu0 %2747
  %v2749 = vsel %vm199, %v2726, -inf
  %2750 = vmax.xlane.f32.xlu0 %v2749
  %v2751 = vpop.xlane.xlu0 %2750
  %v2752 = vsub.f32 %v2537, %v2730
  %v2753 = vsub.f32 %v2564, %v2733
  %v2754 = vsub.f32 %v2591, %v2736
  %v2755 = vsub.f32 %v2618, %v2739
  %v2756 = vsub.f32 %v2645, %v2742
  %v2757 = vsub.f32 %v2672, %v2745
  %v2758 = vsub.f32 %v2699, %v2748
  %v2759 = vsub.f32 %v2726, %v2751
  %v2760 = vmul.f32 %v2752, 1.442695
  %v2761 = vpow.pop %v2760
  %v2762 = vmul.f32 %v2753, 1.442695
  %v2763 = vpow.pop %v2762
  %v2764 = vmul.f32 %v2754, 1.442695
  %v2765 = vpow.pop %v2764
  %v2766 = vmul.f32 %v2755, 1.442695
  %v2767 = vpow.pop %v2766
  %v2768 = vmul.f32 %v2756, 1.442695
  %v2769 = vpow.pop %v2768
  %v2770 = vmul.f32 %v2757, 1.442695
  %v2771 = vpow.pop %v2770
  %v2772 = vmul.f32 %v2758, 1.442695
  %v2773 = vpow.pop %v2772
  %v2774 = vmul.f32 %v2759, 1.442695
  %v2775 = vpow.pop %v2774
  %v2776 = vsel %vm199, %v2761, 0.0
  %2777 = vadd.xlane.f32.xlu0 %v2776
  %v2778 = vpop.xlane.xlu0 %2777
  %v2779 = vsel %vm199, %v2763, 0.0
  %2780 = vadd.xlane.f32.xlu0 %v2779
  %v2781 = vpop.xlane.xlu0 %2780
  %v2782 = vsel %vm199, %v2765, 0.0
  %2783 = vadd.xlane.f32.xlu0 %v2782
  %v2784 = vpop.xlane.xlu0 %2783
  %v2785 = vsel %vm199, %v2767, 0.0
  %2786 = vadd.xlane.f32.xlu0 %v2785
  %v2787 = vpop.xlane.xlu0 %2786
  %v2788 = vsel %vm199, %v2769, 0.0
  %2789 = vadd.xlane.f32.xlu0 %v2788
  %v2790 = vpop.xlane.xlu0 %2789
  %v2791 = vsel %vm199, %v2771, 0.0
  %2792 = vadd.xlane.f32.xlu0 %v2791
  %v2793 = vpop.xlane.xlu0 %2792
  %v2794 = vsel %vm199, %v2773, 0.0
  %2795 = vadd.xlane.f32.xlu0 %v2794
  %v2796 = vpop.xlane.xlu0 %2795
  %v2797 = vsel %vm199, %v2775, 0.0
  %2798 = vadd.xlane.f32.xlu0 %v2797
  %v2799 = vpop.xlane.xlu0 %2798
  %v2800 = vrcp.pop %v2778
  %v2801 = vrcp.pop %v2781
  %v2802 = vrcp.pop %v2784
  %v2803 = vrcp.pop %v2787
  %v2804 = vrcp.pop %v2790
  %v2805 = vrcp.pop %v2793
  %v2806 = vrcp.pop %v2796
  %v2807 = vrcp.pop %v2799
  %v2808 = vmul.f32 %v2761, %v2800
  %v2809 = vmul.f32 %v2763, %v2801
  %v2810 = vmul.f32 %v2765, %v2802
  %v2811 = vmul.f32 %v2767, %v2803
  %v2812 = vmul.f32 %v2769, %v2804
  %v2813 = vmul.f32 %v2771, %v2805
  %v2814 = vmul.f32 %v2773, %v2806
  %v2815 = vmul.f32 %v2775, %v2807
  %2816 = vrot.lane.b32.xlu0 %v139, 96
  %v2817 = vpop.permute.xlu0 %2816
  %v2820 = vsel %vm199, %v2808, 0
  %2822 = vmatpush.msra.mxu0 0.0
  %2823 = vmatpush.msra.mxu0 0.0
  %2824 = vmatpush.msra.mxu0 0.0
  %2825 = vmatpush.msra.mxu0 0.0
  %2826 = vmatpush.msra.mxu0 0.0
  %2827 = vmatpush.msra.mxu0 0.0
  %2828 = vmatpush.msra.mxu0 0.0
  %2829 = vmatpush.msra.mxu0 0.0
  %2830 = vmatpush.msra.mxu0 0.0
  %2831 = vmatpush.msra.mxu0 0.0
  %2832 = vmatpush.msra.mxu0 0.0
  %2833 = vmatpush.msra.mxu0 0.0
  %2834 = vmatpush.msra.mxu0 0.0
  %2835 = vmatpush.msra.mxu0 0.0
  %2836 = vmatpush.msra.mxu0 0.0
  %2837 = vmatpush.msra.mxu0 %v2817
  %2838 = vmatmul.f32.gmra.mxu0 %v2820
  %v2839 = vpop.f32.mrf.mxu0
  %v2840 = vadd.f32 0.0, %v2839
  %2841 = vdwg.mxu0
  %2842 = vrot.lane.b32.xlu0 %v141, 96
  %v2843 = vpop.permute.xlu0 %2842
  %v2846 = vsel %vm199, %v2809, 0
  %2848 = vmatpush.msra.mxu0 0.0
  %2849 = vmatpush.msra.mxu0 0.0
  %2850 = vmatpush.msra.mxu0 0.0
  %2851 = vmatpush.msra.mxu0 0.0
  %2852 = vmatpush.msra.mxu0 0.0
  %2853 = vmatpush.msra.mxu0 0.0
  %2854 = vmatpush.msra.mxu0 0.0
  %2855 = vmatpush.msra.mxu0 0.0
  %2856 = vmatpush.msra.mxu0 0.0
  %2857 = vmatpush.msra.mxu0 0.0
  %2858 = vmatpush.msra.mxu0 0.0
  %2859 = vmatpush.msra.mxu0 0.0
  %2860 = vmatpush.msra.mxu0 0.0
  %2861 = vmatpush.msra.mxu0 0.0
  %2862 = vmatpush.msra.mxu0 0.0
  %2863 = vmatpush.msra.mxu0 %v2843
  %2864 = vmatmul.f32.gmra.mxu0 %v2846
  %v2865 = vpop.f32.mrf.mxu0
  %v2866 = vadd.f32 0.0, %v2865
  %2867 = vdwg.mxu0
  %2868 = vrot.lane.b32.xlu0 %v144, 96
  %v2869 = vpop.permute.xlu0 %2868
  %v2872 = vsel %vm199, %v2810, 0
  %2874 = vmatpush.msra.mxu0 0.0
  %2875 = vmatpush.msra.mxu0 0.0
  %2876 = vmatpush.msra.mxu0 0.0
  %2877 = vmatpush.msra.mxu0 0.0
  %2878 = vmatpush.msra.mxu0 0.0
  %2879 = vmatpush.msra.mxu0 0.0
  %2880 = vmatpush.msra.mxu0 0.0
  %2881 = vmatpush.msra.mxu0 0.0
  %2882 = vmatpush.msra.mxu0 0.0
  %2883 = vmatpush.msra.mxu0 0.0
  %2884 = vmatpush.msra.mxu0 0.0
  %2885 = vmatpush.msra.mxu0 0.0
  %2886 = vmatpush.msra.mxu0 0.0
  %2887 = vmatpush.msra.mxu0 0.0
  %2888 = vmatpush.msra.mxu0 0.0
  %2889 = vmatpush.msra.mxu0 %v2869
  %2890 = vmatmul.f32.gmra.mxu0 %v2872
  %v2891 = vpop.f32.mrf.mxu0
  %v2892 = vadd.f32 0.0, %v2891
  %2893 = vdwg.mxu0
  %2894 = vrot.lane.b32.xlu0 %v146, 96
  %v2895 = vpop.permute.xlu0 %2894
  %v2898 = vsel %vm199, %v2811, 0
  %2900 = vmatpush.msra.mxu0 0.0
  %2901 = vmatpush.msra.mxu0 0.0
  %2902 = vmatpush.msra.mxu0 0.0
  %2903 = vmatpush.msra.mxu0 0.0
  %2904 = vmatpush.msra.mxu0 0.0
  %2905 = vmatpush.msra.mxu0 0.0
  %2906 = vmatpush.msra.mxu0 0.0
  %2907 = vmatpush.msra.mxu0 0.0
  %2908 = vmatpush.msra.mxu0 0.0
  %2909 = vmatpush.msra.mxu0 0.0
  %2910 = vmatpush.msra.mxu0 0.0
  %2911 = vmatpush.msra.mxu0 0.0
  %2912 = vmatpush.msra.mxu0 0.0
  %2913 = vmatpush.msra.mxu0 0.0
  %2914 = vmatpush.msra.mxu0 0.0
  %2915 = vmatpush.msra.mxu0 %v2895
  %2916 = vmatmul.f32.gmra.mxu0 %v2898
  %v2917 = vpop.f32.mrf.mxu0
  %v2918 = vadd.f32 0.0, %v2917
  %2919 = vdwg.mxu0
  %2920 = vrot.lane.b32.xlu0 %v149, 96
  %v2921 = vpop.permute.xlu0 %2920
  %v2924 = vsel %vm199, %v2812, 0
  %2926 = vmatpush.msra.mxu0 0.0
  %2927 = vmatpush.msra.mxu0 0.0
  %2928 = vmatpush.msra.mxu0 0.0
  %2929 = vmatpush.msra.mxu0 0.0
  %2930 = vmatpush.msra.mxu0 0.0
  %2931 = vmatpush.msra.mxu0 0.0
  %2932 = vmatpush.msra.mxu0 0.0
  %2933 = vmatpush.msra.mxu0 0.0
  %2934 = vmatpush.msra.mxu0 0.0
  %2935 = vmatpush.msra.mxu0 0.0
  %2936 = vmatpush.msra.mxu0 0.0
  %2937 = vmatpush.msra.mxu0 0.0
  %2938 = vmatpush.msra.mxu0 0.0
  %2939 = vmatpush.msra.mxu0 0.0
  %2940 = vmatpush.msra.mxu0 0.0
  %2941 = vmatpush.msra.mxu0 %v2921
  %2942 = vmatmul.f32.gmra.mxu0 %v2924
  %v2943 = vpop.f32.mrf.mxu0
  %v2944 = vadd.f32 0.0, %v2943
  %2945 = vdwg.mxu0
  %2946 = vrot.lane.b32.xlu0 %v151, 96
  %v2947 = vpop.permute.xlu0 %2946
  %v2950 = vsel %vm199, %v2813, 0
  %2952 = vmatpush.msra.mxu0 0.0
  %2953 = vmatpush.msra.mxu0 0.0
  %2954 = vmatpush.msra.mxu0 0.0
  %2955 = vmatpush.msra.mxu0 0.0
  %2956 = vmatpush.msra.mxu0 0.0
  %2957 = vmatpush.msra.mxu0 0.0
  %2958 = vmatpush.msra.mxu0 0.0
  %2959 = vmatpush.msra.mxu0 0.0
  %2960 = vmatpush.msra.mxu0 0.0
  %2961 = vmatpush.msra.mxu0 0.0
  %2962 = vmatpush.msra.mxu0 0.0
  %2963 = vmatpush.msra.mxu0 0.0
  %2964 = vmatpush.msra.mxu0 0.0
  %2965 = vmatpush.msra.mxu0 0.0
  %2966 = vmatpush.msra.mxu0 0.0
  %2967 = vmatpush.msra.mxu0 %v2947
  %2968 = vmatmul.f32.gmra.mxu0 %v2950
  %v2969 = vpop.f32.mrf.mxu0
  %v2970 = vadd.f32 0.0, %v2969
  %2971 = vdwg.mxu0
  %2972 = vrot.lane.b32.xlu0 %v154, 96
  %v2973 = vpop.permute.xlu0 %2972
  %v2976 = vsel %vm199, %v2814, 0
  %2978 = vmatpush.msra.mxu0 0.0
  %2979 = vmatpush.msra.mxu0 0.0
  %2980 = vmatpush.msra.mxu0 0.0
  %2981 = vmatpush.msra.mxu0 0.0
  %2982 = vmatpush.msra.mxu0 0.0
  %2983 = vmatpush.msra.mxu0 0.0
  %2984 = vmatpush.msra.mxu0 0.0
  %2985 = vmatpush.msra.mxu0 0.0
  %2986 = vmatpush.msra.mxu0 0.0
  %2987 = vmatpush.msra.mxu0 0.0
  %2988 = vmatpush.msra.mxu0 0.0
  %2989 = vmatpush.msra.mxu0 0.0
  %2990 = vmatpush.msra.mxu0 0.0
  %2991 = vmatpush.msra.mxu0 0.0
  %2992 = vmatpush.msra.mxu0 0.0
  %2993 = vmatpush.msra.mxu0 %v2973
  %2994 = vmatmul.f32.gmra.mxu0 %v2976
  %v2995 = vpop.f32.mrf.mxu0
  %v2996 = vadd.f32 0.0, %v2995
  %2997 = vdwg.mxu0
  %2998 = vrot.lane.b32.xlu0 %v156, 96
  %v2999 = vpop.permute.xlu0 %2998
  %v3002 = vsel %vm199, %v2815, 0
  %3004 = vmatpush.msra.mxu0 0.0
  %3005 = vmatpush.msra.mxu0 0.0
  %3006 = vmatpush.msra.mxu0 0.0
  %3007 = vmatpush.msra.mxu0 0.0
  %3008 = vmatpush.msra.mxu0 0.0
  %3009 = vmatpush.msra.mxu0 0.0
  %3010 = vmatpush.msra.mxu0 0.0
  %3011 = vmatpush.msra.mxu0 0.0
  %3012 = vmatpush.msra.mxu0 0.0
  %3013 = vmatpush.msra.mxu0 0.0
  %3014 = vmatpush.msra.mxu0 0.0
  %3015 = vmatpush.msra.mxu0 0.0
  %3016 = vmatpush.msra.mxu0 0.0
  %3017 = vmatpush.msra.mxu0 0.0
  %3018 = vmatpush.msra.mxu0 0.0
  %3019 = vmatpush.msra.mxu0 %v2999
  %3020 = vmatmul.f32.gmra.mxu0 %v3002
  %v3021 = vpop.f32.mrf.mxu0
  %v3022 = vadd.f32 0.0, %v3021
  %3023 = vdwg.mxu0
  %3024 = vrot.lane.b32.xlu0 %v110, 24
  %v3025 = vpop.permute.xlu0 %3024
  %3026 = vrot.lane.b32.xlu0 %v139, 120
  %v3027 = vpop.permute.xlu0 %3026
  %v3028 = vsel %vm199, %v3025, 0
  %v3030 = vsel %vm199, %v3027, 0
  %3032 = vmatpush.xpose.msra.mxu0 0.0
  %3033 = vmatpush.xpose.msra.mxu0 0.0
  %3034 = vmatpush.xpose.msra.mxu0 0.0
  %3035 = vmatpush.xpose.msra.mxu0 0.0
  %3036 = vmatpush.xpose.msra.mxu0 0.0
  %3037 = vmatpush.xpose.msra.mxu0 0.0
  %3038 = vmatpush.xpose.msra.mxu0 0.0
  %3039 = vmatpush.xpose.msra.mxu0 0.0
  %3040 = vmatpush.xpose.msra.mxu0 0.0
  %3041 = vmatpush.xpose.msra.mxu0 0.0
  %3042 = vmatpush.xpose.msra.mxu0 0.0
  %3043 = vmatpush.xpose.msra.mxu0 0.0
  %3044 = vmatpush.xpose.msra.mxu0 0.0
  %3045 = vmatpush.xpose.msra.mxu0 0.0
  %3046 = vmatpush.xpose.msra.mxu0 0.0
  %3047 = vmatpush.xpose.msra.mxu0 %v3030
  %3048 = vmatmul.f32.gmra.mxu0 %v3028
  %v3049 = vpop.f32.mrf.mxu0
  %v3050 = vadd.f32 %v195, %v3049
  %3051 = vdwg.mxu0
  %3052 = vrot.lane.b32.xlu0 %v112, 24
  %v3053 = vpop.permute.xlu0 %3052
  %3054 = vrot.lane.b32.xlu0 %v141, 120
  %v3055 = vpop.permute.xlu0 %3054
  %v3056 = vsel %vm199, %v3053, 0
  %v3058 = vsel %vm199, %v3055, 0
  %3060 = vmatpush.xpose.msra.mxu0 0.0
  %3061 = vmatpush.xpose.msra.mxu0 0.0
  %3062 = vmatpush.xpose.msra.mxu0 0.0
  %3063 = vmatpush.xpose.msra.mxu0 0.0
  %3064 = vmatpush.xpose.msra.mxu0 0.0
  %3065 = vmatpush.xpose.msra.mxu0 0.0
  %3066 = vmatpush.xpose.msra.mxu0 0.0
  %3067 = vmatpush.xpose.msra.mxu0 0.0
  %3068 = vmatpush.xpose.msra.mxu0 0.0
  %3069 = vmatpush.xpose.msra.mxu0 0.0
  %3070 = vmatpush.xpose.msra.mxu0 0.0
  %3071 = vmatpush.xpose.msra.mxu0 0.0
  %3072 = vmatpush.xpose.msra.mxu0 0.0
  %3073 = vmatpush.xpose.msra.mxu0 0.0
  %3074 = vmatpush.xpose.msra.mxu0 0.0
  %3075 = vmatpush.xpose.msra.mxu0 %v3058
  %3076 = vmatmul.f32.gmra.mxu0 %v3056
  %v3077 = vpop.f32.mrf.mxu0
  %v3078 = vadd.f32 %v195, %v3077
  %3079 = vdwg.mxu0
  %3080 = vrot.lane.b32.xlu0 %v115, 24
  %v3081 = vpop.permute.xlu0 %3080
  %3082 = vrot.lane.b32.xlu0 %v144, 120
  %v3083 = vpop.permute.xlu0 %3082
  %v3084 = vsel %vm199, %v3081, 0
  %v3086 = vsel %vm199, %v3083, 0
  %3088 = vmatpush.xpose.msra.mxu0 0.0
  %3089 = vmatpush.xpose.msra.mxu0 0.0
  %3090 = vmatpush.xpose.msra.mxu0 0.0
  %3091 = vmatpush.xpose.msra.mxu0 0.0
  %3092 = vmatpush.xpose.msra.mxu0 0.0
  %3093 = vmatpush.xpose.msra.mxu0 0.0
  %3094 = vmatpush.xpose.msra.mxu0 0.0
  %3095 = vmatpush.xpose.msra.mxu0 0.0
  %3096 = vmatpush.xpose.msra.mxu0 0.0
  %3097 = vmatpush.xpose.msra.mxu0 0.0
  %3098 = vmatpush.xpose.msra.mxu0 0.0
  %3099 = vmatpush.xpose.msra.mxu0 0.0
  %3100 = vmatpush.xpose.msra.mxu0 0.0
  %3101 = vmatpush.xpose.msra.mxu0 0.0
  %3102 = vmatpush.xpose.msra.mxu0 0.0
  %3103 = vmatpush.xpose.msra.mxu0 %v3086
  %3104 = vmatmul.f32.gmra.mxu0 %v3084
  %v3105 = vpop.f32.mrf.mxu0
  %v3106 = vadd.f32 %v195, %v3105
  %3107 = vdwg.mxu0
  %3108 = vrot.lane.b32.xlu0 %v117, 24
  %v3109 = vpop.permute.xlu0 %3108
  %3110 = vrot.lane.b32.xlu0 %v146, 120
  %v3111 = vpop.permute.xlu0 %3110
  %v3112 = vsel %vm199, %v3109, 0
  %v3114 = vsel %vm199, %v3111, 0
  %3116 = vmatpush.xpose.msra.mxu0 0.0
  %3117 = vmatpush.xpose.msra.mxu0 0.0
  %3118 = vmatpush.xpose.msra.mxu0 0.0
  %3119 = vmatpush.xpose.msra.mxu0 0.0
  %3120 = vmatpush.xpose.msra.mxu0 0.0
  %3121 = vmatpush.xpose.msra.mxu0 0.0
  %3122 = vmatpush.xpose.msra.mxu0 0.0
  %3123 = vmatpush.xpose.msra.mxu0 0.0
  %3124 = vmatpush.xpose.msra.mxu0 0.0
  %3125 = vmatpush.xpose.msra.mxu0 0.0
  %3126 = vmatpush.xpose.msra.mxu0 0.0
  %3127 = vmatpush.xpose.msra.mxu0 0.0
  %3128 = vmatpush.xpose.msra.mxu0 0.0
  %3129 = vmatpush.xpose.msra.mxu0 0.0
  %3130 = vmatpush.xpose.msra.mxu0 0.0
  %3131 = vmatpush.xpose.msra.mxu0 %v3114
  %3132 = vmatmul.f32.gmra.mxu0 %v3112
  %v3133 = vpop.f32.mrf.mxu0
  %v3134 = vadd.f32 %v195, %v3133
  %3135 = vdwg.mxu0
  %3136 = vrot.lane.b32.xlu0 %v120, 24
  %v3137 = vpop.permute.xlu0 %3136
  %3138 = vrot.lane.b32.xlu0 %v149, 120
  %v3139 = vpop.permute.xlu0 %3138
  %v3140 = vsel %vm199, %v3137, 0
  %v3142 = vsel %vm199, %v3139, 0
  %3144 = vmatpush.xpose.msra.mxu0 0.0
  %3145 = vmatpush.xpose.msra.mxu0 0.0
  %3146 = vmatpush.xpose.msra.mxu0 0.0
  %3147 = vmatpush.xpose.msra.mxu0 0.0
  %3148 = vmatpush.xpose.msra.mxu0 0.0
  %3149 = vmatpush.xpose.msra.mxu0 0.0
  %3150 = vmatpush.xpose.msra.mxu0 0.0
  %3151 = vmatpush.xpose.msra.mxu0 0.0
  %3152 = vmatpush.xpose.msra.mxu0 0.0
  %3153 = vmatpush.xpose.msra.mxu0 0.0
  %3154 = vmatpush.xpose.msra.mxu0 0.0
  %3155 = vmatpush.xpose.msra.mxu0 0.0
  %3156 = vmatpush.xpose.msra.mxu0 0.0
  %3157 = vmatpush.xpose.msra.mxu0 0.0
  %3158 = vmatpush.xpose.msra.mxu0 0.0
  %3159 = vmatpush.xpose.msra.mxu0 %v3142
  %3160 = vmatmul.f32.gmra.mxu0 %v3140
  %v3161 = vpop.f32.mrf.mxu0
  %v3162 = vadd.f32 %v195, %v3161
  %3163 = vdwg.mxu0
  %3164 = vrot.lane.b32.xlu0 %v122, 24
  %v3165 = vpop.permute.xlu0 %3164
  %3166 = vrot.lane.b32.xlu0 %v151, 120
  %v3167 = vpop.permute.xlu0 %3166
  %v3168 = vsel %vm199, %v3165, 0
  %v3170 = vsel %vm199, %v3167, 0
  %3172 = vmatpush.xpose.msra.mxu0 0.0
  %3173 = vmatpush.xpose.msra.mxu0 0.0
  %3174 = vmatpush.xpose.msra.mxu0 0.0
  %3175 = vmatpush.xpose.msra.mxu0 0.0
  %3176 = vmatpush.xpose.msra.mxu0 0.0
  %3177 = vmatpush.xpose.msra.mxu0 0.0
  %3178 = vmatpush.xpose.msra.mxu0 0.0
  %3179 = vmatpush.xpose.msra.mxu0 0.0
  %3180 = vmatpush.xpose.msra.mxu0 0.0
  %3181 = vmatpush.xpose.msra.mxu0 0.0
  %3182 = vmatpush.xpose.msra.mxu0 0.0
  %3183 = vmatpush.xpose.msra.mxu0 0.0
  %3184 = vmatpush.xpose.msra.mxu0 0.0
  %3185 = vmatpush.xpose.msra.mxu0 0.0
  %3186 = vmatpush.xpose.msra.mxu0 0.0
  %3187 = vmatpush.xpose.msra.mxu0 %v3170
  %3188 = vmatmul.f32.gmra.mxu0 %v3168
  %v3189 = vpop.f32.mrf.mxu0
  %v3190 = vadd.f32 %v195, %v3189
  %3191 = vdwg.mxu0
  %3192 = vrot.lane.b32.xlu0 %v125, 24
  %v3193 = vpop.permute.xlu0 %3192
  %3194 = vrot.lane.b32.xlu0 %v154, 120
  %v3195 = vpop.permute.xlu0 %3194
  %v3196 = vsel %vm199, %v3193, 0
  %v3198 = vsel %vm199, %v3195, 0
  %3200 = vmatpush.xpose.msra.mxu0 0.0
  %3201 = vmatpush.xpose.msra.mxu0 0.0
  %3202 = vmatpush.xpose.msra.mxu0 0.0
  %3203 = vmatpush.xpose.msra.mxu0 0.0
  %3204 = vmatpush.xpose.msra.mxu0 0.0
  %3205 = vmatpush.xpose.msra.mxu0 0.0
  %3206 = vmatpush.xpose.msra.mxu0 0.0
  %3207 = vmatpush.xpose.msra.mxu0 0.0
  %3208 = vmatpush.xpose.msra.mxu0 0.0
  %3209 = vmatpush.xpose.msra.mxu0 0.0
  %3210 = vmatpush.xpose.msra.mxu0 0.0
  %3211 = vmatpush.xpose.msra.mxu0 0.0
  %3212 = vmatpush.xpose.msra.mxu0 0.0
  %3213 = vmatpush.xpose.msra.mxu0 0.0
  %3214 = vmatpush.xpose.msra.mxu0 0.0
  %3215 = vmatpush.xpose.msra.mxu0 %v3198
  %3216 = vmatmul.f32.gmra.mxu0 %v3196
  %v3217 = vpop.f32.mrf.mxu0
  %v3218 = vadd.f32 %v195, %v3217
  %3219 = vdwg.mxu0
  %3220 = vrot.lane.b32.xlu0 %v127, 24
  %v3221 = vpop.permute.xlu0 %3220
  %3222 = vrot.lane.b32.xlu0 %v156, 120
  %v3223 = vpop.permute.xlu0 %3222
  %v3224 = vsel %vm199, %v3221, 0
  %v3226 = vsel %vm199, %v3223, 0
  %3228 = vmatpush.xpose.msra.mxu0 0.0
  %3229 = vmatpush.xpose.msra.mxu0 0.0
  %3230 = vmatpush.xpose.msra.mxu0 0.0
  %3231 = vmatpush.xpose.msra.mxu0 0.0
  %3232 = vmatpush.xpose.msra.mxu0 0.0
  %3233 = vmatpush.xpose.msra.mxu0 0.0
  %3234 = vmatpush.xpose.msra.mxu0 0.0
  %3235 = vmatpush.xpose.msra.mxu0 0.0
  %3236 = vmatpush.xpose.msra.mxu0 0.0
  %3237 = vmatpush.xpose.msra.mxu0 0.0
  %3238 = vmatpush.xpose.msra.mxu0 0.0
  %3239 = vmatpush.xpose.msra.mxu0 0.0
  %3240 = vmatpush.xpose.msra.mxu0 0.0
  %3241 = vmatpush.xpose.msra.mxu0 0.0
  %3242 = vmatpush.xpose.msra.mxu0 0.0
  %3243 = vmatpush.xpose.msra.mxu0 %v3226
  %3244 = vmatmul.f32.gmra.mxu0 %v3224
  %v3245 = vpop.f32.mrf.mxu0
  %v3246 = vadd.f32 %v195, %v3245
  %3247 = vdwg.mxu0
  %v3248 = vsel %vm199, %v3050, -inf
  %3249 = vmax.xlane.f32.xlu0 %v3248
  %v3250 = vpop.xlane.xlu0 %3249
  %v3251 = vsel %vm199, %v3078, -inf
  %3252 = vmax.xlane.f32.xlu0 %v3251
  %v3253 = vpop.xlane.xlu0 %3252
  %v3254 = vsel %vm199, %v3106, -inf
  %3255 = vmax.xlane.f32.xlu0 %v3254
  %v3256 = vpop.xlane.xlu0 %3255
  %v3257 = vsel %vm199, %v3134, -inf
  %3258 = vmax.xlane.f32.xlu0 %v3257
  %v3259 = vpop.xlane.xlu0 %3258
  %v3260 = vsel %vm199, %v3162, -inf
  %3261 = vmax.xlane.f32.xlu0 %v3260
  %v3262 = vpop.xlane.xlu0 %3261
  %v3263 = vsel %vm199, %v3190, -inf
  %3264 = vmax.xlane.f32.xlu0 %v3263
  %v3265 = vpop.xlane.xlu0 %3264
  %v3266 = vsel %vm199, %v3218, -inf
  %3267 = vmax.xlane.f32.xlu0 %v3266
  %v3268 = vpop.xlane.xlu0 %3267
  %v3269 = vsel %vm199, %v3246, -inf
  %3270 = vmax.xlane.f32.xlu0 %v3269
  %v3271 = vpop.xlane.xlu0 %3270
  %v3272 = vsub.f32 %v3050, %v3250
  %v3273 = vsub.f32 %v3078, %v3253
  %v3274 = vsub.f32 %v3106, %v3256
  %v3275 = vsub.f32 %v3134, %v3259
  %v3276 = vsub.f32 %v3162, %v3262
  %v3277 = vsub.f32 %v3190, %v3265
  %v3278 = vsub.f32 %v3218, %v3268
  %v3279 = vsub.f32 %v3246, %v3271
  %v3280 = vmul.f32 %v3272, 1.442695
  %v3281 = vpow.pop %v3280
  %v3282 = vmul.f32 %v3273, 1.442695
  %v3283 = vpow.pop %v3282
  %v3284 = vmul.f32 %v3274, 1.442695
  %v3285 = vpow.pop %v3284
  %v3286 = vmul.f32 %v3275, 1.442695
  %v3287 = vpow.pop %v3286
  %v3288 = vmul.f32 %v3276, 1.442695
  %v3289 = vpow.pop %v3288
  %v3290 = vmul.f32 %v3277, 1.442695
  %v3291 = vpow.pop %v3290
  %v3292 = vmul.f32 %v3278, 1.442695
  %v3293 = vpow.pop %v3292
  %v3294 = vmul.f32 %v3279, 1.442695
  %v3295 = vpow.pop %v3294
  %v3296 = vsel %vm199, %v3281, 0.0
  %3297 = vadd.xlane.f32.xlu0 %v3296
  %v3298 = vpop.xlane.xlu0 %3297
  %v3299 = vsel %vm199, %v3283, 0.0
  %3300 = vadd.xlane.f32.xlu0 %v3299
  %v3301 = vpop.xlane.xlu0 %3300
  %v3302 = vsel %vm199, %v3285, 0.0
  %3303 = vadd.xlane.f32.xlu0 %v3302
  %v3304 = vpop.xlane.xlu0 %3303
  %v3305 = vsel %vm199, %v3287, 0.0
  %3306 = vadd.xlane.f32.xlu0 %v3305
  %v3307 = vpop.xlane.xlu0 %3306
  %v3308 = vsel %vm199, %v3289, 0.0
  %3309 = vadd.xlane.f32.xlu0 %v3308
  %v3310 = vpop.xlane.xlu0 %3309
  %v3311 = vsel %vm199, %v3291, 0.0
  %3312 = vadd.xlane.f32.xlu0 %v3311
  %v3313 = vpop.xlane.xlu0 %3312
  %v3314 = vsel %vm199, %v3293, 0.0
  %3315 = vadd.xlane.f32.xlu0 %v3314
  %v3316 = vpop.xlane.xlu0 %3315
  %v3317 = vsel %vm199, %v3295, 0.0
  %3318 = vadd.xlane.f32.xlu0 %v3317
  %v3319 = vpop.xlane.xlu0 %3318
  %v3320 = vrcp.pop %v3298
  %v3321 = vrcp.pop %v3301
  %v3322 = vrcp.pop %v3304
  %v3323 = vrcp.pop %v3307
  %v3324 = vrcp.pop %v3310
  %v3325 = vrcp.pop %v3313
  %v3326 = vrcp.pop %v3316
  %v3327 = vrcp.pop %v3319
  %v3328 = vmul.f32 %v3281, %v3320
  %v3329 = vmul.f32 %v3283, %v3321
  %v3330 = vmul.f32 %v3285, %v3322
  %v3331 = vmul.f32 %v3287, %v3323
  %v3332 = vmul.f32 %v3289, %v3324
  %v3333 = vmul.f32 %v3291, %v3325
  %v3334 = vmul.f32 %v3293, %v3326
  %v3335 = vmul.f32 %v3295, %v3327
  %3336 = vrot.lane.b32.xlu0 %v139, 88
  %v3337 = vpop.permute.xlu0 %3336
  %v3340 = vsel %vm199, %v3328, 0
  %3342 = vmatpush.msra.mxu0 0.0
  %3343 = vmatpush.msra.mxu0 0.0
  %3344 = vmatpush.msra.mxu0 0.0
  %3345 = vmatpush.msra.mxu0 0.0
  %3346 = vmatpush.msra.mxu0 0.0
  %3347 = vmatpush.msra.mxu0 0.0
  %3348 = vmatpush.msra.mxu0 0.0
  %3349 = vmatpush.msra.mxu0 0.0
  %3350 = vmatpush.msra.mxu0 0.0
  %3351 = vmatpush.msra.mxu0 0.0
  %3352 = vmatpush.msra.mxu0 0.0
  %3353 = vmatpush.msra.mxu0 0.0
  %3354 = vmatpush.msra.mxu0 0.0
  %3355 = vmatpush.msra.mxu0 0.0
  %3356 = vmatpush.msra.mxu0 0.0
  %3357 = vmatpush.msra.mxu0 %v3337
  %3358 = vmatmul.f32.gmra.mxu0 %v3340
  %v3359 = vpop.f32.mrf.mxu0
  %v3360 = vadd.f32 0.0, %v3359
  %3361 = vdwg.mxu0
  %3362 = vrot.lane.b32.xlu0 %v141, 88
  %v3363 = vpop.permute.xlu0 %3362
  %v3366 = vsel %vm199, %v3329, 0
  %3368 = vmatpush.msra.mxu0 0.0
  %3369 = vmatpush.msra.mxu0 0.0
  %3370 = vmatpush.msra.mxu0 0.0
  %3371 = vmatpush.msra.mxu0 0.0
  %3372 = vmatpush.msra.mxu0 0.0
  %3373 = vmatpush.msra.mxu0 0.0
  %3374 = vmatpush.msra.mxu0 0.0
  %3375 = vmatpush.msra.mxu0 0.0
  %3376 = vmatpush.msra.mxu0 0.0
  %3377 = vmatpush.msra.mxu0 0.0
  %3378 = vmatpush.msra.mxu0 0.0
  %3379 = vmatpush.msra.mxu0 0.0
  %3380 = vmatpush.msra.mxu0 0.0
  %3381 = vmatpush.msra.mxu0 0.0
  %3382 = vmatpush.msra.mxu0 0.0
  %3383 = vmatpush.msra.mxu0 %v3363
  %3384 = vmatmul.f32.gmra.mxu0 %v3366
  %v3385 = vpop.f32.mrf.mxu0
  %v3386 = vadd.f32 0.0, %v3385
  %3387 = vdwg.mxu0
  %3388 = vrot.lane.b32.xlu0 %v144, 88
  %v3389 = vpop.permute.xlu0 %3388
  %v3392 = vsel %vm199, %v3330, 0
  %3394 = vmatpush.msra.mxu0 0.0
  %3395 = vmatpush.msra.mxu0 0.0
  %3396 = vmatpush.msra.mxu0 0.0
  %3397 = vmatpush.msra.mxu0 0.0
  %3398 = vmatpush.msra.mxu0 0.0
  %3399 = vmatpush.msra.mxu0 0.0
  %3400 = vmatpush.msra.mxu0 0.0
  %3401 = vmatpush.msra.mxu0 0.0
  %3402 = vmatpush.msra.mxu0 0.0
  %3403 = vmatpush.msra.mxu0 0.0
  %3404 = vmatpush.msra.mxu0 0.0
  %3405 = vmatpush.msra.mxu0 0.0
  %3406 = vmatpush.msra.mxu0 0.0
  %3407 = vmatpush.msra.mxu0 0.0
  %3408 = vmatpush.msra.mxu0 0.0
  %3409 = vmatpush.msra.mxu0 %v3389
  %3410 = vmatmul.f32.gmra.mxu0 %v3392
  %v3411 = vpop.f32.mrf.mxu0
  %v3412 = vadd.f32 0.0, %v3411
  %3413 = vdwg.mxu0
  %3414 = vrot.lane.b32.xlu0 %v146, 88
  %v3415 = vpop.permute.xlu0 %3414
  %v3418 = vsel %vm199, %v3331, 0
  %3420 = vmatpush.msra.mxu0 0.0
  %3421 = vmatpush.msra.mxu0 0.0
  %3422 = vmatpush.msra.mxu0 0.0
  %3423 = vmatpush.msra.mxu0 0.0
  %3424 = vmatpush.msra.mxu0 0.0
  %3425 = vmatpush.msra.mxu0 0.0
  %3426 = vmatpush.msra.mxu0 0.0
  %3427 = vmatpush.msra.mxu0 0.0
  %3428 = vmatpush.msra.mxu0 0.0
  %3429 = vmatpush.msra.mxu0 0.0
  %3430 = vmatpush.msra.mxu0 0.0
  %3431 = vmatpush.msra.mxu0 0.0
  %3432 = vmatpush.msra.mxu0 0.0
  %3433 = vmatpush.msra.mxu0 0.0
  %3434 = vmatpush.msra.mxu0 0.0
  %3435 = vmatpush.msra.mxu0 %v3415
  %3436 = vmatmul.f32.gmra.mxu0 %v3418
  %v3437 = vpop.f32.mrf.mxu0
  %v3438 = vadd.f32 0.0, %v3437
  %3439 = vdwg.mxu0
  %3440 = vrot.lane.b32.xlu0 %v149, 88
  %v3441 = vpop.permute.xlu0 %3440
  %v3444 = vsel %vm199, %v3332, 0
  %3446 = vmatpush.msra.mxu0 0.0
  %3447 = vmatpush.msra.mxu0 0.0
  %3448 = vmatpush.msra.mxu0 0.0
  %3449 = vmatpush.msra.mxu0 0.0
  %3450 = vmatpush.msra.mxu0 0.0
  %3451 = vmatpush.msra.mxu0 0.0
  %3452 = vmatpush.msra.mxu0 0.0
  %3453 = vmatpush.msra.mxu0 0.0
  %3454 = vmatpush.msra.mxu0 0.0
  %3455 = vmatpush.msra.mxu0 0.0
  %3456 = vmatpush.msra.mxu0 0.0
  %3457 = vmatpush.msra.mxu0 0.0
  %3458 = vmatpush.msra.mxu0 0.0
  %3459 = vmatpush.msra.mxu0 0.0
  %3460 = vmatpush.msra.mxu0 0.0
  %3461 = vmatpush.msra.mxu0 %v3441
  %3462 = vmatmul.f32.gmra.mxu0 %v3444
  %v3463 = vpop.f32.mrf.mxu0
  %v3464 = vadd.f32 0.0, %v3463
  %3465 = vdwg.mxu0
  %3466 = vrot.lane.b32.xlu0 %v151, 88
  %v3467 = vpop.permute.xlu0 %3466
  %v3470 = vsel %vm199, %v3333, 0
  %3472 = vmatpush.msra.mxu0 0.0
  %3473 = vmatpush.msra.mxu0 0.0
  %3474 = vmatpush.msra.mxu0 0.0
  %3475 = vmatpush.msra.mxu0 0.0
  %3476 = vmatpush.msra.mxu0 0.0
  %3477 = vmatpush.msra.mxu0 0.0
  %3478 = vmatpush.msra.mxu0 0.0
  %3479 = vmatpush.msra.mxu0 0.0
  %3480 = vmatpush.msra.mxu0 0.0
  %3481 = vmatpush.msra.mxu0 0.0
  %3482 = vmatpush.msra.mxu0 0.0
  %3483 = vmatpush.msra.mxu0 0.0
  %3484 = vmatpush.msra.mxu0 0.0
  %3485 = vmatpush.msra.mxu0 0.0
  %3486 = vmatpush.msra.mxu0 0.0
  %3487 = vmatpush.msra.mxu0 %v3467
  %3488 = vmatmul.f32.gmra.mxu0 %v3470
  %v3489 = vpop.f32.mrf.mxu0
  %v3490 = vadd.f32 0.0, %v3489
  %3491 = vdwg.mxu0
  %3492 = vrot.lane.b32.xlu0 %v154, 88
  %v3493 = vpop.permute.xlu0 %3492
  %v3496 = vsel %vm199, %v3334, 0
  %3498 = vmatpush.msra.mxu0 0.0
  %3499 = vmatpush.msra.mxu0 0.0
  %3500 = vmatpush.msra.mxu0 0.0
  %3501 = vmatpush.msra.mxu0 0.0
  %3502 = vmatpush.msra.mxu0 0.0
  %3503 = vmatpush.msra.mxu0 0.0
  %3504 = vmatpush.msra.mxu0 0.0
  %3505 = vmatpush.msra.mxu0 0.0
  %3506 = vmatpush.msra.mxu0 0.0
  %3507 = vmatpush.msra.mxu0 0.0
  %3508 = vmatpush.msra.mxu0 0.0
  %3509 = vmatpush.msra.mxu0 0.0
  %3510 = vmatpush.msra.mxu0 0.0
  %3511 = vmatpush.msra.mxu0 0.0
  %3512 = vmatpush.msra.mxu0 0.0
  %3513 = vmatpush.msra.mxu0 %v3493
  %3514 = vmatmul.f32.gmra.mxu0 %v3496
  %v3515 = vpop.f32.mrf.mxu0
  %v3516 = vadd.f32 0.0, %v3515
  %3517 = vdwg.mxu0
  %3518 = vrot.lane.b32.xlu0 %v156, 88
  %v3519 = vpop.permute.xlu0 %3518
  %v3522 = vsel %vm199, %v3335, 0
  %3524 = vmatpush.msra.mxu0 0.0
  %3525 = vmatpush.msra.mxu0 0.0
  %3526 = vmatpush.msra.mxu0 0.0
  %3527 = vmatpush.msra.mxu0 0.0
  %3528 = vmatpush.msra.mxu0 0.0
  %3529 = vmatpush.msra.mxu0 0.0
  %3530 = vmatpush.msra.mxu0 0.0
  %3531 = vmatpush.msra.mxu0 0.0
  %3532 = vmatpush.msra.mxu0 0.0
  %3533 = vmatpush.msra.mxu0 0.0
  %3534 = vmatpush.msra.mxu0 0.0
  %3535 = vmatpush.msra.mxu0 0.0
  %3536 = vmatpush.msra.mxu0 0.0
  %3537 = vmatpush.msra.mxu0 0.0
  %3538 = vmatpush.msra.mxu0 0.0
  %3539 = vmatpush.msra.mxu0 %v3519
  %3540 = vmatmul.f32.gmra.mxu0 %v3522
  %v3541 = vpop.f32.mrf.mxu0
  %v3542 = vadd.f32 0.0, %v3541
  %3543 = vdwg.mxu0
  %3544 = vrot.lane.b32.xlu0 %v110, 16
  %v3545 = vpop.permute.xlu0 %3544
  %3546 = vrot.lane.b32.xlu0 %v139, 112
  %v3547 = vpop.permute.xlu0 %3546
  %v3548 = vsel %vm199, %v3545, 0
  %v3550 = vsel %vm199, %v3547, 0
  %3552 = vmatpush.xpose.msra.mxu0 0.0
  %3553 = vmatpush.xpose.msra.mxu0 0.0
  %3554 = vmatpush.xpose.msra.mxu0 0.0
  %3555 = vmatpush.xpose.msra.mxu0 0.0
  %3556 = vmatpush.xpose.msra.mxu0 0.0
  %3557 = vmatpush.xpose.msra.mxu0 0.0
  %3558 = vmatpush.xpose.msra.mxu0 0.0
  %3559 = vmatpush.xpose.msra.mxu0 0.0
  %3560 = vmatpush.xpose.msra.mxu0 0.0
  %3561 = vmatpush.xpose.msra.mxu0 0.0
  %3562 = vmatpush.xpose.msra.mxu0 0.0
  %3563 = vmatpush.xpose.msra.mxu0 0.0
  %3564 = vmatpush.xpose.msra.mxu0 0.0
  %3565 = vmatpush.xpose.msra.mxu0 0.0
  %3566 = vmatpush.xpose.msra.mxu0 0.0
  %3567 = vmatpush.xpose.msra.mxu0 %v3550
  %3568 = vmatmul.f32.gmra.mxu0 %v3548
  %v3569 = vpop.f32.mrf.mxu0
  %v3570 = vadd.f32 %v195, %v3569
  %3571 = vdwg.mxu0
  %3572 = vrot.lane.b32.xlu0 %v112, 16
  %v3573 = vpop.permute.xlu0 %3572
  %3574 = vrot.lane.b32.xlu0 %v141, 112
  %v3575 = vpop.permute.xlu0 %3574
  %v3576 = vsel %vm199, %v3573, 0
  %v3578 = vsel %vm199, %v3575, 0
  %3580 = vmatpush.xpose.msra.mxu0 0.0
  %3581 = vmatpush.xpose.msra.mxu0 0.0
  %3582 = vmatpush.xpose.msra.mxu0 0.0
  %3583 = vmatpush.xpose.msra.mxu0 0.0
  %3584 = vmatpush.xpose.msra.mxu0 0.0
  %3585 = vmatpush.xpose.msra.mxu0 0.0
  %3586 = vmatpush.xpose.msra.mxu0 0.0
  %3587 = vmatpush.xpose.msra.mxu0 0.0
  %3588 = vmatpush.xpose.msra.mxu0 0.0
  %3589 = vmatpush.xpose.msra.mxu0 0.0
  %3590 = vmatpush.xpose.msra.mxu0 0.0
  %3591 = vmatpush.xpose.msra.mxu0 0.0
  %3592 = vmatpush.xpose.msra.mxu0 0.0
  %3593 = vmatpush.xpose.msra.mxu0 0.0
  %3594 = vmatpush.xpose.msra.mxu0 0.0
  %3595 = vmatpush.xpose.msra.mxu0 %v3578
  %3596 = vmatmul.f32.gmra.mxu0 %v3576
  %v3597 = vpop.f32.mrf.mxu0
  %v3598 = vadd.f32 %v195, %v3597
  %3599 = vdwg.mxu0
  %3600 = vrot.lane.b32.xlu0 %v115, 16
  %v3601 = vpop.permute.xlu0 %3600
  %3602 = vrot.lane.b32.xlu0 %v144, 112
  %v3603 = vpop.permute.xlu0 %3602
  %v3604 = vsel %vm199, %v3601, 0
  %v3606 = vsel %vm199, %v3603, 0
  %3608 = vmatpush.xpose.msra.mxu0 0.0
  %3609 = vmatpush.xpose.msra.mxu0 0.0
  %3610 = vmatpush.xpose.msra.mxu0 0.0
  %3611 = vmatpush.xpose.msra.mxu0 0.0
  %3612 = vmatpush.xpose.msra.mxu0 0.0
  %3613 = vmatpush.xpose.msra.mxu0 0.0
  %3614 = vmatpush.xpose.msra.mxu0 0.0
  %3615 = vmatpush.xpose.msra.mxu0 0.0
  %3616 = vmatpush.xpose.msra.mxu0 0.0
  %3617 = vmatpush.xpose.msra.mxu0 0.0
  %3618 = vmatpush.xpose.msra.mxu0 0.0
  %3619 = vmatpush.xpose.msra.mxu0 0.0
  %3620 = vmatpush.xpose.msra.mxu0 0.0
  %3621 = vmatpush.xpose.msra.mxu0 0.0
  %3622 = vmatpush.xpose.msra.mxu0 0.0
  %3623 = vmatpush.xpose.msra.mxu0 %v3606
  %3624 = vmatmul.f32.gmra.mxu0 %v3604
  %v3625 = vpop.f32.mrf.mxu0
  %v3626 = vadd.f32 %v195, %v3625
  %3627 = vdwg.mxu0
  %3628 = vrot.lane.b32.xlu0 %v117, 16
  %v3629 = vpop.permute.xlu0 %3628
  %3630 = vrot.lane.b32.xlu0 %v146, 112
  %v3631 = vpop.permute.xlu0 %3630
  %v3632 = vsel %vm199, %v3629, 0
  %v3634 = vsel %vm199, %v3631, 0
  %3636 = vmatpush.xpose.msra.mxu0 0.0
  %3637 = vmatpush.xpose.msra.mxu0 0.0
  %3638 = vmatpush.xpose.msra.mxu0 0.0
  %3639 = vmatpush.xpose.msra.mxu0 0.0
  %3640 = vmatpush.xpose.msra.mxu0 0.0
  %3641 = vmatpush.xpose.msra.mxu0 0.0
  %3642 = vmatpush.xpose.msra.mxu0 0.0
  %3643 = vmatpush.xpose.msra.mxu0 0.0
  %3644 = vmatpush.xpose.msra.mxu0 0.0
  %3645 = vmatpush.xpose.msra.mxu0 0.0
  %3646 = vmatpush.xpose.msra.mxu0 0.0
  %3647 = vmatpush.xpose.msra.mxu0 0.0
  %3648 = vmatpush.xpose.msra.mxu0 0.0
  %3649 = vmatpush.xpose.msra.mxu0 0.0
  %3650 = vmatpush.xpose.msra.mxu0 0.0
  %3651 = vmatpush.xpose.msra.mxu0 %v3634
  %3652 = vmatmul.f32.gmra.mxu0 %v3632
  %v3653 = vpop.f32.mrf.mxu0
  %v3654 = vadd.f32 %v195, %v3653
  %3655 = vdwg.mxu0
  %3656 = vrot.lane.b32.xlu0 %v120, 16
  %v3657 = vpop.permute.xlu0 %3656
  %3658 = vrot.lane.b32.xlu0 %v149, 112
  %v3659 = vpop.permute.xlu0 %3658
  %v3660 = vsel %vm199, %v3657, 0
  %v3662 = vsel %vm199, %v3659, 0
  %3664 = vmatpush.xpose.msra.mxu0 0.0
  %3665 = vmatpush.xpose.msra.mxu0 0.0
  %3666 = vmatpush.xpose.msra.mxu0 0.0
  %3667 = vmatpush.xpose.msra.mxu0 0.0
  %3668 = vmatpush.xpose.msra.mxu0 0.0
  %3669 = vmatpush.xpose.msra.mxu0 0.0
  %3670 = vmatpush.xpose.msra.mxu0 0.0
  %3671 = vmatpush.xpose.msra.mxu0 0.0
  %3672 = vmatpush.xpose.msra.mxu0 0.0
  %3673 = vmatpush.xpose.msra.mxu0 0.0
  %3674 = vmatpush.xpose.msra.mxu0 0.0
  %3675 = vmatpush.xpose.msra.mxu0 0.0
  %3676 = vmatpush.xpose.msra.mxu0 0.0
  %3677 = vmatpush.xpose.msra.mxu0 0.0
  %3678 = vmatpush.xpose.msra.mxu0 0.0
  %3679 = vmatpush.xpose.msra.mxu0 %v3662
  %3680 = vmatmul.f32.gmra.mxu0 %v3660
  %v3681 = vpop.f32.mrf.mxu0
  %v3682 = vadd.f32 %v195, %v3681
  %3683 = vdwg.mxu0
  %3684 = vrot.lane.b32.xlu0 %v122, 16
  %v3685 = vpop.permute.xlu0 %3684
  %3686 = vrot.lane.b32.xlu0 %v151, 112
  %v3687 = vpop.permute.xlu0 %3686
  %v3688 = vsel %vm199, %v3685, 0
  %v3690 = vsel %vm199, %v3687, 0
  %3692 = vmatpush.xpose.msra.mxu0 0.0
  %3693 = vmatpush.xpose.msra.mxu0 0.0
  %3694 = vmatpush.xpose.msra.mxu0 0.0
  %3695 = vmatpush.xpose.msra.mxu0 0.0
  %3696 = vmatpush.xpose.msra.mxu0 0.0
  %3697 = vmatpush.xpose.msra.mxu0 0.0
  %3698 = vmatpush.xpose.msra.mxu0 0.0
  %3699 = vmatpush.xpose.msra.mxu0 0.0
  %3700 = vmatpush.xpose.msra.mxu0 0.0
  %3701 = vmatpush.xpose.msra.mxu0 0.0
  %3702 = vmatpush.xpose.msra.mxu0 0.0
  %3703 = vmatpush.xpose.msra.mxu0 0.0
  %3704 = vmatpush.xpose.msra.mxu0 0.0
  %3705 = vmatpush.xpose.msra.mxu0 0.0
  %3706 = vmatpush.xpose.msra.mxu0 0.0
  %3707 = vmatpush.xpose.msra.mxu0 %v3690
  %3708 = vmatmul.f32.gmra.mxu0 %v3688
  %v3709 = vpop.f32.mrf.mxu0
  %v3710 = vadd.f32 %v195, %v3709
  %3711 = vdwg.mxu0
  %3712 = vrot.lane.b32.xlu0 %v125, 16
  %v3713 = vpop.permute.xlu0 %3712
  %3714 = vrot.lane.b32.xlu0 %v154, 112
  %v3715 = vpop.permute.xlu0 %3714
  %v3716 = vsel %vm199, %v3713, 0
  %v3718 = vsel %vm199, %v3715, 0
  %3720 = vmatpush.xpose.msra.mxu0 0.0
  %3721 = vmatpush.xpose.msra.mxu0 0.0
  %3722 = vmatpush.xpose.msra.mxu0 0.0
  %3723 = vmatpush.xpose.msra.mxu0 0.0
  %3724 = vmatpush.xpose.msra.mxu0 0.0
  %3725 = vmatpush.xpose.msra.mxu0 0.0
  %3726 = vmatpush.xpose.msra.mxu0 0.0
  %3727 = vmatpush.xpose.msra.mxu0 0.0
  %3728 = vmatpush.xpose.msra.mxu0 0.0
  %3729 = vmatpush.xpose.msra.mxu0 0.0
  %3730 = vmatpush.xpose.msra.mxu0 0.0
  %3731 = vmatpush.xpose.msra.mxu0 0.0
  %3732 = vmatpush.xpose.msra.mxu0 0.0
  %3733 = vmatpush.xpose.msra.mxu0 0.0
  %3734 = vmatpush.xpose.msra.mxu0 0.0
  %3735 = vmatpush.xpose.msra.mxu0 %v3718
  %3736 = vmatmul.f32.gmra.mxu0 %v3716
  %v3737 = vpop.f32.mrf.mxu0
  %v3738 = vadd.f32 %v195, %v3737
  %3739 = vdwg.mxu0
  %3740 = vrot.lane.b32.xlu0 %v127, 16
  %v3741 = vpop.permute.xlu0 %3740
  %3742 = vrot.lane.b32.xlu0 %v156, 112
  %v3743 = vpop.permute.xlu0 %3742
  %v3744 = vsel %vm199, %v3741, 0
  %v3746 = vsel %vm199, %v3743, 0
  %3748 = vmatpush.xpose.msra.mxu0 0.0
  %3749 = vmatpush.xpose.msra.mxu0 0.0
  %3750 = vmatpush.xpose.msra.mxu0 0.0
  %3751 = vmatpush.xpose.msra.mxu0 0.0
  %3752 = vmatpush.xpose.msra.mxu0 0.0
  %3753 = vmatpush.xpose.msra.mxu0 0.0
  %3754 = vmatpush.xpose.msra.mxu0 0.0
  %3755 = vmatpush.xpose.msra.mxu0 0.0
  %3756 = vmatpush.xpose.msra.mxu0 0.0
  %3757 = vmatpush.xpose.msra.mxu0 0.0
  %3758 = vmatpush.xpose.msra.mxu0 0.0
  %3759 = vmatpush.xpose.msra.mxu0 0.0
  %3760 = vmatpush.xpose.msra.mxu0 0.0
  %3761 = vmatpush.xpose.msra.mxu0 0.0
  %3762 = vmatpush.xpose.msra.mxu0 0.0
  %3763 = vmatpush.xpose.msra.mxu0 %v3746
  %3764 = vmatmul.f32.gmra.mxu0 %v3744
  %v3765 = vpop.f32.mrf.mxu0
  %v3766 = vadd.f32 %v195, %v3765
  %3767 = vdwg.mxu0
  %v3768 = vsel %vm199, %v3570, -inf
  %3769 = vmax.xlane.f32.xlu0 %v3768
  %v3770 = vpop.xlane.xlu0 %3769
  %v3771 = vsel %vm199, %v3598, -inf
  %3772 = vmax.xlane.f32.xlu0 %v3771
  %v3773 = vpop.xlane.xlu0 %3772
  %v3774 = vsel %vm199, %v3626, -inf
  %3775 = vmax.xlane.f32.xlu0 %v3774
  %v3776 = vpop.xlane.xlu0 %3775
  %v3777 = vsel %vm199, %v3654, -inf
  %3778 = vmax.xlane.f32.xlu0 %v3777
  %v3779 = vpop.xlane.xlu0 %3778
  %v3780 = vsel %vm199, %v3682, -inf
  %3781 = vmax.xlane.f32.xlu0 %v3780
  %v3782 = vpop.xlane.xlu0 %3781
  %v3783 = vsel %vm199, %v3710, -inf
  %3784 = vmax.xlane.f32.xlu0 %v3783
  %v3785 = vpop.xlane.xlu0 %3784
  %v3786 = vsel %vm199, %v3738, -inf
  %3787 = vmax.xlane.f32.xlu0 %v3786
  %v3788 = vpop.xlane.xlu0 %3787
  %v3789 = vsel %vm199, %v3766, -inf
  %3790 = vmax.xlane.f32.xlu0 %v3789
  %v3791 = vpop.xlane.xlu0 %3790
  %v3792 = vsub.f32 %v3570, %v3770
  %v3793 = vsub.f32 %v3598, %v3773
  %v3794 = vsub.f32 %v3626, %v3776
  %v3795 = vsub.f32 %v3654, %v3779
  %v3796 = vsub.f32 %v3682, %v3782
  %v3797 = vsub.f32 %v3710, %v3785
  %v3798 = vsub.f32 %v3738, %v3788
  %v3799 = vsub.f32 %v3766, %v3791
  %v3800 = vmul.f32 %v3792, 1.442695
  %v3801 = vpow.pop %v3800
  %v3802 = vmul.f32 %v3793, 1.442695
  %v3803 = vpow.pop %v3802
  %v3804 = vmul.f32 %v3794, 1.442695
  %v3805 = vpow.pop %v3804
  %v3806 = vmul.f32 %v3795, 1.442695
  %v3807 = vpow.pop %v3806
  %v3808 = vmul.f32 %v3796, 1.442695
  %v3809 = vpow.pop %v3808
  %v3810 = vmul.f32 %v3797, 1.442695
  %v3811 = vpow.pop %v3810
  %v3812 = vmul.f32 %v3798, 1.442695
  %v3813 = vpow.pop %v3812
  %v3814 = vmul.f32 %v3799, 1.442695
  %v3815 = vpow.pop %v3814
  %v3816 = vsel %vm199, %v3801, 0.0
  %3817 = vadd.xlane.f32.xlu0 %v3816
  %v3818 = vpop.xlane.xlu0 %3817
  %v3819 = vsel %vm199, %v3803, 0.0
  %3820 = vadd.xlane.f32.xlu0 %v3819
  %v3821 = vpop.xlane.xlu0 %3820
  %v3822 = vsel %vm199, %v3805, 0.0
  %3823 = vadd.xlane.f32.xlu0 %v3822
  %v3824 = vpop.xlane.xlu0 %3823
  %v3825 = vsel %vm199, %v3807, 0.0
  %3826 = vadd.xlane.f32.xlu0 %v3825
  %v3827 = vpop.xlane.xlu0 %3826
  %v3828 = vsel %vm199, %v3809, 0.0
  %3829 = vadd.xlane.f32.xlu0 %v3828
  %v3830 = vpop.xlane.xlu0 %3829
  %v3831 = vsel %vm199, %v3811, 0.0
  %3832 = vadd.xlane.f32.xlu0 %v3831
  %v3833 = vpop.xlane.xlu0 %3832
  %v3834 = vsel %vm199, %v3813, 0.0
  %3835 = vadd.xlane.f32.xlu0 %v3834
  %v3836 = vpop.xlane.xlu0 %3835
  %v3837 = vsel %vm199, %v3815, 0.0
  %3838 = vadd.xlane.f32.xlu0 %v3837
  %v3839 = vpop.xlane.xlu0 %3838
  %v3840 = vrcp.pop %v3818
  %v3841 = vrcp.pop %v3821
  %v3842 = vrcp.pop %v3824
  %v3843 = vrcp.pop %v3827
  %v3844 = vrcp.pop %v3830
  %v3845 = vrcp.pop %v3833
  %v3846 = vrcp.pop %v3836
  %v3847 = vrcp.pop %v3839
  %v3848 = vmul.f32 %v3801, %v3840
  %v3849 = vmul.f32 %v3803, %v3841
  %v3850 = vmul.f32 %v3805, %v3842
  %v3851 = vmul.f32 %v3807, %v3843
  %v3852 = vmul.f32 %v3809, %v3844
  %v3853 = vmul.f32 %v3811, %v3845
  %v3854 = vmul.f32 %v3813, %v3846
  %v3855 = vmul.f32 %v3815, %v3847
  %3856 = vrot.lane.b32.xlu0 %v139, 80
  %v3857 = vpop.permute.xlu0 %3856
  %v3860 = vsel %vm199, %v3848, 0
  %3862 = vmatpush.msra.mxu0 0.0
  %3863 = vmatpush.msra.mxu0 0.0
  %3864 = vmatpush.msra.mxu0 0.0
  %3865 = vmatpush.msra.mxu0 0.0
  %3866 = vmatpush.msra.mxu0 0.0
  %3867 = vmatpush.msra.mxu0 0.0
  %3868 = vmatpush.msra.mxu0 0.0
  %3869 = vmatpush.msra.mxu0 0.0
  %3870 = vmatpush.msra.mxu0 0.0
  %3871 = vmatpush.msra.mxu0 0.0
  %3872 = vmatpush.msra.mxu0 0.0
  %3873 = vmatpush.msra.mxu0 0.0
  %3874 = vmatpush.msra.mxu0 0.0
  %3875 = vmatpush.msra.mxu0 0.0
  %3876 = vmatpush.msra.mxu0 0.0
  %3877 = vmatpush.msra.mxu0 %v3857
  %3878 = vmatmul.f32.gmra.mxu0 %v3860
  %v3879 = vpop.f32.mrf.mxu0
  %v3880 = vadd.f32 0.0, %v3879
  %3881 = vdwg.mxu0
  %3882 = vrot.lane.b32.xlu0 %v141, 80
  %v3883 = vpop.permute.xlu0 %3882
  %v3886 = vsel %vm199, %v3849, 0
  %3888 = vmatpush.msra.mxu0 0.0
  %3889 = vmatpush.msra.mxu0 0.0
  %3890 = vmatpush.msra.mxu0 0.0
  %3891 = vmatpush.msra.mxu0 0.0
  %3892 = vmatpush.msra.mxu0 0.0
  %3893 = vmatpush.msra.mxu0 0.0
  %3894 = vmatpush.msra.mxu0 0.0
  %3895 = vmatpush.msra.mxu0 0.0
  %3896 = vmatpush.msra.mxu0 0.0
  %3897 = vmatpush.msra.mxu0 0.0
  %3898 = vmatpush.msra.mxu0 0.0
  %3899 = vmatpush.msra.mxu0 0.0
  %3900 = vmatpush.msra.mxu0 0.0
  %3901 = vmatpush.msra.mxu0 0.0
  %3902 = vmatpush.msra.mxu0 0.0
  %3903 = vmatpush.msra.mxu0 %v3883
  %3904 = vmatmul.f32.gmra.mxu0 %v3886
  %v3905 = vpop.f32.mrf.mxu0
  %v3906 = vadd.f32 0.0, %v3905
  %3907 = vdwg.mxu0
  %3908 = vrot.lane.b32.xlu0 %v144, 80
  %v3909 = vpop.permute.xlu0 %3908
  %v3912 = vsel %vm199, %v3850, 0
  %3914 = vmatpush.msra.mxu0 0.0
  %3915 = vmatpush.msra.mxu0 0.0
  %3916 = vmatpush.msra.mxu0 0.0
  %3917 = vmatpush.msra.mxu0 0.0
  %3918 = vmatpush.msra.mxu0 0.0
  %3919 = vmatpush.msra.mxu0 0.0
  %3920 = vmatpush.msra.mxu0 0.0
  %3921 = vmatpush.msra.mxu0 0.0
  %3922 = vmatpush.msra.mxu0 0.0
  %3923 = vmatpush.msra.mxu0 0.0
  %3924 = vmatpush.msra.mxu0 0.0
  %3925 = vmatpush.msra.mxu0 0.0
  %3926 = vmatpush.msra.mxu0 0.0
  %3927 = vmatpush.msra.mxu0 0.0
  %3928 = vmatpush.msra.mxu0 0.0
  %3929 = vmatpush.msra.mxu0 %v3909
  %3930 = vmatmul.f32.gmra.mxu0 %v3912
  %v3931 = vpop.f32.mrf.mxu0
  %v3932 = vadd.f32 0.0, %v3931
  %3933 = vdwg.mxu0
  %3934 = vrot.lane.b32.xlu0 %v146, 80
  %v3935 = vpop.permute.xlu0 %3934
  %v3938 = vsel %vm199, %v3851, 0
  %3940 = vmatpush.msra.mxu0 0.0
  %3941 = vmatpush.msra.mxu0 0.0
  %3942 = vmatpush.msra.mxu0 0.0
  %3943 = vmatpush.msra.mxu0 0.0
  %3944 = vmatpush.msra.mxu0 0.0
  %3945 = vmatpush.msra.mxu0 0.0
  %3946 = vmatpush.msra.mxu0 0.0
  %3947 = vmatpush.msra.mxu0 0.0
  %3948 = vmatpush.msra.mxu0 0.0
  %3949 = vmatpush.msra.mxu0 0.0
  %3950 = vmatpush.msra.mxu0 0.0
  %3951 = vmatpush.msra.mxu0 0.0
  %3952 = vmatpush.msra.mxu0 0.0
  %3953 = vmatpush.msra.mxu0 0.0
  %3954 = vmatpush.msra.mxu0 0.0
  %3955 = vmatpush.msra.mxu0 %v3935
  %3956 = vmatmul.f32.gmra.mxu0 %v3938
  %v3957 = vpop.f32.mrf.mxu0
  %v3958 = vadd.f32 0.0, %v3957
  %3959 = vdwg.mxu0
  %3960 = vrot.lane.b32.xlu0 %v149, 80
  %v3961 = vpop.permute.xlu0 %3960
  %v3964 = vsel %vm199, %v3852, 0
  %3966 = vmatpush.msra.mxu0 0.0
  %3967 = vmatpush.msra.mxu0 0.0
  %3968 = vmatpush.msra.mxu0 0.0
  %3969 = vmatpush.msra.mxu0 0.0
  %3970 = vmatpush.msra.mxu0 0.0
  %3971 = vmatpush.msra.mxu0 0.0
  %3972 = vmatpush.msra.mxu0 0.0
  %3973 = vmatpush.msra.mxu0 0.0
  %3974 = vmatpush.msra.mxu0 0.0
  %3975 = vmatpush.msra.mxu0 0.0
  %3976 = vmatpush.msra.mxu0 0.0
  %3977 = vmatpush.msra.mxu0 0.0
  %3978 = vmatpush.msra.mxu0 0.0
  %3979 = vmatpush.msra.mxu0 0.0
  %3980 = vmatpush.msra.mxu0 0.0
  %3981 = vmatpush.msra.mxu0 %v3961
  %3982 = vmatmul.f32.gmra.mxu0 %v3964
  %v3983 = vpop.f32.mrf.mxu0
  %v3984 = vadd.f32 0.0, %v3983
  %3985 = vdwg.mxu0
  %3986 = vrot.lane.b32.xlu0 %v151, 80
  %v3987 = vpop.permute.xlu0 %3986
  %v3990 = vsel %vm199, %v3853, 0
  %3992 = vmatpush.msra.mxu0 0.0
  %3993 = vmatpush.msra.mxu0 0.0
  %3994 = vmatpush.msra.mxu0 0.0
  %3995 = vmatpush.msra.mxu0 0.0
  %3996 = vmatpush.msra.mxu0 0.0
  %3997 = vmatpush.msra.mxu0 0.0
  %3998 = vmatpush.msra.mxu0 0.0
  %3999 = vmatpush.msra.mxu0 0.0
  %4000 = vmatpush.msra.mxu0 0.0
  %4001 = vmatpush.msra.mxu0 0.0
  %4002 = vmatpush.msra.mxu0 0.0
  %4003 = vmatpush.msra.mxu0 0.0
  %4004 = vmatpush.msra.mxu0 0.0
  %4005 = vmatpush.msra.mxu0 0.0
  %4006 = vmatpush.msra.mxu0 0.0
  %4007 = vmatpush.msra.mxu0 %v3987
  %4008 = vmatmul.f32.gmra.mxu0 %v3990
  %v4009 = vpop.f32.mrf.mxu0
  %v4010 = vadd.f32 0.0, %v4009
  %4011 = vdwg.mxu0
  %4012 = vrot.lane.b32.xlu0 %v154, 80
  %v4013 = vpop.permute.xlu0 %4012
  %v4016 = vsel %vm199, %v3854, 0
  %4018 = vmatpush.msra.mxu0 0.0
  %4019 = vmatpush.msra.mxu0 0.0
  %4020 = vmatpush.msra.mxu0 0.0
  %4021 = vmatpush.msra.mxu0 0.0
  %4022 = vmatpush.msra.mxu0 0.0
  %4023 = vmatpush.msra.mxu0 0.0
  %4024 = vmatpush.msra.mxu0 0.0
  %4025 = vmatpush.msra.mxu0 0.0
  %4026 = vmatpush.msra.mxu0 0.0
  %4027 = vmatpush.msra.mxu0 0.0
  %4028 = vmatpush.msra.mxu0 0.0
  %4029 = vmatpush.msra.mxu0 0.0
  %4030 = vmatpush.msra.mxu0 0.0
  %4031 = vmatpush.msra.mxu0 0.0
  %4032 = vmatpush.msra.mxu0 0.0
  %4033 = vmatpush.msra.mxu0 %v4013
  %4034 = vmatmul.f32.gmra.mxu0 %v4016
  %v4035 = vpop.f32.mrf.mxu0
  %v4036 = vadd.f32 0.0, %v4035
  %4037 = vdwg.mxu0
  %4038 = vrot.lane.b32.xlu0 %v156, 80
  %v4039 = vpop.permute.xlu0 %4038
  %v4042 = vsel %vm199, %v3855, 0
  %4044 = vmatpush.msra.mxu0 0.0
  %4045 = vmatpush.msra.mxu0 0.0
  %4046 = vmatpush.msra.mxu0 0.0
  %4047 = vmatpush.msra.mxu0 0.0
  %4048 = vmatpush.msra.mxu0 0.0
  %4049 = vmatpush.msra.mxu0 0.0
  %4050 = vmatpush.msra.mxu0 0.0
  %4051 = vmatpush.msra.mxu0 0.0
  %4052 = vmatpush.msra.mxu0 0.0
  %4053 = vmatpush.msra.mxu0 0.0
  %4054 = vmatpush.msra.mxu0 0.0
  %4055 = vmatpush.msra.mxu0 0.0
  %4056 = vmatpush.msra.mxu0 0.0
  %4057 = vmatpush.msra.mxu0 0.0
  %4058 = vmatpush.msra.mxu0 0.0
  %4059 = vmatpush.msra.mxu0 %v4039
  %4060 = vmatmul.f32.gmra.mxu0 %v4042
  %v4061 = vpop.f32.mrf.mxu0
  %v4062 = vadd.f32 0.0, %v4061
  %4063 = vdwg.mxu0
  %4064 = vrot.lane.b32.xlu0 %v110, 8
  %v4065 = vpop.permute.xlu0 %4064
  %4066 = vrot.lane.b32.xlu0 %v139, 104
  %v4067 = vpop.permute.xlu0 %4066
  %v4068 = vsel %vm199, %v4065, 0
  %v4070 = vsel %vm199, %v4067, 0
  %4072 = vmatpush.xpose.msra.mxu0 0.0
  %4073 = vmatpush.xpose.msra.mxu0 0.0
  %4074 = vmatpush.xpose.msra.mxu0 0.0
  %4075 = vmatpush.xpose.msra.mxu0 0.0
  %4076 = vmatpush.xpose.msra.mxu0 0.0
  %4077 = vmatpush.xpose.msra.mxu0 0.0
  %4078 = vmatpush.xpose.msra.mxu0 0.0
  %4079 = vmatpush.xpose.msra.mxu0 0.0
  %4080 = vmatpush.xpose.msra.mxu0 0.0
  %4081 = vmatpush.xpose.msra.mxu0 0.0
  %4082 = vmatpush.xpose.msra.mxu0 0.0
  %4083 = vmatpush.xpose.msra.mxu0 0.0
  %4084 = vmatpush.xpose.msra.mxu0 0.0
  %4085 = vmatpush.xpose.msra.mxu0 0.0
  %4086 = vmatpush.xpose.msra.mxu0 0.0
  %4087 = vmatpush.xpose.msra.mxu0 %v4070
  %4088 = vmatmul.f32.gmra.mxu0 %v4068
  %v4089 = vpop.f32.mrf.mxu0
  %v4090 = vadd.f32 %v195, %v4089
  %4091 = vdwg.mxu0
  %4092 = vrot.lane.b32.xlu0 %v112, 8
  %v4093 = vpop.permute.xlu0 %4092
  %4094 = vrot.lane.b32.xlu0 %v141, 104
  %v4095 = vpop.permute.xlu0 %4094
  %v4096 = vsel %vm199, %v4093, 0
  %v4098 = vsel %vm199, %v4095, 0
  %4100 = vmatpush.xpose.msra.mxu0 0.0
  %4101 = vmatpush.xpose.msra.mxu0 0.0
  %4102 = vmatpush.xpose.msra.mxu0 0.0
  %4103 = vmatpush.xpose.msra.mxu0 0.0
  %4104 = vmatpush.xpose.msra.mxu0 0.0
  %4105 = vmatpush.xpose.msra.mxu0 0.0
  %4106 = vmatpush.xpose.msra.mxu0 0.0
  %4107 = vmatpush.xpose.msra.mxu0 0.0
  %4108 = vmatpush.xpose.msra.mxu0 0.0
  %4109 = vmatpush.xpose.msra.mxu0 0.0
  %4110 = vmatpush.xpose.msra.mxu0 0.0
  %4111 = vmatpush.xpose.msra.mxu0 0.0
  %4112 = vmatpush.xpose.msra.mxu0 0.0
  %4113 = vmatpush.xpose.msra.mxu0 0.0
  %4114 = vmatpush.xpose.msra.mxu0 0.0
  %4115 = vmatpush.xpose.msra.mxu0 %v4098
  %4116 = vmatmul.f32.gmra.mxu0 %v4096
  %v4117 = vpop.f32.mrf.mxu0
  %v4118 = vadd.f32 %v195, %v4117
  %4119 = vdwg.mxu0
  %4120 = vrot.lane.b32.xlu0 %v115, 8
  %v4121 = vpop.permute.xlu0 %4120
  %4122 = vrot.lane.b32.xlu0 %v144, 104
  %v4123 = vpop.permute.xlu0 %4122
  %v4124 = vsel %vm199, %v4121, 0
  %v4126 = vsel %vm199, %v4123, 0
  %4128 = vmatpush.xpose.msra.mxu0 0.0
  %4129 = vmatpush.xpose.msra.mxu0 0.0
  %4130 = vmatpush.xpose.msra.mxu0 0.0
  %4131 = vmatpush.xpose.msra.mxu0 0.0
  %4132 = vmatpush.xpose.msra.mxu0 0.0
  %4133 = vmatpush.xpose.msra.mxu0 0.0
  %4134 = vmatpush.xpose.msra.mxu0 0.0
  %4135 = vmatpush.xpose.msra.mxu0 0.0
  %4136 = vmatpush.xpose.msra.mxu0 0.0
  %4137 = vmatpush.xpose.msra.mxu0 0.0
  %4138 = vmatpush.xpose.msra.mxu0 0.0
  %4139 = vmatpush.xpose.msra.mxu0 0.0
  %4140 = vmatpush.xpose.msra.mxu0 0.0
  %4141 = vmatpush.xpose.msra.mxu0 0.0
  %4142 = vmatpush.xpose.msra.mxu0 0.0
  %4143 = vmatpush.xpose.msra.mxu0 %v4126
  %4144 = vmatmul.f32.gmra.mxu0 %v4124
  %v4145 = vpop.f32.mrf.mxu0
  %v4146 = vadd.f32 %v195, %v4145
  %4147 = vdwg.mxu0
  %4148 = vrot.lane.b32.xlu0 %v117, 8
  %v4149 = vpop.permute.xlu0 %4148
  %4150 = vrot.lane.b32.xlu0 %v146, 104
  %v4151 = vpop.permute.xlu0 %4150
  %v4152 = vsel %vm199, %v4149, 0
  %v4154 = vsel %vm199, %v4151, 0
  %4156 = vmatpush.xpose.msra.mxu0 0.0
  %4157 = vmatpush.xpose.msra.mxu0 0.0
  %4158 = vmatpush.xpose.msra.mxu0 0.0
  %4159 = vmatpush.xpose.msra.mxu0 0.0
  %4160 = vmatpush.xpose.msra.mxu0 0.0
  %4161 = vmatpush.xpose.msra.mxu0 0.0
  %4162 = vmatpush.xpose.msra.mxu0 0.0
  %4163 = vmatpush.xpose.msra.mxu0 0.0
  %4164 = vmatpush.xpose.msra.mxu0 0.0
  %4165 = vmatpush.xpose.msra.mxu0 0.0
  %4166 = vmatpush.xpose.msra.mxu0 0.0
  %4167 = vmatpush.xpose.msra.mxu0 0.0
  %4168 = vmatpush.xpose.msra.mxu0 0.0
  %4169 = vmatpush.xpose.msra.mxu0 0.0
  %4170 = vmatpush.xpose.msra.mxu0 0.0
  %4171 = vmatpush.xpose.msra.mxu0 %v4154
  %4172 = vmatmul.f32.gmra.mxu0 %v4152
  %v4173 = vpop.f32.mrf.mxu0
  %v4174 = vadd.f32 %v195, %v4173
  %4175 = vdwg.mxu0
  %4176 = vrot.lane.b32.xlu0 %v120, 8
  %v4177 = vpop.permute.xlu0 %4176
  %4178 = vrot.lane.b32.xlu0 %v149, 104
  %v4179 = vpop.permute.xlu0 %4178
  %v4180 = vsel %vm199, %v4177, 0
  %v4182 = vsel %vm199, %v4179, 0
  %4184 = vmatpush.xpose.msra.mxu0 0.0
  %4185 = vmatpush.xpose.msra.mxu0 0.0
  %4186 = vmatpush.xpose.msra.mxu0 0.0
  %4187 = vmatpush.xpose.msra.mxu0 0.0
  %4188 = vmatpush.xpose.msra.mxu0 0.0
  %4189 = vmatpush.xpose.msra.mxu0 0.0
  %4190 = vmatpush.xpose.msra.mxu0 0.0
  %4191 = vmatpush.xpose.msra.mxu0 0.0
  %4192 = vmatpush.xpose.msra.mxu0 0.0
  %4193 = vmatpush.xpose.msra.mxu0 0.0
  %4194 = vmatpush.xpose.msra.mxu0 0.0
  %4195 = vmatpush.xpose.msra.mxu0 0.0
  %4196 = vmatpush.xpose.msra.mxu0 0.0
  %4197 = vmatpush.xpose.msra.mxu0 0.0
  %4198 = vmatpush.xpose.msra.mxu0 0.0
  %4199 = vmatpush.xpose.msra.mxu0 %v4182
  %4200 = vmatmul.f32.gmra.mxu0 %v4180
  %v4201 = vpop.f32.mrf.mxu0
  %v4202 = vadd.f32 %v195, %v4201
  %4203 = vdwg.mxu0
  %4204 = vrot.lane.b32.xlu0 %v122, 8
  %v4205 = vpop.permute.xlu0 %4204
  %4206 = vrot.lane.b32.xlu0 %v151, 104
  %v4207 = vpop.permute.xlu0 %4206
  %v4208 = vsel %vm199, %v4205, 0
  %v4210 = vsel %vm199, %v4207, 0
  %4212 = vmatpush.xpose.msra.mxu0 0.0
  %4213 = vmatpush.xpose.msra.mxu0 0.0
  %4214 = vmatpush.xpose.msra.mxu0 0.0
  %4215 = vmatpush.xpose.msra.mxu0 0.0
  %4216 = vmatpush.xpose.msra.mxu0 0.0
  %4217 = vmatpush.xpose.msra.mxu0 0.0
  %4218 = vmatpush.xpose.msra.mxu0 0.0
  %4219 = vmatpush.xpose.msra.mxu0 0.0
  %4220 = vmatpush.xpose.msra.mxu0 0.0
  %4221 = vmatpush.xpose.msra.mxu0 0.0
  %4222 = vmatpush.xpose.msra.mxu0 0.0
  %4223 = vmatpush.xpose.msra.mxu0 0.0
  %4224 = vmatpush.xpose.msra.mxu0 0.0
  %4225 = vmatpush.xpose.msra.mxu0 0.0
  %4226 = vmatpush.xpose.msra.mxu0 0.0
  %4227 = vmatpush.xpose.msra.mxu0 %v4210
  %4228 = vmatmul.f32.gmra.mxu0 %v4208
  %v4229 = vpop.f32.mrf.mxu0
  %v4230 = vadd.f32 %v195, %v4229
  %4231 = vdwg.mxu0
  %4232 = vrot.lane.b32.xlu0 %v125, 8
  %v4233 = vpop.permute.xlu0 %4232
  %4234 = vrot.lane.b32.xlu0 %v154, 104
  %v4235 = vpop.permute.xlu0 %4234
  %v4236 = vsel %vm199, %v4233, 0
  %v4238 = vsel %vm199, %v4235, 0
  %4240 = vmatpush.xpose.msra.mxu0 0.0
  %4241 = vmatpush.xpose.msra.mxu0 0.0
  %4242 = vmatpush.xpose.msra.mxu0 0.0
  %4243 = vmatpush.xpose.msra.mxu0 0.0
  %4244 = vmatpush.xpose.msra.mxu0 0.0
  %4245 = vmatpush.xpose.msra.mxu0 0.0
  %4246 = vmatpush.xpose.msra.mxu0 0.0
  %4247 = vmatpush.xpose.msra.mxu0 0.0
  %4248 = vmatpush.xpose.msra.mxu0 0.0
  %4249 = vmatpush.xpose.msra.mxu0 0.0
  %4250 = vmatpush.xpose.msra.mxu0 0.0
  %4251 = vmatpush.xpose.msra.mxu0 0.0
  %4252 = vmatpush.xpose.msra.mxu0 0.0
  %4253 = vmatpush.xpose.msra.mxu0 0.0
  %4254 = vmatpush.xpose.msra.mxu0 0.0
  %4255 = vmatpush.xpose.msra.mxu0 %v4238
  %4256 = vmatmul.f32.gmra.mxu0 %v4236
  %v4257 = vpop.f32.mrf.mxu0
  %v4258 = vadd.f32 %v195, %v4257
  %4259 = vdwg.mxu0
  %4260 = vrot.lane.b32.xlu0 %v127, 8
  %v4261 = vpop.permute.xlu0 %4260
  %4262 = vrot.lane.b32.xlu0 %v156, 104
  %v4263 = vpop.permute.xlu0 %4262
  %v4264 = vsel %vm199, %v4261, 0
  %v4266 = vsel %vm199, %v4263, 0
  %4268 = vmatpush.xpose.msra.mxu0 0.0
  %4269 = vmatpush.xpose.msra.mxu0 0.0
  %4270 = vmatpush.xpose.msra.mxu0 0.0
  %4271 = vmatpush.xpose.msra.mxu0 0.0
  %4272 = vmatpush.xpose.msra.mxu0 0.0
  %4273 = vmatpush.xpose.msra.mxu0 0.0
  %4274 = vmatpush.xpose.msra.mxu0 0.0
  %4275 = vmatpush.xpose.msra.mxu0 0.0
  %4276 = vmatpush.xpose.msra.mxu0 0.0
  %4277 = vmatpush.xpose.msra.mxu0 0.0
  %4278 = vmatpush.xpose.msra.mxu0 0.0
  %4279 = vmatpush.xpose.msra.mxu0 0.0
  %4280 = vmatpush.xpose.msra.mxu0 0.0
  %4281 = vmatpush.xpose.msra.mxu0 0.0
  %4282 = vmatpush.xpose.msra.mxu0 0.0
  %4283 = vmatpush.xpose.msra.mxu0 %v4266
  %4284 = vmatmul.f32.gmra.mxu0 %v4264
  %v4285 = vpop.f32.mrf.mxu0
  %v4286 = vadd.f32 %v195, %v4285
  %4287 = vdwg.mxu0
  %v4288 = vsel %vm199, %v4090, -inf
  %4289 = vmax.xlane.f32.xlu0 %v4288
  %v4290 = vpop.xlane.xlu0 %4289
  %v4291 = vsel %vm199, %v4118, -inf
  %4292 = vmax.xlane.f32.xlu0 %v4291
  %v4293 = vpop.xlane.xlu0 %4292
  %v4294 = vsel %vm199, %v4146, -inf
  %4295 = vmax.xlane.f32.xlu0 %v4294
  %v4296 = vpop.xlane.xlu0 %4295
  %v4297 = vsel %vm199, %v4174, -inf
  %4298 = vmax.xlane.f32.xlu0 %v4297
  %v4299 = vpop.xlane.xlu0 %4298
  %v4300 = vsel %vm199, %v4202, -inf
  %4301 = vmax.xlane.f32.xlu0 %v4300
  %v4302 = vpop.xlane.xlu0 %4301
  %v4303 = vsel %vm199, %v4230, -inf
  %4304 = vmax.xlane.f32.xlu0 %v4303
  %v4305 = vpop.xlane.xlu0 %4304
  %v4306 = vsel %vm199, %v4258, -inf
  %4307 = vmax.xlane.f32.xlu0 %v4306
  %v4308 = vpop.xlane.xlu0 %4307
  %v4309 = vsel %vm199, %v4286, -inf
  %4310 = vmax.xlane.f32.xlu0 %v4309
  %v4311 = vpop.xlane.xlu0 %4310
  %v4312 = vsub.f32 %v4090, %v4290
  %v4313 = vsub.f32 %v4118, %v4293
  %v4314 = vsub.f32 %v4146, %v4296
  %v4315 = vsub.f32 %v4174, %v4299
  %v4316 = vsub.f32 %v4202, %v4302
  %v4317 = vsub.f32 %v4230, %v4305
  %v4318 = vsub.f32 %v4258, %v4308
  %v4319 = vsub.f32 %v4286, %v4311
  %v4320 = vmul.f32 %v4312, 1.442695
  %v4321 = vpow.pop %v4320
  %v4322 = vmul.f32 %v4313, 1.442695
  %v4323 = vpow.pop %v4322
  %v4324 = vmul.f32 %v4314, 1.442695
  %v4325 = vpow.pop %v4324
  %v4326 = vmul.f32 %v4315, 1.442695
  %v4327 = vpow.pop %v4326
  %v4328 = vmul.f32 %v4316, 1.442695
  %v4329 = vpow.pop %v4328
  %v4330 = vmul.f32 %v4317, 1.442695
  %v4331 = vpow.pop %v4330
  %v4332 = vmul.f32 %v4318, 1.442695
  %v4333 = vpow.pop %v4332
  %v4334 = vmul.f32 %v4319, 1.442695
  %v4335 = vpow.pop %v4334
  %v4336 = vsel %vm199, %v4321, 0.0
  %4337 = vadd.xlane.f32.xlu0 %v4336
  %v4338 = vpop.xlane.xlu0 %4337
  %v4339 = vsel %vm199, %v4323, 0.0
  %4340 = vadd.xlane.f32.xlu0 %v4339
  %v4341 = vpop.xlane.xlu0 %4340
  %v4342 = vsel %vm199, %v4325, 0.0
  %4343 = vadd.xlane.f32.xlu0 %v4342
  %v4344 = vpop.xlane.xlu0 %4343
  %v4345 = vsel %vm199, %v4327, 0.0
  %4346 = vadd.xlane.f32.xlu0 %v4345
  %v4347 = vpop.xlane.xlu0 %4346
  %v4348 = vsel %vm199, %v4329, 0.0
  %4349 = vadd.xlane.f32.xlu0 %v4348
  %v4350 = vpop.xlane.xlu0 %4349
  %v4351 = vsel %vm199, %v4331, 0.0
  %4352 = vadd.xlane.f32.xlu0 %v4351
  %v4353 = vpop.xlane.xlu0 %4352
  %v4354 = vsel %vm199, %v4333, 0.0
  %4355 = vadd.xlane.f32.xlu0 %v4354
  %v4356 = vpop.xlane.xlu0 %4355
  %v4357 = vsel %vm199, %v4335, 0.0
  %4358 = vadd.xlane.f32.xlu0 %v4357
  %v4359 = vpop.xlane.xlu0 %4358
  %v4360 = vrcp.pop %v4338
  %v4361 = vrcp.pop %v4341
  %v4362 = vrcp.pop %v4344
  %v4363 = vrcp.pop %v4347
  %v4364 = vrcp.pop %v4350
  %v4365 = vrcp.pop %v4353
  %v4366 = vrcp.pop %v4356
  %v4367 = vrcp.pop %v4359
  %v4368 = vmul.f32 %v4321, %v4360
  %v4369 = vmul.f32 %v4323, %v4361
  %v4370 = vmul.f32 %v4325, %v4362
  %v4371 = vmul.f32 %v4327, %v4363
  %v4372 = vmul.f32 %v4329, %v4364
  %v4373 = vmul.f32 %v4331, %v4365
  %v4374 = vmul.f32 %v4333, %v4366
  %v4375 = vmul.f32 %v4335, %v4367
  %4376 = vrot.lane.b32.xlu0 %v139, 72
  %v4377 = vpop.permute.xlu0 %4376
  %v4380 = vsel %vm199, %v4368, 0
  %4382 = vmatpush.msra.mxu0 0.0
  %4383 = vmatpush.msra.mxu0 0.0
  %4384 = vmatpush.msra.mxu0 0.0
  %4385 = vmatpush.msra.mxu0 0.0
  %4386 = vmatpush.msra.mxu0 0.0
  %4387 = vmatpush.msra.mxu0 0.0
  %4388 = vmatpush.msra.mxu0 0.0
  %4389 = vmatpush.msra.mxu0 0.0
  %4390 = vmatpush.msra.mxu0 0.0
  %4391 = vmatpush.msra.mxu0 0.0
  %4392 = vmatpush.msra.mxu0 0.0
  %4393 = vmatpush.msra.mxu0 0.0
  %4394 = vmatpush.msra.mxu0 0.0
  %4395 = vmatpush.msra.mxu0 0.0
  %4396 = vmatpush.msra.mxu0 0.0
  %4397 = vmatpush.msra.mxu0 %v4377
  %4398 = vmatmul.f32.gmra.mxu0 %v4380
  %v4399 = vpop.f32.mrf.mxu0
  %v4400 = vadd.f32 0.0, %v4399
  %4401 = vdwg.mxu0
  %4402 = vrot.lane.b32.xlu0 %v141, 72
  %v4403 = vpop.permute.xlu0 %4402
  %v4406 = vsel %vm199, %v4369, 0
  %4408 = vmatpush.msra.mxu0 0.0
  %4409 = vmatpush.msra.mxu0 0.0
  %4410 = vmatpush.msra.mxu0 0.0
  %4411 = vmatpush.msra.mxu0 0.0
  %4412 = vmatpush.msra.mxu0 0.0
  %4413 = vmatpush.msra.mxu0 0.0
  %4414 = vmatpush.msra.mxu0 0.0
  %4415 = vmatpush.msra.mxu0 0.0
  %4416 = vmatpush.msra.mxu0 0.0
  %4417 = vmatpush.msra.mxu0 0.0
  %4418 = vmatpush.msra.mxu0 0.0
  %4419 = vmatpush.msra.mxu0 0.0
  %4420 = vmatpush.msra.mxu0 0.0
  %4421 = vmatpush.msra.mxu0 0.0
  %4422 = vmatpush.msra.mxu0 0.0
  %4423 = vmatpush.msra.mxu0 %v4403
  %4424 = vmatmul.f32.gmra.mxu0 %v4406
  %v4425 = vpop.f32.mrf.mxu0
  %v4426 = vadd.f32 0.0, %v4425
  %4427 = vdwg.mxu0
  %4428 = vrot.lane.b32.xlu0 %v144, 72
  %v4429 = vpop.permute.xlu0 %4428
  %v4432 = vsel %vm199, %v4370, 0
  %4434 = vmatpush.msra.mxu0 0.0
  %4435 = vmatpush.msra.mxu0 0.0
  %4436 = vmatpush.msra.mxu0 0.0
  %4437 = vmatpush.msra.mxu0 0.0
  %4438 = vmatpush.msra.mxu0 0.0
  %4439 = vmatpush.msra.mxu0 0.0
  %4440 = vmatpush.msra.mxu0 0.0
  %4441 = vmatpush.msra.mxu0 0.0
  %4442 = vmatpush.msra.mxu0 0.0
  %4443 = vmatpush.msra.mxu0 0.0
  %4444 = vmatpush.msra.mxu0 0.0
  %4445 = vmatpush.msra.mxu0 0.0
  %4446 = vmatpush.msra.mxu0 0.0
  %4447 = vmatpush.msra.mxu0 0.0
  %4448 = vmatpush.msra.mxu0 0.0
  %4449 = vmatpush.msra.mxu0 %v4429
  %4450 = vmatmul.f32.gmra.mxu0 %v4432
  %v4451 = vpop.f32.mrf.mxu0
  %v4452 = vadd.f32 0.0, %v4451
  %4453 = vdwg.mxu0
  %4454 = vrot.lane.b32.xlu0 %v146, 72
  %v4455 = vpop.permute.xlu0 %4454
  %v4458 = vsel %vm199, %v4371, 0
  %4460 = vmatpush.msra.mxu0 0.0
  %4461 = vmatpush.msra.mxu0 0.0
  %4462 = vmatpush.msra.mxu0 0.0
  %4463 = vmatpush.msra.mxu0 0.0
  %4464 = vmatpush.msra.mxu0 0.0
  %4465 = vmatpush.msra.mxu0 0.0
  %4466 = vmatpush.msra.mxu0 0.0
  %4467 = vmatpush.msra.mxu0 0.0
  %4468 = vmatpush.msra.mxu0 0.0
  %4469 = vmatpush.msra.mxu0 0.0
  %4470 = vmatpush.msra.mxu0 0.0
  %4471 = vmatpush.msra.mxu0 0.0
  %4472 = vmatpush.msra.mxu0 0.0
  %4473 = vmatpush.msra.mxu0 0.0
  %4474 = vmatpush.msra.mxu0 0.0
  %4475 = vmatpush.msra.mxu0 %v4455
  %4476 = vmatmul.f32.gmra.mxu0 %v4458
  %v4477 = vpop.f32.mrf.mxu0
  %v4478 = vadd.f32 0.0, %v4477
  %4479 = vdwg.mxu0
  %4480 = vrot.lane.b32.xlu0 %v149, 72
  %v4481 = vpop.permute.xlu0 %4480
  %v4484 = vsel %vm199, %v4372, 0
  %4486 = vmatpush.msra.mxu0 0.0
  %4487 = vmatpush.msra.mxu0 0.0
  %4488 = vmatpush.msra.mxu0 0.0
  %4489 = vmatpush.msra.mxu0 0.0
  %4490 = vmatpush.msra.mxu0 0.0
  %4491 = vmatpush.msra.mxu0 0.0
  %4492 = vmatpush.msra.mxu0 0.0
  %4493 = vmatpush.msra.mxu0 0.0
  %4494 = vmatpush.msra.mxu0 0.0
  %4495 = vmatpush.msra.mxu0 0.0
  %4496 = vmatpush.msra.mxu0 0.0
  %4497 = vmatpush.msra.mxu0 0.0
  %4498 = vmatpush.msra.mxu0 0.0
  %4499 = vmatpush.msra.mxu0 0.0
  %4500 = vmatpush.msra.mxu0 0.0
  %4501 = vmatpush.msra.mxu0 %v4481
  %4502 = vmatmul.f32.gmra.mxu0 %v4484
  %v4503 = vpop.f32.mrf.mxu0
  %v4504 = vadd.f32 0.0, %v4503
  %4505 = vdwg.mxu0
  %4506 = vrot.lane.b32.xlu0 %v151, 72
  %v4507 = vpop.permute.xlu0 %4506
  %v4510 = vsel %vm199, %v4373, 0
  %4512 = vmatpush.msra.mxu0 0.0
  %4513 = vmatpush.msra.mxu0 0.0
  %4514 = vmatpush.msra.mxu0 0.0
  %4515 = vmatpush.msra.mxu0 0.0
  %4516 = vmatpush.msra.mxu0 0.0
  %4517 = vmatpush.msra.mxu0 0.0
  %4518 = vmatpush.msra.mxu0 0.0
  %4519 = vmatpush.msra.mxu0 0.0
  %4520 = vmatpush.msra.mxu0 0.0
  %4521 = vmatpush.msra.mxu0 0.0
  %4522 = vmatpush.msra.mxu0 0.0
  %4523 = vmatpush.msra.mxu0 0.0
  %4524 = vmatpush.msra.mxu0 0.0
  %4525 = vmatpush.msra.mxu0 0.0
  %4526 = vmatpush.msra.mxu0 0.0
  %4527 = vmatpush.msra.mxu0 %v4507
  %4528 = vmatmul.f32.gmra.mxu0 %v4510
  %v4529 = vpop.f32.mrf.mxu0
  %v4530 = vadd.f32 0.0, %v4529
  %4531 = vdwg.mxu0
  %4532 = vrot.lane.b32.xlu0 %v154, 72
  %v4533 = vpop.permute.xlu0 %4532
  %v4536 = vsel %vm199, %v4374, 0
  %4538 = vmatpush.msra.mxu0 0.0
  %4539 = vmatpush.msra.mxu0 0.0
  %4540 = vmatpush.msra.mxu0 0.0
  %4541 = vmatpush.msra.mxu0 0.0
  %4542 = vmatpush.msra.mxu0 0.0
  %4543 = vmatpush.msra.mxu0 0.0
  %4544 = vmatpush.msra.mxu0 0.0
  %4545 = vmatpush.msra.mxu0 0.0
  %4546 = vmatpush.msra.mxu0 0.0
  %4547 = vmatpush.msra.mxu0 0.0
  %4548 = vmatpush.msra.mxu0 0.0
  %4549 = vmatpush.msra.mxu0 0.0
  %4550 = vmatpush.msra.mxu0 0.0
  %4551 = vmatpush.msra.mxu0 0.0
  %4552 = vmatpush.msra.mxu0 0.0
  %4553 = vmatpush.msra.mxu0 %v4533
  %4554 = vmatmul.f32.gmra.mxu0 %v4536
  %v4555 = vpop.f32.mrf.mxu0
  %v4556 = vadd.f32 0.0, %v4555
  %4557 = vdwg.mxu0
  %4558 = vrot.lane.b32.xlu0 %v156, 72
  %v4559 = vpop.permute.xlu0 %4558
  %v4562 = vsel %vm199, %v4375, 0
  %4564 = vmatpush.msra.mxu0 0.0
  %4565 = vmatpush.msra.mxu0 0.0
  %4566 = vmatpush.msra.mxu0 0.0
  %4567 = vmatpush.msra.mxu0 0.0
  %4568 = vmatpush.msra.mxu0 0.0
  %4569 = vmatpush.msra.mxu0 0.0
  %4570 = vmatpush.msra.mxu0 0.0
  %4571 = vmatpush.msra.mxu0 0.0
  %4572 = vmatpush.msra.mxu0 0.0
  %4573 = vmatpush.msra.mxu0 0.0
  %4574 = vmatpush.msra.mxu0 0.0
  %4575 = vmatpush.msra.mxu0 0.0
  %4576 = vmatpush.msra.mxu0 0.0
  %4577 = vmatpush.msra.mxu0 0.0
  %4578 = vmatpush.msra.mxu0 0.0
  %4579 = vmatpush.msra.mxu0 %v4559
  %4580 = vmatmul.f32.gmra.mxu0 %v4562
  %v4581 = vpop.f32.mrf.mxu0
  %v4582 = vadd.f32 0.0, %v4581
  %4583 = vdwg.mxu0
  %4592 = vrot.lane.b32.xlu0 %v3360, 8
  %v4593 = vpop.permute.xlu0 %4592
  %4594 = vrot.lane.b32.xlu0 %v3386, 8
  %v4595 = vpop.permute.xlu0 %4594
  %4596 = vrot.lane.b32.xlu0 %v3412, 8
  %v4597 = vpop.permute.xlu0 %4596
  %4598 = vrot.lane.b32.xlu0 %v3438, 8
  %v4599 = vpop.permute.xlu0 %4598
  %4600 = vrot.lane.b32.xlu0 %v3464, 8
  %v4601 = vpop.permute.xlu0 %4600
  %4602 = vrot.lane.b32.xlu0 %v3490, 8
  %v4603 = vpop.permute.xlu0 %4602
  %4604 = vrot.lane.b32.xlu0 %v3516, 8
  %v4605 = vpop.permute.xlu0 %4604
  %4606 = vrot.lane.b32.xlu0 %v3542, 8
  %v4607 = vpop.permute.xlu0 %4606
  %4624 = vrot.lane.b32.xlu0 %v3880, 16
  %v4625 = vpop.permute.xlu0 %4624
  %4626 = vrot.lane.b32.xlu0 %v3906, 16
  %v4627 = vpop.permute.xlu0 %4626
  %4628 = vrot.lane.b32.xlu0 %v3932, 16
  %v4629 = vpop.permute.xlu0 %4628
  %4630 = vrot.lane.b32.xlu0 %v3958, 16
  %v4631 = vpop.permute.xlu0 %4630
  %4632 = vrot.lane.b32.xlu0 %v3984, 16
  %v4633 = vpop.permute.xlu0 %4632
  %4634 = vrot.lane.b32.xlu0 %v4010, 16
  %v4635 = vpop.permute.xlu0 %4634
  %4636 = vrot.lane.b32.xlu0 %v4036, 16
  %v4637 = vpop.permute.xlu0 %4636
  %4638 = vrot.lane.b32.xlu0 %v4062, 16
  %v4639 = vpop.permute.xlu0 %4638
  %4656 = vrot.lane.b32.xlu0 %v4400, 24
  %v4657 = vpop.permute.xlu0 %4656
  %4658 = vrot.lane.b32.xlu0 %v4426, 24
  %v4659 = vpop.permute.xlu0 %4658
  %4660 = vrot.lane.b32.xlu0 %v4452, 24
  %v4661 = vpop.permute.xlu0 %4660
  %4662 = vrot.lane.b32.xlu0 %v4478, 24
  %v4663 = vpop.permute.xlu0 %4662
  %4664 = vrot.lane.b32.xlu0 %v4504, 24
  %v4665 = vpop.permute.xlu0 %4664
  %4666 = vrot.lane.b32.xlu0 %v4530, 24
  %v4667 = vpop.permute.xlu0 %4666
  %4668 = vrot.lane.b32.xlu0 %v4556, 24
  %v4669 = vpop.permute.xlu0 %4668
  %4670 = vrot.lane.b32.xlu0 %v4582, 24
  %v4671 = vpop.permute.xlu0 %4670
  %v4680 = vsel %vm199, %v2840, %v4593
  %v4681 = vsel %vm199, %v2866, %v4595
  %v4682 = vsel %vm199, %v2892, %v4597
  %v4683 = vsel %vm199, %v2918, %v4599
  %v4684 = vsel %vm199, %v2944, %v4601
  %v4685 = vsel %vm199, %v2970, %v4603
  %v4686 = vsel %vm199, %v2996, %v4605
  %v4687 = vsel %vm199, %v3022, %v4607
  %v4688 = vsel %vm2373, %v4680, %v4625
  %v4689 = vsel %vm2373, %v4681, %v4627
  %v4690 = vsel %vm2373, %v4682, %v4629
  %v4691 = vsel %vm2373, %v4683, %v4631
  %v4692 = vsel %vm2373, %v4684, %v4633
  %v4693 = vsel %vm2373, %v4685, %v4635
  %v4694 = vsel %vm2373, %v4686, %v4637
  %v4695 = vsel %vm2373, %v4687, %v4639
  %v4696 = vsel %vm2382, %v4688, %v4657
  %v4697 = vsel %vm2382, %v4689, %v4659
  %v4698 = vsel %vm2382, %v4690, %v4661
  %v4699 = vsel %vm2382, %v4691, %v4663
  %v4700 = vsel %vm2382, %v4692, %v4665
  %v4701 = vsel %vm2382, %v4693, %v4667
  %v4702 = vsel %vm2382, %v4694, %v4669
  %v4703 = vsel %vm2382, %v4695, %v4671
  %v4704 = vpack.c.bf16 %v4697, %v4696
  %v4705 = vpack.c.bf16 %v4699, %v4698
  %v4706 = vpack.c.bf16 %v4701, %v4700
  %v4707 = vpack.c.bf16 %v4703, %v4702
  %s4708 = scalar_lea.vmem %s5, 16
  %v4709 = vld [vmem:[%s4708] sm:$0xf]
  %v4710 = vld [vmem:[%s4708 + $0x4] sm:$0xf]
  %v4711 = vld [vmem:[%s4708 + $0x8] sm:$0xf]
  %v4712 = vld [vmem:[%s4708 + $0xc] sm:$0xf]
  %s4713 = scalar_lea.vmem %s6, 1
  %v4714 = vld [vmem:[%s4713] sm:$0x1]
  %v4716 = vperm.slane %v4714, 0
  %v4722 = vunpack.c.l.b16 %v4709
  %v4723 = vunpack.c.l.b16 %v4710
  %v4724 = vunpack.c.l.b16 %v4711
  %v4725 = vunpack.c.l.b16 %v4712
  %v4726 = vpack.c.b16 %v4723, %v4722
  %v4727 = vpack.c.b16 %v4725, %v4724
  %v4731 = vsel %vm87, %v4704, 0
  %v4734 = vsel %vm87, %v4705, 0
  %v4737 = vsel %vm87, %v4706, 0
  %v4740 = vsel %vm87, %v4707, 0
  %4742 = vmatpush.bf16.msra.mxu0 0
  %4743 = vmatpush.bf16.msra.mxu0 0
  %4744 = vmatpush.bf16.msra.mxu0 0
  %4745 = vmatpush.bf16.msra.mxu0 0
  %4746 = vmatpush.bf16.msra.mxu0 0
  %4747 = vmatpush.bf16.msra.mxu0 0
  %4748 = vmatpush.bf16.msra.mxu0 %v4727
  %4749 = vmatpush.bf16.msra.mxu0 %v4726
  %4750 = vmatmul.bf16.gmra.mxu0 %v4731
  %v4751 = vpop.f32.mrf.mxu0
  %v4752 = vadd.f32 %v4716, %v4751
  %v4753 = vpop.f32.mrf.mxu0
  %v4754 = vadd.f32 %v4716, %v4753
  %4755 = vmatmul.bf16.gmra.mxu0 %v4734
  %v4756 = vpop.f32.mrf.mxu0
  %v4757 = vadd.f32 %v4716, %v4756
  %v4758 = vpop.f32.mrf.mxu0
  %v4759 = vadd.f32 %v4716, %v4758
  %4760 = vmatmul.bf16.gmra.mxu0 %v4737
  %v4761 = vpop.f32.mrf.mxu0
  %v4762 = vadd.f32 %v4716, %v4761
  %v4763 = vpop.f32.mrf.mxu0
  %v4764 = vadd.f32 %v4716, %v4763
  %4765 = vmatmul.bf16.gmra.mxu0 %v4740
  %v4766 = vpop.f32.mrf.mxu0
  %v4767 = vadd.f32 %v4716, %v4766
  %v4768 = vpop.f32.mrf.mxu0
  %v4769 = vadd.f32 %v4716, %v4768
  %4770 = vdwg.mxu0
  %4771 = vset.pattern.permute.xlu0 1
  %4772 = vperm.xlu0 %4771, %v187
  %v4773 = vpop.permute.xlu0 %4772
  %4775 = vset.pattern.permute.xlu0 1
  %4776 = vperm.xlu0 %4775, %v188
  %v4777 = vpop.permute.xlu0 %4776
  %4779 = vset.pattern.permute.xlu0 1
  %4780 = vperm.xlu0 %4779, %v189
  %v4781 = vpop.permute.xlu0 %4780
  %4783 = vset.pattern.permute.xlu0 1
  %4784 = vperm.xlu0 %4783, %v190
  %v4785 = vpop.permute.xlu0 %4784
  %4787 = vset.pattern.permute.xlu0 1
  %4788 = vperm.xlu0 %4787, %v191
  %v4789 = vpop.permute.xlu0 %4788
  %4791 = vset.pattern.permute.xlu0 1
  %4792 = vperm.xlu0 %4791, %v192
  %v4793 = vpop.permute.xlu0 %4792
  %4795 = vset.pattern.permute.xlu0 1
  %4796 = vperm.xlu0 %4795, %v193
  %v4797 = vpop.permute.xlu0 %4796
  %4799 = vset.pattern.permute.xlu0 1
  %4800 = vperm.xlu0 %4799, %v194
  %v4801 = vpop.permute.xlu0 %4800
  %v4803 = vmul.f32 %v4773, %v4752
  %v4804 = vmul.f32 %v4777, %v4754
  %v4805 = vmul.f32 %v4781, %v4757
  %v4806 = vmul.f32 %v4785, %v4759
  %v4807 = vmul.f32 %v4789, %v4762
  %v4808 = vmul.f32 %v4793, %v4764
  %v4809 = vmul.f32 %v4797, %v4767
  %v4810 = vmul.f32 %v4801, %v4769
  %v4811 = vadd.f32 %v2504, %v4803
  %v4812 = vadd.f32 %v2505, %v4804
  %v4813 = vadd.f32 %v2506, %v4805
  %v4814 = vadd.f32 %v2507, %v4806
  %v4815 = vadd.f32 %v2508, %v4807
  %v4816 = vadd.f32 %v2509, %v4808
  %v4817 = vadd.f32 %v2510, %v4809
  %v4818 = vadd.f32 %v2511, %v4810
  %4819 = vrot.lane.b32.xlu0 %v139, 64
  %v4820 = vpop.permute.xlu0 %4819
  %4821 = vrot.lane.b32.xlu0 %v139, 32
  %v4822 = vpop.permute.xlu0 %4821
  %v4823 = vsel %vm199, %v4820, 0
  %v4825 = vsel %vm199, %v4822, 0
  %4827 = vmatpush.xpose.msra.mxu0 0.0
  %4828 = vmatpush.xpose.msra.mxu0 0.0
  %4829 = vmatpush.xpose.msra.mxu0 0.0
  %4830 = vmatpush.xpose.msra.mxu0 0.0
  %4831 = vmatpush.xpose.msra.mxu0 0.0
  %4832 = vmatpush.xpose.msra.mxu0 0.0
  %4833 = vmatpush.xpose.msra.mxu0 0.0
  %4834 = vmatpush.xpose.msra.mxu0 0.0
  %4835 = vmatpush.xpose.msra.mxu0 0.0
  %4836 = vmatpush.xpose.msra.mxu0 0.0
  %4837 = vmatpush.xpose.msra.mxu0 0.0
  %4838 = vmatpush.xpose.msra.mxu0 0.0
  %4839 = vmatpush.xpose.msra.mxu0 0.0
  %4840 = vmatpush.xpose.msra.mxu0 0.0
  %4841 = vmatpush.xpose.msra.mxu0 0.0
  %4842 = vmatpush.xpose.msra.mxu0 %v4825
  %4843 = vmatmul.f32.gmra.mxu0 %v4823
  %v4844 = vpop.f32.mrf.mxu0
  %v4845 = vadd.f32 %v195, %v4844
  %4846 = vdwg.mxu0
  %4847 = vrot.lane.b32.xlu0 %v141, 64
  %v4848 = vpop.permute.xlu0 %4847
  %4849 = vrot.lane.b32.xlu0 %v141, 32
  %v4850 = vpop.permute.xlu0 %4849
  %v4851 = vsel %vm199, %v4848, 0
  %v4853 = vsel %vm199, %v4850, 0
  %4855 = vmatpush.xpose.msra.mxu0 0.0
  %4856 = vmatpush.xpose.msra.mxu0 0.0
  %4857 = vmatpush.xpose.msra.mxu0 0.0
  %4858 = vmatpush.xpose.msra.mxu0 0.0
  %4859 = vmatpush.xpose.msra.mxu0 0.0
  %4860 = vmatpush.xpose.msra.mxu0 0.0
  %4861 = vmatpush.xpose.msra.mxu0 0.0
  %4862 = vmatpush.xpose.msra.mxu0 0.0
  %4863 = vmatpush.xpose.msra.mxu0 0.0
  %4864 = vmatpush.xpose.msra.mxu0 0.0
  %4865 = vmatpush.xpose.msra.mxu0 0.0
  %4866 = vmatpush.xpose.msra.mxu0 0.0
  %4867 = vmatpush.xpose.msra.mxu0 0.0
  %4868 = vmatpush.xpose.msra.mxu0 0.0
  %4869 = vmatpush.xpose.msra.mxu0 0.0
  %4870 = vmatpush.xpose.msra.mxu0 %v4853
  %4871 = vmatmul.f32.gmra.mxu0 %v4851
  %v4872 = vpop.f32.mrf.mxu0
  %v4873 = vadd.f32 %v195, %v4872
  %4874 = vdwg.mxu0
  %4875 = vrot.lane.b32.xlu0 %v144, 64
  %v4876 = vpop.permute.xlu0 %4875
  %4877 = vrot.lane.b32.xlu0 %v144, 32
  %v4878 = vpop.permute.xlu0 %4877
  %v4879 = vsel %vm199, %v4876, 0
  %v4881 = vsel %vm199, %v4878, 0
  %4883 = vmatpush.xpose.msra.mxu0 0.0
  %4884 = vmatpush.xpose.msra.mxu0 0.0
  %4885 = vmatpush.xpose.msra.mxu0 0.0
  %4886 = vmatpush.xpose.msra.mxu0 0.0
  %4887 = vmatpush.xpose.msra.mxu0 0.0
  %4888 = vmatpush.xpose.msra.mxu0 0.0
  %4889 = vmatpush.xpose.msra.mxu0 0.0
  %4890 = vmatpush.xpose.msra.mxu0 0.0
  %4891 = vmatpush.xpose.msra.mxu0 0.0
  %4892 = vmatpush.xpose.msra.mxu0 0.0
  %4893 = vmatpush.xpose.msra.mxu0 0.0
  %4894 = vmatpush.xpose.msra.mxu0 0.0
  %4895 = vmatpush.xpose.msra.mxu0 0.0
  %4896 = vmatpush.xpose.msra.mxu0 0.0
  %4897 = vmatpush.xpose.msra.mxu0 0.0
  %4898 = vmatpush.xpose.msra.mxu0 %v4881
  %4899 = vmatmul.f32.gmra.mxu0 %v4879
  %v4900 = vpop.f32.mrf.mxu0
  %v4901 = vadd.f32 %v195, %v4900
  %4902 = vdwg.mxu0
  %4903 = vrot.lane.b32.xlu0 %v146, 64
  %v4904 = vpop.permute.xlu0 %4903
  %4905 = vrot.lane.b32.xlu0 %v146, 32
  %v4906 = vpop.permute.xlu0 %4905
  %v4907 = vsel %vm199, %v4904, 0
  %v4909 = vsel %vm199, %v4906, 0
  %4911 = vmatpush.xpose.msra.mxu0 0.0
  %4912 = vmatpush.xpose.msra.mxu0 0.0
  %4913 = vmatpush.xpose.msra.mxu0 0.0
  %4914 = vmatpush.xpose.msra.mxu0 0.0
  %4915 = vmatpush.xpose.msra.mxu0 0.0
  %4916 = vmatpush.xpose.msra.mxu0 0.0
  %4917 = vmatpush.xpose.msra.mxu0 0.0
  %4918 = vmatpush.xpose.msra.mxu0 0.0
  %4919 = vmatpush.xpose.msra.mxu0 0.0
  %4920 = vmatpush.xpose.msra.mxu0 0.0
  %4921 = vmatpush.xpose.msra.mxu0 0.0
  %4922 = vmatpush.xpose.msra.mxu0 0.0
  %4923 = vmatpush.xpose.msra.mxu0 0.0
  %4924 = vmatpush.xpose.msra.mxu0 0.0
  %4925 = vmatpush.xpose.msra.mxu0 0.0
  %4926 = vmatpush.xpose.msra.mxu0 %v4909
  %4927 = vmatmul.f32.gmra.mxu0 %v4907
  %v4928 = vpop.f32.mrf.mxu0
  %v4929 = vadd.f32 %v195, %v4928
  %4930 = vdwg.mxu0
  %4931 = vrot.lane.b32.xlu0 %v149, 64
  %v4932 = vpop.permute.xlu0 %4931
  %4933 = vrot.lane.b32.xlu0 %v149, 32
  %v4934 = vpop.permute.xlu0 %4933
  %v4935 = vsel %vm199, %v4932, 0
  %v4937 = vsel %vm199, %v4934, 0
  %4939 = vmatpush.xpose.msra.mxu0 0.0
  %4940 = vmatpush.xpose.msra.mxu0 0.0
  %4941 = vmatpush.xpose.msra.mxu0 0.0
  %4942 = vmatpush.xpose.msra.mxu0 0.0
  %4943 = vmatpush.xpose.msra.mxu0 0.0
  %4944 = vmatpush.xpose.msra.mxu0 0.0
  %4945 = vmatpush.xpose.msra.mxu0 0.0
  %4946 = vmatpush.xpose.msra.mxu0 0.0
  %4947 = vmatpush.xpose.msra.mxu0 0.0
  %4948 = vmatpush.xpose.msra.mxu0 0.0
  %4949 = vmatpush.xpose.msra.mxu0 0.0
  %4950 = vmatpush.xpose.msra.mxu0 0.0
  %4951 = vmatpush.xpose.msra.mxu0 0.0
  %4952 = vmatpush.xpose.msra.mxu0 0.0
  %4953 = vmatpush.xpose.msra.mxu0 0.0
  %4954 = vmatpush.xpose.msra.mxu0 %v4937
  %4955 = vmatmul.f32.gmra.mxu0 %v4935
  %v4956 = vpop.f32.mrf.mxu0
  %v4957 = vadd.f32 %v195, %v4956
  %4958 = vdwg.mxu0
  %4959 = vrot.lane.b32.xlu0 %v151, 64
  %v4960 = vpop.permute.xlu0 %4959
  %4961 = vrot.lane.b32.xlu0 %v151, 32
  %v4962 = vpop.permute.xlu0 %4961
  %v4963 = vsel %vm199, %v4960, 0
  %v4965 = vsel %vm199, %v4962, 0
  %4967 = vmatpush.xpose.msra.mxu0 0.0
  %4968 = vmatpush.xpose.msra.mxu0 0.0
  %4969 = vmatpush.xpose.msra.mxu0 0.0
  %4970 = vmatpush.xpose.msra.mxu0 0.0
  %4971 = vmatpush.xpose.msra.mxu0 0.0
  %4972 = vmatpush.xpose.msra.mxu0 0.0
  %4973 = vmatpush.xpose.msra.mxu0 0.0
  %4974 = vmatpush.xpose.msra.mxu0 0.0
  %4975 = vmatpush.xpose.msra.mxu0 0.0
  %4976 = vmatpush.xpose.msra.mxu0 0.0
  %4977 = vmatpush.xpose.msra.mxu0 0.0
  %4978 = vmatpush.xpose.msra.mxu0 0.0
  %4979 = vmatpush.xpose.msra.mxu0 0.0
  %4980 = vmatpush.xpose.msra.mxu0 0.0
  %4981 = vmatpush.xpose.msra.mxu0 0.0
  %4982 = vmatpush.xpose.msra.mxu0 %v4965
  %4983 = vmatmul.f32.gmra.mxu0 %v4963
  %v4984 = vpop.f32.mrf.mxu0
  %v4985 = vadd.f32 %v195, %v4984
  %4986 = vdwg.mxu0
  %4987 = vrot.lane.b32.xlu0 %v154, 64
  %v4988 = vpop.permute.xlu0 %4987
  %4989 = vrot.lane.b32.xlu0 %v154, 32
  %v4990 = vpop.permute.xlu0 %4989
  %v4991 = vsel %vm199, %v4988, 0
  %v4993 = vsel %vm199, %v4990, 0
  %4995 = vmatpush.xpose.msra.mxu0 0.0
  %4996 = vmatpush.xpose.msra.mxu0 0.0
  %4997 = vmatpush.xpose.msra.mxu0 0.0
  %4998 = vmatpush.xpose.msra.mxu0 0.0
  %4999 = vmatpush.xpose.msra.mxu0 0.0
  %5000 = vmatpush.xpose.msra.mxu0 0.0
  %5001 = vmatpush.xpose.msra.mxu0 0.0
  %5002 = vmatpush.xpose.msra.mxu0 0.0
  %5003 = vmatpush.xpose.msra.mxu0 0.0
  %5004 = vmatpush.xpose.msra.mxu0 0.0
  %5005 = vmatpush.xpose.msra.mxu0 0.0
  %5006 = vmatpush.xpose.msra.mxu0 0.0
  %5007 = vmatpush.xpose.msra.mxu0 0.0
  %5008 = vmatpush.xpose.msra.mxu0 0.0
  %5009 = vmatpush.xpose.msra.mxu0 0.0
  %5010 = vmatpush.xpose.msra.mxu0 %v4993
  %5011 = vmatmul.f32.gmra.mxu0 %v4991
  %v5012 = vpop.f32.mrf.mxu0
  %v5013 = vadd.f32 %v195, %v5012
  %5014 = vdwg.mxu0
  %5015 = vrot.lane.b32.xlu0 %v156, 64
  %v5016 = vpop.permute.xlu0 %5015
  %5017 = vrot.lane.b32.xlu0 %v156, 32
  %v5018 = vpop.permute.xlu0 %5017
  %v5019 = vsel %vm199, %v5016, 0
  %v5021 = vsel %vm199, %v5018, 0
  %5023 = vmatpush.xpose.msra.mxu0 0.0
  %5024 = vmatpush.xpose.msra.mxu0 0.0
  %5025 = vmatpush.xpose.msra.mxu0 0.0
  %5026 = vmatpush.xpose.msra.mxu0 0.0
  %5027 = vmatpush.xpose.msra.mxu0 0.0
  %5028 = vmatpush.xpose.msra.mxu0 0.0
  %5029 = vmatpush.xpose.msra.mxu0 0.0
  %5030 = vmatpush.xpose.msra.mxu0 0.0
  %5031 = vmatpush.xpose.msra.mxu0 0.0
  %5032 = vmatpush.xpose.msra.mxu0 0.0
  %5033 = vmatpush.xpose.msra.mxu0 0.0
  %5034 = vmatpush.xpose.msra.mxu0 0.0
  %5035 = vmatpush.xpose.msra.mxu0 0.0
  %5036 = vmatpush.xpose.msra.mxu0 0.0
  %5037 = vmatpush.xpose.msra.mxu0 0.0
  %5038 = vmatpush.xpose.msra.mxu0 %v5021
  %5039 = vmatmul.f32.gmra.mxu0 %v5019
  %v5040 = vpop.f32.mrf.mxu0
  %v5041 = vadd.f32 %v195, %v5040
  %5042 = vdwg.mxu0
  %v5043 = vsel %vm199, %v4845, -inf
  %5044 = vmax.xlane.f32.xlu0 %v5043
  %v5045 = vpop.xlane.xlu0 %5044
  %v5046 = vsel %vm199, %v4873, -inf
  %5047 = vmax.xlane.f32.xlu0 %v5046
  %v5048 = vpop.xlane.xlu0 %5047
  %v5049 = vsel %vm199, %v4901, -inf
  %5050 = vmax.xlane.f32.xlu0 %v5049
  %v5051 = vpop.xlane.xlu0 %5050
  %v5052 = vsel %vm199, %v4929, -inf
  %5053 = vmax.xlane.f32.xlu0 %v5052
  %v5054 = vpop.xlane.xlu0 %5053
  %v5055 = vsel %vm199, %v4957, -inf
  %5056 = vmax.xlane.f32.xlu0 %v5055
  %v5057 = vpop.xlane.xlu0 %5056
  %v5058 = vsel %vm199, %v4985, -inf
  %5059 = vmax.xlane.f32.xlu0 %v5058
  %v5060 = vpop.xlane.xlu0 %5059
  %v5061 = vsel %vm199, %v5013, -inf
  %5062 = vmax.xlane.f32.xlu0 %v5061
  %v5063 = vpop.xlane.xlu0 %5062
  %v5064 = vsel %vm199, %v5041, -inf
  %5065 = vmax.xlane.f32.xlu0 %v5064
  %v5066 = vpop.xlane.xlu0 %5065
  %v5067 = vsub.f32 %v4845, %v5045
  %v5068 = vsub.f32 %v4873, %v5048
  %v5069 = vsub.f32 %v4901, %v5051
  %v5070 = vsub.f32 %v4929, %v5054
  %v5071 = vsub.f32 %v4957, %v5057
  %v5072 = vsub.f32 %v4985, %v5060
  %v5073 = vsub.f32 %v5013, %v5063
  %v5074 = vsub.f32 %v5041, %v5066
  %v5075 = vmul.f32 %v5067, 1.442695
  %v5076 = vpow.pop %v5075
  %v5077 = vmul.f32 %v5068, 1.442695
  %v5078 = vpow.pop %v5077
  %v5079 = vmul.f32 %v5069, 1.442695
  %v5080 = vpow.pop %v5079
  %v5081 = vmul.f32 %v5070, 1.442695
  %v5082 = vpow.pop %v5081
  %v5083 = vmul.f32 %v5071, 1.442695
  %v5084 = vpow.pop %v5083
  %v5085 = vmul.f32 %v5072, 1.442695
  %v5086 = vpow.pop %v5085
  %v5087 = vmul.f32 %v5073, 1.442695
  %v5088 = vpow.pop %v5087
  %v5089 = vmul.f32 %v5074, 1.442695
  %v5090 = vpow.pop %v5089
  %v5091 = vsel %vm199, %v5076, 0.0
  %5092 = vadd.xlane.f32.xlu0 %v5091
  %v5093 = vpop.xlane.xlu0 %5092
  %v5094 = vsel %vm199, %v5078, 0.0
  %5095 = vadd.xlane.f32.xlu0 %v5094
  %v5096 = vpop.xlane.xlu0 %5095
  %v5097 = vsel %vm199, %v5080, 0.0
  %5098 = vadd.xlane.f32.xlu0 %v5097
  %v5099 = vpop.xlane.xlu0 %5098
  %v5100 = vsel %vm199, %v5082, 0.0
  %5101 = vadd.xlane.f32.xlu0 %v5100
  %v5102 = vpop.xlane.xlu0 %5101
  %v5103 = vsel %vm199, %v5084, 0.0
  %5104 = vadd.xlane.f32.xlu0 %v5103
  %v5105 = vpop.xlane.xlu0 %5104
  %v5106 = vsel %vm199, %v5086, 0.0
  %5107 = vadd.xlane.f32.xlu0 %v5106
  %v5108 = vpop.xlane.xlu0 %5107
  %v5109 = vsel %vm199, %v5088, 0.0
  %5110 = vadd.xlane.f32.xlu0 %v5109
  %v5111 = vpop.xlane.xlu0 %5110
  %v5112 = vsel %vm199, %v5090, 0.0
  %5113 = vadd.xlane.f32.xlu0 %v5112
  %v5114 = vpop.xlane.xlu0 %5113
  %v5115 = vrcp.pop %v5093
  %v5116 = vrcp.pop %v5096
  %v5117 = vrcp.pop %v5099
  %v5118 = vrcp.pop %v5102
  %v5119 = vrcp.pop %v5105
  %v5120 = vrcp.pop %v5108
  %v5121 = vrcp.pop %v5111
  %v5122 = vrcp.pop %v5114
  %v5123 = vmul.f32 %v5076, %v5115
  %v5124 = vmul.f32 %v5078, %v5116
  %v5125 = vmul.f32 %v5080, %v5117
  %v5126 = vmul.f32 %v5082, %v5118
  %v5127 = vmul.f32 %v5084, %v5119
  %v5128 = vmul.f32 %v5086, %v5120
  %v5129 = vmul.f32 %v5088, %v5121
  %v5130 = vmul.f32 %v5090, %v5122
  %v5132 = vsel %vm199, %v5123, 0
  %5134 = vmatpush.msra.mxu0 0.0
  %5135 = vmatpush.msra.mxu0 0.0
  %5136 = vmatpush.msra.mxu0 0.0
  %5137 = vmatpush.msra.mxu0 0.0
  %5138 = vmatpush.msra.mxu0 0.0
  %5139 = vmatpush.msra.mxu0 0.0
  %5140 = vmatpush.msra.mxu0 0.0
  %5141 = vmatpush.msra.mxu0 0.0
  %5142 = vmatpush.msra.mxu0 0.0
  %5143 = vmatpush.msra.mxu0 0.0
  %5144 = vmatpush.msra.mxu0 0.0
  %5145 = vmatpush.msra.mxu0 0.0
  %5146 = vmatpush.msra.mxu0 0.0
  %5147 = vmatpush.msra.mxu0 0.0
  %5148 = vmatpush.msra.mxu0 0.0
  %5149 = vmatpush.msra.mxu0 %v168
  %5150 = vmatmul.f32.gmra.mxu0 %v5132
  %v5151 = vpop.f32.mrf.mxu0
  %v5152 = vadd.f32 0.0, %v5151
  %5153 = vdwg.mxu0
  %v5155 = vsel %vm199, %v5124, 0
  %5157 = vmatpush.msra.mxu0 0.0
  %5158 = vmatpush.msra.mxu0 0.0
  %5159 = vmatpush.msra.mxu0 0.0
  %5160 = vmatpush.msra.mxu0 0.0
  %5161 = vmatpush.msra.mxu0 0.0
  %5162 = vmatpush.msra.mxu0 0.0
  %5163 = vmatpush.msra.mxu0 0.0
  %5164 = vmatpush.msra.mxu0 0.0
  %5165 = vmatpush.msra.mxu0 0.0
  %5166 = vmatpush.msra.mxu0 0.0
  %5167 = vmatpush.msra.mxu0 0.0
  %5168 = vmatpush.msra.mxu0 0.0
  %5169 = vmatpush.msra.mxu0 0.0
  %5170 = vmatpush.msra.mxu0 0.0
  %5171 = vmatpush.msra.mxu0 0.0
  %5172 = vmatpush.msra.mxu0 %v170
  %5173 = vmatmul.f32.gmra.mxu0 %v5155
  %v5174 = vpop.f32.mrf.mxu0
  %v5175 = vadd.f32 0.0, %v5174
  %5176 = vdwg.mxu0
  %v5178 = vsel %vm199, %v5125, 0
  %5180 = vmatpush.msra.mxu0 0.0
  %5181 = vmatpush.msra.mxu0 0.0
  %5182 = vmatpush.msra.mxu0 0.0
  %5183 = vmatpush.msra.mxu0 0.0
  %5184 = vmatpush.msra.mxu0 0.0
  %5185 = vmatpush.msra.mxu0 0.0
  %5186 = vmatpush.msra.mxu0 0.0
  %5187 = vmatpush.msra.mxu0 0.0
  %5188 = vmatpush.msra.mxu0 0.0
  %5189 = vmatpush.msra.mxu0 0.0
  %5190 = vmatpush.msra.mxu0 0.0
  %5191 = vmatpush.msra.mxu0 0.0
  %5192 = vmatpush.msra.mxu0 0.0
  %5193 = vmatpush.msra.mxu0 0.0
  %5194 = vmatpush.msra.mxu0 0.0
  %5195 = vmatpush.msra.mxu0 %v173
  %5196 = vmatmul.f32.gmra.mxu0 %v5178
  %v5197 = vpop.f32.mrf.mxu0
  %v5198 = vadd.f32 0.0, %v5197
  %5199 = vdwg.mxu0
  %v5201 = vsel %vm199, %v5126, 0
  %5203 = vmatpush.msra.mxu0 0.0
  %5204 = vmatpush.msra.mxu0 0.0
  %5205 = vmatpush.msra.mxu0 0.0
  %5206 = vmatpush.msra.mxu0 0.0
  %5207 = vmatpush.msra.mxu0 0.0
  %5208 = vmatpush.msra.mxu0 0.0
  %5209 = vmatpush.msra.mxu0 0.0
  %5210 = vmatpush.msra.mxu0 0.0
  %5211 = vmatpush.msra.mxu0 0.0
  %5212 = vmatpush.msra.mxu0 0.0
  %5213 = vmatpush.msra.mxu0 0.0
  %5214 = vmatpush.msra.mxu0 0.0
  %5215 = vmatpush.msra.mxu0 0.0
  %5216 = vmatpush.msra.mxu0 0.0
  %5217 = vmatpush.msra.mxu0 0.0
  %5218 = vmatpush.msra.mxu0 %v175
  %5219 = vmatmul.f32.gmra.mxu0 %v5201
  %v5220 = vpop.f32.mrf.mxu0
  %v5221 = vadd.f32 0.0, %v5220
  %5222 = vdwg.mxu0
  %v5224 = vsel %vm199, %v5127, 0
  %5226 = vmatpush.msra.mxu0 0.0
  %5227 = vmatpush.msra.mxu0 0.0
  %5228 = vmatpush.msra.mxu0 0.0
  %5229 = vmatpush.msra.mxu0 0.0
  %5230 = vmatpush.msra.mxu0 0.0
  %5231 = vmatpush.msra.mxu0 0.0
  %5232 = vmatpush.msra.mxu0 0.0
  %5233 = vmatpush.msra.mxu0 0.0
  %5234 = vmatpush.msra.mxu0 0.0
  %5235 = vmatpush.msra.mxu0 0.0
  %5236 = vmatpush.msra.mxu0 0.0
  %5237 = vmatpush.msra.mxu0 0.0
  %5238 = vmatpush.msra.mxu0 0.0
  %5239 = vmatpush.msra.mxu0 0.0
  %5240 = vmatpush.msra.mxu0 0.0
  %5241 = vmatpush.msra.mxu0 %v178
  %5242 = vmatmul.f32.gmra.mxu0 %v5224
  %v5243 = vpop.f32.mrf.mxu0
  %v5244 = vadd.f32 0.0, %v5243
  %5245 = vdwg.mxu0
  %v5247 = vsel %vm199, %v5128, 0
  %5249 = vmatpush.msra.mxu0 0.0
  %5250 = vmatpush.msra.mxu0 0.0
  %5251 = vmatpush.msra.mxu0 0.0
  %5252 = vmatpush.msra.mxu0 0.0
  %5253 = vmatpush.msra.mxu0 0.0
  %5254 = vmatpush.msra.mxu0 0.0
  %5255 = vmatpush.msra.mxu0 0.0
  %5256 = vmatpush.msra.mxu0 0.0
  %5257 = vmatpush.msra.mxu0 0.0
  %5258 = vmatpush.msra.mxu0 0.0
  %5259 = vmatpush.msra.mxu0 0.0
  %5260 = vmatpush.msra.mxu0 0.0
  %5261 = vmatpush.msra.mxu0 0.0
  %5262 = vmatpush.msra.mxu0 0.0
  %5263 = vmatpush.msra.mxu0 0.0
  %5264 = vmatpush.msra.mxu0 %v180
  %5265 = vmatmul.f32.gmra.mxu0 %v5247
  %v5266 = vpop.f32.mrf.mxu0
  %v5267 = vadd.f32 0.0, %v5266
  %5268 = vdwg.mxu0
  %v5270 = vsel %vm199, %v5129, 0
  %5272 = vmatpush.msra.mxu0 0.0
  %5273 = vmatpush.msra.mxu0 0.0
  %5274 = vmatpush.msra.mxu0 0.0
  %5275 = vmatpush.msra.mxu0 0.0
  %5276 = vmatpush.msra.mxu0 0.0
  %5277 = vmatpush.msra.mxu0 0.0
  %5278 = vmatpush.msra.mxu0 0.0
  %5279 = vmatpush.msra.mxu0 0.0
  %5280 = vmatpush.msra.mxu0 0.0
  %5281 = vmatpush.msra.mxu0 0.0
  %5282 = vmatpush.msra.mxu0 0.0
  %5283 = vmatpush.msra.mxu0 0.0
  %5284 = vmatpush.msra.mxu0 0.0
  %5285 = vmatpush.msra.mxu0 0.0
  %5286 = vmatpush.msra.mxu0 0.0
  %5287 = vmatpush.msra.mxu0 %v183
  %5288 = vmatmul.f32.gmra.mxu0 %v5270
  %v5289 = vpop.f32.mrf.mxu0
  %v5290 = vadd.f32 0.0, %v5289
  %5291 = vdwg.mxu0
  %v5293 = vsel %vm199, %v5130, 0
  %5295 = vmatpush.msra.mxu0 0.0
  %5296 = vmatpush.msra.mxu0 0.0
  %5297 = vmatpush.msra.mxu0 0.0
  %5298 = vmatpush.msra.mxu0 0.0
  %5299 = vmatpush.msra.mxu0 0.0
  %5300 = vmatpush.msra.mxu0 0.0
  %5301 = vmatpush.msra.mxu0 0.0
  %5302 = vmatpush.msra.mxu0 0.0
  %5303 = vmatpush.msra.mxu0 0.0
  %5304 = vmatpush.msra.mxu0 0.0
  %5305 = vmatpush.msra.mxu0 0.0
  %5306 = vmatpush.msra.mxu0 0.0
  %5307 = vmatpush.msra.mxu0 0.0
  %5308 = vmatpush.msra.mxu0 0.0
  %5309 = vmatpush.msra.mxu0 0.0
  %5310 = vmatpush.msra.mxu0 %v185
  %5311 = vmatmul.f32.gmra.mxu0 %v5293
  %v5312 = vpop.f32.mrf.mxu0
  %v5313 = vadd.f32 0.0, %v5312
  %5314 = vdwg.mxu0
  %5315 = vrot.lane.b32.xlu0 %v139, 56
  %v5316 = vpop.permute.xlu0 %5315
  %5317 = vrot.lane.b32.xlu0 %v139, 24
  %v5318 = vpop.permute.xlu0 %5317
  %v5319 = vsel %vm199, %v5316, 0
  %v5321 = vsel %vm199, %v5318, 0
  %5323 = vmatpush.xpose.msra.mxu0 0.0
  %5324 = vmatpush.xpose.msra.mxu0 0.0
  %5325 = vmatpush.xpose.msra.mxu0 0.0
  %5326 = vmatpush.xpose.msra.mxu0 0.0
  %5327 = vmatpush.xpose.msra.mxu0 0.0
  %5328 = vmatpush.xpose.msra.mxu0 0.0
  %5329 = vmatpush.xpose.msra.mxu0 0.0
  %5330 = vmatpush.xpose.msra.mxu0 0.0
  %5331 = vmatpush.xpose.msra.mxu0 0.0
  %5332 = vmatpush.xpose.msra.mxu0 0.0
  %5333 = vmatpush.xpose.msra.mxu0 0.0
  %5334 = vmatpush.xpose.msra.mxu0 0.0
  %5335 = vmatpush.xpose.msra.mxu0 0.0
  %5336 = vmatpush.xpose.msra.mxu0 0.0
  %5337 = vmatpush.xpose.msra.mxu0 0.0
  %5338 = vmatpush.xpose.msra.mxu0 %v5321
  %5339 = vmatmul.f32.gmra.mxu0 %v5319
  %v5340 = vpop.f32.mrf.mxu0
  %v5341 = vadd.f32 %v195, %v5340
  %5342 = vdwg.mxu0
  %5343 = vrot.lane.b32.xlu0 %v141, 56
  %v5344 = vpop.permute.xlu0 %5343
  %5345 = vrot.lane.b32.xlu0 %v141, 24
  %v5346 = vpop.permute.xlu0 %5345
  %v5347 = vsel %vm199, %v5344, 0
  %v5349 = vsel %vm199, %v5346, 0
  %5351 = vmatpush.xpose.msra.mxu0 0.0
  %5352 = vmatpush.xpose.msra.mxu0 0.0
  %5353 = vmatpush.xpose.msra.mxu0 0.0
  %5354 = vmatpush.xpose.msra.mxu0 0.0
  %5355 = vmatpush.xpose.msra.mxu0 0.0
  %5356 = vmatpush.xpose.msra.mxu0 0.0
  %5357 = vmatpush.xpose.msra.mxu0 0.0
  %5358 = vmatpush.xpose.msra.mxu0 0.0
  %5359 = vmatpush.xpose.msra.mxu0 0.0
  %5360 = vmatpush.xpose.msra.mxu0 0.0
  %5361 = vmatpush.xpose.msra.mxu0 0.0
  %5362 = vmatpush.xpose.msra.mxu0 0.0
  %5363 = vmatpush.xpose.msra.mxu0 0.0
  %5364 = vmatpush.xpose.msra.mxu0 0.0
  %5365 = vmatpush.xpose.msra.mxu0 0.0
  %5366 = vmatpush.xpose.msra.mxu0 %v5349
  %5367 = vmatmul.f32.gmra.mxu0 %v5347
  %v5368 = vpop.f32.mrf.mxu0
  %v5369 = vadd.f32 %v195, %v5368
  %5370 = vdwg.mxu0
  %5371 = vrot.lane.b32.xlu0 %v144, 56
  %v5372 = vpop.permute.xlu0 %5371
  %5373 = vrot.lane.b32.xlu0 %v144, 24
  %v5374 = vpop.permute.xlu0 %5373
  %v5375 = vsel %vm199, %v5372, 0
  %v5377 = vsel %vm199, %v5374, 0
  %5379 = vmatpush.xpose.msra.mxu0 0.0
  %5380 = vmatpush.xpose.msra.mxu0 0.0
  %5381 = vmatpush.xpose.msra.mxu0 0.0
  %5382 = vmatpush.xpose.msra.mxu0 0.0
  %5383 = vmatpush.xpose.msra.mxu0 0.0
  %5384 = vmatpush.xpose.msra.mxu0 0.0
  %5385 = vmatpush.xpose.msra.mxu0 0.0
  %5386 = vmatpush.xpose.msra.mxu0 0.0
  %5387 = vmatpush.xpose.msra.mxu0 0.0
  %5388 = vmatpush.xpose.msra.mxu0 0.0
  %5389 = vmatpush.xpose.msra.mxu0 0.0
  %5390 = vmatpush.xpose.msra.mxu0 0.0
  %5391 = vmatpush.xpose.msra.mxu0 0.0
  %5392 = vmatpush.xpose.msra.mxu0 0.0
  %5393 = vmatpush.xpose.msra.mxu0 0.0
  %5394 = vmatpush.xpose.msra.mxu0 %v5377
  %5395 = vmatmul.f32.gmra.mxu0 %v5375
  %v5396 = vpop.f32.mrf.mxu0
  %v5397 = vadd.f32 %v195, %v5396
  %5398 = vdwg.mxu0
  %5399 = vrot.lane.b32.xlu0 %v146, 56
  %v5400 = vpop.permute.xlu0 %5399
  %5401 = vrot.lane.b32.xlu0 %v146, 24
  %v5402 = vpop.permute.xlu0 %5401
  %v5403 = vsel %vm199, %v5400, 0
  %v5405 = vsel %vm199, %v5402, 0
  %5407 = vmatpush.xpose.msra.mxu0 0.0
  %5408 = vmatpush.xpose.msra.mxu0 0.0
  %5409 = vmatpush.xpose.msra.mxu0 0.0
  %5410 = vmatpush.xpose.msra.mxu0 0.0
  %5411 = vmatpush.xpose.msra.mxu0 0.0
  %5412 = vmatpush.xpose.msra.mxu0 0.0
  %5413 = vmatpush.xpose.msra.mxu0 0.0
  %5414 = vmatpush.xpose.msra.mxu0 0.0
  %5415 = vmatpush.xpose.msra.mxu0 0.0
  %5416 = vmatpush.xpose.msra.mxu0 0.0
  %5417 = vmatpush.xpose.msra.mxu0 0.0
  %5418 = vmatpush.xpose.msra.mxu0 0.0
  %5419 = vmatpush.xpose.msra.mxu0 0.0
  %5420 = vmatpush.xpose.msra.mxu0 0.0
  %5421 = vmatpush.xpose.msra.mxu0 0.0
  %5422 = vmatpush.xpose.msra.mxu0 %v5405
  %5423 = vmatmul.f32.gmra.mxu0 %v5403
  %v5424 = vpop.f32.mrf.mxu0
  %v5425 = vadd.f32 %v195, %v5424
  %5426 = vdwg.mxu0
  %5427 = vrot.lane.b32.xlu0 %v149, 56
  %v5428 = vpop.permute.xlu0 %5427
  %5429 = vrot.lane.b32.xlu0 %v149, 24
  %v5430 = vpop.permute.xlu0 %5429
  %v5431 = vsel %vm199, %v5428, 0
  %v5433 = vsel %vm199, %v5430, 0
  %5435 = vmatpush.xpose.msra.mxu0 0.0
  %5436 = vmatpush.xpose.msra.mxu0 0.0
  %5437 = vmatpush.xpose.msra.mxu0 0.0
  %5438 = vmatpush.xpose.msra.mxu0 0.0
  %5439 = vmatpush.xpose.msra.mxu0 0.0
  %5440 = vmatpush.xpose.msra.mxu0 0.0
  %5441 = vmatpush.xpose.msra.mxu0 0.0
  %5442 = vmatpush.xpose.msra.mxu0 0.0
  %5443 = vmatpush.xpose.msra.mxu0 0.0
  %5444 = vmatpush.xpose.msra.mxu0 0.0
  %5445 = vmatpush.xpose.msra.mxu0 0.0
  %5446 = vmatpush.xpose.msra.mxu0 0.0
  %5447 = vmatpush.xpose.msra.mxu0 0.0
  %5448 = vmatpush.xpose.msra.mxu0 0.0
  %5449 = vmatpush.xpose.msra.mxu0 0.0
  %5450 = vmatpush.xpose.msra.mxu0 %v5433
  %5451 = vmatmul.f32.gmra.mxu0 %v5431
  %v5452 = vpop.f32.mrf.mxu0
  %v5453 = vadd.f32 %v195, %v5452
  %5454 = vdwg.mxu0
  %5455 = vrot.lane.b32.xlu0 %v151, 56
  %v5456 = vpop.permute.xlu0 %5455
  %5457 = vrot.lane.b32.xlu0 %v151, 24
  %v5458 = vpop.permute.xlu0 %5457
  %v5459 = vsel %vm199, %v5456, 0
  %v5461 = vsel %vm199, %v5458, 0
  %5463 = vmatpush.xpose.msra.mxu0 0.0
  %5464 = vmatpush.xpose.msra.mxu0 0.0
  %5465 = vmatpush.xpose.msra.mxu0 0.0
  %5466 = vmatpush.xpose.msra.mxu0 0.0
  %5467 = vmatpush.xpose.msra.mxu0 0.0
  %5468 = vmatpush.xpose.msra.mxu0 0.0
  %5469 = vmatpush.xpose.msra.mxu0 0.0
  %5470 = vmatpush.xpose.msra.mxu0 0.0
  %5471 = vmatpush.xpose.msra.mxu0 0.0
  %5472 = vmatpush.xpose.msra.mxu0 0.0
  %5473 = vmatpush.xpose.msra.mxu0 0.0
  %5474 = vmatpush.xpose.msra.mxu0 0.0
  %5475 = vmatpush.xpose.msra.mxu0 0.0
  %5476 = vmatpush.xpose.msra.mxu0 0.0
  %5477 = vmatpush.xpose.msra.mxu0 0.0
  %5478 = vmatpush.xpose.msra.mxu0 %v5461
  %5479 = vmatmul.f32.gmra.mxu0 %v5459
  %v5480 = vpop.f32.mrf.mxu0
  %v5481 = vadd.f32 %v195, %v5480
  %5482 = vdwg.mxu0
  %5483 = vrot.lane.b32.xlu0 %v154, 56
  %v5484 = vpop.permute.xlu0 %5483
  %5485 = vrot.lane.b32.xlu0 %v154, 24
  %v5486 = vpop.permute.xlu0 %5485
  %v5487 = vsel %vm199, %v5484, 0
  %v5489 = vsel %vm199, %v5486, 0
  %5491 = vmatpush.xpose.msra.mxu0 0.0
  %5492 = vmatpush.xpose.msra.mxu0 0.0
  %5493 = vmatpush.xpose.msra.mxu0 0.0
  %5494 = vmatpush.xpose.msra.mxu0 0.0
  %5495 = vmatpush.xpose.msra.mxu0 0.0
  %5496 = vmatpush.xpose.msra.mxu0 0.0
  %5497 = vmatpush.xpose.msra.mxu0 0.0
  %5498 = vmatpush.xpose.msra.mxu0 0.0
  %5499 = vmatpush.xpose.msra.mxu0 0.0
  %5500 = vmatpush.xpose.msra.mxu0 0.0
  %5501 = vmatpush.xpose.msra.mxu0 0.0
  %5502 = vmatpush.xpose.msra.mxu0 0.0
  %5503 = vmatpush.xpose.msra.mxu0 0.0
  %5504 = vmatpush.xpose.msra.mxu0 0.0
  %5505 = vmatpush.xpose.msra.mxu0 0.0
  %5506 = vmatpush.xpose.msra.mxu0 %v5489
  %5507 = vmatmul.f32.gmra.mxu0 %v5487
  %v5508 = vpop.f32.mrf.mxu0
  %v5509 = vadd.f32 %v195, %v5508
  %5510 = vdwg.mxu0
  %5511 = vrot.lane.b32.xlu0 %v156, 56
  %v5512 = vpop.permute.xlu0 %5511
  %5513 = vrot.lane.b32.xlu0 %v156, 24
  %v5514 = vpop.permute.xlu0 %5513
  %v5515 = vsel %vm199, %v5512, 0
  %v5517 = vsel %vm199, %v5514, 0
  %5519 = vmatpush.xpose.msra.mxu0 0.0
  %5520 = vmatpush.xpose.msra.mxu0 0.0
  %5521 = vmatpush.xpose.msra.mxu0 0.0
  %5522 = vmatpush.xpose.msra.mxu0 0.0
  %5523 = vmatpush.xpose.msra.mxu0 0.0
  %5524 = vmatpush.xpose.msra.mxu0 0.0
  %5525 = vmatpush.xpose.msra.mxu0 0.0
  %5526 = vmatpush.xpose.msra.mxu0 0.0
  %5527 = vmatpush.xpose.msra.mxu0 0.0
  %5528 = vmatpush.xpose.msra.mxu0 0.0
  %5529 = vmatpush.xpose.msra.mxu0 0.0
  %5530 = vmatpush.xpose.msra.mxu0 0.0
  %5531 = vmatpush.xpose.msra.mxu0 0.0
  %5532 = vmatpush.xpose.msra.mxu0 0.0
  %5533 = vmatpush.xpose.msra.mxu0 0.0
  %5534 = vmatpush.xpose.msra.mxu0 %v5517
  %5535 = vmatmul.f32.gmra.mxu0 %v5515
  %v5536 = vpop.f32.mrf.mxu0
  %v5537 = vadd.f32 %v195, %v5536
  %5538 = vdwg.mxu0
  %v5539 = vsel %vm199, %v5341, -inf
  %5540 = vmax.xlane.f32.xlu0 %v5539
  %v5541 = vpop.xlane.xlu0 %5540
  %v5542 = vsel %vm199, %v5369, -inf
  %5543 = vmax.xlane.f32.xlu0 %v5542
  %v5544 = vpop.xlane.xlu0 %5543
  %v5545 = vsel %vm199, %v5397, -inf
  %5546 = vmax.xlane.f32.xlu0 %v5545
  %v5547 = vpop.xlane.xlu0 %5546
  %v5548 = vsel %vm199, %v5425, -inf
  %5549 = vmax.xlane.f32.xlu0 %v5548
  %v5550 = vpop.xlane.xlu0 %5549
  %v5551 = vsel %vm199, %v5453, -inf
  %5552 = vmax.xlane.f32.xlu0 %v5551
  %v5553 = vpop.xlane.xlu0 %5552
  %v5554 = vsel %vm199, %v5481, -inf
  %5555 = vmax.xlane.f32.xlu0 %v5554
  %v5556 = vpop.xlane.xlu0 %5555
  %v5557 = vsel %vm199, %v5509, -inf
  %5558 = vmax.xlane.f32.xlu0 %v5557
  %v5559 = vpop.xlane.xlu0 %5558
  %v5560 = vsel %vm199, %v5537, -inf
  %5561 = vmax.xlane.f32.xlu0 %v5560
  %v5562 = vpop.xlane.xlu0 %5561
  %v5563 = vsub.f32 %v5341, %v5541
  %v5564 = vsub.f32 %v5369, %v5544
  %v5565 = vsub.f32 %v5397, %v5547
  %v5566 = vsub.f32 %v5425, %v5550
  %v5567 = vsub.f32 %v5453, %v5553
  %v5568 = vsub.f32 %v5481, %v5556
  %v5569 = vsub.f32 %v5509, %v5559
  %v5570 = vsub.f32 %v5537, %v5562
  %v5571 = vmul.f32 %v5563, 1.442695
  %v5572 = vpow.pop %v5571
  %v5573 = vmul.f32 %v5564, 1.442695
  %v5574 = vpow.pop %v5573
  %v5575 = vmul.f32 %v5565, 1.442695
  %v5576 = vpow.pop %v5575
  %v5577 = vmul.f32 %v5566, 1.442695
  %v5578 = vpow.pop %v5577
  %v5579 = vmul.f32 %v5567, 1.442695
  %v5580 = vpow.pop %v5579
  %v5581 = vmul.f32 %v5568, 1.442695
  %v5582 = vpow.pop %v5581
  %v5583 = vmul.f32 %v5569, 1.442695
  %v5584 = vpow.pop %v5583
  %v5585 = vmul.f32 %v5570, 1.442695
  %v5586 = vpow.pop %v5585
  %v5587 = vsel %vm199, %v5572, 0.0
  %5588 = vadd.xlane.f32.xlu0 %v5587
  %v5589 = vpop.xlane.xlu0 %5588
  %v5590 = vsel %vm199, %v5574, 0.0
  %5591 = vadd.xlane.f32.xlu0 %v5590
  %v5592 = vpop.xlane.xlu0 %5591
  %v5593 = vsel %vm199, %v5576, 0.0
  %5594 = vadd.xlane.f32.xlu0 %v5593
  %v5595 = vpop.xlane.xlu0 %5594
  %v5596 = vsel %vm199, %v5578, 0.0
  %5597 = vadd.xlane.f32.xlu0 %v5596
  %v5598 = vpop.xlane.xlu0 %5597
  %v5599 = vsel %vm199, %v5580, 0.0
  %5600 = vadd.xlane.f32.xlu0 %v5599
  %v5601 = vpop.xlane.xlu0 %5600
  %v5602 = vsel %vm199, %v5582, 0.0
  %5603 = vadd.xlane.f32.xlu0 %v5602
  %v5604 = vpop.xlane.xlu0 %5603
  %v5605 = vsel %vm199, %v5584, 0.0
  %5606 = vadd.xlane.f32.xlu0 %v5605
  %v5607 = vpop.xlane.xlu0 %5606
  %v5608 = vsel %vm199, %v5586, 0.0
  %5609 = vadd.xlane.f32.xlu0 %v5608
  %v5610 = vpop.xlane.xlu0 %5609
  %v5611 = vrcp.pop %v5589
  %v5612 = vrcp.pop %v5592
  %v5613 = vrcp.pop %v5595
  %v5614 = vrcp.pop %v5598
  %v5615 = vrcp.pop %v5601
  %v5616 = vrcp.pop %v5604
  %v5617 = vrcp.pop %v5607
  %v5618 = vrcp.pop %v5610
  %v5619 = vmul.f32 %v5572, %v5611
  %v5620 = vmul.f32 %v5574, %v5612
  %v5621 = vmul.f32 %v5576, %v5613
  %v5622 = vmul.f32 %v5578, %v5614
  %v5623 = vmul.f32 %v5580, %v5615
  %v5624 = vmul.f32 %v5582, %v5616
  %v5625 = vmul.f32 %v5584, %v5617
  %v5626 = vmul.f32 %v5586, %v5618
  %5628 = vrot.lane.b32.xlu0 %v168, 120
  %v5629 = vpop.permute.xlu0 %5628
  %v5632 = vsel %vm199, %v5619, 0
  %5634 = vmatpush.msra.mxu0 0.0
  %5635 = vmatpush.msra.mxu0 0.0
  %5636 = vmatpush.msra.mxu0 0.0
  %5637 = vmatpush.msra.mxu0 0.0
  %5638 = vmatpush.msra.mxu0 0.0
  %5639 = vmatpush.msra.mxu0 0.0
  %5640 = vmatpush.msra.mxu0 0.0
  %5641 = vmatpush.msra.mxu0 0.0
  %5642 = vmatpush.msra.mxu0 0.0
  %5643 = vmatpush.msra.mxu0 0.0
  %5644 = vmatpush.msra.mxu0 0.0
  %5645 = vmatpush.msra.mxu0 0.0
  %5646 = vmatpush.msra.mxu0 0.0
  %5647 = vmatpush.msra.mxu0 0.0
  %5648 = vmatpush.msra.mxu0 0.0
  %5649 = vmatpush.msra.mxu0 %v5629
  %5650 = vmatmul.f32.gmra.mxu0 %v5632
  %v5651 = vpop.f32.mrf.mxu0
  %v5652 = vadd.f32 0.0, %v5651
  %5653 = vdwg.mxu0
  %5655 = vrot.lane.b32.xlu0 %v170, 120
  %v5656 = vpop.permute.xlu0 %5655
  %v5659 = vsel %vm199, %v5620, 0
  %5661 = vmatpush.msra.mxu0 0.0
  %5662 = vmatpush.msra.mxu0 0.0
  %5663 = vmatpush.msra.mxu0 0.0
  %5664 = vmatpush.msra.mxu0 0.0
  %5665 = vmatpush.msra.mxu0 0.0
  %5666 = vmatpush.msra.mxu0 0.0
  %5667 = vmatpush.msra.mxu0 0.0
  %5668 = vmatpush.msra.mxu0 0.0
  %5669 = vmatpush.msra.mxu0 0.0
  %5670 = vmatpush.msra.mxu0 0.0
  %5671 = vmatpush.msra.mxu0 0.0
  %5672 = vmatpush.msra.mxu0 0.0
  %5673 = vmatpush.msra.mxu0 0.0
  %5674 = vmatpush.msra.mxu0 0.0
  %5675 = vmatpush.msra.mxu0 0.0
  %5676 = vmatpush.msra.mxu0 %v5656
  %5677 = vmatmul.f32.gmra.mxu0 %v5659
  %v5678 = vpop.f32.mrf.mxu0
  %v5679 = vadd.f32 0.0, %v5678
  %5680 = vdwg.mxu0
  %5682 = vrot.lane.b32.xlu0 %v173, 120
  %v5683 = vpop.permute.xlu0 %5682
  %v5686 = vsel %vm199, %v5621, 0
  %5688 = vmatpush.msra.mxu0 0.0
  %5689 = vmatpush.msra.mxu0 0.0
  %5690 = vmatpush.msra.mxu0 0.0
  %5691 = vmatpush.msra.mxu0 0.0
  %5692 = vmatpush.msra.mxu0 0.0
  %5693 = vmatpush.msra.mxu0 0.0
  %5694 = vmatpush.msra.mxu0 0.0
  %5695 = vmatpush.msra.mxu0 0.0
  %5696 = vmatpush.msra.mxu0 0.0
  %5697 = vmatpush.msra.mxu0 0.0
  %5698 = vmatpush.msra.mxu0 0.0
  %5699 = vmatpush.msra.mxu0 0.0
  %5700 = vmatpush.msra.mxu0 0.0
  %5701 = vmatpush.msra.mxu0 0.0
  %5702 = vmatpush.msra.mxu0 0.0
  %5703 = vmatpush.msra.mxu0 %v5683
  %5704 = vmatmul.f32.gmra.mxu0 %v5686
  %v5705 = vpop.f32.mrf.mxu0
  %v5706 = vadd.f32 0.0, %v5705
  %5707 = vdwg.mxu0
  %5709 = vrot.lane.b32.xlu0 %v175, 120
  %v5710 = vpop.permute.xlu0 %5709
  %v5713 = vsel %vm199, %v5622, 0
  %5715 = vmatpush.msra.mxu0 0.0
  %5716 = vmatpush.msra.mxu0 0.0
  %5717 = vmatpush.msra.mxu0 0.0
  %5718 = vmatpush.msra.mxu0 0.0
  %5719 = vmatpush.msra.mxu0 0.0
  %5720 = vmatpush.msra.mxu0 0.0
  %5721 = vmatpush.msra.mxu0 0.0
  %5722 = vmatpush.msra.mxu0 0.0
  %5723 = vmatpush.msra.mxu0 0.0
  %5724 = vmatpush.msra.mxu0 0.0
  %5725 = vmatpush.msra.mxu0 0.0
  %5726 = vmatpush.msra.mxu0 0.0
  %5727 = vmatpush.msra.mxu0 0.0
  %5728 = vmatpush.msra.mxu0 0.0
  %5729 = vmatpush.msra.mxu0 0.0
  %5730 = vmatpush.msra.mxu0 %v5710
  %5731 = vmatmul.f32.gmra.mxu0 %v5713
  %v5732 = vpop.f32.mrf.mxu0
  %v5733 = vadd.f32 0.0, %v5732
  %5734 = vdwg.mxu0
  %5736 = vrot.lane.b32.xlu0 %v178, 120
  %v5737 = vpop.permute.xlu0 %5736
  %v5740 = vsel %vm199, %v5623, 0
  %5742 = vmatpush.msra.mxu0 0.0
  %5743 = vmatpush.msra.mxu0 0.0
  %5744 = vmatpush.msra.mxu0 0.0
  %5745 = vmatpush.msra.mxu0 0.0
  %5746 = vmatpush.msra.mxu0 0.0
  %5747 = vmatpush.msra.mxu0 0.0
  %5748 = vmatpush.msra.mxu0 0.0
  %5749 = vmatpush.msra.mxu0 0.0
  %5750 = vmatpush.msra.mxu0 0.0
  %5751 = vmatpush.msra.mxu0 0.0
  %5752 = vmatpush.msra.mxu0 0.0
  %5753 = vmatpush.msra.mxu0 0.0
  %5754 = vmatpush.msra.mxu0 0.0
  %5755 = vmatpush.msra.mxu0 0.0
  %5756 = vmatpush.msra.mxu0 0.0
  %5757 = vmatpush.msra.mxu0 %v5737
  %5758 = vmatmul.f32.gmra.mxu0 %v5740
  %v5759 = vpop.f32.mrf.mxu0
  %v5760 = vadd.f32 0.0, %v5759
  %5761 = vdwg.mxu0
  %5763 = vrot.lane.b32.xlu0 %v180, 120
  %v5764 = vpop.permute.xlu0 %5763
  %v5767 = vsel %vm199, %v5624, 0
  %5769 = vmatpush.msra.mxu0 0.0
  %5770 = vmatpush.msra.mxu0 0.0
  %5771 = vmatpush.msra.mxu0 0.0
  %5772 = vmatpush.msra.mxu0 0.0
  %5773 = vmatpush.msra.mxu0 0.0
  %5774 = vmatpush.msra.mxu0 0.0
  %5775 = vmatpush.msra.mxu0 0.0
  %5776 = vmatpush.msra.mxu0 0.0
  %5777 = vmatpush.msra.mxu0 0.0
  %5778 = vmatpush.msra.mxu0 0.0
  %5779 = vmatpush.msra.mxu0 0.0
  %5780 = vmatpush.msra.mxu0 0.0
  %5781 = vmatpush.msra.mxu0 0.0
  %5782 = vmatpush.msra.mxu0 0.0
  %5783 = vmatpush.msra.mxu0 0.0
  %5784 = vmatpush.msra.mxu0 %v5764
  %5785 = vmatmul.f32.gmra.mxu0 %v5767
  %v5786 = vpop.f32.mrf.mxu0
  %v5787 = vadd.f32 0.0, %v5786
  %5788 = vdwg.mxu0
  %5790 = vrot.lane.b32.xlu0 %v183, 120
  %v5791 = vpop.permute.xlu0 %5790
  %v5794 = vsel %vm199, %v5625, 0
  %5796 = vmatpush.msra.mxu0 0.0
  %5797 = vmatpush.msra.mxu0 0.0
  %5798 = vmatpush.msra.mxu0 0.0
  %5799 = vmatpush.msra.mxu0 0.0
  %5800 = vmatpush.msra.mxu0 0.0
  %5801 = vmatpush.msra.mxu0 0.0
  %5802 = vmatpush.msra.mxu0 0.0
  %5803 = vmatpush.msra.mxu0 0.0
  %5804 = vmatpush.msra.mxu0 0.0
  %5805 = vmatpush.msra.mxu0 0.0
  %5806 = vmatpush.msra.mxu0 0.0
  %5807 = vmatpush.msra.mxu0 0.0
  %5808 = vmatpush.msra.mxu0 0.0
  %5809 = vmatpush.msra.mxu0 0.0
  %5810 = vmatpush.msra.mxu0 0.0
  %5811 = vmatpush.msra.mxu0 %v5791
  %5812 = vmatmul.f32.gmra.mxu0 %v5794
  %v5813 = vpop.f32.mrf.mxu0
  %v5814 = vadd.f32 0.0, %v5813
  %5815 = vdwg.mxu0
  %5817 = vrot.lane.b32.xlu0 %v185, 120
  %v5818 = vpop.permute.xlu0 %5817
  %v5821 = vsel %vm199, %v5626, 0
  %5823 = vmatpush.msra.mxu0 0.0
  %5824 = vmatpush.msra.mxu0 0.0
  %5825 = vmatpush.msra.mxu0 0.0
  %5826 = vmatpush.msra.mxu0 0.0
  %5827 = vmatpush.msra.mxu0 0.0
  %5828 = vmatpush.msra.mxu0 0.0
  %5829 = vmatpush.msra.mxu0 0.0
  %5830 = vmatpush.msra.mxu0 0.0
  %5831 = vmatpush.msra.mxu0 0.0
  %5832 = vmatpush.msra.mxu0 0.0
  %5833 = vmatpush.msra.mxu0 0.0
  %5834 = vmatpush.msra.mxu0 0.0
  %5835 = vmatpush.msra.mxu0 0.0
  %5836 = vmatpush.msra.mxu0 0.0
  %5837 = vmatpush.msra.mxu0 0.0
  %5838 = vmatpush.msra.mxu0 %v5818
  %5839 = vmatmul.f32.gmra.mxu0 %v5821
  %v5840 = vpop.f32.mrf.mxu0
  %v5841 = vadd.f32 0.0, %v5840
  %5842 = vdwg.mxu0
  %5843 = vrot.lane.b32.xlu0 %v139, 48
  %v5844 = vpop.permute.xlu0 %5843
  %5845 = vrot.lane.b32.xlu0 %v139, 16
  %v5846 = vpop.permute.xlu0 %5845
  %v5847 = vsel %vm199, %v5844, 0
  %v5849 = vsel %vm199, %v5846, 0
  %5851 = vmatpush.xpose.msra.mxu0 0.0
  %5852 = vmatpush.xpose.msra.mxu0 0.0
  %5853 = vmatpush.xpose.msra.mxu0 0.0
  %5854 = vmatpush.xpose.msra.mxu0 0.0
  %5855 = vmatpush.xpose.msra.mxu0 0.0
  %5856 = vmatpush.xpose.msra.mxu0 0.0
  %5857 = vmatpush.xpose.msra.mxu0 0.0
  %5858 = vmatpush.xpose.msra.mxu0 0.0
  %5859 = vmatpush.xpose.msra.mxu0 0.0
  %5860 = vmatpush.xpose.msra.mxu0 0.0
  %5861 = vmatpush.xpose.msra.mxu0 0.0
  %5862 = vmatpush.xpose.msra.mxu0 0.0
  %5863 = vmatpush.xpose.msra.mxu0 0.0
  %5864 = vmatpush.xpose.msra.mxu0 0.0
  %5865 = vmatpush.xpose.msra.mxu0 0.0
  %5866 = vmatpush.xpose.msra.mxu0 %v5849
  %5867 = vmatmul.f32.gmra.mxu0 %v5847
  %v5868 = vpop.f32.mrf.mxu0
  %v5869 = vadd.f32 %v195, %v5868
  %5870 = vdwg.mxu0
  %5871 = vrot.lane.b32.xlu0 %v141, 48
  %v5872 = vpop.permute.xlu0 %5871
  %5873 = vrot.lane.b32.xlu0 %v141, 16
  %v5874 = vpop.permute.xlu0 %5873
  %v5875 = vsel %vm199, %v5872, 0
  %v5877 = vsel %vm199, %v5874, 0
  %5879 = vmatpush.xpose.msra.mxu0 0.0
  %5880 = vmatpush.xpose.msra.mxu0 0.0
  %5881 = vmatpush.xpose.msra.mxu0 0.0
  %5882 = vmatpush.xpose.msra.mxu0 0.0
  %5883 = vmatpush.xpose.msra.mxu0 0.0
  %5884 = vmatpush.xpose.msra.mxu0 0.0
  %5885 = vmatpush.xpose.msra.mxu0 0.0
  %5886 = vmatpush.xpose.msra.mxu0 0.0
  %5887 = vmatpush.xpose.msra.mxu0 0.0
  %5888 = vmatpush.xpose.msra.mxu0 0.0
  %5889 = vmatpush.xpose.msra.mxu0 0.0
  %5890 = vmatpush.xpose.msra.mxu0 0.0
  %5891 = vmatpush.xpose.msra.mxu0 0.0
  %5892 = vmatpush.xpose.msra.mxu0 0.0
  %5893 = vmatpush.xpose.msra.mxu0 0.0
  %5894 = vmatpush.xpose.msra.mxu0 %v5877
  %5895 = vmatmul.f32.gmra.mxu0 %v5875
  %v5896 = vpop.f32.mrf.mxu0
  %v5897 = vadd.f32 %v195, %v5896
  %5898 = vdwg.mxu0
  %5899 = vrot.lane.b32.xlu0 %v144, 48
  %v5900 = vpop.permute.xlu0 %5899
  %5901 = vrot.lane.b32.xlu0 %v144, 16
  %v5902 = vpop.permute.xlu0 %5901
  %v5903 = vsel %vm199, %v5900, 0
  %v5905 = vsel %vm199, %v5902, 0
  %5907 = vmatpush.xpose.msra.mxu0 0.0
  %5908 = vmatpush.xpose.msra.mxu0 0.0
  %5909 = vmatpush.xpose.msra.mxu0 0.0
  %5910 = vmatpush.xpose.msra.mxu0 0.0
  %5911 = vmatpush.xpose.msra.mxu0 0.0
  %5912 = vmatpush.xpose.msra.mxu0 0.0
  %5913 = vmatpush.xpose.msra.mxu0 0.0
  %5914 = vmatpush.xpose.msra.mxu0 0.0
  %5915 = vmatpush.xpose.msra.mxu0 0.0
  %5916 = vmatpush.xpose.msra.mxu0 0.0
  %5917 = vmatpush.xpose.msra.mxu0 0.0
  %5918 = vmatpush.xpose.msra.mxu0 0.0
  %5919 = vmatpush.xpose.msra.mxu0 0.0
  %5920 = vmatpush.xpose.msra.mxu0 0.0
  %5921 = vmatpush.xpose.msra.mxu0 0.0
  %5922 = vmatpush.xpose.msra.mxu0 %v5905
  %5923 = vmatmul.f32.gmra.mxu0 %v5903
  %v5924 = vpop.f32.mrf.mxu0
  %v5925 = vadd.f32 %v195, %v5924
  %5926 = vdwg.mxu0
  %5927 = vrot.lane.b32.xlu0 %v146, 48
  %v5928 = vpop.permute.xlu0 %5927
  %5929 = vrot.lane.b32.xlu0 %v146, 16
  %v5930 = vpop.permute.xlu0 %5929
  %v5931 = vsel %vm199, %v5928, 0
  %v5933 = vsel %vm199, %v5930, 0
  %5935 = vmatpush.xpose.msra.mxu0 0.0
  %5936 = vmatpush.xpose.msra.mxu0 0.0
  %5937 = vmatpush.xpose.msra.mxu0 0.0
  %5938 = vmatpush.xpose.msra.mxu0 0.0
  %5939 = vmatpush.xpose.msra.mxu0 0.0
  %5940 = vmatpush.xpose.msra.mxu0 0.0
  %5941 = vmatpush.xpose.msra.mxu0 0.0
  %5942 = vmatpush.xpose.msra.mxu0 0.0
  %5943 = vmatpush.xpose.msra.mxu0 0.0
  %5944 = vmatpush.xpose.msra.mxu0 0.0
  %5945 = vmatpush.xpose.msra.mxu0 0.0
  %5946 = vmatpush.xpose.msra.mxu0 0.0
  %5947 = vmatpush.xpose.msra.mxu0 0.0
  %5948 = vmatpush.xpose.msra.mxu0 0.0
  %5949 = vmatpush.xpose.msra.mxu0 0.0
  %5950 = vmatpush.xpose.msra.mxu0 %v5933
  %5951 = vmatmul.f32.gmra.mxu0 %v5931
  %v5952 = vpop.f32.mrf.mxu0
  %v5953 = vadd.f32 %v195, %v5952
  %5954 = vdwg.mxu0
  %5955 = vrot.lane.b32.xlu0 %v149, 48
  %v5956 = vpop.permute.xlu0 %5955
  %5957 = vrot.lane.b32.xlu0 %v149, 16
  %v5958 = vpop.permute.xlu0 %5957
  %v5959 = vsel %vm199, %v5956, 0
  %v5961 = vsel %vm199, %v5958, 0
  %5963 = vmatpush.xpose.msra.mxu0 0.0
  %5964 = vmatpush.xpose.msra.mxu0 0.0
  %5965 = vmatpush.xpose.msra.mxu0 0.0
  %5966 = vmatpush.xpose.msra.mxu0 0.0
  %5967 = vmatpush.xpose.msra.mxu0 0.0
  %5968 = vmatpush.xpose.msra.mxu0 0.0
  %5969 = vmatpush.xpose.msra.mxu0 0.0
  %5970 = vmatpush.xpose.msra.mxu0 0.0
  %5971 = vmatpush.xpose.msra.mxu0 0.0
  %5972 = vmatpush.xpose.msra.mxu0 0.0
  %5973 = vmatpush.xpose.msra.mxu0 0.0
  %5974 = vmatpush.xpose.msra.mxu0 0.0
  %5975 = vmatpush.xpose.msra.mxu0 0.0
  %5976 = vmatpush.xpose.msra.mxu0 0.0
  %5977 = vmatpush.xpose.msra.mxu0 0.0
  %5978 = vmatpush.xpose.msra.mxu0 %v5961
  %5979 = vmatmul.f32.gmra.mxu0 %v5959
  %v5980 = vpop.f32.mrf.mxu0
  %v5981 = vadd.f32 %v195, %v5980
  %5982 = vdwg.mxu0
  %5983 = vrot.lane.b32.xlu0 %v151, 48
  %v5984 = vpop.permute.xlu0 %5983
  %5985 = vrot.lane.b32.xlu0 %v151, 16
  %v5986 = vpop.permute.xlu0 %5985
  %v5987 = vsel %vm199, %v5984, 0
  %v5989 = vsel %vm199, %v5986, 0
  %5991 = vmatpush.xpose.msra.mxu0 0.0
  %5992 = vmatpush.xpose.msra.mxu0 0.0
  %5993 = vmatpush.xpose.msra.mxu0 0.0
  %5994 = vmatpush.xpose.msra.mxu0 0.0
  %5995 = vmatpush.xpose.msra.mxu0 0.0
  %5996 = vmatpush.xpose.msra.mxu0 0.0
  %5997 = vmatpush.xpose.msra.mxu0 0.0
  %5998 = vmatpush.xpose.msra.mxu0 0.0
  %5999 = vmatpush.xpose.msra.mxu0 0.0
  %6000 = vmatpush.xpose.msra.mxu0 0.0
  %6001 = vmatpush.xpose.msra.mxu0 0.0
  %6002 = vmatpush.xpose.msra.mxu0 0.0
  %6003 = vmatpush.xpose.msra.mxu0 0.0
  %6004 = vmatpush.xpose.msra.mxu0 0.0
  %6005 = vmatpush.xpose.msra.mxu0 0.0
  %6006 = vmatpush.xpose.msra.mxu0 %v5989
  %6007 = vmatmul.f32.gmra.mxu0 %v5987
  %v6008 = vpop.f32.mrf.mxu0
  %v6009 = vadd.f32 %v195, %v6008
  %6010 = vdwg.mxu0
  %6011 = vrot.lane.b32.xlu0 %v154, 48
  %v6012 = vpop.permute.xlu0 %6011
  %6013 = vrot.lane.b32.xlu0 %v154, 16
  %v6014 = vpop.permute.xlu0 %6013
  %v6015 = vsel %vm199, %v6012, 0
  %v6017 = vsel %vm199, %v6014, 0
  %6019 = vmatpush.xpose.msra.mxu0 0.0
  %6020 = vmatpush.xpose.msra.mxu0 0.0
  %6021 = vmatpush.xpose.msra.mxu0 0.0
  %6022 = vmatpush.xpose.msra.mxu0 0.0
  %6023 = vmatpush.xpose.msra.mxu0 0.0
  %6024 = vmatpush.xpose.msra.mxu0 0.0
  %6025 = vmatpush.xpose.msra.mxu0 0.0
  %6026 = vmatpush.xpose.msra.mxu0 0.0
  %6027 = vmatpush.xpose.msra.mxu0 0.0
  %6028 = vmatpush.xpose.msra.mxu0 0.0
  %6029 = vmatpush.xpose.msra.mxu0 0.0
  %6030 = vmatpush.xpose.msra.mxu0 0.0
  %6031 = vmatpush.xpose.msra.mxu0 0.0
  %6032 = vmatpush.xpose.msra.mxu0 0.0
  %6033 = vmatpush.xpose.msra.mxu0 0.0
  %6034 = vmatpush.xpose.msra.mxu0 %v6017
  %6035 = vmatmul.f32.gmra.mxu0 %v6015
  %v6036 = vpop.f32.mrf.mxu0
  %v6037 = vadd.f32 %v195, %v6036
  %6038 = vdwg.mxu0
  %6039 = vrot.lane.b32.xlu0 %v156, 48
  %v6040 = vpop.permute.xlu0 %6039
  %6041 = vrot.lane.b32.xlu0 %v156, 16
  %v6042 = vpop.permute.xlu0 %6041
  %v6043 = vsel %vm199, %v6040, 0
  %v6045 = vsel %vm199, %v6042, 0
  %6047 = vmatpush.xpose.msra.mxu0 0.0
  %6048 = vmatpush.xpose.msra.mxu0 0.0
  %6049 = vmatpush.xpose.msra.mxu0 0.0
  %6050 = vmatpush.xpose.msra.mxu0 0.0
  %6051 = vmatpush.xpose.msra.mxu0 0.0
  %6052 = vmatpush.xpose.msra.mxu0 0.0
  %6053 = vmatpush.xpose.msra.mxu0 0.0
  %6054 = vmatpush.xpose.msra.mxu0 0.0
  %6055 = vmatpush.xpose.msra.mxu0 0.0
  %6056 = vmatpush.xpose.msra.mxu0 0.0
  %6057 = vmatpush.xpose.msra.mxu0 0.0
  %6058 = vmatpush.xpose.msra.mxu0 0.0
  %6059 = vmatpush.xpose.msra.mxu0 0.0
  %6060 = vmatpush.xpose.msra.mxu0 0.0
  %6061 = vmatpush.xpose.msra.mxu0 0.0
  %6062 = vmatpush.xpose.msra.mxu0 %v6045
  %6063 = vmatmul.f32.gmra.mxu0 %v6043
  %v6064 = vpop.f32.mrf.mxu0
  %v6065 = vadd.f32 %v195, %v6064
  %6066 = vdwg.mxu0
  %v6067 = vsel %vm199, %v5869, -inf
  %6068 = vmax.xlane.f32.xlu0 %v6067
  %v6069 = vpop.xlane.xlu0 %6068
  %v6070 = vsel %vm199, %v5897, -inf
  %6071 = vmax.xlane.f32.xlu0 %v6070
  %v6072 = vpop.xlane.xlu0 %6071
  %v6073 = vsel %vm199, %v5925, -inf
  %6074 = vmax.xlane.f32.xlu0 %v6073
  %v6075 = vpop.xlane.xlu0 %6074
  %v6076 = vsel %vm199, %v5953, -inf
  %6077 = vmax.xlane.f32.xlu0 %v6076
  %v6078 = vpop.xlane.xlu0 %6077
  %v6079 = vsel %vm199, %v5981, -inf
  %6080 = vmax.xlane.f32.xlu0 %v6079
  %v6081 = vpop.xlane.xlu0 %6080
  %v6082 = vsel %vm199, %v6009, -inf
  %6083 = vmax.xlane.f32.xlu0 %v6082
  %v6084 = vpop.xlane.xlu0 %6083
  %v6085 = vsel %vm199, %v6037, -inf
  %6086 = vmax.xlane.f32.xlu0 %v6085
  %v6087 = vpop.xlane.xlu0 %6086
  %v6088 = vsel %vm199, %v6065, -inf
  %6089 = vmax.xlane.f32.xlu0 %v6088
  %v6090 = vpop.xlane.xlu0 %6089
  %v6091 = vsub.f32 %v5869, %v6069
  %v6092 = vsub.f32 %v5897, %v6072
  %v6093 = vsub.f32 %v5925, %v6075
  %v6094 = vsub.f32 %v5953, %v6078
  %v6095 = vsub.f32 %v5981, %v6081
  %v6096 = vsub.f32 %v6009, %v6084
  %v6097 = vsub.f32 %v6037, %v6087
  %v6098 = vsub.f32 %v6065, %v6090
  %v6099 = vmul.f32 %v6091, 1.442695
  %v6100 = vpow.pop %v6099
  %v6101 = vmul.f32 %v6092, 1.442695
  %v6102 = vpow.pop %v6101
  %v6103 = vmul.f32 %v6093, 1.442695
  %v6104 = vpow.pop %v6103
  %v6105 = vmul.f32 %v6094, 1.442695
  %v6106 = vpow.pop %v6105
  %v6107 = vmul.f32 %v6095, 1.442695
  %v6108 = vpow.pop %v6107
  %v6109 = vmul.f32 %v6096, 1.442695
  %v6110 = vpow.pop %v6109
  %v6111 = vmul.f32 %v6097, 1.442695
  %v6112 = vpow.pop %v6111
  %v6113 = vmul.f32 %v6098, 1.442695
  %v6114 = vpow.pop %v6113
  %v6115 = vsel %vm199, %v6100, 0.0
  %6116 = vadd.xlane.f32.xlu0 %v6115
  %v6117 = vpop.xlane.xlu0 %6116
  %v6118 = vsel %vm199, %v6102, 0.0
  %6119 = vadd.xlane.f32.xlu0 %v6118
  %v6120 = vpop.xlane.xlu0 %6119
  %v6121 = vsel %vm199, %v6104, 0.0
  %6122 = vadd.xlane.f32.xlu0 %v6121
  %v6123 = vpop.xlane.xlu0 %6122
  %v6124 = vsel %vm199, %v6106, 0.0
  %6125 = vadd.xlane.f32.xlu0 %v6124
  %v6126 = vpop.xlane.xlu0 %6125
  %v6127 = vsel %vm199, %v6108, 0.0
  %6128 = vadd.xlane.f32.xlu0 %v6127
  %v6129 = vpop.xlane.xlu0 %6128
  %v6130 = vsel %vm199, %v6110, 0.0
  %6131 = vadd.xlane.f32.xlu0 %v6130
  %v6132 = vpop.xlane.xlu0 %6131
  %v6133 = vsel %vm199, %v6112, 0.0
  %6134 = vadd.xlane.f32.xlu0 %v6133
  %v6135 = vpop.xlane.xlu0 %6134
  %v6136 = vsel %vm199, %v6114, 0.0
  %6137 = vadd.xlane.f32.xlu0 %v6136
  %v6138 = vpop.xlane.xlu0 %6137
  %v6139 = vrcp.pop %v6117
  %v6140 = vrcp.pop %v6120
  %v6141 = vrcp.pop %v6123
  %v6142 = vrcp.pop %v6126
  %v6143 = vrcp.pop %v6129
  %v6144 = vrcp.pop %v6132
  %v6145 = vrcp.pop %v6135
  %v6146 = vrcp.pop %v6138
  %v6147 = vmul.f32 %v6100, %v6139
  %v6148 = vmul.f32 %v6102, %v6140
  %v6149 = vmul.f32 %v6104, %v6141
  %v6150 = vmul.f32 %v6106, %v6142
  %v6151 = vmul.f32 %v6108, %v6143
  %v6152 = vmul.f32 %v6110, %v6144
  %v6153 = vmul.f32 %v6112, %v6145
  %v6154 = vmul.f32 %v6114, %v6146
  %6155 = vrot.lane.b32.xlu0 %v168, 112
  %v6156 = vpop.permute.xlu0 %6155
  %v6159 = vsel %vm199, %v6147, 0
  %6161 = vmatpush.msra.mxu0 0.0
  %6162 = vmatpush.msra.mxu0 0.0
  %6163 = vmatpush.msra.mxu0 0.0
  %6164 = vmatpush.msra.mxu0 0.0
  %6165 = vmatpush.msra.mxu0 0.0
  %6166 = vmatpush.msra.mxu0 0.0
  %6167 = vmatpush.msra.mxu0 0.0
  %6168 = vmatpush.msra.mxu0 0.0
  %6169 = vmatpush.msra.mxu0 0.0
  %6170 = vmatpush.msra.mxu0 0.0
  %6171 = vmatpush.msra.mxu0 0.0
  %6172 = vmatpush.msra.mxu0 0.0
  %6173 = vmatpush.msra.mxu0 0.0
  %6174 = vmatpush.msra.mxu0 0.0
  %6175 = vmatpush.msra.mxu0 0.0
  %6176 = vmatpush.msra.mxu0 %v6156
  %6177 = vmatmul.f32.gmra.mxu0 %v6159
  %v6178 = vpop.f32.mrf.mxu0
  %v6179 = vadd.f32 0.0, %v6178
  %6180 = vdwg.mxu0
  %6181 = vrot.lane.b32.xlu0 %v170, 112
  %v6182 = vpop.permute.xlu0 %6181
  %v6185 = vsel %vm199, %v6148, 0
  %6187 = vmatpush.msra.mxu0 0.0
  %6188 = vmatpush.msra.mxu0 0.0
  %6189 = vmatpush.msra.mxu0 0.0
  %6190 = vmatpush.msra.mxu0 0.0
  %6191 = vmatpush.msra.mxu0 0.0
  %6192 = vmatpush.msra.mxu0 0.0
  %6193 = vmatpush.msra.mxu0 0.0
  %6194 = vmatpush.msra.mxu0 0.0
  %6195 = vmatpush.msra.mxu0 0.0
  %6196 = vmatpush.msra.mxu0 0.0
  %6197 = vmatpush.msra.mxu0 0.0
  %6198 = vmatpush.msra.mxu0 0.0
  %6199 = vmatpush.msra.mxu0 0.0
  %6200 = vmatpush.msra.mxu0 0.0
  %6201 = vmatpush.msra.mxu0 0.0
  %6202 = vmatpush.msra.mxu0 %v6182
  %6203 = vmatmul.f32.gmra.mxu0 %v6185
  %v6204 = vpop.f32.mrf.mxu0
  %v6205 = vadd.f32 0.0, %v6204
  %6206 = vdwg.mxu0
  %6207 = vrot.lane.b32.xlu0 %v173, 112
  %v6208 = vpop.permute.xlu0 %6207
  %v6211 = vsel %vm199, %v6149, 0
  %6213 = vmatpush.msra.mxu0 0.0
  %6214 = vmatpush.msra.mxu0 0.0
  %6215 = vmatpush.msra.mxu0 0.0
  %6216 = vmatpush.msra.mxu0 0.0
  %6217 = vmatpush.msra.mxu0 0.0
  %6218 = vmatpush.msra.mxu0 0.0
  %6219 = vmatpush.msra.mxu0 0.0
  %6220 = vmatpush.msra.mxu0 0.0
  %6221 = vmatpush.msra.mxu0 0.0
  %6222 = vmatpush.msra.mxu0 0.0
  %6223 = vmatpush.msra.mxu0 0.0
  %6224 = vmatpush.msra.mxu0 0.0
  %6225 = vmatpush.msra.mxu0 0.0
  %6226 = vmatpush.msra.mxu0 0.0
  %6227 = vmatpush.msra.mxu0 0.0
  %6228 = vmatpush.msra.mxu0 %v6208
  %6229 = vmatmul.f32.gmra.mxu0 %v6211
  %v6230 = vpop.f32.mrf.mxu0
  %v6231 = vadd.f32 0.0, %v6230
  %6232 = vdwg.mxu0
  %6233 = vrot.lane.b32.xlu0 %v175, 112
  %v6234 = vpop.permute.xlu0 %6233
  %v6237 = vsel %vm199, %v6150, 0
  %6239 = vmatpush.msra.mxu0 0.0
  %6240 = vmatpush.msra.mxu0 0.0
  %6241 = vmatpush.msra.mxu0 0.0
  %6242 = vmatpush.msra.mxu0 0.0
  %6243 = vmatpush.msra.mxu0 0.0
  %6244 = vmatpush.msra.mxu0 0.0
  %6245 = vmatpush.msra.mxu0 0.0
  %6246 = vmatpush.msra.mxu0 0.0
  %6247 = vmatpush.msra.mxu0 0.0
  %6248 = vmatpush.msra.mxu0 0.0
  %6249 = vmatpush.msra.mxu0 0.0
  %6250 = vmatpush.msra.mxu0 0.0
  %6251 = vmatpush.msra.mxu0 0.0
  %6252 = vmatpush.msra.mxu0 0.0
  %6253 = vmatpush.msra.mxu0 0.0
  %6254 = vmatpush.msra.mxu0 %v6234
  %6255 = vmatmul.f32.gmra.mxu0 %v6237
  %v6256 = vpop.f32.mrf.mxu0
  %v6257 = vadd.f32 0.0, %v6256
  %6258 = vdwg.mxu0
  %6259 = vrot.lane.b32.xlu0 %v178, 112
  %v6260 = vpop.permute.xlu0 %6259
  %v6263 = vsel %vm199, %v6151, 0
  %6265 = vmatpush.msra.mxu0 0.0
  %6266 = vmatpush.msra.mxu0 0.0
  %6267 = vmatpush.msra.mxu0 0.0
  %6268 = vmatpush.msra.mxu0 0.0
  %6269 = vmatpush.msra.mxu0 0.0
  %6270 = vmatpush.msra.mxu0 0.0
  %6271 = vmatpush.msra.mxu0 0.0
  %6272 = vmatpush.msra.mxu0 0.0
  %6273 = vmatpush.msra.mxu0 0.0
  %6274 = vmatpush.msra.mxu0 0.0
  %6275 = vmatpush.msra.mxu0 0.0
  %6276 = vmatpush.msra.mxu0 0.0
  %6277 = vmatpush.msra.mxu0 0.0
  %6278 = vmatpush.msra.mxu0 0.0
  %6279 = vmatpush.msra.mxu0 0.0
  %6280 = vmatpush.msra.mxu0 %v6260
  %6281 = vmatmul.f32.gmra.mxu0 %v6263
  %v6282 = vpop.f32.mrf.mxu0
  %v6283 = vadd.f32 0.0, %v6282
  %6284 = vdwg.mxu0
  %6285 = vrot.lane.b32.xlu0 %v180, 112
  %v6286 = vpop.permute.xlu0 %6285
  %v6289 = vsel %vm199, %v6152, 0
  %6291 = vmatpush.msra.mxu0 0.0
  %6292 = vmatpush.msra.mxu0 0.0
  %6293 = vmatpush.msra.mxu0 0.0
  %6294 = vmatpush.msra.mxu0 0.0
  %6295 = vmatpush.msra.mxu0 0.0
  %6296 = vmatpush.msra.mxu0 0.0
  %6297 = vmatpush.msra.mxu0 0.0
  %6298 = vmatpush.msra.mxu0 0.0
  %6299 = vmatpush.msra.mxu0 0.0
  %6300 = vmatpush.msra.mxu0 0.0
  %6301 = vmatpush.msra.mxu0 0.0
  %6302 = vmatpush.msra.mxu0 0.0
  %6303 = vmatpush.msra.mxu0 0.0
  %6304 = vmatpush.msra.mxu0 0.0
  %6305 = vmatpush.msra.mxu0 0.0
  %6306 = vmatpush.msra.mxu0 %v6286
  %6307 = vmatmul.f32.gmra.mxu0 %v6289
  %v6308 = vpop.f32.mrf.mxu0
  %v6309 = vadd.f32 0.0, %v6308
  %6310 = vdwg.mxu0
  %6311 = vrot.lane.b32.xlu0 %v183, 112
  %v6312 = vpop.permute.xlu0 %6311
  %v6315 = vsel %vm199, %v6153, 0
  %6317 = vmatpush.msra.mxu0 0.0
  %6318 = vmatpush.msra.mxu0 0.0
  %6319 = vmatpush.msra.mxu0 0.0
  %6320 = vmatpush.msra.mxu0 0.0
  %6321 = vmatpush.msra.mxu0 0.0
  %6322 = vmatpush.msra.mxu0 0.0
  %6323 = vmatpush.msra.mxu0 0.0
  %6324 = vmatpush.msra.mxu0 0.0
  %6325 = vmatpush.msra.mxu0 0.0
  %6326 = vmatpush.msra.mxu0 0.0
  %6327 = vmatpush.msra.mxu0 0.0
  %6328 = vmatpush.msra.mxu0 0.0
  %6329 = vmatpush.msra.mxu0 0.0
  %6330 = vmatpush.msra.mxu0 0.0
  %6331 = vmatpush.msra.mxu0 0.0
  %6332 = vmatpush.msra.mxu0 %v6312
  %6333 = vmatmul.f32.gmra.mxu0 %v6315
  %v6334 = vpop.f32.mrf.mxu0
  %v6335 = vadd.f32 0.0, %v6334
  %6336 = vdwg.mxu0
  %6337 = vrot.lane.b32.xlu0 %v185, 112
  %v6338 = vpop.permute.xlu0 %6337
  %v6341 = vsel %vm199, %v6154, 0
  %6343 = vmatpush.msra.mxu0 0.0
  %6344 = vmatpush.msra.mxu0 0.0
  %6345 = vmatpush.msra.mxu0 0.0
  %6346 = vmatpush.msra.mxu0 0.0
  %6347 = vmatpush.msra.mxu0 0.0
  %6348 = vmatpush.msra.mxu0 0.0
  %6349 = vmatpush.msra.mxu0 0.0
  %6350 = vmatpush.msra.mxu0 0.0
  %6351 = vmatpush.msra.mxu0 0.0
  %6352 = vmatpush.msra.mxu0 0.0
  %6353 = vmatpush.msra.mxu0 0.0
  %6354 = vmatpush.msra.mxu0 0.0
  %6355 = vmatpush.msra.mxu0 0.0
  %6356 = vmatpush.msra.mxu0 0.0
  %6357 = vmatpush.msra.mxu0 0.0
  %6358 = vmatpush.msra.mxu0 %v6338
  %6359 = vmatmul.f32.gmra.mxu0 %v6341
  %v6360 = vpop.f32.mrf.mxu0
  %v6361 = vadd.f32 0.0, %v6360
  %6362 = vdwg.mxu0
  %6363 = vrot.lane.b32.xlu0 %v139, 40
  %v6364 = vpop.permute.xlu0 %6363
  %6365 = vrot.lane.b32.xlu0 %v139, 8
  %v6366 = vpop.permute.xlu0 %6365
  %v6367 = vsel %vm199, %v6364, 0
  %v6369 = vsel %vm199, %v6366, 0
  %6371 = vmatpush.xpose.msra.mxu0 0.0
  %6372 = vmatpush.xpose.msra.mxu0 0.0
  %6373 = vmatpush.xpose.msra.mxu0 0.0
  %6374 = vmatpush.xpose.msra.mxu0 0.0
  %6375 = vmatpush.xpose.msra.mxu0 0.0
  %6376 = vmatpush.xpose.msra.mxu0 0.0
  %6377 = vmatpush.xpose.msra.mxu0 0.0
  %6378 = vmatpush.xpose.msra.mxu0 0.0
  %6379 = vmatpush.xpose.msra.mxu0 0.0
  %6380 = vmatpush.xpose.msra.mxu0 0.0
  %6381 = vmatpush.xpose.msra.mxu0 0.0
  %6382 = vmatpush.xpose.msra.mxu0 0.0
  %6383 = vmatpush.xpose.msra.mxu0 0.0
  %6384 = vmatpush.xpose.msra.mxu0 0.0
  %6385 = vmatpush.xpose.msra.mxu0 0.0
  %6386 = vmatpush.xpose.msra.mxu0 %v6369
  %6387 = vmatmul.f32.gmra.mxu0 %v6367
  %v6388 = vpop.f32.mrf.mxu0
  %v6389 = vadd.f32 %v195, %v6388
  %6390 = vdwg.mxu0
  %6391 = vrot.lane.b32.xlu0 %v141, 40
  %v6392 = vpop.permute.xlu0 %6391
  %6393 = vrot.lane.b32.xlu0 %v141, 8
  %v6394 = vpop.permute.xlu0 %6393
  %v6395 = vsel %vm199, %v6392, 0
  %v6397 = vsel %vm199, %v6394, 0
  %6399 = vmatpush.xpose.msra.mxu0 0.0
  %6400 = vmatpush.xpose.msra.mxu0 0.0
  %6401 = vmatpush.xpose.msra.mxu0 0.0
  %6402 = vmatpush.xpose.msra.mxu0 0.0
  %6403 = vmatpush.xpose.msra.mxu0 0.0
  %6404 = vmatpush.xpose.msra.mxu0 0.0
  %6405 = vmatpush.xpose.msra.mxu0 0.0
  %6406 = vmatpush.xpose.msra.mxu0 0.0
  %6407 = vmatpush.xpose.msra.mxu0 0.0
  %6408 = vmatpush.xpose.msra.mxu0 0.0
  %6409 = vmatpush.xpose.msra.mxu0 0.0
  %6410 = vmatpush.xpose.msra.mxu0 0.0
  %6411 = vmatpush.xpose.msra.mxu0 0.0
  %6412 = vmatpush.xpose.msra.mxu0 0.0
  %6413 = vmatpush.xpose.msra.mxu0 0.0
  %6414 = vmatpush.xpose.msra.mxu0 %v6397
  %6415 = vmatmul.f32.gmra.mxu0 %v6395
  %v6416 = vpop.f32.mrf.mxu0
  %v6417 = vadd.f32 %v195, %v6416
  %6418 = vdwg.mxu0
  %6419 = vrot.lane.b32.xlu0 %v144, 40
  %v6420 = vpop.permute.xlu0 %6419
  %6421 = vrot.lane.b32.xlu0 %v144, 8
  %v6422 = vpop.permute.xlu0 %6421
  %v6423 = vsel %vm199, %v6420, 0
  %v6425 = vsel %vm199, %v6422, 0
  %6427 = vmatpush.xpose.msra.mxu0 0.0
  %6428 = vmatpush.xpose.msra.mxu0 0.0
  %6429 = vmatpush.xpose.msra.mxu0 0.0
  %6430 = vmatpush.xpose.msra.mxu0 0.0
  %6431 = vmatpush.xpose.msra.mxu0 0.0
  %6432 = vmatpush.xpose.msra.mxu0 0.0
  %6433 = vmatpush.xpose.msra.mxu0 0.0
  %6434 = vmatpush.xpose.msra.mxu0 0.0
  %6435 = vmatpush.xpose.msra.mxu0 0.0
  %6436 = vmatpush.xpose.msra.mxu0 0.0
  %6437 = vmatpush.xpose.msra.mxu0 0.0
  %6438 = vmatpush.xpose.msra.mxu0 0.0
  %6439 = vmatpush.xpose.msra.mxu0 0.0
  %6440 = vmatpush.xpose.msra.mxu0 0.0
  %6441 = vmatpush.xpose.msra.mxu0 0.0
  %6442 = vmatpush.xpose.msra.mxu0 %v6425
  %6443 = vmatmul.f32.gmra.mxu0 %v6423
  %v6444 = vpop.f32.mrf.mxu0
  %v6445 = vadd.f32 %v195, %v6444
  %6446 = vdwg.mxu0
  %6447 = vrot.lane.b32.xlu0 %v146, 40
  %v6448 = vpop.permute.xlu0 %6447
  %6449 = vrot.lane.b32.xlu0 %v146, 8
  %v6450 = vpop.permute.xlu0 %6449
  %v6451 = vsel %vm199, %v6448, 0
  %v6453 = vsel %vm199, %v6450, 0
  %6455 = vmatpush.xpose.msra.mxu0 0.0
  %6456 = vmatpush.xpose.msra.mxu0 0.0
  %6457 = vmatpush.xpose.msra.mxu0 0.0
  %6458 = vmatpush.xpose.msra.mxu0 0.0
  %6459 = vmatpush.xpose.msra.mxu0 0.0
  %6460 = vmatpush.xpose.msra.mxu0 0.0
  %6461 = vmatpush.xpose.msra.mxu0 0.0
  %6462 = vmatpush.xpose.msra.mxu0 0.0
  %6463 = vmatpush.xpose.msra.mxu0 0.0
  %6464 = vmatpush.xpose.msra.mxu0 0.0
  %6465 = vmatpush.xpose.msra.mxu0 0.0
  %6466 = vmatpush.xpose.msra.mxu0 0.0
  %6467 = vmatpush.xpose.msra.mxu0 0.0
  %6468 = vmatpush.xpose.msra.mxu0 0.0
  %6469 = vmatpush.xpose.msra.mxu0 0.0
  %6470 = vmatpush.xpose.msra.mxu0 %v6453
  %6471 = vmatmul.f32.gmra.mxu0 %v6451
  %v6472 = vpop.f32.mrf.mxu0
  %v6473 = vadd.f32 %v195, %v6472
  %6474 = vdwg.mxu0
  %6475 = vrot.lane.b32.xlu0 %v149, 40
  %v6476 = vpop.permute.xlu0 %6475
  %6477 = vrot.lane.b32.xlu0 %v149, 8
  %v6478 = vpop.permute.xlu0 %6477
  %v6479 = vsel %vm199, %v6476, 0
  %v6481 = vsel %vm199, %v6478, 0
  %6483 = vmatpush.xpose.msra.mxu0 0.0
  %6484 = vmatpush.xpose.msra.mxu0 0.0
  %6485 = vmatpush.xpose.msra.mxu0 0.0
  %6486 = vmatpush.xpose.msra.mxu0 0.0
  %6487 = vmatpush.xpose.msra.mxu0 0.0
  %6488 = vmatpush.xpose.msra.mxu0 0.0
  %6489 = vmatpush.xpose.msra.mxu0 0.0
  %6490 = vmatpush.xpose.msra.mxu0 0.0
  %6491 = vmatpush.xpose.msra.mxu0 0.0
  %6492 = vmatpush.xpose.msra.mxu0 0.0
  %6493 = vmatpush.xpose.msra.mxu0 0.0
  %6494 = vmatpush.xpose.msra.mxu0 0.0
  %6495 = vmatpush.xpose.msra.mxu0 0.0
  %6496 = vmatpush.xpose.msra.mxu0 0.0
  %6497 = vmatpush.xpose.msra.mxu0 0.0
  %6498 = vmatpush.xpose.msra.mxu0 %v6481
  %6499 = vmatmul.f32.gmra.mxu0 %v6479
  %v6500 = vpop.f32.mrf.mxu0
  %v6501 = vadd.f32 %v195, %v6500
  %6502 = vdwg.mxu0
  %6503 = vrot.lane.b32.xlu0 %v151, 40
  %v6504 = vpop.permute.xlu0 %6503
  %6505 = vrot.lane.b32.xlu0 %v151, 8
  %v6506 = vpop.permute.xlu0 %6505
  %v6507 = vsel %vm199, %v6504, 0
  %v6509 = vsel %vm199, %v6506, 0
  %6511 = vmatpush.xpose.msra.mxu0 0.0
  %6512 = vmatpush.xpose.msra.mxu0 0.0
  %6513 = vmatpush.xpose.msra.mxu0 0.0
  %6514 = vmatpush.xpose.msra.mxu0 0.0
  %6515 = vmatpush.xpose.msra.mxu0 0.0
  %6516 = vmatpush.xpose.msra.mxu0 0.0
  %6517 = vmatpush.xpose.msra.mxu0 0.0
  %6518 = vmatpush.xpose.msra.mxu0 0.0
  %6519 = vmatpush.xpose.msra.mxu0 0.0
  %6520 = vmatpush.xpose.msra.mxu0 0.0
  %6521 = vmatpush.xpose.msra.mxu0 0.0
  %6522 = vmatpush.xpose.msra.mxu0 0.0
  %6523 = vmatpush.xpose.msra.mxu0 0.0
  %6524 = vmatpush.xpose.msra.mxu0 0.0
  %6525 = vmatpush.xpose.msra.mxu0 0.0
  %6526 = vmatpush.xpose.msra.mxu0 %v6509
  %6527 = vmatmul.f32.gmra.mxu0 %v6507
  %v6528 = vpop.f32.mrf.mxu0
  %v6529 = vadd.f32 %v195, %v6528
  %6530 = vdwg.mxu0
  %6531 = vrot.lane.b32.xlu0 %v154, 40
  %v6532 = vpop.permute.xlu0 %6531
  %6533 = vrot.lane.b32.xlu0 %v154, 8
  %v6534 = vpop.permute.xlu0 %6533
  %v6535 = vsel %vm199, %v6532, 0
  %v6537 = vsel %vm199, %v6534, 0
  %6539 = vmatpush.xpose.msra.mxu0 0.0
  %6540 = vmatpush.xpose.msra.mxu0 0.0
  %6541 = vmatpush.xpose.msra.mxu0 0.0
  %6542 = vmatpush.xpose.msra.mxu0 0.0
  %6543 = vmatpush.xpose.msra.mxu0 0.0
  %6544 = vmatpush.xpose.msra.mxu0 0.0
  %6545 = vmatpush.xpose.msra.mxu0 0.0
  %6546 = vmatpush.xpose.msra.mxu0 0.0
  %6547 = vmatpush.xpose.msra.mxu0 0.0
  %6548 = vmatpush.xpose.msra.mxu0 0.0
  %6549 = vmatpush.xpose.msra.mxu0 0.0
  %6550 = vmatpush.xpose.msra.mxu0 0.0
  %6551 = vmatpush.xpose.msra.mxu0 0.0
  %6552 = vmatpush.xpose.msra.mxu0 0.0
  %6553 = vmatpush.xpose.msra.mxu0 0.0
  %6554 = vmatpush.xpose.msra.mxu0 %v6537
  %6555 = vmatmul.f32.gmra.mxu0 %v6535
  %v6556 = vpop.f32.mrf.mxu0
  %v6557 = vadd.f32 %v195, %v6556
  %6558 = vdwg.mxu0
  %6559 = vrot.lane.b32.xlu0 %v156, 40
  %v6560 = vpop.permute.xlu0 %6559
  %6561 = vrot.lane.b32.xlu0 %v156, 8
  %v6562 = vpop.permute.xlu0 %6561
  %v6563 = vsel %vm199, %v6560, 0
  %v6565 = vsel %vm199, %v6562, 0
  %6567 = vmatpush.xpose.msra.mxu0 0.0
  %6568 = vmatpush.xpose.msra.mxu0 0.0
  %6569 = vmatpush.xpose.msra.mxu0 0.0
  %6570 = vmatpush.xpose.msra.mxu0 0.0
  %6571 = vmatpush.xpose.msra.mxu0 0.0
  %6572 = vmatpush.xpose.msra.mxu0 0.0
  %6573 = vmatpush.xpose.msra.mxu0 0.0
  %6574 = vmatpush.xpose.msra.mxu0 0.0
  %6575 = vmatpush.xpose.msra.mxu0 0.0
  %6576 = vmatpush.xpose.msra.mxu0 0.0
  %6577 = vmatpush.xpose.msra.mxu0 0.0
  %6578 = vmatpush.xpose.msra.mxu0 0.0
  %6579 = vmatpush.xpose.msra.mxu0 0.0
  %6580 = vmatpush.xpose.msra.mxu0 0.0
  %6581 = vmatpush.xpose.msra.mxu0 0.0
  %6582 = vmatpush.xpose.msra.mxu0 %v6565
  %6583 = vmatmul.f32.gmra.mxu0 %v6563
  %v6584 = vpop.f32.mrf.mxu0
  %v6585 = vadd.f32 %v195, %v6584
  %6586 = vdwg.mxu0
  %v6587 = vsel %vm199, %v6389, -inf
  %6588 = vmax.xlane.f32.xlu0 %v6587
  %v6589 = vpop.xlane.xlu0 %6588
  %v6590 = vsel %vm199, %v6417, -inf
  %6591 = vmax.xlane.f32.xlu0 %v6590
  %v6592 = vpop.xlane.xlu0 %6591
  %v6593 = vsel %vm199, %v6445, -inf
  %6594 = vmax.xlane.f32.xlu0 %v6593
  %v6595 = vpop.xlane.xlu0 %6594
  %v6596 = vsel %vm199, %v6473, -inf
  %6597 = vmax.xlane.f32.xlu0 %v6596
  %v6598 = vpop.xlane.xlu0 %6597
  %v6599 = vsel %vm199, %v6501, -inf
  %6600 = vmax.xlane.f32.xlu0 %v6599
  %v6601 = vpop.xlane.xlu0 %6600
  %v6602 = vsel %vm199, %v6529, -inf
  %6603 = vmax.xlane.f32.xlu0 %v6602
  %v6604 = vpop.xlane.xlu0 %6603
  %v6605 = vsel %vm199, %v6557, -inf
  %6606 = vmax.xlane.f32.xlu0 %v6605
  %v6607 = vpop.xlane.xlu0 %6606
  %v6608 = vsel %vm199, %v6585, -inf
  %6609 = vmax.xlane.f32.xlu0 %v6608
  %v6610 = vpop.xlane.xlu0 %6609
  %v6611 = vsub.f32 %v6389, %v6589
  %v6612 = vsub.f32 %v6417, %v6592
  %v6613 = vsub.f32 %v6445, %v6595
  %v6614 = vsub.f32 %v6473, %v6598
  %v6615 = vsub.f32 %v6501, %v6601
  %v6616 = vsub.f32 %v6529, %v6604
  %v6617 = vsub.f32 %v6557, %v6607
  %v6618 = vsub.f32 %v6585, %v6610
  %v6619 = vmul.f32 %v6611, 1.442695
  %v6620 = vpow.pop %v6619
  %v6621 = vmul.f32 %v6612, 1.442695
  %v6622 = vpow.pop %v6621
  %v6623 = vmul.f32 %v6613, 1.442695
  %v6624 = vpow.pop %v6623
  %v6625 = vmul.f32 %v6614, 1.442695
  %v6626 = vpow.pop %v6625
  %v6627 = vmul.f32 %v6615, 1.442695
  %v6628 = vpow.pop %v6627
  %v6629 = vmul.f32 %v6616, 1.442695
  %v6630 = vpow.pop %v6629
  %v6631 = vmul.f32 %v6617, 1.442695
  %v6632 = vpow.pop %v6631
  %v6633 = vmul.f32 %v6618, 1.442695
  %v6634 = vpow.pop %v6633
  %v6635 = vsel %vm199, %v6620, 0.0
  %6636 = vadd.xlane.f32.xlu0 %v6635
  %v6637 = vpop.xlane.xlu0 %6636
  %v6638 = vsel %vm199, %v6622, 0.0
  %6639 = vadd.xlane.f32.xlu0 %v6638
  %v6640 = vpop.xlane.xlu0 %6639
  %v6641 = vsel %vm199, %v6624, 0.0
  %6642 = vadd.xlane.f32.xlu0 %v6641
  %v6643 = vpop.xlane.xlu0 %6642
  %v6644 = vsel %vm199, %v6626, 0.0
  %6645 = vadd.xlane.f32.xlu0 %v6644
  %v6646 = vpop.xlane.xlu0 %6645
  %v6647 = vsel %vm199, %v6628, 0.0
  %6648 = vadd.xlane.f32.xlu0 %v6647
  %v6649 = vpop.xlane.xlu0 %6648
  %v6650 = vsel %vm199, %v6630, 0.0
  %6651 = vadd.xlane.f32.xlu0 %v6650
  %v6652 = vpop.xlane.xlu0 %6651
  %v6653 = vsel %vm199, %v6632, 0.0
  %6654 = vadd.xlane.f32.xlu0 %v6653
  %v6655 = vpop.xlane.xlu0 %6654
  %v6656 = vsel %vm199, %v6634, 0.0
  %6657 = vadd.xlane.f32.xlu0 %v6656
  %v6658 = vpop.xlane.xlu0 %6657
  %v6659 = vrcp.pop %v6637
  %v6660 = vrcp.pop %v6640
  %v6661 = vrcp.pop %v6643
  %v6662 = vrcp.pop %v6646
  %v6663 = vrcp.pop %v6649
  %v6664 = vrcp.pop %v6652
  %v6665 = vrcp.pop %v6655
  %v6666 = vrcp.pop %v6658
  %v6667 = vmul.f32 %v6620, %v6659
  %v6668 = vmul.f32 %v6622, %v6660
  %v6669 = vmul.f32 %v6624, %v6661
  %v6670 = vmul.f32 %v6626, %v6662
  %v6671 = vmul.f32 %v6628, %v6663
  %v6672 = vmul.f32 %v6630, %v6664
  %v6673 = vmul.f32 %v6632, %v6665
  %v6674 = vmul.f32 %v6634, %v6666
  %6675 = vrot.lane.b32.xlu0 %v168, 104
  %v6676 = vpop.permute.xlu0 %6675
  %v6679 = vsel %vm199, %v6667, 0
  %6681 = vmatpush.msra.mxu0 0.0
  %6682 = vmatpush.msra.mxu0 0.0
  %6683 = vmatpush.msra.mxu0 0.0
  %6684 = vmatpush.msra.mxu0 0.0
  %6685 = vmatpush.msra.mxu0 0.0
  %6686 = vmatpush.msra.mxu0 0.0
  %6687 = vmatpush.msra.mxu0 0.0
  %6688 = vmatpush.msra.mxu0 0.0
  %6689 = vmatpush.msra.mxu0 0.0
  %6690 = vmatpush.msra.mxu0 0.0
  %6691 = vmatpush.msra.mxu0 0.0
  %6692 = vmatpush.msra.mxu0 0.0
  %6693 = vmatpush.msra.mxu0 0.0
  %6694 = vmatpush.msra.mxu0 0.0
  %6695 = vmatpush.msra.mxu0 0.0
  %6696 = vmatpush.msra.mxu0 %v6676
  %6697 = vmatmul.f32.gmra.mxu0 %v6679
  %v6698 = vpop.f32.mrf.mxu0
  %v6699 = vadd.f32 0.0, %v6698
  %6700 = vdwg.mxu0
  %6701 = vrot.lane.b32.xlu0 %v170, 104
  %v6702 = vpop.permute.xlu0 %6701
  %v6705 = vsel %vm199, %v6668, 0
  %6707 = vmatpush.msra.mxu0 0.0
  %6708 = vmatpush.msra.mxu0 0.0
  %6709 = vmatpush.msra.mxu0 0.0
  %6710 = vmatpush.msra.mxu0 0.0
  %6711 = vmatpush.msra.mxu0 0.0
  %6712 = vmatpush.msra.mxu0 0.0
  %6713 = vmatpush.msra.mxu0 0.0
  %6714 = vmatpush.msra.mxu0 0.0
  %6715 = vmatpush.msra.mxu0 0.0
  %6716 = vmatpush.msra.mxu0 0.0
  %6717 = vmatpush.msra.mxu0 0.0
  %6718 = vmatpush.msra.mxu0 0.0
  %6719 = vmatpush.msra.mxu0 0.0
  %6720 = vmatpush.msra.mxu0 0.0
  %6721 = vmatpush.msra.mxu0 0.0
  %6722 = vmatpush.msra.mxu0 %v6702
  %6723 = vmatmul.f32.gmra.mxu0 %v6705
  %v6724 = vpop.f32.mrf.mxu0
  %v6725 = vadd.f32 0.0, %v6724
  %6726 = vdwg.mxu0
  %6727 = vrot.lane.b32.xlu0 %v173, 104
  %v6728 = vpop.permute.xlu0 %6727
  %v6731 = vsel %vm199, %v6669, 0
  %6733 = vmatpush.msra.mxu0 0.0
  %6734 = vmatpush.msra.mxu0 0.0
  %6735 = vmatpush.msra.mxu0 0.0
  %6736 = vmatpush.msra.mxu0 0.0
  %6737 = vmatpush.msra.mxu0 0.0
  %6738 = vmatpush.msra.mxu0 0.0
  %6739 = vmatpush.msra.mxu0 0.0
  %6740 = vmatpush.msra.mxu0 0.0
  %6741 = vmatpush.msra.mxu0 0.0
  %6742 = vmatpush.msra.mxu0 0.0
  %6743 = vmatpush.msra.mxu0 0.0
  %6744 = vmatpush.msra.mxu0 0.0
  %6745 = vmatpush.msra.mxu0 0.0
  %6746 = vmatpush.msra.mxu0 0.0
  %6747 = vmatpush.msra.mxu0 0.0
  %6748 = vmatpush.msra.mxu0 %v6728
  %6749 = vmatmul.f32.gmra.mxu0 %v6731
  %v6750 = vpop.f32.mrf.mxu0
  %v6751 = vadd.f32 0.0, %v6750
  %6752 = vdwg.mxu0
  %6753 = vrot.lane.b32.xlu0 %v175, 104
  %v6754 = vpop.permute.xlu0 %6753
  %v6757 = vsel %vm199, %v6670, 0
  %6759 = vmatpush.msra.mxu0 0.0
  %6760 = vmatpush.msra.mxu0 0.0
  %6761 = vmatpush.msra.mxu0 0.0
  %6762 = vmatpush.msra.mxu0 0.0
  %6763 = vmatpush.msra.mxu0 0.0
  %6764 = vmatpush.msra.mxu0 0.0
  %6765 = vmatpush.msra.mxu0 0.0
  %6766 = vmatpush.msra.mxu0 0.0
  %6767 = vmatpush.msra.mxu0 0.0
  %6768 = vmatpush.msra.mxu0 0.0
  %6769 = vmatpush.msra.mxu0 0.0
  %6770 = vmatpush.msra.mxu0 0.0
  %6771 = vmatpush.msra.mxu0 0.0
  %6772 = vmatpush.msra.mxu0 0.0
  %6773 = vmatpush.msra.mxu0 0.0
  %6774 = vmatpush.msra.mxu0 %v6754
  %6775 = vmatmul.f32.gmra.mxu0 %v6757
  %v6776 = vpop.f32.mrf.mxu0
  %v6777 = vadd.f32 0.0, %v6776
  %6778 = vdwg.mxu0
  %6779 = vrot.lane.b32.xlu0 %v178, 104
  %v6780 = vpop.permute.xlu0 %6779
  %v6783 = vsel %vm199, %v6671, 0
  %6785 = vmatpush.msra.mxu0 0.0
  %6786 = vmatpush.msra.mxu0 0.0
  %6787 = vmatpush.msra.mxu0 0.0
  %6788 = vmatpush.msra.mxu0 0.0
  %6789 = vmatpush.msra.mxu0 0.0
  %6790 = vmatpush.msra.mxu0 0.0
  %6791 = vmatpush.msra.mxu0 0.0
  %6792 = vmatpush.msra.mxu0 0.0
  %6793 = vmatpush.msra.mxu0 0.0
  %6794 = vmatpush.msra.mxu0 0.0
  %6795 = vmatpush.msra.mxu0 0.0
  %6796 = vmatpush.msra.mxu0 0.0
  %6797 = vmatpush.msra.mxu0 0.0
  %6798 = vmatpush.msra.mxu0 0.0
  %6799 = vmatpush.msra.mxu0 0.0
  %6800 = vmatpush.msra.mxu0 %v6780
  %6801 = vmatmul.f32.gmra.mxu0 %v6783
  %v6802 = vpop.f32.mrf.mxu0
  %v6803 = vadd.f32 0.0, %v6802
  %6804 = vdwg.mxu0
  %6805 = vrot.lane.b32.xlu0 %v180, 104
  %v6806 = vpop.permute.xlu0 %6805
  %v6809 = vsel %vm199, %v6672, 0
  %6811 = vmatpush.msra.mxu0 0.0
  %6812 = vmatpush.msra.mxu0 0.0
  %6813 = vmatpush.msra.mxu0 0.0
  %6814 = vmatpush.msra.mxu0 0.0
  %6815 = vmatpush.msra.mxu0 0.0
  %6816 = vmatpush.msra.mxu0 0.0
  %6817 = vmatpush.msra.mxu0 0.0
  %6818 = vmatpush.msra.mxu0 0.0
  %6819 = vmatpush.msra.mxu0 0.0
  %6820 = vmatpush.msra.mxu0 0.0
  %6821 = vmatpush.msra.mxu0 0.0
  %6822 = vmatpush.msra.mxu0 0.0
  %6823 = vmatpush.msra.mxu0 0.0
  %6824 = vmatpush.msra.mxu0 0.0
  %6825 = vmatpush.msra.mxu0 0.0
  %6826 = vmatpush.msra.mxu0 %v6806
  %6827 = vmatmul.f32.gmra.mxu0 %v6809
  %v6828 = vpop.f32.mrf.mxu0
  %v6829 = vadd.f32 0.0, %v6828
  %6830 = vdwg.mxu0
  %6831 = vrot.lane.b32.xlu0 %v183, 104
  %v6832 = vpop.permute.xlu0 %6831
  %v6835 = vsel %vm199, %v6673, 0
  %6837 = vmatpush.msra.mxu0 0.0
  %6838 = vmatpush.msra.mxu0 0.0
  %6839 = vmatpush.msra.mxu0 0.0
  %6840 = vmatpush.msra.mxu0 0.0
  %6841 = vmatpush.msra.mxu0 0.0
  %6842 = vmatpush.msra.mxu0 0.0
  %6843 = vmatpush.msra.mxu0 0.0
  %6844 = vmatpush.msra.mxu0 0.0
  %6845 = vmatpush.msra.mxu0 0.0
  %6846 = vmatpush.msra.mxu0 0.0
  %6847 = vmatpush.msra.mxu0 0.0
  %6848 = vmatpush.msra.mxu0 0.0
  %6849 = vmatpush.msra.mxu0 0.0
  %6850 = vmatpush.msra.mxu0 0.0
  %6851 = vmatpush.msra.mxu0 0.0
  %6852 = vmatpush.msra.mxu0 %v6832
  %6853 = vmatmul.f32.gmra.mxu0 %v6835
  %v6854 = vpop.f32.mrf.mxu0
  %v6855 = vadd.f32 0.0, %v6854
  %6856 = vdwg.mxu0
  %6857 = vrot.lane.b32.xlu0 %v185, 104
  %v6858 = vpop.permute.xlu0 %6857
  %v6861 = vsel %vm199, %v6674, 0
  %6863 = vmatpush.msra.mxu0 0.0
  %6864 = vmatpush.msra.mxu0 0.0
  %6865 = vmatpush.msra.mxu0 0.0
  %6866 = vmatpush.msra.mxu0 0.0
  %6867 = vmatpush.msra.mxu0 0.0
  %6868 = vmatpush.msra.mxu0 0.0
  %6869 = vmatpush.msra.mxu0 0.0
  %6870 = vmatpush.msra.mxu0 0.0
  %6871 = vmatpush.msra.mxu0 0.0
  %6872 = vmatpush.msra.mxu0 0.0
  %6873 = vmatpush.msra.mxu0 0.0
  %6874 = vmatpush.msra.mxu0 0.0
  %6875 = vmatpush.msra.mxu0 0.0
  %6876 = vmatpush.msra.mxu0 0.0
  %6877 = vmatpush.msra.mxu0 0.0
  %6878 = vmatpush.msra.mxu0 %v6858
  %6879 = vmatmul.f32.gmra.mxu0 %v6861
  %v6880 = vpop.f32.mrf.mxu0
  %v6881 = vadd.f32 0.0, %v6880
  %6882 = vdwg.mxu0
  %6891 = vrot.lane.b32.xlu0 %v5652, 8
  %v6892 = vpop.permute.xlu0 %6891
  %6893 = vrot.lane.b32.xlu0 %v5679, 8
  %v6894 = vpop.permute.xlu0 %6893
  %6895 = vrot.lane.b32.xlu0 %v5706, 8
  %v6896 = vpop.permute.xlu0 %6895
  %6897 = vrot.lane.b32.xlu0 %v5733, 8
  %v6898 = vpop.permute.xlu0 %6897
  %6899 = vrot.lane.b32.xlu0 %v5760, 8
  %v6900 = vpop.permute.xlu0 %6899
  %6901 = vrot.lane.b32.xlu0 %v5787, 8
  %v6902 = vpop.permute.xlu0 %6901
  %6903 = vrot.lane.b32.xlu0 %v5814, 8
  %v6904 = vpop.permute.xlu0 %6903
  %6905 = vrot.lane.b32.xlu0 %v5841, 8
  %v6906 = vpop.permute.xlu0 %6905
  %6923 = vrot.lane.b32.xlu0 %v6179, 16
  %v6924 = vpop.permute.xlu0 %6923
  %6925 = vrot.lane.b32.xlu0 %v6205, 16
  %v6926 = vpop.permute.xlu0 %6925
  %6927 = vrot.lane.b32.xlu0 %v6231, 16
  %v6928 = vpop.permute.xlu0 %6927
  %6929 = vrot.lane.b32.xlu0 %v6257, 16
  %v6930 = vpop.permute.xlu0 %6929
  %6931 = vrot.lane.b32.xlu0 %v6283, 16
  %v6932 = vpop.permute.xlu0 %6931
  %6933 = vrot.lane.b32.xlu0 %v6309, 16
  %v6934 = vpop.permute.xlu0 %6933
  %6935 = vrot.lane.b32.xlu0 %v6335, 16
  %v6936 = vpop.permute.xlu0 %6935
  %6937 = vrot.lane.b32.xlu0 %v6361, 16
  %v6938 = vpop.permute.xlu0 %6937
  %6955 = vrot.lane.b32.xlu0 %v6699, 24
  %v6956 = vpop.permute.xlu0 %6955
  %6957 = vrot.lane.b32.xlu0 %v6725, 24
  %v6958 = vpop.permute.xlu0 %6957
  %6959 = vrot.lane.b32.xlu0 %v6751, 24
  %v6960 = vpop.permute.xlu0 %6959
  %6961 = vrot.lane.b32.xlu0 %v6777, 24
  %v6962 = vpop.permute.xlu0 %6961
  %6963 = vrot.lane.b32.xlu0 %v6803, 24
  %v6964 = vpop.permute.xlu0 %6963
  %6965 = vrot.lane.b32.xlu0 %v6829, 24
  %v6966 = vpop.permute.xlu0 %6965
  %6967 = vrot.lane.b32.xlu0 %v6855, 24
  %v6968 = vpop.permute.xlu0 %6967
  %6969 = vrot.lane.b32.xlu0 %v6881, 24
  %v6970 = vpop.permute.xlu0 %6969
  %v6979 = vsel %vm199, %v5152, %v6892
  %v6980 = vsel %vm199, %v5175, %v6894
  %v6981 = vsel %vm199, %v5198, %v6896
  %v6982 = vsel %vm199, %v5221, %v6898
  %v6983 = vsel %vm199, %v5244, %v6900
  %v6984 = vsel %vm199, %v5267, %v6902
  %v6985 = vsel %vm199, %v5290, %v6904
  %v6986 = vsel %vm199, %v5313, %v6906
  %v6987 = vsel %vm2373, %v6979, %v6924
  %v6988 = vsel %vm2373, %v6980, %v6926
  %v6989 = vsel %vm2373, %v6981, %v6928
  %v6990 = vsel %vm2373, %v6982, %v6930
  %v6991 = vsel %vm2373, %v6983, %v6932
  %v6992 = vsel %vm2373, %v6984, %v6934
  %v6993 = vsel %vm2373, %v6985, %v6936
  %v6994 = vsel %vm2373, %v6986, %v6938
  %v6995 = vsel %vm2382, %v6987, %v6956
  %v6996 = vsel %vm2382, %v6988, %v6958
  %v6997 = vsel %vm2382, %v6989, %v6960
  %v6998 = vsel %vm2382, %v6990, %v6962
  %v6999 = vsel %vm2382, %v6991, %v6964
  %v7000 = vsel %vm2382, %v6992, %v6966
  %v7001 = vsel %vm2382, %v6993, %v6968
  %v7002 = vsel %vm2382, %v6994, %v6970
  %v7003 = vpack.c.bf16 %v6996, %v6995
  %v7004 = vpack.c.bf16 %v6998, %v6997
  %v7005 = vpack.c.bf16 %v7000, %v6999
  %v7006 = vpack.c.bf16 %v7002, %v7001
  %s7007 = scalar_lea.vmem %s5, 32
  %v7008 = vld [vmem:[%s7007] sm:$0xf]
  %v7009 = vld [vmem:[%s7007 + $0x4] sm:$0xf]
  %v7010 = vld [vmem:[%s7007 + $0x8] sm:$0xf]
  %v7011 = vld [vmem:[%s7007 + $0xc] sm:$0xf]
  %s7012 = scalar_lea.vmem %s6, 2
  %v7013 = vld [vmem:[%s7012] sm:$0x1]
  %v7015 = vperm.slane %v7013, 0
  %v7021 = vunpack.c.l.b16 %v7008
  %v7022 = vunpack.c.l.b16 %v7009
  %v7023 = vunpack.c.l.b16 %v7010
  %v7024 = vunpack.c.l.b16 %v7011
  %v7025 = vpack.c.b16 %v7022, %v7021
  %v7026 = vpack.c.b16 %v7024, %v7023
  %v7030 = vsel %vm87, %v7003, 0
  %v7033 = vsel %vm87, %v7004, 0
  %v7036 = vsel %vm87, %v7005, 0
  %v7039 = vsel %vm87, %v7006, 0
  %7041 = vmatpush.bf16.msra.mxu0 0
  %7042 = vmatpush.bf16.msra.mxu0 0
  %7043 = vmatpush.bf16.msra.mxu0 0
  %7044 = vmatpush.bf16.msra.mxu0 0
  %7045 = vmatpush.bf16.msra.mxu0 0
  %7046 = vmatpush.bf16.msra.mxu0 0
  %7047 = vmatpush.bf16.msra.mxu0 %v7026
  %7048 = vmatpush.bf16.msra.mxu0 %v7025
  %7049 = vmatmul.bf16.gmra.mxu0 %v7030
  %v7050 = vpop.f32.mrf.mxu0
  %v7051 = vadd.f32 %v7015, %v7050
  %v7052 = vpop.f32.mrf.mxu0
  %v7053 = vadd.f32 %v7015, %v7052
  %7054 = vmatmul.bf16.gmra.mxu0 %v7033
  %v7055 = vpop.f32.mrf.mxu0
  %v7056 = vadd.f32 %v7015, %v7055
  %v7057 = vpop.f32.mrf.mxu0
  %v7058 = vadd.f32 %v7015, %v7057
  %7059 = vmatmul.bf16.gmra.mxu0 %v7036
  %v7060 = vpop.f32.mrf.mxu0
  %v7061 = vadd.f32 %v7015, %v7060
  %v7062 = vpop.f32.mrf.mxu0
  %v7063 = vadd.f32 %v7015, %v7062
  %7064 = vmatmul.bf16.gmra.mxu0 %v7039
  %v7065 = vpop.f32.mrf.mxu0
  %v7066 = vadd.f32 %v7015, %v7065
  %v7067 = vpop.f32.mrf.mxu0
  %v7068 = vadd.f32 %v7015, %v7067
  %7069 = vdwg.mxu0
  %7070 = vset.pattern.permute.xlu0 2
  %7071 = vperm.xlu0 %7070, %v187
  %v7072 = vpop.permute.xlu0 %7071
  %7074 = vset.pattern.permute.xlu0 2
  %7075 = vperm.xlu0 %7074, %v188
  %v7076 = vpop.permute.xlu0 %7075
  %7078 = vset.pattern.permute.xlu0 2
  %7079 = vperm.xlu0 %7078, %v189
  %v7080 = vpop.permute.xlu0 %7079
  %7082 = vset.pattern.permute.xlu0 2
  %7083 = vperm.xlu0 %7082, %v190
  %v7084 = vpop.permute.xlu0 %7083
  %7086 = vset.pattern.permute.xlu0 2
  %7087 = vperm.xlu0 %7086, %v191
  %v7088 = vpop.permute.xlu0 %7087
  %7090 = vset.pattern.permute.xlu0 2
  %7091 = vperm.xlu0 %7090, %v192
  %v7092 = vpop.permute.xlu0 %7091
  %7094 = vset.pattern.permute.xlu0 2
  %7095 = vperm.xlu0 %7094, %v193
  %v7096 = vpop.permute.xlu0 %7095
  %7098 = vset.pattern.permute.xlu0 2
  %7099 = vperm.xlu0 %7098, %v194
  %v7100 = vpop.permute.xlu0 %7099
  %v7102 = vmul.f32 %v7072, %v7051
  %v7103 = vmul.f32 %v7076, %v7053
  %v7104 = vmul.f32 %v7080, %v7056
  %v7105 = vmul.f32 %v7084, %v7058
  %v7106 = vmul.f32 %v7088, %v7061
  %v7107 = vmul.f32 %v7092, %v7063
  %v7108 = vmul.f32 %v7096, %v7066
  %v7109 = vmul.f32 %v7100, %v7068
  %v7110 = vadd.f32 %v4811, %v7102
  %v7111 = vadd.f32 %v4812, %v7103
  %v7112 = vadd.f32 %v4813, %v7104
  %v7113 = vadd.f32 %v4814, %v7105
  %v7114 = vadd.f32 %v4815, %v7106
  %v7115 = vadd.f32 %v4816, %v7107
  %v7116 = vadd.f32 %v4817, %v7108
  %v7117 = vadd.f32 %v4818, %v7109
  %7118 = vrot.lane.b32.xlu0 %v168, 96
  %v7119 = vpop.permute.xlu0 %7118
  %7120 = vrot.lane.b32.xlu0 %v168, 64
  %v7121 = vpop.permute.xlu0 %7120
  %v7122 = vsel %vm199, %v7119, 0
  %v7124 = vsel %vm199, %v7121, 0
  %7126 = vmatpush.xpose.msra.mxu0 0.0
  %7127 = vmatpush.xpose.msra.mxu0 0.0
  %7128 = vmatpush.xpose.msra.mxu0 0.0
  %7129 = vmatpush.xpose.msra.mxu0 0.0
  %7130 = vmatpush.xpose.msra.mxu0 0.0
  %7131 = vmatpush.xpose.msra.mxu0 0.0
  %7132 = vmatpush.xpose.msra.mxu0 0.0
  %7133 = vmatpush.xpose.msra.mxu0 0.0
  %7134 = vmatpush.xpose.msra.mxu0 0.0
  %7135 = vmatpush.xpose.msra.mxu0 0.0
  %7136 = vmatpush.xpose.msra.mxu0 0.0
  %7137 = vmatpush.xpose.msra.mxu0 0.0
  %7138 = vmatpush.xpose.msra.mxu0 0.0
  %7139 = vmatpush.xpose.msra.mxu0 0.0
  %7140 = vmatpush.xpose.msra.mxu0 0.0
  %7141 = vmatpush.xpose.msra.mxu0 %v7124
  %7142 = vmatmul.f32.gmra.mxu0 %v7122
  %v7143 = vpop.f32.mrf.mxu0
  %v7144 = vadd.f32 %v195, %v7143
  %7145 = vdwg.mxu0
  %7146 = vrot.lane.b32.xlu0 %v170, 96
  %v7147 = vpop.permute.xlu0 %7146
  %7148 = vrot.lane.b32.xlu0 %v170, 64
  %v7149 = vpop.permute.xlu0 %7148
  %v7150 = vsel %vm199, %v7147, 0
  %v7152 = vsel %vm199, %v7149, 0
  %7154 = vmatpush.xpose.msra.mxu0 0.0
  %7155 = vmatpush.xpose.msra.mxu0 0.0
  %7156 = vmatpush.xpose.msra.mxu0 0.0
  %7157 = vmatpush.xpose.msra.mxu0 0.0
  %7158 = vmatpush.xpose.msra.mxu0 0.0
  %7159 = vmatpush.xpose.msra.mxu0 0.0
  %7160 = vmatpush.xpose.msra.mxu0 0.0
  %7161 = vmatpush.xpose.msra.mxu0 0.0
  %7162 = vmatpush.xpose.msra.mxu0 0.0
  %7163 = vmatpush.xpose.msra.mxu0 0.0
  %7164 = vmatpush.xpose.msra.mxu0 0.0
  %7165 = vmatpush.xpose.msra.mxu0 0.0
  %7166 = vmatpush.xpose.msra.mxu0 0.0
  %7167 = vmatpush.xpose.msra.mxu0 0.0
  %7168 = vmatpush.xpose.msra.mxu0 0.0
  %7169 = vmatpush.xpose.msra.mxu0 %v7152
  %7170 = vmatmul.f32.gmra.mxu0 %v7150
  %v7171 = vpop.f32.mrf.mxu0
  %v7172 = vadd.f32 %v195, %v7171
  %7173 = vdwg.mxu0
  %7174 = vrot.lane.b32.xlu0 %v173, 96
  %v7175 = vpop.permute.xlu0 %7174
  %7176 = vrot.lane.b32.xlu0 %v173, 64
  %v7177 = vpop.permute.xlu0 %7176
  %v7178 = vsel %vm199, %v7175, 0
  %v7180 = vsel %vm199, %v7177, 0
  %7182 = vmatpush.xpose.msra.mxu0 0.0
  %7183 = vmatpush.xpose.msra.mxu0 0.0
  %7184 = vmatpush.xpose.msra.mxu0 0.0
  %7185 = vmatpush.xpose.msra.mxu0 0.0
  %7186 = vmatpush.xpose.msra.mxu0 0.0
  %7187 = vmatpush.xpose.msra.mxu0 0.0
  %7188 = vmatpush.xpose.msra.mxu0 0.0
  %7189 = vmatpush.xpose.msra.mxu0 0.0
  %7190 = vmatpush.xpose.msra.mxu0 0.0
  %7191 = vmatpush.xpose.msra.mxu0 0.0
  %7192 = vmatpush.xpose.msra.mxu0 0.0
  %7193 = vmatpush.xpose.msra.mxu0 0.0
  %7194 = vmatpush.xpose.msra.mxu0 0.0
  %7195 = vmatpush.xpose.msra.mxu0 0.0
  %7196 = vmatpush.xpose.msra.mxu0 0.0
  %7197 = vmatpush.xpose.msra.mxu0 %v7180
  %7198 = vmatmul.f32.gmra.mxu0 %v7178
  %v7199 = vpop.f32.mrf.mxu0
  %v7200 = vadd.f32 %v195, %v7199
  %7201 = vdwg.mxu0
  %7202 = vrot.lane.b32.xlu0 %v175, 96
  %v7203 = vpop.permute.xlu0 %7202
  %7204 = vrot.lane.b32.xlu0 %v175, 64
  %v7205 = vpop.permute.xlu0 %7204
  %v7206 = vsel %vm199, %v7203, 0
  %v7208 = vsel %vm199, %v7205, 0
  %7210 = vmatpush.xpose.msra.mxu0 0.0
  %7211 = vmatpush.xpose.msra.mxu0 0.0
  %7212 = vmatpush.xpose.msra.mxu0 0.0
  %7213 = vmatpush.xpose.msra.mxu0 0.0
  %7214 = vmatpush.xpose.msra.mxu0 0.0
  %7215 = vmatpush.xpose.msra.mxu0 0.0
  %7216 = vmatpush.xpose.msra.mxu0 0.0
  %7217 = vmatpush.xpose.msra.mxu0 0.0
  %7218 = vmatpush.xpose.msra.mxu0 0.0
  %7219 = vmatpush.xpose.msra.mxu0 0.0
  %7220 = vmatpush.xpose.msra.mxu0 0.0
  %7221 = vmatpush.xpose.msra.mxu0 0.0
  %7222 = vmatpush.xpose.msra.mxu0 0.0
  %7223 = vmatpush.xpose.msra.mxu0 0.0
  %7224 = vmatpush.xpose.msra.mxu0 0.0
  %7225 = vmatpush.xpose.msra.mxu0 %v7208
  %7226 = vmatmul.f32.gmra.mxu0 %v7206
  %v7227 = vpop.f32.mrf.mxu0
  %v7228 = vadd.f32 %v195, %v7227
  %7229 = vdwg.mxu0
  %7230 = vrot.lane.b32.xlu0 %v178, 96
  %v7231 = vpop.permute.xlu0 %7230
  %7232 = vrot.lane.b32.xlu0 %v178, 64
  %v7233 = vpop.permute.xlu0 %7232
  %v7234 = vsel %vm199, %v7231, 0
  %v7236 = vsel %vm199, %v7233, 0
  %7238 = vmatpush.xpose.msra.mxu0 0.0
  %7239 = vmatpush.xpose.msra.mxu0 0.0
  %7240 = vmatpush.xpose.msra.mxu0 0.0
  %7241 = vmatpush.xpose.msra.mxu0 0.0
  %7242 = vmatpush.xpose.msra.mxu0 0.0
  %7243 = vmatpush.xpose.msra.mxu0 0.0
  %7244 = vmatpush.xpose.msra.mxu0 0.0
  %7245 = vmatpush.xpose.msra.mxu0 0.0
  %7246 = vmatpush.xpose.msra.mxu0 0.0
  %7247 = vmatpush.xpose.msra.mxu0 0.0
  %7248 = vmatpush.xpose.msra.mxu0 0.0
  %7249 = vmatpush.xpose.msra.mxu0 0.0
  %7250 = vmatpush.xpose.msra.mxu0 0.0
  %7251 = vmatpush.xpose.msra.mxu0 0.0
  %7252 = vmatpush.xpose.msra.mxu0 0.0
  %7253 = vmatpush.xpose.msra.mxu0 %v7236
  %7254 = vmatmul.f32.gmra.mxu0 %v7234
  %v7255 = vpop.f32.mrf.mxu0
  %v7256 = vadd.f32 %v195, %v7255
  %7257 = vdwg.mxu0
  %7258 = vrot.lane.b32.xlu0 %v180, 96
  %v7259 = vpop.permute.xlu0 %7258
  %7260 = vrot.lane.b32.xlu0 %v180, 64
  %v7261 = vpop.permute.xlu0 %7260
  %v7262 = vsel %vm199, %v7259, 0
  %v7264 = vsel %vm199, %v7261, 0
  %7266 = vmatpush.xpose.msra.mxu0 0.0
  %7267 = vmatpush.xpose.msra.mxu0 0.0
  %7268 = vmatpush.xpose.msra.mxu0 0.0
  %7269 = vmatpush.xpose.msra.mxu0 0.0
  %7270 = vmatpush.xpose.msra.mxu0 0.0
  %7271 = vmatpush.xpose.msra.mxu0 0.0
  %7272 = vmatpush.xpose.msra.mxu0 0.0
  %7273 = vmatpush.xpose.msra.mxu0 0.0
  %7274 = vmatpush.xpose.msra.mxu0 0.0
  %7275 = vmatpush.xpose.msra.mxu0 0.0
  %7276 = vmatpush.xpose.msra.mxu0 0.0
  %7277 = vmatpush.xpose.msra.mxu0 0.0
  %7278 = vmatpush.xpose.msra.mxu0 0.0
  %7279 = vmatpush.xpose.msra.mxu0 0.0
  %7280 = vmatpush.xpose.msra.mxu0 0.0
  %7281 = vmatpush.xpose.msra.mxu0 %v7264
  %7282 = vmatmul.f32.gmra.mxu0 %v7262
  %v7283 = vpop.f32.mrf.mxu0
  %v7284 = vadd.f32 %v195, %v7283
  %7285 = vdwg.mxu0
  %7286 = vrot.lane.b32.xlu0 %v183, 96
  %v7287 = vpop.permute.xlu0 %7286
  %7288 = vrot.lane.b32.xlu0 %v183, 64
  %v7289 = vpop.permute.xlu0 %7288
  %v7290 = vsel %vm199, %v7287, 0
  %v7292 = vsel %vm199, %v7289, 0
  %7294 = vmatpush.xpose.msra.mxu0 0.0
  %7295 = vmatpush.xpose.msra.mxu0 0.0
  %7296 = vmatpush.xpose.msra.mxu0 0.0
  %7297 = vmatpush.xpose.msra.mxu0 0.0
  %7298 = vmatpush.xpose.msra.mxu0 0.0
  %7299 = vmatpush.xpose.msra.mxu0 0.0
  %7300 = vmatpush.xpose.msra.mxu0 0.0
  %7301 = vmatpush.xpose.msra.mxu0 0.0
  %7302 = vmatpush.xpose.msra.mxu0 0.0
  %7303 = vmatpush.xpose.msra.mxu0 0.0
  %7304 = vmatpush.xpose.msra.mxu0 0.0
  %7305 = vmatpush.xpose.msra.mxu0 0.0
  %7306 = vmatpush.xpose.msra.mxu0 0.0
  %7307 = vmatpush.xpose.msra.mxu0 0.0
  %7308 = vmatpush.xpose.msra.mxu0 0.0
  %7309 = vmatpush.xpose.msra.mxu0 %v7292
  %7310 = vmatmul.f32.gmra.mxu0 %v7290
  %v7311 = vpop.f32.mrf.mxu0
  %v7312 = vadd.f32 %v195, %v7311
  %7313 = vdwg.mxu0
  %7314 = vrot.lane.b32.xlu0 %v185, 96
  %v7315 = vpop.permute.xlu0 %7314
  %7316 = vrot.lane.b32.xlu0 %v185, 64
  %v7317 = vpop.permute.xlu0 %7316
  %v7318 = vsel %vm199, %v7315, 0
  %v7320 = vsel %vm199, %v7317, 0
  %7322 = vmatpush.xpose.msra.mxu0 0.0
  %7323 = vmatpush.xpose.msra.mxu0 0.0
  %7324 = vmatpush.xpose.msra.mxu0 0.0
  %7325 = vmatpush.xpose.msra.mxu0 0.0
  %7326 = vmatpush.xpose.msra.mxu0 0.0
  %7327 = vmatpush.xpose.msra.mxu0 0.0
  %7328 = vmatpush.xpose.msra.mxu0 0.0
  %7329 = vmatpush.xpose.msra.mxu0 0.0
  %7330 = vmatpush.xpose.msra.mxu0 0.0
  %7331 = vmatpush.xpose.msra.mxu0 0.0
  %7332 = vmatpush.xpose.msra.mxu0 0.0
  %7333 = vmatpush.xpose.msra.mxu0 0.0
  %7334 = vmatpush.xpose.msra.mxu0 0.0
  %7335 = vmatpush.xpose.msra.mxu0 0.0
  %7336 = vmatpush.xpose.msra.mxu0 0.0
  %7337 = vmatpush.xpose.msra.mxu0 %v7320
  %7338 = vmatmul.f32.gmra.mxu0 %v7318
  %v7339 = vpop.f32.mrf.mxu0
  %v7340 = vadd.f32 %v195, %v7339
  %7341 = vdwg.mxu0
  %v7342 = vsel %vm199, %v7144, -inf
  %7343 = vmax.xlane.f32.xlu0 %v7342
  %v7344 = vpop.xlane.xlu0 %7343
  %v7345 = vsel %vm199, %v7172, -inf
  %7346 = vmax.xlane.f32.xlu0 %v7345
  %v7347 = vpop.xlane.xlu0 %7346
  %v7348 = vsel %vm199, %v7200, -inf
  %7349 = vmax.xlane.f32.xlu0 %v7348
  %v7350 = vpop.xlane.xlu0 %7349
  %v7351 = vsel %vm199, %v7228, -inf
  %7352 = vmax.xlane.f32.xlu0 %v7351
  %v7353 = vpop.xlane.xlu0 %7352
  %v7354 = vsel %vm199, %v7256, -inf
  %7355 = vmax.xlane.f32.xlu0 %v7354
  %v7356 = vpop.xlane.xlu0 %7355
  %v7357 = vsel %vm199, %v7284, -inf
  %7358 = vmax.xlane.f32.xlu0 %v7357
  %v7359 = vpop.xlane.xlu0 %7358
  %v7360 = vsel %vm199, %v7312, -inf
  %7361 = vmax.xlane.f32.xlu0 %v7360
  %v7362 = vpop.xlane.xlu0 %7361
  %v7363 = vsel %vm199, %v7340, -inf
  %7364 = vmax.xlane.f32.xlu0 %v7363
  %v7365 = vpop.xlane.xlu0 %7364
  %v7366 = vsub.f32 %v7144, %v7344
  %v7367 = vsub.f32 %v7172, %v7347
  %v7368 = vsub.f32 %v7200, %v7350
  %v7369 = vsub.f32 %v7228, %v7353
  %v7370 = vsub.f32 %v7256, %v7356
  %v7371 = vsub.f32 %v7284, %v7359
  %v7372 = vsub.f32 %v7312, %v7362
  %v7373 = vsub.f32 %v7340, %v7365
  %v7374 = vmul.f32 %v7366, 1.442695
  %v7375 = vpow.pop %v7374
  %v7376 = vmul.f32 %v7367, 1.442695
  %v7377 = vpow.pop %v7376
  %v7378 = vmul.f32 %v7368, 1.442695
  %v7379 = vpow.pop %v7378
  %v7380 = vmul.f32 %v7369, 1.442695
  %v7381 = vpow.pop %v7380
  %v7382 = vmul.f32 %v7370, 1.442695
  %v7383 = vpow.pop %v7382
  %v7384 = vmul.f32 %v7371, 1.442695
  %v7385 = vpow.pop %v7384
  %v7386 = vmul.f32 %v7372, 1.442695
  %v7387 = vpow.pop %v7386
  %v7388 = vmul.f32 %v7373, 1.442695
  %v7389 = vpow.pop %v7388
  %v7390 = vsel %vm199, %v7375, 0.0
  %7391 = vadd.xlane.f32.xlu0 %v7390
  %v7392 = vpop.xlane.xlu0 %7391
  %v7393 = vsel %vm199, %v7377, 0.0
  %7394 = vadd.xlane.f32.xlu0 %v7393
  %v7395 = vpop.xlane.xlu0 %7394
  %v7396 = vsel %vm199, %v7379, 0.0
  %7397 = vadd.xlane.f32.xlu0 %v7396
  %v7398 = vpop.xlane.xlu0 %7397
  %v7399 = vsel %vm199, %v7381, 0.0
  %7400 = vadd.xlane.f32.xlu0 %v7399
  %v7401 = vpop.xlane.xlu0 %7400
  %v7402 = vsel %vm199, %v7383, 0.0
  %7403 = vadd.xlane.f32.xlu0 %v7402
  %v7404 = vpop.xlane.xlu0 %7403
  %v7405 = vsel %vm199, %v7385, 0.0
  %7406 = vadd.xlane.f32.xlu0 %v7405
  %v7407 = vpop.xlane.xlu0 %7406
  %v7408 = vsel %vm199, %v7387, 0.0
  %7409 = vadd.xlane.f32.xlu0 %v7408
  %v7410 = vpop.xlane.xlu0 %7409
  %v7411 = vsel %vm199, %v7389, 0.0
  %7412 = vadd.xlane.f32.xlu0 %v7411
  %v7413 = vpop.xlane.xlu0 %7412
  %v7414 = vrcp.pop %v7392
  %v7415 = vrcp.pop %v7395
  %v7416 = vrcp.pop %v7398
  %v7417 = vrcp.pop %v7401
  %v7418 = vrcp.pop %v7404
  %v7419 = vrcp.pop %v7407
  %v7420 = vrcp.pop %v7410
  %v7421 = vrcp.pop %v7413
  %v7422 = vmul.f32 %v7375, %v7414
  %v7423 = vmul.f32 %v7377, %v7415
  %v7424 = vmul.f32 %v7379, %v7416
  %v7425 = vmul.f32 %v7381, %v7417
  %v7426 = vmul.f32 %v7383, %v7418
  %v7427 = vmul.f32 %v7385, %v7419
  %v7428 = vmul.f32 %v7387, %v7420
  %v7429 = vmul.f32 %v7389, %v7421
  %7430 = vrot.lane.b32.xlu0 %v168, 32
  %v7431 = vpop.permute.xlu0 %7430
  %v7434 = vsel %vm199, %v7422, 0
  %7436 = vmatpush.msra.mxu0 0.0
  %7437 = vmatpush.msra.mxu0 0.0
  %7438 = vmatpush.msra.mxu0 0.0
  %7439 = vmatpush.msra.mxu0 0.0
  %7440 = vmatpush.msra.mxu0 0.0
  %7441 = vmatpush.msra.mxu0 0.0
  %7442 = vmatpush.msra.mxu0 0.0
  %7443 = vmatpush.msra.mxu0 0.0
  %7444 = vmatpush.msra.mxu0 0.0
  %7445 = vmatpush.msra.mxu0 0.0
  %7446 = vmatpush.msra.mxu0 0.0
  %7447 = vmatpush.msra.mxu0 0.0
  %7448 = vmatpush.msra.mxu0 0.0
  %7449 = vmatpush.msra.mxu0 0.0
  %7450 = vmatpush.msra.mxu0 0.0
  %7451 = vmatpush.msra.mxu0 %v7431
  %7452 = vmatmul.f32.gmra.mxu0 %v7434
  %v7453 = vpop.f32.mrf.mxu0
  %v7454 = vadd.f32 0.0, %v7453
  %7455 = vdwg.mxu0
  %7456 = vrot.lane.b32.xlu0 %v170, 32
  %v7457 = vpop.permute.xlu0 %7456
  %v7460 = vsel %vm199, %v7423, 0
  %7462 = vmatpush.msra.mxu0 0.0
  %7463 = vmatpush.msra.mxu0 0.0
  %7464 = vmatpush.msra.mxu0 0.0
  %7465 = vmatpush.msra.mxu0 0.0
  %7466 = vmatpush.msra.mxu0 0.0
  %7467 = vmatpush.msra.mxu0 0.0
  %7468 = vmatpush.msra.mxu0 0.0
  %7469 = vmatpush.msra.mxu0 0.0
  %7470 = vmatpush.msra.mxu0 0.0
  %7471 = vmatpush.msra.mxu0 0.0
  %7472 = vmatpush.msra.mxu0 0.0
  %7473 = vmatpush.msra.mxu0 0.0
  %7474 = vmatpush.msra.mxu0 0.0
  %7475 = vmatpush.msra.mxu0 0.0
  %7476 = vmatpush.msra.mxu0 0.0
  %7477 = vmatpush.msra.mxu0 %v7457
  %7478 = vmatmul.f32.gmra.mxu0 %v7460
  %v7479 = vpop.f32.mrf.mxu0
  %v7480 = vadd.f32 0.0, %v7479
  %7481 = vdwg.mxu0
  %7482 = vrot.lane.b32.xlu0 %v173, 32
  %v7483 = vpop.permute.xlu0 %7482
  %v7486 = vsel %vm199, %v7424, 0
  %7488 = vmatpush.msra.mxu0 0.0
  %7489 = vmatpush.msra.mxu0 0.0
  %7490 = vmatpush.msra.mxu0 0.0
  %7491 = vmatpush.msra.mxu0 0.0
  %7492 = vmatpush.msra.mxu0 0.0
  %7493 = vmatpush.msra.mxu0 0.0
  %7494 = vmatpush.msra.mxu0 0.0
  %7495 = vmatpush.msra.mxu0 0.0
  %7496 = vmatpush.msra.mxu0 0.0
  %7497 = vmatpush.msra.mxu0 0.0
  %7498 = vmatpush.msra.mxu0 0.0
  %7499 = vmatpush.msra.mxu0 0.0
  %7500 = vmatpush.msra.mxu0 0.0
  %7501 = vmatpush.msra.mxu0 0.0
  %7502 = vmatpush.msra.mxu0 0.0
  %7503 = vmatpush.msra.mxu0 %v7483
  %7504 = vmatmul.f32.gmra.mxu0 %v7486
  %v7505 = vpop.f32.mrf.mxu0
  %v7506 = vadd.f32 0.0, %v7505
  %7507 = vdwg.mxu0
  %7508 = vrot.lane.b32.xlu0 %v175, 32
  %v7509 = vpop.permute.xlu0 %7508
  %v7512 = vsel %vm199, %v7425, 0
  %7514 = vmatpush.msra.mxu0 0.0
  %7515 = vmatpush.msra.mxu0 0.0
  %7516 = vmatpush.msra.mxu0 0.0
  %7517 = vmatpush.msra.mxu0 0.0
  %7518 = vmatpush.msra.mxu0 0.0
  %7519 = vmatpush.msra.mxu0 0.0
  %7520 = vmatpush.msra.mxu0 0.0
  %7521 = vmatpush.msra.mxu0 0.0
  %7522 = vmatpush.msra.mxu0 0.0
  %7523 = vmatpush.msra.mxu0 0.0
  %7524 = vmatpush.msra.mxu0 0.0
  %7525 = vmatpush.msra.mxu0 0.0
  %7526 = vmatpush.msra.mxu0 0.0
  %7527 = vmatpush.msra.mxu0 0.0
  %7528 = vmatpush.msra.mxu0 0.0
  %7529 = vmatpush.msra.mxu0 %v7509
  %7530 = vmatmul.f32.gmra.mxu0 %v7512
  %v7531 = vpop.f32.mrf.mxu0
  %v7532 = vadd.f32 0.0, %v7531
  %7533 = vdwg.mxu0
  %7534 = vrot.lane.b32.xlu0 %v178, 32
  %v7535 = vpop.permute.xlu0 %7534
  %v7538 = vsel %vm199, %v7426, 0
  %7540 = vmatpush.msra.mxu0 0.0
  %7541 = vmatpush.msra.mxu0 0.0
  %7542 = vmatpush.msra.mxu0 0.0
  %7543 = vmatpush.msra.mxu0 0.0
  %7544 = vmatpush.msra.mxu0 0.0
  %7545 = vmatpush.msra.mxu0 0.0
  %7546 = vmatpush.msra.mxu0 0.0
  %7547 = vmatpush.msra.mxu0 0.0
  %7548 = vmatpush.msra.mxu0 0.0
  %7549 = vmatpush.msra.mxu0 0.0
  %7550 = vmatpush.msra.mxu0 0.0
  %7551 = vmatpush.msra.mxu0 0.0
  %7552 = vmatpush.msra.mxu0 0.0
  %7553 = vmatpush.msra.mxu0 0.0
  %7554 = vmatpush.msra.mxu0 0.0
  %7555 = vmatpush.msra.mxu0 %v7535
  %7556 = vmatmul.f32.gmra.mxu0 %v7538
  %v7557 = vpop.f32.mrf.mxu0
  %v7558 = vadd.f32 0.0, %v7557
  %7559 = vdwg.mxu0
  %7560 = vrot.lane.b32.xlu0 %v180, 32
  %v7561 = vpop.permute.xlu0 %7560
  %v7564 = vsel %vm199, %v7427, 0
  %7566 = vmatpush.msra.mxu0 0.0
  %7567 = vmatpush.msra.mxu0 0.0
  %7568 = vmatpush.msra.mxu0 0.0
  %7569 = vmatpush.msra.mxu0 0.0
  %7570 = vmatpush.msra.mxu0 0.0
  %7571 = vmatpush.msra.mxu0 0.0
  %7572 = vmatpush.msra.mxu0 0.0
  %7573 = vmatpush.msra.mxu0 0.0
  %7574 = vmatpush.msra.mxu0 0.0
  %7575 = vmatpush.msra.mxu0 0.0
  %7576 = vmatpush.msra.mxu0 0.0
  %7577 = vmatpush.msra.mxu0 0.0
  %7578 = vmatpush.msra.mxu0 0.0
  %7579 = vmatpush.msra.mxu0 0.0
  %7580 = vmatpush.msra.mxu0 0.0
  %7581 = vmatpush.msra.mxu0 %v7561
  %7582 = vmatmul.f32.gmra.mxu0 %v7564
  %v7583 = vpop.f32.mrf.mxu0
  %v7584 = vadd.f32 0.0, %v7583
  %7585 = vdwg.mxu0
  %7586 = vrot.lane.b32.xlu0 %v183, 32
  %v7587 = vpop.permute.xlu0 %7586
  %v7590 = vsel %vm199, %v7428, 0
  %7592 = vmatpush.msra.mxu0 0.0
  %7593 = vmatpush.msra.mxu0 0.0
  %7594 = vmatpush.msra.mxu0 0.0
  %7595 = vmatpush.msra.mxu0 0.0
  %7596 = vmatpush.msra.mxu0 0.0
  %7597 = vmatpush.msra.mxu0 0.0
  %7598 = vmatpush.msra.mxu0 0.0
  %7599 = vmatpush.msra.mxu0 0.0
  %7600 = vmatpush.msra.mxu0 0.0
  %7601 = vmatpush.msra.mxu0 0.0
  %7602 = vmatpush.msra.mxu0 0.0
  %7603 = vmatpush.msra.mxu0 0.0
  %7604 = vmatpush.msra.mxu0 0.0
  %7605 = vmatpush.msra.mxu0 0.0
  %7606 = vmatpush.msra.mxu0 0.0
  %7607 = vmatpush.msra.mxu0 %v7587
  %7608 = vmatmul.f32.gmra.mxu0 %v7590
  %v7609 = vpop.f32.mrf.mxu0
  %v7610 = vadd.f32 0.0, %v7609
  %7611 = vdwg.mxu0
  %7612 = vrot.lane.b32.xlu0 %v185, 32
  %v7613 = vpop.permute.xlu0 %7612
  %v7616 = vsel %vm199, %v7429, 0
  %7618 = vmatpush.msra.mxu0 0.0
  %7619 = vmatpush.msra.mxu0 0.0
  %7620 = vmatpush.msra.mxu0 0.0
  %7621 = vmatpush.msra.mxu0 0.0
  %7622 = vmatpush.msra.mxu0 0.0
  %7623 = vmatpush.msra.mxu0 0.0
  %7624 = vmatpush.msra.mxu0 0.0
  %7625 = vmatpush.msra.mxu0 0.0
  %7626 = vmatpush.msra.mxu0 0.0
  %7627 = vmatpush.msra.mxu0 0.0
  %7628 = vmatpush.msra.mxu0 0.0
  %7629 = vmatpush.msra.mxu0 0.0
  %7630 = vmatpush.msra.mxu0 0.0
  %7631 = vmatpush.msra.mxu0 0.0
  %7632 = vmatpush.msra.mxu0 0.0
  %7633 = vmatpush.msra.mxu0 %v7613
  %7634 = vmatmul.f32.gmra.mxu0 %v7616
  %v7635 = vpop.f32.mrf.mxu0
  %v7636 = vadd.f32 0.0, %v7635
  %7637 = vdwg.mxu0
  %7638 = vrot.lane.b32.xlu0 %v168, 88
  %v7639 = vpop.permute.xlu0 %7638
  %7640 = vrot.lane.b32.xlu0 %v168, 56
  %v7641 = vpop.permute.xlu0 %7640
  %v7642 = vsel %vm199, %v7639, 0
  %v7644 = vsel %vm199, %v7641, 0
  %7646 = vmatpush.xpose.msra.mxu0 0.0
  %7647 = vmatpush.xpose.msra.mxu0 0.0
  %7648 = vmatpush.xpose.msra.mxu0 0.0
  %7649 = vmatpush.xpose.msra.mxu0 0.0
  %7650 = vmatpush.xpose.msra.mxu0 0.0
  %7651 = vmatpush.xpose.msra.mxu0 0.0
  %7652 = vmatpush.xpose.msra.mxu0 0.0
  %7653 = vmatpush.xpose.msra.mxu0 0.0
  %7654 = vmatpush.xpose.msra.mxu0 0.0
  %7655 = vmatpush.xpose.msra.mxu0 0.0
  %7656 = vmatpush.xpose.msra.mxu0 0.0
  %7657 = vmatpush.xpose.msra.mxu0 0.0
  %7658 = vmatpush.xpose.msra.mxu0 0.0
  %7659 = vmatpush.xpose.msra.mxu0 0.0
  %7660 = vmatpush.xpose.msra.mxu0 0.0
  %7661 = vmatpush.xpose.msra.mxu0 %v7644
  %7662 = vmatmul.f32.gmra.mxu0 %v7642
  %v7663 = vpop.f32.mrf.mxu0
  %v7664 = vadd.f32 %v195, %v7663
  %7665 = vdwg.mxu0
  %7666 = vrot.lane.b32.xlu0 %v170, 88
  %v7667 = vpop.permute.xlu0 %7666
  %7668 = vrot.lane.b32.xlu0 %v170, 56
  %v7669 = vpop.permute.xlu0 %7668
  %v7670 = vsel %vm199, %v7667, 0
  %v7672 = vsel %vm199, %v7669, 0
  %7674 = vmatpush.xpose.msra.mxu0 0.0
  %7675 = vmatpush.xpose.msra.mxu0 0.0
  %7676 = vmatpush.xpose.msra.mxu0 0.0
  %7677 = vmatpush.xpose.msra.mxu0 0.0
  %7678 = vmatpush.xpose.msra.mxu0 0.0
  %7679 = vmatpush.xpose.msra.mxu0 0.0
  %7680 = vmatpush.xpose.msra.mxu0 0.0
  %7681 = vmatpush.xpose.msra.mxu0 0.0
  %7682 = vmatpush.xpose.msra.mxu0 0.0
  %7683 = vmatpush.xpose.msra.mxu0 0.0
  %7684 = vmatpush.xpose.msra.mxu0 0.0
  %7685 = vmatpush.xpose.msra.mxu0 0.0
  %7686 = vmatpush.xpose.msra.mxu0 0.0
  %7687 = vmatpush.xpose.msra.mxu0 0.0
  %7688 = vmatpush.xpose.msra.mxu0 0.0
  %7689 = vmatpush.xpose.msra.mxu0 %v7672
  %7690 = vmatmul.f32.gmra.mxu0 %v7670
  %v7691 = vpop.f32.mrf.mxu0
  %v7692 = vadd.f32 %v195, %v7691
  %7693 = vdwg.mxu0
  %7694 = vrot.lane.b32.xlu0 %v173, 88
  %v7695 = vpop.permute.xlu0 %7694
  %7696 = vrot.lane.b32.xlu0 %v173, 56
  %v7697 = vpop.permute.xlu0 %7696
  %v7698 = vsel %vm199, %v7695, 0
  %v7700 = vsel %vm199, %v7697, 0
  %7702 = vmatpush.xpose.msra.mxu0 0.0
  %7703 = vmatpush.xpose.msra.mxu0 0.0
  %7704 = vmatpush.xpose.msra.mxu0 0.0
  %7705 = vmatpush.xpose.msra.mxu0 0.0
  %7706 = vmatpush.xpose.msra.mxu0 0.0
  %7707 = vmatpush.xpose.msra.mxu0 0.0
  %7708 = vmatpush.xpose.msra.mxu0 0.0
  %7709 = vmatpush.xpose.msra.mxu0 0.0
  %7710 = vmatpush.xpose.msra.mxu0 0.0
  %7711 = vmatpush.xpose.msra.mxu0 0.0
  %7712 = vmatpush.xpose.msra.mxu0 0.0
  %7713 = vmatpush.xpose.msra.mxu0 0.0
  %7714 = vmatpush.xpose.msra.mxu0 0.0
  %7715 = vmatpush.xpose.msra.mxu0 0.0
  %7716 = vmatpush.xpose.msra.mxu0 0.0
  %7717 = vmatpush.xpose.msra.mxu0 %v7700
  %7718 = vmatmul.f32.gmra.mxu0 %v7698
  %v7719 = vpop.f32.mrf.mxu0
  %v7720 = vadd.f32 %v195, %v7719
  %7721 = vdwg.mxu0
  %7722 = vrot.lane.b32.xlu0 %v175, 88
  %v7723 = vpop.permute.xlu0 %7722
  %7724 = vrot.lane.b32.xlu0 %v175, 56
  %v7725 = vpop.permute.xlu0 %7724
  %v7726 = vsel %vm199, %v7723, 0
  %v7728 = vsel %vm199, %v7725, 0
  %7730 = vmatpush.xpose.msra.mxu0 0.0
  %7731 = vmatpush.xpose.msra.mxu0 0.0
  %7732 = vmatpush.xpose.msra.mxu0 0.0
  %7733 = vmatpush.xpose.msra.mxu0 0.0
  %7734 = vmatpush.xpose.msra.mxu0 0.0
  %7735 = vmatpush.xpose.msra.mxu0 0.0
  %7736 = vmatpush.xpose.msra.mxu0 0.0
  %7737 = vmatpush.xpose.msra.mxu0 0.0
  %7738 = vmatpush.xpose.msra.mxu0 0.0
  %7739 = vmatpush.xpose.msra.mxu0 0.0
  %7740 = vmatpush.xpose.msra.mxu0 0.0
  %7741 = vmatpush.xpose.msra.mxu0 0.0
  %7742 = vmatpush.xpose.msra.mxu0 0.0
  %7743 = vmatpush.xpose.msra.mxu0 0.0
  %7744 = vmatpush.xpose.msra.mxu0 0.0
  %7745 = vmatpush.xpose.msra.mxu0 %v7728
  %7746 = vmatmul.f32.gmra.mxu0 %v7726
  %v7747 = vpop.f32.mrf.mxu0
  %v7748 = vadd.f32 %v195, %v7747
  %7749 = vdwg.mxu0
  %7750 = vrot.lane.b32.xlu0 %v178, 88
  %v7751 = vpop.permute.xlu0 %7750
  %7752 = vrot.lane.b32.xlu0 %v178, 56
  %v7753 = vpop.permute.xlu0 %7752
  %v7754 = vsel %vm199, %v7751, 0
  %v7756 = vsel %vm199, %v7753, 0
  %7758 = vmatpush.xpose.msra.mxu0 0.0
  %7759 = vmatpush.xpose.msra.mxu0 0.0
  %7760 = vmatpush.xpose.msra.mxu0 0.0
  %7761 = vmatpush.xpose.msra.mxu0 0.0
  %7762 = vmatpush.xpose.msra.mxu0 0.0
  %7763 = vmatpush.xpose.msra.mxu0 0.0
  %7764 = vmatpush.xpose.msra.mxu0 0.0
  %7765 = vmatpush.xpose.msra.mxu0 0.0
  %7766 = vmatpush.xpose.msra.mxu0 0.0
  %7767 = vmatpush.xpose.msra.mxu0 0.0
  %7768 = vmatpush.xpose.msra.mxu0 0.0
  %7769 = vmatpush.xpose.msra.mxu0 0.0
  %7770 = vmatpush.xpose.msra.mxu0 0.0
  %7771 = vmatpush.xpose.msra.mxu0 0.0
  %7772 = vmatpush.xpose.msra.mxu0 0.0
  %7773 = vmatpush.xpose.msra.mxu0 %v7756
  %7774 = vmatmul.f32.gmra.mxu0 %v7754
  %v7775 = vpop.f32.mrf.mxu0
  %v7776 = vadd.f32 %v195, %v7775
  %7777 = vdwg.mxu0
  %7778 = vrot.lane.b32.xlu0 %v180, 88
  %v7779 = vpop.permute.xlu0 %7778
  %7780 = vrot.lane.b32.xlu0 %v180, 56
  %v7781 = vpop.permute.xlu0 %7780
  %v7782 = vsel %vm199, %v7779, 0
  %v7784 = vsel %vm199, %v7781, 0
  %7786 = vmatpush.xpose.msra.mxu0 0.0
  %7787 = vmatpush.xpose.msra.mxu0 0.0
  %7788 = vmatpush.xpose.msra.mxu0 0.0
  %7789 = vmatpush.xpose.msra.mxu0 0.0
  %7790 = vmatpush.xpose.msra.mxu0 0.0
  %7791 = vmatpush.xpose.msra.mxu0 0.0
  %7792 = vmatpush.xpose.msra.mxu0 0.0
  %7793 = vmatpush.xpose.msra.mxu0 0.0
  %7794 = vmatpush.xpose.msra.mxu0 0.0
  %7795 = vmatpush.xpose.msra.mxu0 0.0
  %7796 = vmatpush.xpose.msra.mxu0 0.0
  %7797 = vmatpush.xpose.msra.mxu0 0.0
  %7798 = vmatpush.xpose.msra.mxu0 0.0
  %7799 = vmatpush.xpose.msra.mxu0 0.0
  %7800 = vmatpush.xpose.msra.mxu0 0.0
  %7801 = vmatpush.xpose.msra.mxu0 %v7784
  %7802 = vmatmul.f32.gmra.mxu0 %v7782
  %v7803 = vpop.f32.mrf.mxu0
  %v7804 = vadd.f32 %v195, %v7803
  %7805 = vdwg.mxu0
  %7806 = vrot.lane.b32.xlu0 %v183, 88
  %v7807 = vpop.permute.xlu0 %7806
  %7808 = vrot.lane.b32.xlu0 %v183, 56
  %v7809 = vpop.permute.xlu0 %7808
  %v7810 = vsel %vm199, %v7807, 0
  %v7812 = vsel %vm199, %v7809, 0
  %7814 = vmatpush.xpose.msra.mxu0 0.0
  %7815 = vmatpush.xpose.msra.mxu0 0.0
  %7816 = vmatpush.xpose.msra.mxu0 0.0
  %7817 = vmatpush.xpose.msra.mxu0 0.0
  %7818 = vmatpush.xpose.msra.mxu0 0.0
  %7819 = vmatpush.xpose.msra.mxu0 0.0
  %7820 = vmatpush.xpose.msra.mxu0 0.0
  %7821 = vmatpush.xpose.msra.mxu0 0.0
  %7822 = vmatpush.xpose.msra.mxu0 0.0
  %7823 = vmatpush.xpose.msra.mxu0 0.0
  %7824 = vmatpush.xpose.msra.mxu0 0.0
  %7825 = vmatpush.xpose.msra.mxu0 0.0
  %7826 = vmatpush.xpose.msra.mxu0 0.0
  %7827 = vmatpush.xpose.msra.mxu0 0.0
  %7828 = vmatpush.xpose.msra.mxu0 0.0
  %7829 = vmatpush.xpose.msra.mxu0 %v7812
  %7830 = vmatmul.f32.gmra.mxu0 %v7810
  %v7831 = vpop.f32.mrf.mxu0
  %v7832 = vadd.f32 %v195, %v7831
  %7833 = vdwg.mxu0
  %7834 = vrot.lane.b32.xlu0 %v185, 88
  %v7835 = vpop.permute.xlu0 %7834
  %7836 = vrot.lane.b32.xlu0 %v185, 56
  %v7837 = vpop.permute.xlu0 %7836
  %v7838 = vsel %vm199, %v7835, 0
  %v7840 = vsel %vm199, %v7837, 0
  %7842 = vmatpush.xpose.msra.mxu0 0.0
  %7843 = vmatpush.xpose.msra.mxu0 0.0
  %7844 = vmatpush.xpose.msra.mxu0 0.0
  %7845 = vmatpush.xpose.msra.mxu0 0.0
  %7846 = vmatpush.xpose.msra.mxu0 0.0
  %7847 = vmatpush.xpose.msra.mxu0 0.0
  %7848 = vmatpush.xpose.msra.mxu0 0.0
  %7849 = vmatpush.xpose.msra.mxu0 0.0
  %7850 = vmatpush.xpose.msra.mxu0 0.0
  %7851 = vmatpush.xpose.msra.mxu0 0.0
  %7852 = vmatpush.xpose.msra.mxu0 0.0
  %7853 = vmatpush.xpose.msra.mxu0 0.0
  %7854 = vmatpush.xpose.msra.mxu0 0.0
  %7855 = vmatpush.xpose.msra.mxu0 0.0
  %7856 = vmatpush.xpose.msra.mxu0 0.0
  %7857 = vmatpush.xpose.msra.mxu0 %v7840
  %7858 = vmatmul.f32.gmra.mxu0 %v7838
  %v7859 = vpop.f32.mrf.mxu0
  %v7860 = vadd.f32 %v195, %v7859
  %7861 = vdwg.mxu0
  %v7862 = vsel %vm199, %v7664, -inf
  %7863 = vmax.xlane.f32.xlu0 %v7862
  %v7864 = vpop.xlane.xlu0 %7863
  %v7865 = vsel %vm199, %v7692, -inf
  %7866 = vmax.xlane.f32.xlu0 %v7865
  %v7867 = vpop.xlane.xlu0 %7866
  %v7868 = vsel %vm199, %v7720, -inf
  %7869 = vmax.xlane.f32.xlu0 %v7868
  %v7870 = vpop.xlane.xlu0 %7869
  %v7871 = vsel %vm199, %v7748, -inf
  %7872 = vmax.xlane.f32.xlu0 %v7871
  %v7873 = vpop.xlane.xlu0 %7872
  %v7874 = vsel %vm199, %v7776, -inf
  %7875 = vmax.xlane.f32.xlu0 %v7874
  %v7876 = vpop.xlane.xlu0 %7875
  %v7877 = vsel %vm199, %v7804, -inf
  %7878 = vmax.xlane.f32.xlu0 %v7877
  %v7879 = vpop.xlane.xlu0 %7878
  %v7880 = vsel %vm199, %v7832, -inf
  %7881 = vmax.xlane.f32.xlu0 %v7880
  %v7882 = vpop.xlane.xlu0 %7881
  %v7883 = vsel %vm199, %v7860, -inf
  %7884 = vmax.xlane.f32.xlu0 %v7883
  %v7885 = vpop.xlane.xlu0 %7884
  %v7886 = vsub.f32 %v7664, %v7864
  %v7887 = vsub.f32 %v7692, %v7867
  %v7888 = vsub.f32 %v7720, %v7870
  %v7889 = vsub.f32 %v7748, %v7873
  %v7890 = vsub.f32 %v7776, %v7876
  %v7891 = vsub.f32 %v7804, %v7879
  %v7892 = vsub.f32 %v7832, %v7882
  %v7893 = vsub.f32 %v7860, %v7885
  %v7894 = vmul.f32 %v7886, 1.442695
  %v7895 = vpow.pop %v7894
  %v7896 = vmul.f32 %v7887, 1.442695
  %v7897 = vpow.pop %v7896
  %v7898 = vmul.f32 %v7888, 1.442695
  %v7899 = vpow.pop %v7898
  %v7900 = vmul.f32 %v7889, 1.442695
  %v7901 = vpow.pop %v7900
  %v7902 = vmul.f32 %v7890, 1.442695
  %v7903 = vpow.pop %v7902
  %v7904 = vmul.f32 %v7891, 1.442695
  %v7905 = vpow.pop %v7904
  %v7906 = vmul.f32 %v7892, 1.442695
  %v7907 = vpow.pop %v7906
  %v7908 = vmul.f32 %v7893, 1.442695
  %v7909 = vpow.pop %v7908
  %v7910 = vsel %vm199, %v7895, 0.0
  %7911 = vadd.xlane.f32.xlu0 %v7910
  %v7912 = vpop.xlane.xlu0 %7911
  %v7913 = vsel %vm199, %v7897, 0.0
  %7914 = vadd.xlane.f32.xlu0 %v7913
  %v7915 = vpop.xlane.xlu0 %7914
  %v7916 = vsel %vm199, %v7899, 0.0
  %7917 = vadd.xlane.f32.xlu0 %v7916
  %v7918 = vpop.xlane.xlu0 %7917
  %v7919 = vsel %vm199, %v7901, 0.0
  %7920 = vadd.xlane.f32.xlu0 %v7919
  %v7921 = vpop.xlane.xlu0 %7920
  %v7922 = vsel %vm199, %v7903, 0.0
  %7923 = vadd.xlane.f32.xlu0 %v7922
  %v7924 = vpop.xlane.xlu0 %7923
  %v7925 = vsel %vm199, %v7905, 0.0
  %7926 = vadd.xlane.f32.xlu0 %v7925
  %v7927 = vpop.xlane.xlu0 %7926
  %v7928 = vsel %vm199, %v7907, 0.0
  %7929 = vadd.xlane.f32.xlu0 %v7928
  %v7930 = vpop.xlane.xlu0 %7929
  %v7931 = vsel %vm199, %v7909, 0.0
  %7932 = vadd.xlane.f32.xlu0 %v7931
  %v7933 = vpop.xlane.xlu0 %7932
  %v7934 = vrcp.pop %v7912
  %v7935 = vrcp.pop %v7915
  %v7936 = vrcp.pop %v7918
  %v7937 = vrcp.pop %v7921
  %v7938 = vrcp.pop %v7924
  %v7939 = vrcp.pop %v7927
  %v7940 = vrcp.pop %v7930
  %v7941 = vrcp.pop %v7933
  %v7942 = vmul.f32 %v7895, %v7934
  %v7943 = vmul.f32 %v7897, %v7935
  %v7944 = vmul.f32 %v7899, %v7936
  %v7945 = vmul.f32 %v7901, %v7937
  %v7946 = vmul.f32 %v7903, %v7938
  %v7947 = vmul.f32 %v7905, %v7939
  %v7948 = vmul.f32 %v7907, %v7940
  %v7949 = vmul.f32 %v7909, %v7941
  %7950 = vrot.lane.b32.xlu0 %v168, 24
  %v7951 = vpop.permute.xlu0 %7950
  %v7954 = vsel %vm199, %v7942, 0
  %7956 = vmatpush.msra.mxu0 0.0
  %7957 = vmatpush.msra.mxu0 0.0
  %7958 = vmatpush.msra.mxu0 0.0
  %7959 = vmatpush.msra.mxu0 0.0
  %7960 = vmatpush.msra.mxu0 0.0
  %7961 = vmatpush.msra.mxu0 0.0
  %7962 = vmatpush.msra.mxu0 0.0
  %7963 = vmatpush.msra.mxu0 0.0
  %7964 = vmatpush.msra.mxu0 0.0
  %7965 = vmatpush.msra.mxu0 0.0
  %7966 = vmatpush.msra.mxu0 0.0
  %7967 = vmatpush.msra.mxu0 0.0
  %7968 = vmatpush.msra.mxu0 0.0
  %7969 = vmatpush.msra.mxu0 0.0
  %7970 = vmatpush.msra.mxu0 0.0
  %7971 = vmatpush.msra.mxu0 %v7951
  %7972 = vmatmul.f32.gmra.mxu0 %v7954
  %v7973 = vpop.f32.mrf.mxu0
  %v7974 = vadd.f32 0.0, %v7973
  %7975 = vdwg.mxu0
  %7976 = vrot.lane.b32.xlu0 %v170, 24
  %v7977 = vpop.permute.xlu0 %7976
  %v7980 = vsel %vm199, %v7943, 0
  %7982 = vmatpush.msra.mxu0 0.0
  %7983 = vmatpush.msra.mxu0 0.0
  %7984 = vmatpush.msra.mxu0 0.0
  %7985 = vmatpush.msra.mxu0 0.0
  %7986 = vmatpush.msra.mxu0 0.0
  %7987 = vmatpush.msra.mxu0 0.0
  %7988 = vmatpush.msra.mxu0 0.0
  %7989 = vmatpush.msra.mxu0 0.0
  %7990 = vmatpush.msra.mxu0 0.0
  %7991 = vmatpush.msra.mxu0 0.0
  %7992 = vmatpush.msra.mxu0 0.0
  %7993 = vmatpush.msra.mxu0 0.0
  %7994 = vmatpush.msra.mxu0 0.0
  %7995 = vmatpush.msra.mxu0 0.0
  %7996 = vmatpush.msra.mxu0 0.0
  %7997 = vmatpush.msra.mxu0 %v7977
  %7998 = vmatmul.f32.gmra.mxu0 %v7980
  %v7999 = vpop.f32.mrf.mxu0
  %v8000 = vadd.f32 0.0, %v7999
  %8001 = vdwg.mxu0
  %8002 = vrot.lane.b32.xlu0 %v173, 24
  %v8003 = vpop.permute.xlu0 %8002
  %v8006 = vsel %vm199, %v7944, 0
  %8008 = vmatpush.msra.mxu0 0.0
  %8009 = vmatpush.msra.mxu0 0.0
  %8010 = vmatpush.msra.mxu0 0.0
  %8011 = vmatpush.msra.mxu0 0.0
  %8012 = vmatpush.msra.mxu0 0.0
  %8013 = vmatpush.msra.mxu0 0.0
  %8014 = vmatpush.msra.mxu0 0.0
  %8015 = vmatpush.msra.mxu0 0.0
  %8016 = vmatpush.msra.mxu0 0.0
  %8017 = vmatpush.msra.mxu0 0.0
  %8018 = vmatpush.msra.mxu0 0.0
  %8019 = vmatpush.msra.mxu0 0.0
  %8020 = vmatpush.msra.mxu0 0.0
  %8021 = vmatpush.msra.mxu0 0.0
  %8022 = vmatpush.msra.mxu0 0.0
  %8023 = vmatpush.msra.mxu0 %v8003
  %8024 = vmatmul.f32.gmra.mxu0 %v8006
  %v8025 = vpop.f32.mrf.mxu0
  %v8026 = vadd.f32 0.0, %v8025
  %8027 = vdwg.mxu0
  %8028 = vrot.lane.b32.xlu0 %v175, 24
  %v8029 = vpop.permute.xlu0 %8028
  %v8032 = vsel %vm199, %v7945, 0
  %8034 = vmatpush.msra.mxu0 0.0
  %8035 = vmatpush.msra.mxu0 0.0
  %8036 = vmatpush.msra.mxu0 0.0
  %8037 = vmatpush.msra.mxu0 0.0
  %8038 = vmatpush.msra.mxu0 0.0
  %8039 = vmatpush.msra.mxu0 0.0
  %8040 = vmatpush.msra.mxu0 0.0
  %8041 = vmatpush.msra.mxu0 0.0
  %8042 = vmatpush.msra.mxu0 0.0
  %8043 = vmatpush.msra.mxu0 0.0
  %8044 = vmatpush.msra.mxu0 0.0
  %8045 = vmatpush.msra.mxu0 0.0
  %8046 = vmatpush.msra.mxu0 0.0
  %8047 = vmatpush.msra.mxu0 0.0
  %8048 = vmatpush.msra.mxu0 0.0
  %8049 = vmatpush.msra.mxu0 %v8029
  %8050 = vmatmul.f32.gmra.mxu0 %v8032
  %v8051 = vpop.f32.mrf.mxu0
  %v8052 = vadd.f32 0.0, %v8051
  %8053 = vdwg.mxu0
  %8054 = vrot.lane.b32.xlu0 %v178, 24
  %v8055 = vpop.permute.xlu0 %8054
  %v8058 = vsel %vm199, %v7946, 0
  %8060 = vmatpush.msra.mxu0 0.0
  %8061 = vmatpush.msra.mxu0 0.0
  %8062 = vmatpush.msra.mxu0 0.0
  %8063 = vmatpush.msra.mxu0 0.0
  %8064 = vmatpush.msra.mxu0 0.0
  %8065 = vmatpush.msra.mxu0 0.0
  %8066 = vmatpush.msra.mxu0 0.0
  %8067 = vmatpush.msra.mxu0 0.0
  %8068 = vmatpush.msra.mxu0 0.0
  %8069 = vmatpush.msra.mxu0 0.0
  %8070 = vmatpush.msra.mxu0 0.0
  %8071 = vmatpush.msra.mxu0 0.0
  %8072 = vmatpush.msra.mxu0 0.0
  %8073 = vmatpush.msra.mxu0 0.0
  %8074 = vmatpush.msra.mxu0 0.0
  %8075 = vmatpush.msra.mxu0 %v8055
  %8076 = vmatmul.f32.gmra.mxu0 %v8058
  %v8077 = vpop.f32.mrf.mxu0
  %v8078 = vadd.f32 0.0, %v8077
  %8079 = vdwg.mxu0
  %8080 = vrot.lane.b32.xlu0 %v180, 24
  %v8081 = vpop.permute.xlu0 %8080
  %v8084 = vsel %vm199, %v7947, 0
  %8086 = vmatpush.msra.mxu0 0.0
  %8087 = vmatpush.msra.mxu0 0.0
  %8088 = vmatpush.msra.mxu0 0.0
  %8089 = vmatpush.msra.mxu0 0.0
  %8090 = vmatpush.msra.mxu0 0.0
  %8091 = vmatpush.msra.mxu0 0.0
  %8092 = vmatpush.msra.mxu0 0.0
  %8093 = vmatpush.msra.mxu0 0.0
  %8094 = vmatpush.msra.mxu0 0.0
  %8095 = vmatpush.msra.mxu0 0.0
  %8096 = vmatpush.msra.mxu0 0.0
  %8097 = vmatpush.msra.mxu0 0.0
  %8098 = vmatpush.msra.mxu0 0.0
  %8099 = vmatpush.msra.mxu0 0.0
  %8100 = vmatpush.msra.mxu0 0.0
  %8101 = vmatpush.msra.mxu0 %v8081
  %8102 = vmatmul.f32.gmra.mxu0 %v8084
  %v8103 = vpop.f32.mrf.mxu0
  %v8104 = vadd.f32 0.0, %v8103
  %8105 = vdwg.mxu0
  %8106 = vrot.lane.b32.xlu0 %v183, 24
  %v8107 = vpop.permute.xlu0 %8106
  %v8110 = vsel %vm199, %v7948, 0
  %8112 = vmatpush.msra.mxu0 0.0
  %8113 = vmatpush.msra.mxu0 0.0
  %8114 = vmatpush.msra.mxu0 0.0
  %8115 = vmatpush.msra.mxu0 0.0
  %8116 = vmatpush.msra.mxu0 0.0
  %8117 = vmatpush.msra.mxu0 0.0
  %8118 = vmatpush.msra.mxu0 0.0
  %8119 = vmatpush.msra.mxu0 0.0
  %8120 = vmatpush.msra.mxu0 0.0
  %8121 = vmatpush.msra.mxu0 0.0
  %8122 = vmatpush.msra.mxu0 0.0
  %8123 = vmatpush.msra.mxu0 0.0
  %8124 = vmatpush.msra.mxu0 0.0
  %8125 = vmatpush.msra.mxu0 0.0
  %8126 = vmatpush.msra.mxu0 0.0
  %8127 = vmatpush.msra.mxu0 %v8107
  %8128 = vmatmul.f32.gmra.mxu0 %v8110
  %v8129 = vpop.f32.mrf.mxu0
  %v8130 = vadd.f32 0.0, %v8129
  %8131 = vdwg.mxu0
  %8132 = vrot.lane.b32.xlu0 %v185, 24
  %v8133 = vpop.permute.xlu0 %8132
  %v8136 = vsel %vm199, %v7949, 0
  %8138 = vmatpush.msra.mxu0 0.0
  %8139 = vmatpush.msra.mxu0 0.0
  %8140 = vmatpush.msra.mxu0 0.0
  %8141 = vmatpush.msra.mxu0 0.0
  %8142 = vmatpush.msra.mxu0 0.0
  %8143 = vmatpush.msra.mxu0 0.0
  %8144 = vmatpush.msra.mxu0 0.0
  %8145 = vmatpush.msra.mxu0 0.0
  %8146 = vmatpush.msra.mxu0 0.0
  %8147 = vmatpush.msra.mxu0 0.0
  %8148 = vmatpush.msra.mxu0 0.0
  %8149 = vmatpush.msra.mxu0 0.0
  %8150 = vmatpush.msra.mxu0 0.0
  %8151 = vmatpush.msra.mxu0 0.0
  %8152 = vmatpush.msra.mxu0 0.0
  %8153 = vmatpush.msra.mxu0 %v8133
  %8154 = vmatmul.f32.gmra.mxu0 %v8136
  %v8155 = vpop.f32.mrf.mxu0
  %v8156 = vadd.f32 0.0, %v8155
  %8157 = vdwg.mxu0
  %8158 = vrot.lane.b32.xlu0 %v168, 80
  %v8159 = vpop.permute.xlu0 %8158
  %8160 = vrot.lane.b32.xlu0 %v168, 48
  %v8161 = vpop.permute.xlu0 %8160
  %v8162 = vsel %vm199, %v8159, 0
  %v8164 = vsel %vm199, %v8161, 0
  %8166 = vmatpush.xpose.msra.mxu0 0.0
  %8167 = vmatpush.xpose.msra.mxu0 0.0
  %8168 = vmatpush.xpose.msra.mxu0 0.0
  %8169 = vmatpush.xpose.msra.mxu0 0.0
  %8170 = vmatpush.xpose.msra.mxu0 0.0
  %8171 = vmatpush.xpose.msra.mxu0 0.0
  %8172 = vmatpush.xpose.msra.mxu0 0.0
  %8173 = vmatpush.xpose.msra.mxu0 0.0
  %8174 = vmatpush.xpose.msra.mxu0 0.0
  %8175 = vmatpush.xpose.msra.mxu0 0.0
  %8176 = vmatpush.xpose.msra.mxu0 0.0
  %8177 = vmatpush.xpose.msra.mxu0 0.0
  %8178 = vmatpush.xpose.msra.mxu0 0.0
  %8179 = vmatpush.xpose.msra.mxu0 0.0
  %8180 = vmatpush.xpose.msra.mxu0 0.0
  %8181 = vmatpush.xpose.msra.mxu0 %v8164
  %8182 = vmatmul.f32.gmra.mxu0 %v8162
  %v8183 = vpop.f32.mrf.mxu0
  %v8184 = vadd.f32 %v195, %v8183
  %8185 = vdwg.mxu0
  %8186 = vrot.lane.b32.xlu0 %v170, 80
  %v8187 = vpop.permute.xlu0 %8186
  %8188 = vrot.lane.b32.xlu0 %v170, 48
  %v8189 = vpop.permute.xlu0 %8188
  %v8190 = vsel %vm199, %v8187, 0
  %v8192 = vsel %vm199, %v8189, 0
  %8194 = vmatpush.xpose.msra.mxu0 0.0
  %8195 = vmatpush.xpose.msra.mxu0 0.0
  %8196 = vmatpush.xpose.msra.mxu0 0.0
  %8197 = vmatpush.xpose.msra.mxu0 0.0
  %8198 = vmatpush.xpose.msra.mxu0 0.0
  %8199 = vmatpush.xpose.msra.mxu0 0.0
  %8200 = vmatpush.xpose.msra.mxu0 0.0
  %8201 = vmatpush.xpose.msra.mxu0 0.0
  %8202 = vmatpush.xpose.msra.mxu0 0.0
  %8203 = vmatpush.xpose.msra.mxu0 0.0
  %8204 = vmatpush.xpose.msra.mxu0 0.0
  %8205 = vmatpush.xpose.msra.mxu0 0.0
  %8206 = vmatpush.xpose.msra.mxu0 0.0
  %8207 = vmatpush.xpose.msra.mxu0 0.0
  %8208 = vmatpush.xpose.msra.mxu0 0.0
  %8209 = vmatpush.xpose.msra.mxu0 %v8192
  %8210 = vmatmul.f32.gmra.mxu0 %v8190
  %v8211 = vpop.f32.mrf.mxu0
  %v8212 = vadd.f32 %v195, %v8211
  %8213 = vdwg.mxu0
  %8214 = vrot.lane.b32.xlu0 %v173, 80
  %v8215 = vpop.permute.xlu0 %8214
  %8216 = vrot.lane.b32.xlu0 %v173, 48
  %v8217 = vpop.permute.xlu0 %8216
  %v8218 = vsel %vm199, %v8215, 0
  %v8220 = vsel %vm199, %v8217, 0
  %8222 = vmatpush.xpose.msra.mxu0 0.0
  %8223 = vmatpush.xpose.msra.mxu0 0.0
  %8224 = vmatpush.xpose.msra.mxu0 0.0
  %8225 = vmatpush.xpose.msra.mxu0 0.0
  %8226 = vmatpush.xpose.msra.mxu0 0.0
  %8227 = vmatpush.xpose.msra.mxu0 0.0
  %8228 = vmatpush.xpose.msra.mxu0 0.0
  %8229 = vmatpush.xpose.msra.mxu0 0.0
  %8230 = vmatpush.xpose.msra.mxu0 0.0
  %8231 = vmatpush.xpose.msra.mxu0 0.0
  %8232 = vmatpush.xpose.msra.mxu0 0.0
  %8233 = vmatpush.xpose.msra.mxu0 0.0
  %8234 = vmatpush.xpose.msra.mxu0 0.0
  %8235 = vmatpush.xpose.msra.mxu0 0.0
  %8236 = vmatpush.xpose.msra.mxu0 0.0
  %8237 = vmatpush.xpose.msra.mxu0 %v8220
  %8238 = vmatmul.f32.gmra.mxu0 %v8218
  %v8239 = vpop.f32.mrf.mxu0
  %v8240 = vadd.f32 %v195, %v8239
  %8241 = vdwg.mxu0
  %8242 = vrot.lane.b32.xlu0 %v175, 80
  %v8243 = vpop.permute.xlu0 %8242
  %8244 = vrot.lane.b32.xlu0 %v175, 48
  %v8245 = vpop.permute.xlu0 %8244
  %v8246 = vsel %vm199, %v8243, 0
  %v8248 = vsel %vm199, %v8245, 0
  %8250 = vmatpush.xpose.msra.mxu0 0.0
  %8251 = vmatpush.xpose.msra.mxu0 0.0
  %8252 = vmatpush.xpose.msra.mxu0 0.0
  %8253 = vmatpush.xpose.msra.mxu0 0.0
  %8254 = vmatpush.xpose.msra.mxu0 0.0
  %8255 = vmatpush.xpose.msra.mxu0 0.0
  %8256 = vmatpush.xpose.msra.mxu0 0.0
  %8257 = vmatpush.xpose.msra.mxu0 0.0
  %8258 = vmatpush.xpose.msra.mxu0 0.0
  %8259 = vmatpush.xpose.msra.mxu0 0.0
  %8260 = vmatpush.xpose.msra.mxu0 0.0
  %8261 = vmatpush.xpose.msra.mxu0 0.0
  %8262 = vmatpush.xpose.msra.mxu0 0.0
  %8263 = vmatpush.xpose.msra.mxu0 0.0
  %8264 = vmatpush.xpose.msra.mxu0 0.0
  %8265 = vmatpush.xpose.msra.mxu0 %v8248
  %8266 = vmatmul.f32.gmra.mxu0 %v8246
  %v8267 = vpop.f32.mrf.mxu0
  %v8268 = vadd.f32 %v195, %v8267
  %8269 = vdwg.mxu0
  %8270 = vrot.lane.b32.xlu0 %v178, 80
  %v8271 = vpop.permute.xlu0 %8270
  %8272 = vrot.lane.b32.xlu0 %v178, 48
  %v8273 = vpop.permute.xlu0 %8272
  %v8274 = vsel %vm199, %v8271, 0
  %v8276 = vsel %vm199, %v8273, 0
  %8278 = vmatpush.xpose.msra.mxu0 0.0
  %8279 = vmatpush.xpose.msra.mxu0 0.0
  %8280 = vmatpush.xpose.msra.mxu0 0.0
  %8281 = vmatpush.xpose.msra.mxu0 0.0
  %8282 = vmatpush.xpose.msra.mxu0 0.0
  %8283 = vmatpush.xpose.msra.mxu0 0.0
  %8284 = vmatpush.xpose.msra.mxu0 0.0
  %8285 = vmatpush.xpose.msra.mxu0 0.0
  %8286 = vmatpush.xpose.msra.mxu0 0.0
  %8287 = vmatpush.xpose.msra.mxu0 0.0
  %8288 = vmatpush.xpose.msra.mxu0 0.0
  %8289 = vmatpush.xpose.msra.mxu0 0.0
  %8290 = vmatpush.xpose.msra.mxu0 0.0
  %8291 = vmatpush.xpose.msra.mxu0 0.0
  %8292 = vmatpush.xpose.msra.mxu0 0.0
  %8293 = vmatpush.xpose.msra.mxu0 %v8276
  %8294 = vmatmul.f32.gmra.mxu0 %v8274
  %v8295 = vpop.f32.mrf.mxu0
  %v8296 = vadd.f32 %v195, %v8295
  %8297 = vdwg.mxu0
  %8298 = vrot.lane.b32.xlu0 %v180, 80
  %v8299 = vpop.permute.xlu0 %8298
  %8300 = vrot.lane.b32.xlu0 %v180, 48
  %v8301 = vpop.permute.xlu0 %8300
  %v8302 = vsel %vm199, %v8299, 0
  %v8304 = vsel %vm199, %v8301, 0
  %8306 = vmatpush.xpose.msra.mxu0 0.0
  %8307 = vmatpush.xpose.msra.mxu0 0.0
  %8308 = vmatpush.xpose.msra.mxu0 0.0
  %8309 = vmatpush.xpose.msra.mxu0 0.0
  %8310 = vmatpush.xpose.msra.mxu0 0.0
  %8311 = vmatpush.xpose.msra.mxu0 0.0
  %8312 = vmatpush.xpose.msra.mxu0 0.0
  %8313 = vmatpush.xpose.msra.mxu0 0.0
  %8314 = vmatpush.xpose.msra.mxu0 0.0
  %8315 = vmatpush.xpose.msra.mxu0 0.0
  %8316 = vmatpush.xpose.msra.mxu0 0.0
  %8317 = vmatpush.xpose.msra.mxu0 0.0
  %8318 = vmatpush.xpose.msra.mxu0 0.0
  %8319 = vmatpush.xpose.msra.mxu0 0.0
  %8320 = vmatpush.xpose.msra.mxu0 0.0
  %8321 = vmatpush.xpose.msra.mxu0 %v8304
  %8322 = vmatmul.f32.gmra.mxu0 %v8302
  %v8323 = vpop.f32.mrf.mxu0
  %v8324 = vadd.f32 %v195, %v8323
  %8325 = vdwg.mxu0
  %8326 = vrot.lane.b32.xlu0 %v183, 80
  %v8327 = vpop.permute.xlu0 %8326
  %8328 = vrot.lane.b32.xlu0 %v183, 48
  %v8329 = vpop.permute.xlu0 %8328
  %v8330 = vsel %vm199, %v8327, 0
  %v8332 = vsel %vm199, %v8329, 0
  %8334 = vmatpush.xpose.msra.mxu0 0.0
  %8335 = vmatpush.xpose.msra.mxu0 0.0
  %8336 = vmatpush.xpose.msra.mxu0 0.0
  %8337 = vmatpush.xpose.msra.mxu0 0.0
  %8338 = vmatpush.xpose.msra.mxu0 0.0
  %8339 = vmatpush.xpose.msra.mxu0 0.0
  %8340 = vmatpush.xpose.msra.mxu0 0.0
  %8341 = vmatpush.xpose.msra.mxu0 0.0
  %8342 = vmatpush.xpose.msra.mxu0 0.0
  %8343 = vmatpush.xpose.msra.mxu0 0.0
  %8344 = vmatpush.xpose.msra.mxu0 0.0
  %8345 = vmatpush.xpose.msra.mxu0 0.0
  %8346 = vmatpush.xpose.msra.mxu0 0.0
  %8347 = vmatpush.xpose.msra.mxu0 0.0
  %8348 = vmatpush.xpose.msra.mxu0 0.0
  %8349 = vmatpush.xpose.msra.mxu0 %v8332
  %8350 = vmatmul.f32.gmra.mxu0 %v8330
  %v8351 = vpop.f32.mrf.mxu0
  %v8352 = vadd.f32 %v195, %v8351
  %8353 = vdwg.mxu0
  %8354 = vrot.lane.b32.xlu0 %v185, 80
  %v8355 = vpop.permute.xlu0 %8354
  %8356 = vrot.lane.b32.xlu0 %v185, 48
  %v8357 = vpop.permute.xlu0 %8356
  %v8358 = vsel %vm199, %v8355, 0
  %v8360 = vsel %vm199, %v8357, 0
  %8362 = vmatpush.xpose.msra.mxu0 0.0
  %8363 = vmatpush.xpose.msra.mxu0 0.0
  %8364 = vmatpush.xpose.msra.mxu0 0.0
  %8365 = vmatpush.xpose.msra.mxu0 0.0
  %8366 = vmatpush.xpose.msra.mxu0 0.0
  %8367 = vmatpush.xpose.msra.mxu0 0.0
  %8368 = vmatpush.xpose.msra.mxu0 0.0
  %8369 = vmatpush.xpose.msra.mxu0 0.0
  %8370 = vmatpush.xpose.msra.mxu0 0.0
  %8371 = vmatpush.xpose.msra.mxu0 0.0
  %8372 = vmatpush.xpose.msra.mxu0 0.0
  %8373 = vmatpush.xpose.msra.mxu0 0.0
  %8374 = vmatpush.xpose.msra.mxu0 0.0
  %8375 = vmatpush.xpose.msra.mxu0 0.0
  %8376 = vmatpush.xpose.msra.mxu0 0.0
  %8377 = vmatpush.xpose.msra.mxu0 %v8360
  %8378 = vmatmul.f32.gmra.mxu0 %v8358
  %v8379 = vpop.f32.mrf.mxu0
  %v8380 = vadd.f32 %v195, %v8379
  %8381 = vdwg.mxu0
  %v8382 = vsel %vm199, %v8184, -inf
  %8383 = vmax.xlane.f32.xlu0 %v8382
  %v8384 = vpop.xlane.xlu0 %8383
  %v8385 = vsel %vm199, %v8212, -inf
  %8386 = vmax.xlane.f32.xlu0 %v8385
  %v8387 = vpop.xlane.xlu0 %8386
  %v8388 = vsel %vm199, %v8240, -inf
  %8389 = vmax.xlane.f32.xlu0 %v8388
  %v8390 = vpop.xlane.xlu0 %8389
  %v8391 = vsel %vm199, %v8268, -inf
  %8392 = vmax.xlane.f32.xlu0 %v8391
  %v8393 = vpop.xlane.xlu0 %8392
  %v8394 = vsel %vm199, %v8296, -inf
  %8395 = vmax.xlane.f32.xlu0 %v8394
  %v8396 = vpop.xlane.xlu0 %8395
  %v8397 = vsel %vm199, %v8324, -inf
  %8398 = vmax.xlane.f32.xlu0 %v8397
  %v8399 = vpop.xlane.xlu0 %8398
  %v8400 = vsel %vm199, %v8352, -inf
  %8401 = vmax.xlane.f32.xlu0 %v8400
  %v8402 = vpop.xlane.xlu0 %8401
  %v8403 = vsel %vm199, %v8380, -inf
  %8404 = vmax.xlane.f32.xlu0 %v8403
  %v8405 = vpop.xlane.xlu0 %8404
  %v8406 = vsub.f32 %v8184, %v8384
  %v8407 = vsub.f32 %v8212, %v8387
  %v8408 = vsub.f32 %v8240, %v8390
  %v8409 = vsub.f32 %v8268, %v8393
  %v8410 = vsub.f32 %v8296, %v8396
  %v8411 = vsub.f32 %v8324, %v8399
  %v8412 = vsub.f32 %v8352, %v8402
  %v8413 = vsub.f32 %v8380, %v8405
  %v8414 = vmul.f32 %v8406, 1.442695
  %v8415 = vpow.pop %v8414
  %v8416 = vmul.f32 %v8407, 1.442695
  %v8417 = vpow.pop %v8416
  %v8418 = vmul.f32 %v8408, 1.442695
  %v8419 = vpow.pop %v8418
  %v8420 = vmul.f32 %v8409, 1.442695
  %v8421 = vpow.pop %v8420
  %v8422 = vmul.f32 %v8410, 1.442695
  %v8423 = vpow.pop %v8422
  %v8424 = vmul.f32 %v8411, 1.442695
  %v8425 = vpow.pop %v8424
  %v8426 = vmul.f32 %v8412, 1.442695
  %v8427 = vpow.pop %v8426
  %v8428 = vmul.f32 %v8413, 1.442695
  %v8429 = vpow.pop %v8428
  %v8430 = vsel %vm199, %v8415, 0.0
  %8431 = vadd.xlane.f32.xlu0 %v8430
  %v8432 = vpop.xlane.xlu0 %8431
  %v8433 = vsel %vm199, %v8417, 0.0
  %8434 = vadd.xlane.f32.xlu0 %v8433
  %v8435 = vpop.xlane.xlu0 %8434
  %v8436 = vsel %vm199, %v8419, 0.0
  %8437 = vadd.xlane.f32.xlu0 %v8436
  %v8438 = vpop.xlane.xlu0 %8437
  %v8439 = vsel %vm199, %v8421, 0.0
  %8440 = vadd.xlane.f32.xlu0 %v8439
  %v8441 = vpop.xlane.xlu0 %8440
  %v8442 = vsel %vm199, %v8423, 0.0
  %8443 = vadd.xlane.f32.xlu0 %v8442
  %v8444 = vpop.xlane.xlu0 %8443
  %v8445 = vsel %vm199, %v8425, 0.0
  %8446 = vadd.xlane.f32.xlu0 %v8445
  %v8447 = vpop.xlane.xlu0 %8446
  %v8448 = vsel %vm199, %v8427, 0.0
  %8449 = vadd.xlane.f32.xlu0 %v8448
  %v8450 = vpop.xlane.xlu0 %8449
  %v8451 = vsel %vm199, %v8429, 0.0
  %8452 = vadd.xlane.f32.xlu0 %v8451
  %v8453 = vpop.xlane.xlu0 %8452
  %v8454 = vrcp.pop %v8432
  %v8455 = vrcp.pop %v8435
  %v8456 = vrcp.pop %v8438
  %v8457 = vrcp.pop %v8441
  %v8458 = vrcp.pop %v8444
  %v8459 = vrcp.pop %v8447
  %v8460 = vrcp.pop %v8450
  %v8461 = vrcp.pop %v8453
  %v8462 = vmul.f32 %v8415, %v8454
  %v8463 = vmul.f32 %v8417, %v8455
  %v8464 = vmul.f32 %v8419, %v8456
  %v8465 = vmul.f32 %v8421, %v8457
  %v8466 = vmul.f32 %v8423, %v8458
  %v8467 = vmul.f32 %v8425, %v8459
  %v8468 = vmul.f32 %v8427, %v8460
  %v8469 = vmul.f32 %v8429, %v8461
  %8470 = vrot.lane.b32.xlu0 %v168, 16
  %v8471 = vpop.permute.xlu0 %8470
  %v8474 = vsel %vm199, %v8462, 0
  %8476 = vmatpush.msra.mxu0 0.0
  %8477 = vmatpush.msra.mxu0 0.0
  %8478 = vmatpush.msra.mxu0 0.0
  %8479 = vmatpush.msra.mxu0 0.0
  %8480 = vmatpush.msra.mxu0 0.0
  %8481 = vmatpush.msra.mxu0 0.0
  %8482 = vmatpush.msra.mxu0 0.0
  %8483 = vmatpush.msra.mxu0 0.0
  %8484 = vmatpush.msra.mxu0 0.0
  %8485 = vmatpush.msra.mxu0 0.0
  %8486 = vmatpush.msra.mxu0 0.0
  %8487 = vmatpush.msra.mxu0 0.0
  %8488 = vmatpush.msra.mxu0 0.0
  %8489 = vmatpush.msra.mxu0 0.0
  %8490 = vmatpush.msra.mxu0 0.0
  %8491 = vmatpush.msra.mxu0 %v8471
  %8492 = vmatmul.f32.gmra.mxu0 %v8474
  %v8493 = vpop.f32.mrf.mxu0
  %v8494 = vadd.f32 0.0, %v8493
  %8495 = vdwg.mxu0
  %8496 = vrot.lane.b32.xlu0 %v170, 16
  %v8497 = vpop.permute.xlu0 %8496
  %v8500 = vsel %vm199, %v8463, 0
  %8502 = vmatpush.msra.mxu0 0.0
  %8503 = vmatpush.msra.mxu0 0.0
  %8504 = vmatpush.msra.mxu0 0.0
  %8505 = vmatpush.msra.mxu0 0.0
  %8506 = vmatpush.msra.mxu0 0.0
  %8507 = vmatpush.msra.mxu0 0.0
  %8508 = vmatpush.msra.mxu0 0.0
  %8509 = vmatpush.msra.mxu0 0.0
  %8510 = vmatpush.msra.mxu0 0.0
  %8511 = vmatpush.msra.mxu0 0.0
  %8512 = vmatpush.msra.mxu0 0.0
  %8513 = vmatpush.msra.mxu0 0.0
  %8514 = vmatpush.msra.mxu0 0.0
  %8515 = vmatpush.msra.mxu0 0.0
  %8516 = vmatpush.msra.mxu0 0.0
  %8517 = vmatpush.msra.mxu0 %v8497
  %8518 = vmatmul.f32.gmra.mxu0 %v8500
  %v8519 = vpop.f32.mrf.mxu0
  %v8520 = vadd.f32 0.0, %v8519
  %8521 = vdwg.mxu0
  %8522 = vrot.lane.b32.xlu0 %v173, 16
  %v8523 = vpop.permute.xlu0 %8522
  %v8526 = vsel %vm199, %v8464, 0
  %8528 = vmatpush.msra.mxu0 0.0
  %8529 = vmatpush.msra.mxu0 0.0
  %8530 = vmatpush.msra.mxu0 0.0
  %8531 = vmatpush.msra.mxu0 0.0
  %8532 = vmatpush.msra.mxu0 0.0
  %8533 = vmatpush.msra.mxu0 0.0
  %8534 = vmatpush.msra.mxu0 0.0
  %8535 = vmatpush.msra.mxu0 0.0
  %8536 = vmatpush.msra.mxu0 0.0
  %8537 = vmatpush.msra.mxu0 0.0
  %8538 = vmatpush.msra.mxu0 0.0
  %8539 = vmatpush.msra.mxu0 0.0
  %8540 = vmatpush.msra.mxu0 0.0
  %8541 = vmatpush.msra.mxu0 0.0
  %8542 = vmatpush.msra.mxu0 0.0
  %8543 = vmatpush.msra.mxu0 %v8523
  %8544 = vmatmul.f32.gmra.mxu0 %v8526
  %v8545 = vpop.f32.mrf.mxu0
  %v8546 = vadd.f32 0.0, %v8545
  %8547 = vdwg.mxu0
  %8548 = vrot.lane.b32.xlu0 %v175, 16
  %v8549 = vpop.permute.xlu0 %8548
  %v8552 = vsel %vm199, %v8465, 0
  %8554 = vmatpush.msra.mxu0 0.0
  %8555 = vmatpush.msra.mxu0 0.0
  %8556 = vmatpush.msra.mxu0 0.0
  %8557 = vmatpush.msra.mxu0 0.0
  %8558 = vmatpush.msra.mxu0 0.0
  %8559 = vmatpush.msra.mxu0 0.0
  %8560 = vmatpush.msra.mxu0 0.0
  %8561 = vmatpush.msra.mxu0 0.0
  %8562 = vmatpush.msra.mxu0 0.0
  %8563 = vmatpush.msra.mxu0 0.0
  %8564 = vmatpush.msra.mxu0 0.0
  %8565 = vmatpush.msra.mxu0 0.0
  %8566 = vmatpush.msra.mxu0 0.0
  %8567 = vmatpush.msra.mxu0 0.0
  %8568 = vmatpush.msra.mxu0 0.0
  %8569 = vmatpush.msra.mxu0 %v8549
  %8570 = vmatmul.f32.gmra.mxu0 %v8552
  %v8571 = vpop.f32.mrf.mxu0
  %v8572 = vadd.f32 0.0, %v8571
  %8573 = vdwg.mxu0
  %8574 = vrot.lane.b32.xlu0 %v178, 16
  %v8575 = vpop.permute.xlu0 %8574
  %v8578 = vsel %vm199, %v8466, 0
  %8580 = vmatpush.msra.mxu0 0.0
  %8581 = vmatpush.msra.mxu0 0.0
  %8582 = vmatpush.msra.mxu0 0.0
  %8583 = vmatpush.msra.mxu0 0.0
  %8584 = vmatpush.msra.mxu0 0.0
  %8585 = vmatpush.msra.mxu0 0.0
  %8586 = vmatpush.msra.mxu0 0.0
  %8587 = vmatpush.msra.mxu0 0.0
  %8588 = vmatpush.msra.mxu0 0.0
  %8589 = vmatpush.msra.mxu0 0.0
  %8590 = vmatpush.msra.mxu0 0.0
  %8591 = vmatpush.msra.mxu0 0.0
  %8592 = vmatpush.msra.mxu0 0.0
  %8593 = vmatpush.msra.mxu0 0.0
  %8594 = vmatpush.msra.mxu0 0.0
  %8595 = vmatpush.msra.mxu0 %v8575
  %8596 = vmatmul.f32.gmra.mxu0 %v8578
  %v8597 = vpop.f32.mrf.mxu0
  %v8598 = vadd.f32 0.0, %v8597
  %8599 = vdwg.mxu0
  %8600 = vrot.lane.b32.xlu0 %v180, 16
  %v8601 = vpop.permute.xlu0 %8600
  %v8604 = vsel %vm199, %v8467, 0
  %8606 = vmatpush.msra.mxu0 0.0
  %8607 = vmatpush.msra.mxu0 0.0
  %8608 = vmatpush.msra.mxu0 0.0
  %8609 = vmatpush.msra.mxu0 0.0
  %8610 = vmatpush.msra.mxu0 0.0
  %8611 = vmatpush.msra.mxu0 0.0
  %8612 = vmatpush.msra.mxu0 0.0
  %8613 = vmatpush.msra.mxu0 0.0
  %8614 = vmatpush.msra.mxu0 0.0
  %8615 = vmatpush.msra.mxu0 0.0
  %8616 = vmatpush.msra.mxu0 0.0
  %8617 = vmatpush.msra.mxu0 0.0
  %8618 = vmatpush.msra.mxu0 0.0
  %8619 = vmatpush.msra.mxu0 0.0
  %8620 = vmatpush.msra.mxu0 0.0
  %8621 = vmatpush.msra.mxu0 %v8601
  %8622 = vmatmul.f32.gmra.mxu0 %v8604
  %v8623 = vpop.f32.mrf.mxu0
  %v8624 = vadd.f32 0.0, %v8623
  %8625 = vdwg.mxu0
  %8626 = vrot.lane.b32.xlu0 %v183, 16
  %v8627 = vpop.permute.xlu0 %8626
  %v8630 = vsel %vm199, %v8468, 0
  %8632 = vmatpush.msra.mxu0 0.0
  %8633 = vmatpush.msra.mxu0 0.0
  %8634 = vmatpush.msra.mxu0 0.0
  %8635 = vmatpush.msra.mxu0 0.0
  %8636 = vmatpush.msra.mxu0 0.0
  %8637 = vmatpush.msra.mxu0 0.0
  %8638 = vmatpush.msra.mxu0 0.0
  %8639 = vmatpush.msra.mxu0 0.0
  %8640 = vmatpush.msra.mxu0 0.0
  %8641 = vmatpush.msra.mxu0 0.0
  %8642 = vmatpush.msra.mxu0 0.0
  %8643 = vmatpush.msra.mxu0 0.0
  %8644 = vmatpush.msra.mxu0 0.0
  %8645 = vmatpush.msra.mxu0 0.0
  %8646 = vmatpush.msra.mxu0 0.0
  %8647 = vmatpush.msra.mxu0 %v8627
  %8648 = vmatmul.f32.gmra.mxu0 %v8630
  %v8649 = vpop.f32.mrf.mxu0
  %v8650 = vadd.f32 0.0, %v8649
  %8651 = vdwg.mxu0
  %8652 = vrot.lane.b32.xlu0 %v185, 16
  %v8653 = vpop.permute.xlu0 %8652
  %v8656 = vsel %vm199, %v8469, 0
  %8658 = vmatpush.msra.mxu0 0.0
  %8659 = vmatpush.msra.mxu0 0.0
  %8660 = vmatpush.msra.mxu0 0.0
  %8661 = vmatpush.msra.mxu0 0.0
  %8662 = vmatpush.msra.mxu0 0.0
  %8663 = vmatpush.msra.mxu0 0.0
  %8664 = vmatpush.msra.mxu0 0.0
  %8665 = vmatpush.msra.mxu0 0.0
  %8666 = vmatpush.msra.mxu0 0.0
  %8667 = vmatpush.msra.mxu0 0.0
  %8668 = vmatpush.msra.mxu0 0.0
  %8669 = vmatpush.msra.mxu0 0.0
  %8670 = vmatpush.msra.mxu0 0.0
  %8671 = vmatpush.msra.mxu0 0.0
  %8672 = vmatpush.msra.mxu0 0.0
  %8673 = vmatpush.msra.mxu0 %v8653
  %8674 = vmatmul.f32.gmra.mxu0 %v8656
  %v8675 = vpop.f32.mrf.mxu0
  %v8676 = vadd.f32 0.0, %v8675
  %8677 = vdwg.mxu0
  %8678 = vrot.lane.b32.xlu0 %v168, 72
  %v8679 = vpop.permute.xlu0 %8678
  %8680 = vrot.lane.b32.xlu0 %v168, 40
  %v8681 = vpop.permute.xlu0 %8680
  %v8682 = vsel %vm199, %v8679, 0
  %v8684 = vsel %vm199, %v8681, 0
  %8686 = vmatpush.xpose.msra.mxu0 0.0
  %8687 = vmatpush.xpose.msra.mxu0 0.0
  %8688 = vmatpush.xpose.msra.mxu0 0.0
  %8689 = vmatpush.xpose.msra.mxu0 0.0
  %8690 = vmatpush.xpose.msra.mxu0 0.0
  %8691 = vmatpush.xpose.msra.mxu0 0.0
  %8692 = vmatpush.xpose.msra.mxu0 0.0
  %8693 = vmatpush.xpose.msra.mxu0 0.0
  %8694 = vmatpush.xpose.msra.mxu0 0.0
  %8695 = vmatpush.xpose.msra.mxu0 0.0
  %8696 = vmatpush.xpose.msra.mxu0 0.0
  %8697 = vmatpush.xpose.msra.mxu0 0.0
  %8698 = vmatpush.xpose.msra.mxu0 0.0
  %8699 = vmatpush.xpose.msra.mxu0 0.0
  %8700 = vmatpush.xpose.msra.mxu0 0.0
  %8701 = vmatpush.xpose.msra.mxu0 %v8684
  %8702 = vmatmul.f32.gmra.mxu0 %v8682
  %v8703 = vpop.f32.mrf.mxu0
  %v8704 = vadd.f32 %v195, %v8703
  %8705 = vdwg.mxu0
  %8706 = vrot.lane.b32.xlu0 %v170, 72
  %v8707 = vpop.permute.xlu0 %8706
  %8708 = vrot.lane.b32.xlu0 %v170, 40
  %v8709 = vpop.permute.xlu0 %8708
  %v8710 = vsel %vm199, %v8707, 0
  %v8712 = vsel %vm199, %v8709, 0
  %8714 = vmatpush.xpose.msra.mxu0 0.0
  %8715 = vmatpush.xpose.msra.mxu0 0.0
  %8716 = vmatpush.xpose.msra.mxu0 0.0
  %8717 = vmatpush.xpose.msra.mxu0 0.0
  %8718 = vmatpush.xpose.msra.mxu0 0.0
  %8719 = vmatpush.xpose.msra.mxu0 0.0
  %8720 = vmatpush.xpose.msra.mxu0 0.0
  %8721 = vmatpush.xpose.msra.mxu0 0.0
  %8722 = vmatpush.xpose.msra.mxu0 0.0
  %8723 = vmatpush.xpose.msra.mxu0 0.0
  %8724 = vmatpush.xpose.msra.mxu0 0.0
  %8725 = vmatpush.xpose.msra.mxu0 0.0
  %8726 = vmatpush.xpose.msra.mxu0 0.0
  %8727 = vmatpush.xpose.msra.mxu0 0.0
  %8728 = vmatpush.xpose.msra.mxu0 0.0
  %8729 = vmatpush.xpose.msra.mxu0 %v8712
  %8730 = vmatmul.f32.gmra.mxu0 %v8710
  %v8731 = vpop.f32.mrf.mxu0
  %v8732 = vadd.f32 %v195, %v8731
  %8733 = vdwg.mxu0
  %8734 = vrot.lane.b32.xlu0 %v173, 72
  %v8735 = vpop.permute.xlu0 %8734
  %8736 = vrot.lane.b32.xlu0 %v173, 40
  %v8737 = vpop.permute.xlu0 %8736
  %v8738 = vsel %vm199, %v8735, 0
  %v8740 = vsel %vm199, %v8737, 0
  %8742 = vmatpush.xpose.msra.mxu0 0.0
  %8743 = vmatpush.xpose.msra.mxu0 0.0
  %8744 = vmatpush.xpose.msra.mxu0 0.0
  %8745 = vmatpush.xpose.msra.mxu0 0.0
  %8746 = vmatpush.xpose.msra.mxu0 0.0
  %8747 = vmatpush.xpose.msra.mxu0 0.0
  %8748 = vmatpush.xpose.msra.mxu0 0.0
  %8749 = vmatpush.xpose.msra.mxu0 0.0
  %8750 = vmatpush.xpose.msra.mxu0 0.0
  %8751 = vmatpush.xpose.msra.mxu0 0.0
  %8752 = vmatpush.xpose.msra.mxu0 0.0
  %8753 = vmatpush.xpose.msra.mxu0 0.0
  %8754 = vmatpush.xpose.msra.mxu0 0.0
  %8755 = vmatpush.xpose.msra.mxu0 0.0
  %8756 = vmatpush.xpose.msra.mxu0 0.0
  %8757 = vmatpush.xpose.msra.mxu0 %v8740
  %8758 = vmatmul.f32.gmra.mxu0 %v8738
  %v8759 = vpop.f32.mrf.mxu0
  %v8760 = vadd.f32 %v195, %v8759
  %8761 = vdwg.mxu0
  %8762 = vrot.lane.b32.xlu0 %v175, 72
  %v8763 = vpop.permute.xlu0 %8762
  %8764 = vrot.lane.b32.xlu0 %v175, 40
  %v8765 = vpop.permute.xlu0 %8764
  %v8766 = vsel %vm199, %v8763, 0
  %v8768 = vsel %vm199, %v8765, 0
  %8770 = vmatpush.xpose.msra.mxu0 0.0
  %8771 = vmatpush.xpose.msra.mxu0 0.0
  %8772 = vmatpush.xpose.msra.mxu0 0.0
  %8773 = vmatpush.xpose.msra.mxu0 0.0
  %8774 = vmatpush.xpose.msra.mxu0 0.0
  %8775 = vmatpush.xpose.msra.mxu0 0.0
  %8776 = vmatpush.xpose.msra.mxu0 0.0
  %8777 = vmatpush.xpose.msra.mxu0 0.0
  %8778 = vmatpush.xpose.msra.mxu0 0.0
  %8779 = vmatpush.xpose.msra.mxu0 0.0
  %8780 = vmatpush.xpose.msra.mxu0 0.0
  %8781 = vmatpush.xpose.msra.mxu0 0.0
  %8782 = vmatpush.xpose.msra.mxu0 0.0
  %8783 = vmatpush.xpose.msra.mxu0 0.0
  %8784 = vmatpush.xpose.msra.mxu0 0.0
  %8785 = vmatpush.xpose.msra.mxu0 %v8768
  %8786 = vmatmul.f32.gmra.mxu0 %v8766
  %v8787 = vpop.f32.mrf.mxu0
  %v8788 = vadd.f32 %v195, %v8787
  %8789 = vdwg.mxu0
  %8790 = vrot.lane.b32.xlu0 %v178, 72
  %v8791 = vpop.permute.xlu0 %8790
  %8792 = vrot.lane.b32.xlu0 %v178, 40
  %v8793 = vpop.permute.xlu0 %8792
  %v8794 = vsel %vm199, %v8791, 0
  %v8796 = vsel %vm199, %v8793, 0
  %8798 = vmatpush.xpose.msra.mxu0 0.0
  %8799 = vmatpush.xpose.msra.mxu0 0.0
  %8800 = vmatpush.xpose.msra.mxu0 0.0
  %8801 = vmatpush.xpose.msra.mxu0 0.0
  %8802 = vmatpush.xpose.msra.mxu0 0.0
  %8803 = vmatpush.xpose.msra.mxu0 0.0
  %8804 = vmatpush.xpose.msra.mxu0 0.0
  %8805 = vmatpush.xpose.msra.mxu0 0.0
  %8806 = vmatpush.xpose.msra.mxu0 0.0
  %8807 = vmatpush.xpose.msra.mxu0 0.0
  %8808 = vmatpush.xpose.msra.mxu0 0.0
  %8809 = vmatpush.xpose.msra.mxu0 0.0
  %8810 = vmatpush.xpose.msra.mxu0 0.0
  %8811 = vmatpush.xpose.msra.mxu0 0.0
  %8812 = vmatpush.xpose.msra.mxu0 0.0
  %8813 = vmatpush.xpose.msra.mxu0 %v8796
  %8814 = vmatmul.f32.gmra.mxu0 %v8794
  %v8815 = vpop.f32.mrf.mxu0
  %v8816 = vadd.f32 %v195, %v8815
  %8817 = vdwg.mxu0
  %8818 = vrot.lane.b32.xlu0 %v180, 72
  %v8819 = vpop.permute.xlu0 %8818
  %8820 = vrot.lane.b32.xlu0 %v180, 40
  %v8821 = vpop.permute.xlu0 %8820
  %v8822 = vsel %vm199, %v8819, 0
  %v8824 = vsel %vm199, %v8821, 0
  %8826 = vmatpush.xpose.msra.mxu0 0.0
  %8827 = vmatpush.xpose.msra.mxu0 0.0
  %8828 = vmatpush.xpose.msra.mxu0 0.0
  %8829 = vmatpush.xpose.msra.mxu0 0.0
  %8830 = vmatpush.xpose.msra.mxu0 0.0
  %8831 = vmatpush.xpose.msra.mxu0 0.0
  %8832 = vmatpush.xpose.msra.mxu0 0.0
  %8833 = vmatpush.xpose.msra.mxu0 0.0
  %8834 = vmatpush.xpose.msra.mxu0 0.0
  %8835 = vmatpush.xpose.msra.mxu0 0.0
  %8836 = vmatpush.xpose.msra.mxu0 0.0
  %8837 = vmatpush.xpose.msra.mxu0 0.0
  %8838 = vmatpush.xpose.msra.mxu0 0.0
  %8839 = vmatpush.xpose.msra.mxu0 0.0
  %8840 = vmatpush.xpose.msra.mxu0 0.0
  %8841 = vmatpush.xpose.msra.mxu0 %v8824
  %8842 = vmatmul.f32.gmra.mxu0 %v8822
  %v8843 = vpop.f32.mrf.mxu0
  %v8844 = vadd.f32 %v195, %v8843
  %8845 = vdwg.mxu0
  %8846 = vrot.lane.b32.xlu0 %v183, 72
  %v8847 = vpop.permute.xlu0 %8846
  %8848 = vrot.lane.b32.xlu0 %v183, 40
  %v8849 = vpop.permute.xlu0 %8848
  %v8850 = vsel %vm199, %v8847, 0
  %v8852 = vsel %vm199, %v8849, 0
  %8854 = vmatpush.xpose.msra.mxu0 0.0
  %8855 = vmatpush.xpose.msra.mxu0 0.0
  %8856 = vmatpush.xpose.msra.mxu0 0.0
  %8857 = vmatpush.xpose.msra.mxu0 0.0
  %8858 = vmatpush.xpose.msra.mxu0 0.0
  %8859 = vmatpush.xpose.msra.mxu0 0.0
  %8860 = vmatpush.xpose.msra.mxu0 0.0
  %8861 = vmatpush.xpose.msra.mxu0 0.0
  %8862 = vmatpush.xpose.msra.mxu0 0.0
  %8863 = vmatpush.xpose.msra.mxu0 0.0
  %8864 = vmatpush.xpose.msra.mxu0 0.0
  %8865 = vmatpush.xpose.msra.mxu0 0.0
  %8866 = vmatpush.xpose.msra.mxu0 0.0
  %8867 = vmatpush.xpose.msra.mxu0 0.0
  %8868 = vmatpush.xpose.msra.mxu0 0.0
  %8869 = vmatpush.xpose.msra.mxu0 %v8852
  %8870 = vmatmul.f32.gmra.mxu0 %v8850
  %v8871 = vpop.f32.mrf.mxu0
  %v8872 = vadd.f32 %v195, %v8871
  %8873 = vdwg.mxu0
  %8874 = vrot.lane.b32.xlu0 %v185, 72
  %v8875 = vpop.permute.xlu0 %8874
  %8876 = vrot.lane.b32.xlu0 %v185, 40
  %v8877 = vpop.permute.xlu0 %8876
  %v8878 = vsel %vm199, %v8875, 0
  %v8880 = vsel %vm199, %v8877, 0
  %8882 = vmatpush.xpose.msra.mxu0 0.0
  %8883 = vmatpush.xpose.msra.mxu0 0.0
  %8884 = vmatpush.xpose.msra.mxu0 0.0
  %8885 = vmatpush.xpose.msra.mxu0 0.0
  %8886 = vmatpush.xpose.msra.mxu0 0.0
  %8887 = vmatpush.xpose.msra.mxu0 0.0
  %8888 = vmatpush.xpose.msra.mxu0 0.0
  %8889 = vmatpush.xpose.msra.mxu0 0.0
  %8890 = vmatpush.xpose.msra.mxu0 0.0
  %8891 = vmatpush.xpose.msra.mxu0 0.0
  %8892 = vmatpush.xpose.msra.mxu0 0.0
  %8893 = vmatpush.xpose.msra.mxu0 0.0
  %8894 = vmatpush.xpose.msra.mxu0 0.0
  %8895 = vmatpush.xpose.msra.mxu0 0.0
  %8896 = vmatpush.xpose.msra.mxu0 0.0
  %8897 = vmatpush.xpose.msra.mxu0 %v8880
  %8898 = vmatmul.f32.gmra.mxu0 %v8878
  %v8899 = vpop.f32.mrf.mxu0
  %v8900 = vadd.f32 %v195, %v8899
  %8901 = vdwg.mxu0
  %v8902 = vsel %vm199, %v8704, -inf
  %8903 = vmax.xlane.f32.xlu0 %v8902
  %v8904 = vpop.xlane.xlu0 %8903
  %v8905 = vsel %vm199, %v8732, -inf
  %8906 = vmax.xlane.f32.xlu0 %v8905
  %v8907 = vpop.xlane.xlu0 %8906
  %v8908 = vsel %vm199, %v8760, -inf
  %8909 = vmax.xlane.f32.xlu0 %v8908
  %v8910 = vpop.xlane.xlu0 %8909
  %v8911 = vsel %vm199, %v8788, -inf
  %8912 = vmax.xlane.f32.xlu0 %v8911
  %v8913 = vpop.xlane.xlu0 %8912
  %v8914 = vsel %vm199, %v8816, -inf
  %8915 = vmax.xlane.f32.xlu0 %v8914
  %v8916 = vpop.xlane.xlu0 %8915
  %v8917 = vsel %vm199, %v8844, -inf
  %8918 = vmax.xlane.f32.xlu0 %v8917
  %v8919 = vpop.xlane.xlu0 %8918
  %v8920 = vsel %vm199, %v8872, -inf
  %8921 = vmax.xlane.f32.xlu0 %v8920
  %v8922 = vpop.xlane.xlu0 %8921
  %v8923 = vsel %vm199, %v8900, -inf
  %8924 = vmax.xlane.f32.xlu0 %v8923
  %v8925 = vpop.xlane.xlu0 %8924
  %v8926 = vsub.f32 %v8704, %v8904
  %v8927 = vsub.f32 %v8732, %v8907
  %v8928 = vsub.f32 %v8760, %v8910
  %v8929 = vsub.f32 %v8788, %v8913
  %v8930 = vsub.f32 %v8816, %v8916
  %v8931 = vsub.f32 %v8844, %v8919
  %v8932 = vsub.f32 %v8872, %v8922
  %v8933 = vsub.f32 %v8900, %v8925
  %v8934 = vmul.f32 %v8926, 1.442695
  %v8935 = vpow.pop %v8934
  %v8936 = vmul.f32 %v8927, 1.442695
  %v8937 = vpow.pop %v8936
  %v8938 = vmul.f32 %v8928, 1.442695
  %v8939 = vpow.pop %v8938
  %v8940 = vmul.f32 %v8929, 1.442695
  %v8941 = vpow.pop %v8940
  %v8942 = vmul.f32 %v8930, 1.442695
  %v8943 = vpow.pop %v8942
  %v8944 = vmul.f32 %v8931, 1.442695
  %v8945 = vpow.pop %v8944
  %v8946 = vmul.f32 %v8932, 1.442695
  %v8947 = vpow.pop %v8946
  %v8948 = vmul.f32 %v8933, 1.442695
  %v8949 = vpow.pop %v8948
  %v8950 = vsel %vm199, %v8935, 0.0
  %8951 = vadd.xlane.f32.xlu0 %v8950
  %v8952 = vpop.xlane.xlu0 %8951
  %v8953 = vsel %vm199, %v8937, 0.0
  %8954 = vadd.xlane.f32.xlu0 %v8953
  %v8955 = vpop.xlane.xlu0 %8954
  %v8956 = vsel %vm199, %v8939, 0.0
  %8957 = vadd.xlane.f32.xlu0 %v8956
  %v8958 = vpop.xlane.xlu0 %8957
  %v8959 = vsel %vm199, %v8941, 0.0
  %8960 = vadd.xlane.f32.xlu0 %v8959
  %v8961 = vpop.xlane.xlu0 %8960
  %v8962 = vsel %vm199, %v8943, 0.0
  %8963 = vadd.xlane.f32.xlu0 %v8962
  %v8964 = vpop.xlane.xlu0 %8963
  %v8965 = vsel %vm199, %v8945, 0.0
  %8966 = vadd.xlane.f32.xlu0 %v8965
  %v8967 = vpop.xlane.xlu0 %8966
  %v8968 = vsel %vm199, %v8947, 0.0
  %8969 = vadd.xlane.f32.xlu0 %v8968
  %v8970 = vpop.xlane.xlu0 %8969
  %v8971 = vsel %vm199, %v8949, 0.0
  %8972 = vadd.xlane.f32.xlu0 %v8971
  %v8973 = vpop.xlane.xlu0 %8972
  %v8974 = vrcp.pop %v8952
  %v8975 = vrcp.pop %v8955
  %v8976 = vrcp.pop %v8958
  %v8977 = vrcp.pop %v8961
  %v8978 = vrcp.pop %v8964
  %v8979 = vrcp.pop %v8967
  %v8980 = vrcp.pop %v8970
  %v8981 = vrcp.pop %v8973
  %v8982 = vmul.f32 %v8935, %v8974
  %v8983 = vmul.f32 %v8937, %v8975
  %v8984 = vmul.f32 %v8939, %v8976
  %v8985 = vmul.f32 %v8941, %v8977
  %v8986 = vmul.f32 %v8943, %v8978
  %v8987 = vmul.f32 %v8945, %v8979
  %v8988 = vmul.f32 %v8947, %v8980
  %v8989 = vmul.f32 %v8949, %v8981
  %8990 = vrot.lane.b32.xlu0 %v168, 8
  %v8991 = vpop.permute.xlu0 %8990
  %v8994 = vsel %vm199, %v8982, 0
  %8996 = vmatpush.msra.mxu0 0.0
  %8997 = vmatpush.msra.mxu0 0.0
  %8998 = vmatpush.msra.mxu0 0.0
  %8999 = vmatpush.msra.mxu0 0.0
  %9000 = vmatpush.msra.mxu0 0.0
  %9001 = vmatpush.msra.mxu0 0.0
  %9002 = vmatpush.msra.mxu0 0.0
  %9003 = vmatpush.msra.mxu0 0.0
  %9004 = vmatpush.msra.mxu0 0.0
  %9005 = vmatpush.msra.mxu0 0.0
  %9006 = vmatpush.msra.mxu0 0.0
  %9007 = vmatpush.msra.mxu0 0.0
  %9008 = vmatpush.msra.mxu0 0.0
  %9009 = vmatpush.msra.mxu0 0.0
  %9010 = vmatpush.msra.mxu0 0.0
  %9011 = vmatpush.msra.mxu0 %v8991
  %9012 = vmatmul.f32.gmra.mxu0 %v8994
  %v9013 = vpop.f32.mrf.mxu0
  %v9014 = vadd.f32 0.0, %v9013
  %9015 = vdwg.mxu0
  %9016 = vrot.lane.b32.xlu0 %v170, 8
  %v9017 = vpop.permute.xlu0 %9016
  %v9020 = vsel %vm199, %v8983, 0
  %9022 = vmatpush.msra.mxu0 0.0
  %9023 = vmatpush.msra.mxu0 0.0
  %9024 = vmatpush.msra.mxu0 0.0
  %9025 = vmatpush.msra.mxu0 0.0
  %9026 = vmatpush.msra.mxu0 0.0
  %9027 = vmatpush.msra.mxu0 0.0
  %9028 = vmatpush.msra.mxu0 0.0
  %9029 = vmatpush.msra.mxu0 0.0
  %9030 = vmatpush.msra.mxu0 0.0
  %9031 = vmatpush.msra.mxu0 0.0
  %9032 = vmatpush.msra.mxu0 0.0
  %9033 = vmatpush.msra.mxu0 0.0
  %9034 = vmatpush.msra.mxu0 0.0
  %9035 = vmatpush.msra.mxu0 0.0
  %9036 = vmatpush.msra.mxu0 0.0
  %9037 = vmatpush.msra.mxu0 %v9017
  %9038 = vmatmul.f32.gmra.mxu0 %v9020
  %v9039 = vpop.f32.mrf.mxu0
  %v9040 = vadd.f32 0.0, %v9039
  %9041 = vdwg.mxu0
  %9042 = vrot.lane.b32.xlu0 %v173, 8
  %v9043 = vpop.permute.xlu0 %9042
  %v9046 = vsel %vm199, %v8984, 0
  %9048 = vmatpush.msra.mxu0 0.0
  %9049 = vmatpush.msra.mxu0 0.0
  %9050 = vmatpush.msra.mxu0 0.0
  %9051 = vmatpush.msra.mxu0 0.0
  %9052 = vmatpush.msra.mxu0 0.0
  %9053 = vmatpush.msra.mxu0 0.0
  %9054 = vmatpush.msra.mxu0 0.0
  %9055 = vmatpush.msra.mxu0 0.0
  %9056 = vmatpush.msra.mxu0 0.0
  %9057 = vmatpush.msra.mxu0 0.0
  %9058 = vmatpush.msra.mxu0 0.0
  %9059 = vmatpush.msra.mxu0 0.0
  %9060 = vmatpush.msra.mxu0 0.0
  %9061 = vmatpush.msra.mxu0 0.0
  %9062 = vmatpush.msra.mxu0 0.0
  %9063 = vmatpush.msra.mxu0 %v9043
  %9064 = vmatmul.f32.gmra.mxu0 %v9046
  %v9065 = vpop.f32.mrf.mxu0
  %v9066 = vadd.f32 0.0, %v9065
  %9067 = vdwg.mxu0
  %9068 = vrot.lane.b32.xlu0 %v175, 8
  %v9069 = vpop.permute.xlu0 %9068
  %v9072 = vsel %vm199, %v8985, 0
  %9074 = vmatpush.msra.mxu0 0.0
  %9075 = vmatpush.msra.mxu0 0.0
  %9076 = vmatpush.msra.mxu0 0.0
  %9077 = vmatpush.msra.mxu0 0.0
  %9078 = vmatpush.msra.mxu0 0.0
  %9079 = vmatpush.msra.mxu0 0.0
  %9080 = vmatpush.msra.mxu0 0.0
  %9081 = vmatpush.msra.mxu0 0.0
  %9082 = vmatpush.msra.mxu0 0.0
  %9083 = vmatpush.msra.mxu0 0.0
  %9084 = vmatpush.msra.mxu0 0.0
  %9085 = vmatpush.msra.mxu0 0.0
  %9086 = vmatpush.msra.mxu0 0.0
  %9087 = vmatpush.msra.mxu0 0.0
  %9088 = vmatpush.msra.mxu0 0.0
  %9089 = vmatpush.msra.mxu0 %v9069
  %9090 = vmatmul.f32.gmra.mxu0 %v9072
  %v9091 = vpop.f32.mrf.mxu0
  %v9092 = vadd.f32 0.0, %v9091
  %9093 = vdwg.mxu0
  %9094 = vrot.lane.b32.xlu0 %v178, 8
  %v9095 = vpop.permute.xlu0 %9094
  %v9098 = vsel %vm199, %v8986, 0
  %9100 = vmatpush.msra.mxu0 0.0
  %9101 = vmatpush.msra.mxu0 0.0
  %9102 = vmatpush.msra.mxu0 0.0
  %9103 = vmatpush.msra.mxu0 0.0
  %9104 = vmatpush.msra.mxu0 0.0
  %9105 = vmatpush.msra.mxu0 0.0
  %9106 = vmatpush.msra.mxu0 0.0
  %9107 = vmatpush.msra.mxu0 0.0
  %9108 = vmatpush.msra.mxu0 0.0
  %9109 = vmatpush.msra.mxu0 0.0
  %9110 = vmatpush.msra.mxu0 0.0
  %9111 = vmatpush.msra.mxu0 0.0
  %9112 = vmatpush.msra.mxu0 0.0
  %9113 = vmatpush.msra.mxu0 0.0
  %9114 = vmatpush.msra.mxu0 0.0
  %9115 = vmatpush.msra.mxu0 %v9095
  %9116 = vmatmul.f32.gmra.mxu0 %v9098
  %v9117 = vpop.f32.mrf.mxu0
  %v9118 = vadd.f32 0.0, %v9117
  %9119 = vdwg.mxu0
  %9120 = vrot.lane.b32.xlu0 %v180, 8
  %v9121 = vpop.permute.xlu0 %9120
  %v9124 = vsel %vm199, %v8987, 0
  %9126 = vmatpush.msra.mxu0 0.0
  %9127 = vmatpush.msra.mxu0 0.0
  %9128 = vmatpush.msra.mxu0 0.0
  %9129 = vmatpush.msra.mxu0 0.0
  %9130 = vmatpush.msra.mxu0 0.0
  %9131 = vmatpush.msra.mxu0 0.0
  %9132 = vmatpush.msra.mxu0 0.0
  %9133 = vmatpush.msra.mxu0 0.0
  %9134 = vmatpush.msra.mxu0 0.0
  %9135 = vmatpush.msra.mxu0 0.0
  %9136 = vmatpush.msra.mxu0 0.0
  %9137 = vmatpush.msra.mxu0 0.0
  %9138 = vmatpush.msra.mxu0 0.0
  %9139 = vmatpush.msra.mxu0 0.0
  %9140 = vmatpush.msra.mxu0 0.0
  %9141 = vmatpush.msra.mxu0 %v9121
  %9142 = vmatmul.f32.gmra.mxu0 %v9124
  %v9143 = vpop.f32.mrf.mxu0
  %v9144 = vadd.f32 0.0, %v9143
  %9145 = vdwg.mxu0
  %9146 = vrot.lane.b32.xlu0 %v183, 8
  %v9147 = vpop.permute.xlu0 %9146
  %v9150 = vsel %vm199, %v8988, 0
  %9152 = vmatpush.msra.mxu0 0.0
  %9153 = vmatpush.msra.mxu0 0.0
  %9154 = vmatpush.msra.mxu0 0.0
  %9155 = vmatpush.msra.mxu0 0.0
  %9156 = vmatpush.msra.mxu0 0.0
  %9157 = vmatpush.msra.mxu0 0.0
  %9158 = vmatpush.msra.mxu0 0.0
  %9159 = vmatpush.msra.mxu0 0.0
  %9160 = vmatpush.msra.mxu0 0.0
  %9161 = vmatpush.msra.mxu0 0.0
  %9162 = vmatpush.msra.mxu0 0.0
  %9163 = vmatpush.msra.mxu0 0.0
  %9164 = vmatpush.msra.mxu0 0.0
  %9165 = vmatpush.msra.mxu0 0.0
  %9166 = vmatpush.msra.mxu0 0.0
  %9167 = vmatpush.msra.mxu0 %v9147
  %9168 = vmatmul.f32.gmra.mxu0 %v9150
  %v9169 = vpop.f32.mrf.mxu0
  %v9170 = vadd.f32 0.0, %v9169
  %9171 = vdwg.mxu0
  %9172 = vrot.lane.b32.xlu0 %v185, 8
  %v9173 = vpop.permute.xlu0 %9172
  %v9176 = vsel %vm199, %v8989, 0
  %9178 = vmatpush.msra.mxu0 0.0
  %9179 = vmatpush.msra.mxu0 0.0
  %9180 = vmatpush.msra.mxu0 0.0
  %9181 = vmatpush.msra.mxu0 0.0
  %9182 = vmatpush.msra.mxu0 0.0
  %9183 = vmatpush.msra.mxu0 0.0
  %9184 = vmatpush.msra.mxu0 0.0
  %9185 = vmatpush.msra.mxu0 0.0
  %9186 = vmatpush.msra.mxu0 0.0
  %9187 = vmatpush.msra.mxu0 0.0
  %9188 = vmatpush.msra.mxu0 0.0
  %9189 = vmatpush.msra.mxu0 0.0
  %9190 = vmatpush.msra.mxu0 0.0
  %9191 = vmatpush.msra.mxu0 0.0
  %9192 = vmatpush.msra.mxu0 0.0
  %9193 = vmatpush.msra.mxu0 %v9173
  %9194 = vmatmul.f32.gmra.mxu0 %v9176
  %v9195 = vpop.f32.mrf.mxu0
  %v9196 = vadd.f32 0.0, %v9195
  %9197 = vdwg.mxu0
  %9206 = vrot.lane.b32.xlu0 %v7974, 8
  %v9207 = vpop.permute.xlu0 %9206
  %9208 = vrot.lane.b32.xlu0 %v8000, 8
  %v9209 = vpop.permute.xlu0 %9208
  %9210 = vrot.lane.b32.xlu0 %v8026, 8
  %v9211 = vpop.permute.xlu0 %9210
  %9212 = vrot.lane.b32.xlu0 %v8052, 8
  %v9213 = vpop.permute.xlu0 %9212
  %9214 = vrot.lane.b32.xlu0 %v8078, 8
  %v9215 = vpop.permute.xlu0 %9214
  %9216 = vrot.lane.b32.xlu0 %v8104, 8
  %v9217 = vpop.permute.xlu0 %9216
  %9218 = vrot.lane.b32.xlu0 %v8130, 8
  %v9219 = vpop.permute.xlu0 %9218
  %9220 = vrot.lane.b32.xlu0 %v8156, 8
  %v9221 = vpop.permute.xlu0 %9220
  %9238 = vrot.lane.b32.xlu0 %v8494, 16
  %v9239 = vpop.permute.xlu0 %9238
  %9240 = vrot.lane.b32.xlu0 %v8520, 16
  %v9241 = vpop.permute.xlu0 %9240
  %9242 = vrot.lane.b32.xlu0 %v8546, 16
  %v9243 = vpop.permute.xlu0 %9242
  %9244 = vrot.lane.b32.xlu0 %v8572, 16
  %v9245 = vpop.permute.xlu0 %9244
  %9246 = vrot.lane.b32.xlu0 %v8598, 16
  %v9247 = vpop.permute.xlu0 %9246
  %9248 = vrot.lane.b32.xlu0 %v8624, 16
  %v9249 = vpop.permute.xlu0 %9248
  %9250 = vrot.lane.b32.xlu0 %v8650, 16
  %v9251 = vpop.permute.xlu0 %9250
  %9252 = vrot.lane.b32.xlu0 %v8676, 16
  %v9253 = vpop.permute.xlu0 %9252
  %9270 = vrot.lane.b32.xlu0 %v9014, 24
  %v9271 = vpop.permute.xlu0 %9270
  %9272 = vrot.lane.b32.xlu0 %v9040, 24
  %v9273 = vpop.permute.xlu0 %9272
  %9274 = vrot.lane.b32.xlu0 %v9066, 24
  %v9275 = vpop.permute.xlu0 %9274
  %9276 = vrot.lane.b32.xlu0 %v9092, 24
  %v9277 = vpop.permute.xlu0 %9276
  %9278 = vrot.lane.b32.xlu0 %v9118, 24
  %v9279 = vpop.permute.xlu0 %9278
  %9280 = vrot.lane.b32.xlu0 %v9144, 24
  %v9281 = vpop.permute.xlu0 %9280
  %9282 = vrot.lane.b32.xlu0 %v9170, 24
  %v9283 = vpop.permute.xlu0 %9282
  %9284 = vrot.lane.b32.xlu0 %v9196, 24
  %v9285 = vpop.permute.xlu0 %9284
  %v9294 = vsel %vm199, %v7454, %v9207
  %v9295 = vsel %vm199, %v7480, %v9209
  %v9296 = vsel %vm199, %v7506, %v9211
  %v9297 = vsel %vm199, %v7532, %v9213
  %v9298 = vsel %vm199, %v7558, %v9215
  %v9299 = vsel %vm199, %v7584, %v9217
  %v9300 = vsel %vm199, %v7610, %v9219
  %v9301 = vsel %vm199, %v7636, %v9221
  %v9302 = vsel %vm2373, %v9294, %v9239
  %v9303 = vsel %vm2373, %v9295, %v9241
  %v9304 = vsel %vm2373, %v9296, %v9243
  %v9305 = vsel %vm2373, %v9297, %v9245
  %v9306 = vsel %vm2373, %v9298, %v9247
  %v9307 = vsel %vm2373, %v9299, %v9249
  %v9308 = vsel %vm2373, %v9300, %v9251
  %v9309 = vsel %vm2373, %v9301, %v9253
  %v9310 = vsel %vm2382, %v9302, %v9271
  %v9311 = vsel %vm2382, %v9303, %v9273
  %v9312 = vsel %vm2382, %v9304, %v9275
  %v9313 = vsel %vm2382, %v9305, %v9277
  %v9314 = vsel %vm2382, %v9306, %v9279
  %v9315 = vsel %vm2382, %v9307, %v9281
  %v9316 = vsel %vm2382, %v9308, %v9283
  %v9317 = vsel %vm2382, %v9309, %v9285
  %v9318 = vpack.c.bf16 %v9311, %v9310
  %v9319 = vpack.c.bf16 %v9313, %v9312
  %v9320 = vpack.c.bf16 %v9315, %v9314
  %v9321 = vpack.c.bf16 %v9317, %v9316
  %s9322 = scalar_lea.vmem %s5, 48
  %v9323 = vld [vmem:[%s9322] sm:$0xf]
  %v9324 = vld [vmem:[%s9322 + $0x4] sm:$0xf]
  %v9325 = vld [vmem:[%s9322 + $0x8] sm:$0xf]
  %v9326 = vld [vmem:[%s9322 + $0xc] sm:$0xf]
  %s9327 = scalar_lea.vmem %s6, 3
  %v9328 = vld [vmem:[%s9327] sm:$0x1]
  %v9330 = vperm.slane %v9328, 0
  %v9336 = vunpack.c.l.b16 %v9323
  %v9337 = vunpack.c.l.b16 %v9324
  %v9338 = vunpack.c.l.b16 %v9325
  %v9339 = vunpack.c.l.b16 %v9326
  %v9340 = vpack.c.b16 %v9337, %v9336
  %v9341 = vpack.c.b16 %v9339, %v9338
  %v9345 = vsel %vm87, %v9318, 0
  %v9348 = vsel %vm87, %v9319, 0
  %v9351 = vsel %vm87, %v9320, 0
  %v9354 = vsel %vm87, %v9321, 0
  %9356 = vmatpush.bf16.msra.mxu0 0
  %9357 = vmatpush.bf16.msra.mxu0 0
  %9358 = vmatpush.bf16.msra.mxu0 0
  %9359 = vmatpush.bf16.msra.mxu0 0
  %9360 = vmatpush.bf16.msra.mxu0 0
  %9361 = vmatpush.bf16.msra.mxu0 0
  %9362 = vmatpush.bf16.msra.mxu0 %v9341
  %9363 = vmatpush.bf16.msra.mxu0 %v9340
  %9364 = vmatmul.bf16.gmra.mxu0 %v9345
  %v9365 = vpop.f32.mrf.mxu0
  %v9366 = vadd.f32 %v9330, %v9365
  %v9367 = vpop.f32.mrf.mxu0
  %v9368 = vadd.f32 %v9330, %v9367
  %9369 = vmatmul.bf16.gmra.mxu0 %v9348
  %v9370 = vpop.f32.mrf.mxu0
  %v9371 = vadd.f32 %v9330, %v9370
  %v9372 = vpop.f32.mrf.mxu0
  %v9373 = vadd.f32 %v9330, %v9372
  %9374 = vmatmul.bf16.gmra.mxu0 %v9351
  %v9375 = vpop.f32.mrf.mxu0
  %v9376 = vadd.f32 %v9330, %v9375
  %v9377 = vpop.f32.mrf.mxu0
  %v9378 = vadd.f32 %v9330, %v9377
  %9379 = vmatmul.bf16.gmra.mxu0 %v9354
  %v9380 = vpop.f32.mrf.mxu0
  %v9381 = vadd.f32 %v9330, %v9380
  %v9382 = vpop.f32.mrf.mxu0
  %v9383 = vadd.f32 %v9330, %v9382
  %9384 = vdwg.mxu0
  %9385 = vset.pattern.permute.xlu0 3
  %9386 = vperm.xlu0 %9385, %v187
  %v9387 = vpop.permute.xlu0 %9386
  %9389 = vset.pattern.permute.xlu0 3
  %9390 = vperm.xlu0 %9389, %v188
  %v9391 = vpop.permute.xlu0 %9390
  %9393 = vset.pattern.permute.xlu0 3
  %9394 = vperm.xlu0 %9393, %v189
  %v9395 = vpop.permute.xlu0 %9394
  %9397 = vset.pattern.permute.xlu0 3
  %9398 = vperm.xlu0 %9397, %v190
  %v9399 = vpop.permute.xlu0 %9398
  %9401 = vset.pattern.permute.xlu0 3
  %9402 = vperm.xlu0 %9401, %v191
  %v9403 = vpop.permute.xlu0 %9402
  %9405 = vset.pattern.permute.xlu0 3
  %9406 = vperm.xlu0 %9405, %v192
  %v9407 = vpop.permute.xlu0 %9406
  %9409 = vset.pattern.permute.xlu0 3
  %9410 = vperm.xlu0 %9409, %v193
  %v9411 = vpop.permute.xlu0 %9410
  %9413 = vset.pattern.permute.xlu0 3
  %9414 = vperm.xlu0 %9413, %v194
  %v9415 = vpop.permute.xlu0 %9414
  %v9417 = vmul.f32 %v9387, %v9366
  %v9418 = vmul.f32 %v9391, %v9368
  %v9419 = vmul.f32 %v9395, %v9371
  %v9420 = vmul.f32 %v9399, %v9373
  %v9421 = vmul.f32 %v9403, %v9376
  %v9422 = vmul.f32 %v9407, %v9378
  %v9423 = vmul.f32 %v9411, %v9381
  %v9424 = vmul.f32 %v9415, %v9383
  %v9425 = vadd.f32 %v7110, %v9417
  %v9426 = vadd.f32 %v7111, %v9418
  %v9427 = vadd.f32 %v7112, %v9419
  %v9428 = vadd.f32 %v7113, %v9420
  %v9429 = vadd.f32 %v7114, %v9421
  %v9430 = vadd.f32 %v7115, %v9422
  %v9431 = vadd.f32 %v7116, %v9423
  %v9432 = vadd.f32 %v7117, %v9424
  %vm9433 = vcmp.eq.f32.partialorder %v9425, 0.0
  %vm9434 = vcmp.eq.f32.partialorder %v9426, 0.0
  %vm9435 = vcmp.eq.f32.partialorder %v9427, 0.0
  %vm9436 = vcmp.eq.f32.partialorder %v9428, 0.0
  %vm9437 = vcmp.eq.f32.partialorder %v9429, 0.0
  %vm9438 = vcmp.eq.f32.partialorder %v9430, 0.0
  %vm9439 = vcmp.eq.f32.partialorder %v9431, 0.0
  %vm9440 = vcmp.eq.f32.partialorder %v9432, 0.0
  %v9441 = vsel %vm9433, 2.220446e-16, %v9425
  %v9442 = vsel %vm9434, 2.220446e-16, %v9426
  %v9443 = vsel %vm9435, 2.220446e-16, %v9427
  %v9444 = vsel %vm9436, 2.220446e-16, %v9428
  %v9445 = vsel %vm9437, 2.220446e-16, %v9429
  %v9446 = vsel %vm9438, 2.220446e-16, %v9430
  %v9447 = vsel %vm9439, 2.220446e-16, %v9431
  %v9448 = vsel %vm9440, 2.220446e-16, %v9432
  %9449 = vst.msk [vmem:[%s7] sm:$0xff] %vm87, %v9441
  %9450 = vst.msk [vmem:[%s7 + $0x8] sm:$0xff] %vm87, %v9442
  %9451 = vst.msk [vmem:[%s7 + $0x10] sm:$0xff] %vm87, %v9443
  %9452 = vst.msk [vmem:[%s7 + $0x18] sm:$0xff] %vm87, %v9444
  %9453 = vst.msk [vmem:[%s7 + $0x20] sm:$0xff] %vm87, %v9445
  %9454 = vst.msk [vmem:[%s7 + $0x28] sm:$0xff] %vm87, %v9446
  %9455 = vst.msk [vmem:[%s7 + $0x30] sm:$0xff] %vm87, %v9447
  %9456 = vst.msk [vmem:[%s7 + $0x38] sm:$0xff] %vm87, %v9448
  // Predicated region
  $region30: #{tpu_custom_call.1} parent=0 // pred_check
    _
  $region31: #{tpu_custom_call.1} parent=0 // pred_check_branch
    %9458 = sbr.rel (0) target = $region33
  $region32: #{tpu_custom_call.1} parent=0 // pred_region
    _
  $region33: #{tpu_custom_call.1} parent=0 // pred_fallthru
    _
  // Predicated region
  $region34: #{tpu_custom_call.1} parent=0 // pred_check
    _
  $region35: #{tpu_custom_call.1} parent=0 // pred_check_branch
    %9460 = sbr.rel (0) target = $region37
  $region36: #{tpu_custom_call.1} parent=0 // pred_region
    _
  $region37: #{tpu_custom_call.1} parent=0 // pred_fallthru
    _

</llo_original>
